<compile_context>
chip_gen: v5e
topology: v5e:2x2
jax: 0.10.0
libtpu: 0.0.40
codegen_flags: <defaults>
</compile_context>

<pallas_src>
import functools
import math

import jax
import jax.numpy as jnp
from jax.experimental import pallas as pl
from jax.experimental.pallas import tpu as pltpu  # noqa: F401  (TPU backend)

# ----------------------------- model hyper-params -----------------------------
B = 2            # batch
S_SRC = 8        # source sequence length
S_TGT = 8        # target sequence length
D_MODEL = 32     # hidden size
N_HEADS = 4      # attention heads (main + random encoder)
HEAD_DIM = D_MODEL // N_HEADS
FFN_DIM = 64     # feed-forward dim (main encoder/decoder)
RAND_FFN_DIM = 64
RAND_LAYERS = 2  # random_encoder_layers (scaled down)
ENC_LAYERS = 2
DEC_LAYERS = 2
SRC_VOCAB = 128  # random encoder src vocab (lane-dense)
TGT_VOCAB = 128  # decoder / output vocab (lane-dense final store)
MAX_POS = 16     # max_position_embeddings
PAD_IDX = 1
INIT_STD = 0.02
NEG_INF = -1e9
LN_EPS = 1e-5

_ENC_KEYS = ("ln_emb_g", "ln_emb_b",
             "wqkv", "bqkv", "wo", "bo", "ln1_g", "ln1_b",
             "fc1_w", "fc1_b", "fc2_w", "fc2_b", "ln2_g", "ln2_b")

_DEC_KEYS = ("ln_emb_g", "ln_emb_b",
             "wqkv", "bqkv", "wo", "bo", "ln1_g", "ln1_b",
             "wcq", "bcq", "wckv", "bckv", "wco", "bco", "ln2_g", "ln2_b",
             "fc1_w", "fc1_b", "fc2_w", "fc2_b", "ln3_g", "ln3_b")


# ============================ in-kernel helpers ============================
def _ln(x, g, b):
    """LayerNorm over last dim. x: (M, D) f32, g/b: (1, D)."""
    mean = jnp.mean(x, axis=-1, keepdims=True)
    xc = x - mean
    var = jnp.mean(xc * xc, axis=-1, keepdims=True)
    return xc * jax.lax.rsqrt(var + LN_EPS) * g + b


def _softmax(s):
    """Numerically-stable softmax along last dim; EUP reciprocal for the divide."""
    s = s - jnp.max(s, axis=-1, keepdims=True)
    p = jnp.exp(s)
    return p * pl.reciprocal(jnp.sum(p, axis=-1, keepdims=True), approx=True)


def _mha(q2, k2, v2, add_mask, b, sq, sk, n_heads):
    """Multi-head attention core.

    q2: (b*sq, D) already scaled, k2/v2: (b*sk, D),
    add_mask: additive, (b, 1, sk) or (b, sq, sk).  Returns (b*sq, D).
    """
    d = q2.shape[-1]
    hd = d // n_heads
    heads = []
    for h in range(n_heads):          # static unroll; all heads in one launch
        qh = q2[:, h * hd:(h + 1) * hd].reshape(b, sq, hd)
        kh = k2[:, h * hd:(h + 1) * hd].reshape(b, sk, hd)
        vh = v2[:, h * hd:(h + 1) * hd].reshape(b, sk, hd)
        s = jnp.einsum("bqd,bkd->bqk", qh, kh,
                       preferred_element_type=jnp.float32)
        p = _softmax(s + add_mask)
        oh = jnp.einsum("bqk,bkd->bqd", p, vh,
                        preferred_element_type=jnp.float32)
        heads.append(oh.reshape(b * sq, hd))
    return jnp.concatenate(heads, axis=-1)


def _tile_pos(pos_tab, b, s, d):
    """Positional table (MAX_POS, D) -> (b*s, D), positions 0..s-1 (static slice)."""
    pos = pos_tab[:s]
    return jnp.broadcast_to(pos[None], (b, s, d)).reshape(b * s, d)


def _embed(ids, tok_tab, pos_tab, b, s, d):
    """Token + positional embedding, fully in-kernel.

    ids: (b, s) int32.  Token lookup is a one-hot (b*s, V) x (V, D) MXU matmul;
    V = 128 so the contraction is lane-dense.  padding_idx row is zeroed at init.
    """
    v = tok_tab.shape[0]
    col = jax.lax.broadcasted_iota(jnp.int32, (b, s, v), 2)
    onehot = (col == ids[:, :, None]).astype(jnp.float32)        # (b, s, V)
    tok = jnp.dot(onehot.reshape(b * s, v), tok_tab,
                  preferred_element_type=jnp.float32)            # (b*s, D)
    return tok + _tile_pos(pos_tab, b, s, d)


def _encoder_stack(x2, p, add_mask, b, s, n_heads):
    """Embedding-LN + full BartEncoder stack.  x2: (b*s, D)."""
    d = x2.shape[-1]
    x2 = _ln(x2, p["ln_emb_g"][...], p["ln_emb_b"][...])
    n_layers = p["wqkv"].shape[0]
    for l in range(n_layers):                      # static unroll over layers
        # --- self attention (fused QKV, scale folded into Q weights) ---
        qkv = jnp.dot(x2, p["wqkv"][l], preferred_element_type=jnp.float32) + p["bqkv"][l]
        a = _mha(qkv[:, :d], qkv[:, d:2 * d], qkv[:, 2 * d:],
                 add_mask, b, s, s, n_heads)
        a = jnp.dot(a, p["wo"][l], preferred_element_type=jnp.float32) + p["bo"][l]
        x2 = _ln(x2 + a, p["ln1_g"][l], p["ln1_b"][l])       # residual fused in LN
        # --- feed forward ---
        h = jnp.dot(x2, p["fc1_w"][l], preferred_element_type=jnp.float32) + p["fc1_b"][l]
        # TODO(synk): HF BART uses exact (erf) GELU; tanh approximation used here.
        h = jax.nn.gelu(h)
        h = jnp.dot(h, p["fc2_w"][l], preferred_element_type=jnp.float32) + p["fc2_b"][l]
        x2 = _ln(x2 + h, p["ln2_g"][l], p["ln2_b"][l])
    return x2


def _decoder_stack(y2, p, self_mask, enc2, cross_mask, b, st, ss, n_heads):
    """Embedding-LN + full BartDecoder stack.  y2: (b*st, D), enc2: (b*ss, D)."""
    d = y2.shape[-1]
    y2 = _ln(y2, p["ln_emb_g"][...], p["ln_emb_b"][...])
    n_layers = p["wqkv"].shape[0]
    for l in range(n_layers):
        # --- masked self attention ---
        qkv = jnp.dot(y2, p["wqkv"][l], preferred_element_type=jnp.float32) + p["bqkv"][l]
        a = _mha(qkv[:, :d], qkv[:, d:2 * d], qkv[:, 2 * d:],
                 self_mask, b, st, st, n_heads)
        a = jnp.dot(a, p["wo"][l], preferred_element_type=jnp.float32) + p["bo"][l]
        y2 = _ln(y2 + a, p["ln1_g"][l], p["ln1_b"][l])
        # --- cross attention on encoder hidden states ---
        q = jnp.dot(y2, p["wcq"][l], preferred_element_type=jnp.float32) + p["bcq"][l]
        kv = jnp.dot(enc2, p["wckv"][l], preferred_element_type=jnp.float32) + p["bckv"][l]
        a = _mha(q, kv[:, :d], kv[:, d:], cross_mask, b, st, ss, n_heads)
        a = jnp.dot(a, p["wco"][l], preferred_element_type=jnp.float32) + p["bco"][l]
        y2 = _ln(y2 + a, p["ln2_g"][l], p["ln2_b"][l])
        # --- feed forward ---
        h = jnp.dot(y2, p["fc1_w"][l], preferred_element_type=jnp.float32) + p["fc1_b"][l]
        h = jax.nn.gelu(h)  # TODO(synk): exact erf GELU in HF BART
        h = jnp.dot(h, p["fc2_w"][l], preferred_element_type=jnp.float32) + p["fc2_b"][l]
        y2 = _ln(y2 + h, p["ln3_g"][l], p["ln3_b"][l])
    return y2


# ============================ the single fused kernel ============================
def _model_kernel(*refs, n_heads):
    (*in_refs, logits_ref) = refs
    it = iter(in_refs)
    src_ids_ref = next(it)
    src_mask_ref = next(it)
    tgt_ids_ref = next(it)
    tgt_mask_ref = next(it)
    rand_tok_ref = next(it)
    rand_pos_ref = next(it)
    rand_enc = {k: next(it) for k in _ENC_KEYS}
    mid_pos_ref = next(it)
    enc = {k: next(it) for k in _ENC_KEYS}
    dec_tok_ref = next(it)
    dec_pos_ref = next(it)
    dec = {k: next(it) for k in _DEC_KEYS}
    outw_ref = next(it)
    outb_ref = next(it)

    b, ss = src_ids_ref.shape
    _, st = tgt_ids_ref.shape
    d = rand_tok_ref.shape[1]
    vocab = outw_ref.shape[1]

    # ---- additive attention masks, built once (hoisted) and reused everywhere ----
    src_pad = (1.0 - src_mask_ref[...].astype(jnp.float32)) * NEG_INF    # (b, ss)
    enc_mask = src_pad[:, None, :]                                       # (b, 1, ss)
    tgt_pad = (1.0 - tgt_mask_ref[...].astype(jnp.float32)) * NEG_INF    # (b, st)
    row = jax.lax.broadcasted_iota(jnp.int32, (st, st), 0)
    col = jax.lax.broadcasted_iota(jnp.int32, (st, st), 1)
    causal = jnp.where(col <= row, 0.0, NEG_INF)                         # (st, st)
    self_mask = tgt_pad[:, None, :] + causal[None]                       # (b, st, st)

    # ---- 1) random encoder: embeds + encoder stack ----
    x2 = _embed(src_ids_ref[...], rand_tok_ref[...], rand_pos_ref[...], b, ss, d)
    x2 = _encoder_stack(x2, rand_enc, enc_mask, b, ss, n_heads)

    # ---- 2) self.inputs_embeds with embed_tokens deleted ----
    # TODO(synk): exact custom BartEmbeds(inputs_embeds=...) semantics unknown;
    #             implemented as "+ positional embedding" (no token lookup).
    x2 = x2 + _tile_pos(mid_pos_ref[...], b, ss, d)

    # ---- 3) main encoder stack ----
    enc2 = _encoder_stack(x2, enc, enc_mask, b, ss, n_heads)

    # ---- 4) decoder embeds + decoder stack ----
    y2 = _embed(tgt_ids_ref[...], dec_tok_ref[...], dec_pos_ref[...], b, st, d)
    y2 = _decoder_stack(y2, dec, self_mask, enc2, enc_mask, b, st, ss, n_heads)

    # ---- 5) fused output vocab projection (lane-dense store: vocab = 128) ----
    logits = jnp.dot(y2, outw_ref[...], preferred_element_type=jnp.float32) + outb_ref[...]
    logits_ref[...] = logits.reshape(b, st, vocab).astype(logits_ref.dtype)


# ================================ model glue ================================
def forward(params, input_ids, attention_mask, decoder_input_ids, decoder_attention_mask):
    b, st = decoder_input_ids.shape
    vocab = params["out"]["w"].shape[1]
    inputs = [
        input_ids, attention_mask, decoder_input_ids, decoder_attention_mask,
        params["rand_emb"]["tok"], params["rand_emb"]["pos"],
        *[params["rand_enc"][k] for k in _ENC_KEYS],
        params["mid_emb"]["pos"],
        *[params["enc"][k] for k in _ENC_KEYS],
        params["dec_emb"]["tok"], params["dec_emb"]["pos"],
        *[params["dec"][k] for k in _DEC_KEYS],
        params["out"]["w"], params["out"]["b"],
    ]
    kernel = functools.partial(_model_kernel, n_heads=N_HEADS)
    return pl.pallas_call(
        kernel,
        out_shape=jax.ShapeDtypeStruct((b, st, vocab), jnp.float32),
    )(*inputs)


# ================================ parameter init ================================
class _Keys:
    def __init__(self, key):
        self._key = key

    def __call__(self):
        self._key, k = jax.random.split(self._key)
        return k


def _randn(kg, shape, std):
    return jax.random.normal(kg(), shape, jnp.float32) * std


def _init_embeds(kg, vocab, d, max_pos, pad_idx, std):
    tok = _randn(kg, (vocab, d), std).at[pad_idx].set(0.0)   # padding_idx row = 0
    pos = _randn(kg, (max_pos, d), std)
    return {"tok": tok, "pos": pos}


def _init_encoder_stack(kg, n_layers, d, ffn, n_heads, std):
    hd = d // n_heads
    qs = 1.0 / math.sqrt(hd)                 # folded into Q weight slice
    keys = ("wqkv", "bqkv", "wo", "bo", "ln1_g", "ln1_b",
            "fc1_w", "fc1_b", "fc2_w", "fc2_b", "ln2_g", "ln2_b")
    acc = {k: [] for k in keys}
    for _ in range(n_layers):
        wq, wk, wv = (_randn(kg, (d, d), std) for _ in range(3))
        acc["wqkv"].append(jnp.concatenate([wq * qs, wk, wv], axis=1))
        acc["bqkv"].append(jnp.zeros((1, 3 * d), jnp.float32))
        acc["wo"].append(_randn(kg, (d, d), std))
        acc["bo"].append(jnp.zeros((1, d), jnp.float32))
        acc["ln1_g"].append(jnp.ones((1, d), jnp.float32))
        acc["ln1_b"].append(jnp.zeros((1, d), jnp.float32))
        acc["fc1_w"].append(_randn(kg, (d, ffn), std))
        acc["fc1_b"].append(jnp.zeros((1, ffn), jnp.float32))
        acc["fc2_w"].append(_randn(kg, (ffn, d), std))
        acc["fc2_b"].append(jnp.zeros((1, d), jnp.float32))
        acc["ln2_g"].append(jnp.ones((1, d), jnp.float32))
        acc["ln2_b"].append(jnp.zeros((1, d), jnp.float32))
    p = {k: jnp.stack(v) for k, v in acc.items()}
    p["ln_emb_g"] = jnp.ones((1, d), jnp.float32)
    p["ln_emb_b"] = jnp.zeros((1, d), jnp.float32)
    return p


def _init_decoder_stack(kg, n_layers, d, ffn, n_heads, std):
    hd = d // n_heads
    qs = 1.0 / math.sqrt(hd)
    keys = ("wqkv", "bqkv", "wo", "bo", "ln1_g", "ln1_b",
            "wcq", "bcq", "wckv", "bckv", "wco", "bco", "ln2_g", "ln2_b",
            "fc1_w", "fc1_b", "fc2_w", "fc2_b", "ln3_g", "ln3_b")
    acc = {k: [] for k in keys}
    for _ in range(n_layers):
        wq, wk, wv = (_randn(kg, (d, d), std) for _ in range(3))
        acc["wqkv"].append(jnp.concatenate([wq * qs, wk, wv], axis=1))
        acc["bqkv"].append(jnp.zeros((1, 3 * d), jnp.float32))
        acc["wo"].append(_randn(kg, (d, d), std))
        acc["bo"].append(jnp.zeros((1, d), jnp.float32))
        acc["ln1_g"].append(jnp.ones((1, d), jnp.float32))
        acc["ln1_b"].append(jnp.zeros((1, d), jnp.float32))
        acc["wcq"].append(_randn(kg, (d, d), std) * qs)
        acc["bcq"].append(jnp.zeros((1, d), jnp.float32))
        wck, wcv = (_randn(kg, (d, d), std) for _ in range(2))
        acc["wckv"].append(jnp.concatenate([wck, wcv], axis=1))
        acc["bckv"].append(jnp.zeros((1, 2 * d), jnp.float32))
        acc["wco"].append(_randn(kg, (d, d), std))
        acc["bco"].append(jnp.zeros((1, d), jnp.float32))
        acc["ln2_g"].append(jnp.ones((1, d), jnp.float32))
        acc["ln2_b"].append(jnp.zeros((1, d), jnp.float32))
        acc["fc1_w"].append(_randn(kg, (d, ffn), std))
        acc["fc1_b"].append(jnp.zeros((1, ffn), jnp.float32))
        acc["fc2_w"].append(_randn(kg, (ffn, d), std))
        acc["fc2_b"].append(jnp.zeros((1, d), jnp.float32))
        acc["ln3_g"].append(jnp.ones((1, d), jnp.float32))
        acc["ln3_b"].append(jnp.zeros((1, d), jnp.float32))
    p = {k: jnp.stack(v) for k, v in acc.items()}
    p["ln_emb_g"] = jnp.ones((1, d), jnp.float32)
    p["ln_emb_b"] = jnp.zeros((1, d), jnp.float32)
    return p


def init_params(key):
    kg = _Keys(key)
    return {
        "rand_emb": _init_embeds(kg, SRC_VOCAB, D_MODEL, MAX_POS, PAD_IDX, INIT_STD),
        "rand_enc": _init_encoder_stack(kg, RAND_LAYERS, D_MODEL, RAND_FFN_DIM, N_HEADS, INIT_STD),
        # self.inputs_embeds: embed_tokens was deleted -> only positional table kept
        "mid_emb": {"pos": _randn(kg, (MAX_POS, D_MODEL), INIT_STD)},
        "enc": _init_encoder_stack(kg, ENC_LAYERS, D_MODEL, FFN_DIM, N_HEADS, INIT_STD),
        "dec_emb": _init_embeds(kg, TGT_VOCAB, D_MODEL, MAX_POS, PAD_IDX, INIT_STD),
        "dec": _init_decoder_stack(kg, DEC_LAYERS, D_MODEL, FFN_DIM, N_HEADS, INIT_STD),
        "out": {"w": _randn(kg, (D_MODEL, TGT_VOCAB), INIT_STD),
                "b": jnp.zeros((1, TGT_VOCAB), jnp.float32)},
    }


# ================================ main ================================
if __name__ == "__main__":
    root = jax.random.PRNGKey(0)
    k_param, k_src, k_tgt = jax.random.split(root, 3)

    params = init_params(k_param)

    input_ids = jax.random.randint(k_src, (B, S_SRC), 0, SRC_VOCAB, dtype=jnp.int32)
    decoder_input_ids = jax.random.randint(k_tgt, (B, S_TGT), 0, TGT_VOCAB, dtype=jnp.int32)
    # simple padding masks: last token of batch element 1 is padding
    attention_mask = jnp.ones((B, S_SRC), jnp.int32).at[1, -1].set(0)
    decoder_attention_mask = jnp.ones((B, S_TGT), jnp.int32).at[1, -1].set(0)

    fwd = jax.jit(forward)
    logits = fwd(params, input_ids, attention_mask, decoder_input_ids, decoder_attention_mask)
    logits = jax.block_until_ready(logits)

    assert logits.shape == (B, S_TGT, TGT_VOCAB), logits.shape
    assert bool(jnp.all(jnp.isfinite(logits)))
    print("KERNEL_OK")
</pallas_src>

<mosaic_0001>
module attributes {stable_mosaic.version = 11 : i64} {
  func.func @_model_kernel(%arg0: memref<2x8xi32, #tpu.memory_space<vmem>>, %arg1: memref<2x8xi32, #tpu.memory_space<vmem>>, %arg2: memref<2x8xi32, #tpu.memory_space<vmem>>, %arg3: memref<2x8xi32, #tpu.memory_space<vmem>>, %arg4: memref<128x32xf32, #tpu.memory_space<vmem>>, %arg5: memref<16x32xf32, #tpu.memory_space<vmem>>, %arg6: memref<1x32xf32, #tpu.memory_space<vmem>>, %arg7: memref<1x32xf32, #tpu.memory_space<vmem>>, %arg8: memref<2x32x96xf32, #tpu.memory_space<vmem>>, %arg9: memref<2x1x96xf32, #tpu.memory_space<vmem>>, %arg10: memref<2x32x32xf32, #tpu.memory_space<vmem>>, %arg11: memref<2x1x32xf32, #tpu.memory_space<vmem>>, %arg12: memref<2x1x32xf32, #tpu.memory_space<vmem>>, %arg13: memref<2x1x32xf32, #tpu.memory_space<vmem>>, %arg14: memref<2x32x64xf32, #tpu.memory_space<vmem>>, %arg15: memref<2x1x64xf32, #tpu.memory_space<vmem>>, %arg16: memref<2x64x32xf32, #tpu.memory_space<vmem>>, %arg17: memref<2x1x32xf32, #tpu.memory_space<vmem>>, %arg18: memref<2x1x32xf32, #tpu.memory_space<vmem>>, %arg19: memref<2x1x32xf32, #tpu.memory_space<vmem>>, %arg20: memref<16x32xf32, #tpu.memory_space<vmem>>, %arg21: memref<1x32xf32, #tpu.memory_space<vmem>>, %arg22: memref<1x32xf32, #tpu.memory_space<vmem>>, %arg23: memref<2x32x96xf32, #tpu.memory_space<vmem>>, %arg24: memref<2x1x96xf32, #tpu.memory_space<vmem>>, %arg25: memref<2x32x32xf32, #tpu.memory_space<vmem>>, %arg26: memref<2x1x32xf32, #tpu.memory_space<vmem>>, %arg27: memref<2x1x32xf32, #tpu.memory_space<vmem>>, %arg28: memref<2x1x32xf32, #tpu.memory_space<vmem>>, %arg29: memref<2x32x64xf32, #tpu.memory_space<vmem>>, %arg30: memref<2x1x64xf32, #tpu.memory_space<vmem>>, %arg31: memref<2x64x32xf32, #tpu.memory_space<vmem>>, %arg32: memref<2x1x32xf32, #tpu.memory_space<vmem>>, %arg33: memref<2x1x32xf32, #tpu.memory_space<vmem>>, %arg34: memref<2x1x32xf32, #tpu.memory_space<vmem>>, %arg35: memref<128x32xf32, #tpu.memory_space<vmem>>, %arg36: memref<16x32xf32, #tpu.memory_space<vmem>>, %arg37: memref<1x32xf32, #tpu.memory_space<vmem>>, %arg38: memref<1x32xf32, #tpu.memory_space<vmem>>, %arg39: memref<2x32x96xf32, #tpu.memory_space<vmem>>, %arg40: memref<2x1x96xf32, #tpu.memory_space<vmem>>, %arg41: memref<2x32x32xf32, #tpu.memory_space<vmem>>, %arg42: memref<2x1x32xf32, #tpu.memory_space<vmem>>, %arg43: memref<2x1x32xf32, #tpu.memory_space<vmem>>, %arg44: memref<2x1x32xf32, #tpu.memory_space<vmem>>, %arg45: memref<2x32x32xf32, #tpu.memory_space<vmem>>, %arg46: memref<2x1x32xf32, #tpu.memory_space<vmem>>, %arg47: memref<2x32x64xf32, #tpu.memory_space<vmem>>, %arg48: memref<2x1x64xf32, #tpu.memory_space<vmem>>, %arg49: memref<2x32x32xf32, #tpu.memory_space<vmem>>, %arg50: memref<2x1x32xf32, #tpu.memory_space<vmem>>, %arg51: memref<2x1x32xf32, #tpu.memory_space<vmem>>, %arg52: memref<2x1x32xf32, #tpu.memory_space<vmem>>, %arg53: memref<2x32x64xf32, #tpu.memory_space<vmem>>, %arg54: memref<2x1x64xf32, #tpu.memory_space<vmem>>, %arg55: memref<2x64x32xf32, #tpu.memory_space<vmem>>, %arg56: memref<2x1x32xf32, #tpu.memory_space<vmem>>, %arg57: memref<2x1x32xf32, #tpu.memory_space<vmem>>, %arg58: memref<2x1x32xf32, #tpu.memory_space<vmem>>, %arg59: memref<32x128xf32, #tpu.memory_space<vmem>>, %arg60: memref<1x128xf32, #tpu.memory_space<vmem>>, %arg61: memref<2x8x128xf32, #tpu.memory_space<vmem>>) attributes {dimension_semantics = [], scalar_prefetch = 0 : i64, scratch_operands = 0 : i64, tpu.core_type = #tpu.core_type<tc>} {
    %c0 = arith.constant 0 : index
    %c0_0 = arith.constant 0 : index
    %0 = vector.load %arg1[%c0, %c0_0] : memref<2x8xi32, #tpu.memory_space<vmem>>, vector<2x8xi32>
    %1 = arith.sitofp %0 : vector<2x8xi32> to vector<2x8xf32>
    %cst = arith.constant 1.000000e+00 : f32
    %2 = vector.broadcast %cst : f32 to vector<2x8xf32>
    %3 = arith.subf %2, %1 : vector<2x8xf32>
    %cst_1 = arith.constant -1.000000e+09 : f32
    %4 = vector.broadcast %cst_1 : f32 to vector<2x8xf32>
    %5 = arith.mulf %3, %4 : vector<2x8xf32>
    %6 = vector.shape_cast %5 : vector<2x8xf32> to vector<2x1x8xf32>
    %c0_2 = arith.constant 0 : index
    %c0_3 = arith.constant 0 : index
    %7 = vector.load %arg3[%c0_2, %c0_3] : memref<2x8xi32, #tpu.memory_space<vmem>>, vector<2x8xi32>
    %8 = arith.sitofp %7 : vector<2x8xi32> to vector<2x8xf32>
    %cst_4 = arith.constant 1.000000e+00 : f32
    %9 = vector.broadcast %cst_4 : f32 to vector<2x8xf32>
    %10 = arith.subf %9, %8 : vector<2x8xf32>
    %cst_5 = arith.constant -1.000000e+09 : f32
    %11 = vector.broadcast %cst_5 : f32 to vector<2x8xf32>
    %12 = arith.mulf %10, %11 : vector<2x8xf32>
    %13 = tpu.iota {dimensions = array<i32: 0>} : vector<8x8xi32>
    %14 = tpu.iota {dimensions = array<i32: 1>} : vector<8x8xi32>
    %15 = arith.cmpi sle, %14, %13 : vector<8x8xi32>
    %cst_6 = arith.constant 0.000000e+00 : f32
    %cst_7 = arith.constant -1.000000e+09 : f32
    %16 = vector.broadcast %cst_6 : f32 to vector<8x8xf32>
    %17 = vector.broadcast %cst_7 : f32 to vector<8x8xf32>
    %18 = arith.select %15, %16, %17 : vector<8x8xi1>, vector<8x8xf32>
    %19 = vector.shape_cast %12 : vector<2x8xf32> to vector<2x1x8xf32>
    %20 = vector.shape_cast %18 : vector<8x8xf32> to vector<1x8x8xf32>
    %21 = vector.broadcast %19 : vector<2x1x8xf32> to vector<2x8x8xf32>
    %22 = vector.broadcast %20 : vector<1x8x8xf32> to vector<2x8x8xf32>
    %23 = arith.addf %21, %22 : vector<2x8x8xf32>
    %c0_8 = arith.constant 0 : index
    %c0_9 = arith.constant 0 : index
    %24 = vector.load %arg0[%c0_8, %c0_9] : memref<2x8xi32, #tpu.memory_space<vmem>>, vector<2x8xi32>
    %c0_10 = arith.constant 0 : index
    %c0_11 = arith.constant 0 : index
    %25 = vector.load %arg4[%c0_10, %c0_11] : memref<128x32xf32, #tpu.memory_space<vmem>>, vector<128x32xf32>
    %c0_12 = arith.constant 0 : index
    %c0_13 = arith.constant 0 : index
    %26 = vector.load %arg5[%c0_12, %c0_13] : memref<16x32xf32, #tpu.memory_space<vmem>>, vector<16x32xf32>
    %27 = tpu.iota {dimensions = array<i32: 2>} : vector<2x8x128xi32>
    %28 = vector.shape_cast %24 : vector<2x8xi32> to vector<2x8x1xi32>
    %29 = vector.broadcast %28 : vector<2x8x1xi32> to vector<2x8x128xi32>
    %30 = arith.cmpi eq, %27, %29 : vector<2x8x128xi32>
    %31 = arith.extui %30 : vector<2x8x128xi1> to vector<2x8x128xi32>
    %32 = arith.sitofp %31 : vector<2x8x128xi32> to vector<2x8x128xf32>
    %33 = vector.shape_cast %32 : vector<2x8x128xf32> to vector<16x128xf32>
    %cst_14 = arith.constant dense<0.000000e+00> : vector<16x32xf32>
    %34 = tpu.matmul %33, %25, %cst_14 {dimension_numbers = #tpu.dot_dimension_numbers<[1], [0], [0], [1], [0, 0, 1, 1], [], []>} : vector<16x128xf32>, vector<128x32xf32>, vector<16x32xf32> -> vector<16x32xf32>
    %35 = vector.extract_strided_slice %26 {offsets = [0, 0], sizes = [8, 32], strides = [1, 1]} : vector<16x32xf32> to vector<8x32xf32>
    %36 = vector.shape_cast %35 : vector<8x32xf32> to vector<1x8x32xf32>
    %37 = vector.shape_cast %36 : vector<1x8x32xf32> to vector<1x8x32xf32>
    %38 = vector.broadcast %37 : vector<1x8x32xf32> to vector<2x8x32xf32>
    %39 = vector.shape_cast %38 : vector<2x8x32xf32> to vector<16x32xf32>
    %40 = arith.addf %34, %39 : vector<16x32xf32>
    %c0_15 = arith.constant 0 : index
    %c0_16 = arith.constant 0 : index
    %41 = vector.load %arg6[%c0_15, %c0_16] : memref<1x32xf32, #tpu.memory_space<vmem>>, vector<1x32xf32>
    %c0_17 = arith.constant 0 : index
    %c0_18 = arith.constant 0 : index
    %42 = vector.load %arg7[%c0_17, %c0_18] : memref<1x32xf32, #tpu.memory_space<vmem>>, vector<1x32xf32>
    %cst_19 = arith.constant dense<0.000000e+00> : vector<16xf32>
    %43 = vector.multi_reduction <add>, %40, %cst_19 [1] : vector<16x32xf32> to vector<16xf32>
    %44 = vector.shape_cast %43 : vector<16xf32> to vector<16x1xf32>
    %cst_20 = arith.constant 3.200000e+01 : f32
    %45 = vector.broadcast %cst_20 : f32 to vector<16x1xf32>
    %46 = arith.divf %44, %45 : vector<16x1xf32>
    %47 = vector.broadcast %46 : vector<16x1xf32> to vector<16x32xf32>
    %48 = arith.subf %40, %47 : vector<16x32xf32>
    %49 = arith.mulf %48, %48 : vector<16x32xf32>
    %cst_21 = arith.constant dense<0.000000e+00> : vector<16xf32>
    %50 = vector.multi_reduction <add>, %49, %cst_21 [1] : vector<16x32xf32> to vector<16xf32>
    %51 = vector.shape_cast %50 : vector<16xf32> to vector<16x1xf32>
    %cst_22 = arith.constant 3.200000e+01 : f32
    %52 = vector.broadcast %cst_22 : f32 to vector<16x1xf32>
    %53 = arith.divf %51, %52 : vector<16x1xf32>
    %cst_23 = arith.constant 9.99999974E-6 : f32
    %54 = vector.broadcast %cst_23 : f32 to vector<16x1xf32>
    %55 = arith.addf %53, %54 : vector<16x1xf32>
    %56 = math.rsqrt %55 : vector<16x1xf32>
    %57 = vector.broadcast %56 : vector<16x1xf32> to vector<16x32xf32>
    %58 = arith.mulf %48, %57 : vector<16x32xf32>
    %59 = vector.broadcast %41 : vector<1x32xf32> to vector<16x32xf32>
    %60 = arith.mulf %58, %59 : vector<16x32xf32>
    %61 = vector.broadcast %42 : vector<1x32xf32> to vector<16x32xf32>
    %62 = arith.addf %60, %61 : vector<16x32xf32>
    %c0_24 = arith.constant 0 : index
    %c0_25 = arith.constant 0 : index
    %c0_26 = arith.constant 0 : index
    %63 = vector.load %arg8[%c0_24, %c0_25, %c0_26] : memref<2x32x96xf32, #tpu.memory_space<vmem>>, vector<1x32x96xf32>
    %64 = vector.shape_cast %63 : vector<1x32x96xf32> to vector<32x96xf32>
    %cst_27 = arith.constant dense<0.000000e+00> : vector<16x96xf32>
    %65 = tpu.matmul %62, %64, %cst_27 {dimension_numbers = #tpu.dot_dimension_numbers<[1], [0], [0], [1], [0, 0, 1, 1], [], []>} : vector<16x32xf32>, vector<32x96xf32>, vector<16x96xf32> -> vector<16x96xf32>
    %c0_28 = arith.constant 0 : index
    %c0_29 = arith.constant 0 : index
    %c0_30 = arith.constant 0 : index
    %66 = vector.load %arg9[%c0_28, %c0_29, %c0_30] : memref<2x1x96xf32, #tpu.memory_space<vmem>>, vector<1x1x96xf32>
    %67 = vector.shape_cast %66 : vector<1x1x96xf32> to vector<1x96xf32>
    %68 = vector.broadcast %67 : vector<1x96xf32> to vector<16x96xf32>
    %69 = arith.addf %65, %68 : vector<16x96xf32>
    %70 = vector.extract_strided_slice %69 {offsets = [0, 0], sizes = [16, 32], strides = [1, 1]} : vector<16x96xf32> to vector<16x32xf32>
    %71 = vector.extract_strided_slice %69 {offsets = [0, 32], sizes = [16, 32], strides = [1, 1]} : vector<16x96xf32> to vector<16x32xf32>
    %72 = vector.extract_strided_slice %69 {offsets = [0, 64], sizes = [16, 32], strides = [1, 1]} : vector<16x96xf32> to vector<16x32xf32>
    %73 = vector.extract_strided_slice %70 {offsets = [0, 0], sizes = [16, 8], strides = [1, 1]} : vector<16x32xf32> to vector<16x8xf32>
    %74 = vector.shape_cast %73 : vector<16x8xf32> to vector<2x8x8xf32>
    %75 = vector.extract_strided_slice %71 {offsets = [0, 0], sizes = [16, 8], strides = [1, 1]} : vector<16x32xf32> to vector<16x8xf32>
    %76 = vector.shape_cast %75 : vector<16x8xf32> to vector<2x8x8xf32>
    %77 = vector.extract_strided_slice %72 {offsets = [0, 0], sizes = [16, 8], strides = [1, 1]} : vector<16x32xf32> to vector<16x8xf32>
    %78 = vector.shape_cast %77 : vector<16x8xf32> to vector<2x8x8xf32>
    "tpu.trace_start"() <{level = 10 : i32, message = "bqd,bkd->bqk"}> : () -> ()
    %cst_31 = arith.constant dense<0.000000e+00> : vector<2x8x8xf32>
    %79 = tpu.matmul %74, %76, %cst_31 {dimension_numbers = #tpu.dot_dimension_numbers<[2], [2], [1], [1], [0, 0, 0, 1, 1, 1], [0], [0]>} : vector<2x8x8xf32>, vector<2x8x8xf32>, vector<2x8x8xf32> -> vector<2x8x8xf32>
    "tpu.trace_stop"() : () -> ()
    %80 = vector.broadcast %6 : vector<2x1x8xf32> to vector<2x8x8xf32>
    %81 = arith.addf %79, %80 : vector<2x8x8xf32>
    %cst_32 = arith.constant dense<0xFF800000> : vector<2x8xf32>
    %82 = vector.multi_reduction <maximumf>, %81, %cst_32 [2] : vector<2x8x8xf32> to vector<2x8xf32>
    %83 = vector.shape_cast %82 : vector<2x8xf32> to vector<2x8x1xf32>
    %84 = vector.broadcast %83 : vector<2x8x1xf32> to vector<2x8x8xf32>
    %85 = arith.subf %81, %84 : vector<2x8x8xf32>
    %86 = math.exp %85 : vector<2x8x8xf32>
    %cst_33 = arith.constant dense<0.000000e+00> : vector<2x8xf32>
    %87 = vector.multi_reduction <add>, %86, %cst_33 [2] : vector<2x8x8xf32> to vector<2x8xf32>
    %88 = vector.shape_cast %87 : vector<2x8xf32> to vector<2x8x1xf32>
    %89 = tpu.reciprocal %88 {approx = true} : vector<2x8x1xf32> -> vector<2x8x1xf32>
    %90 = vector.broadcast %89 : vector<2x8x1xf32> to vector<2x8x8xf32>
    %91 = arith.mulf %86, %90 : vector<2x8x8xf32>
    "tpu.trace_start"() <{level = 10 : i32, message = "bqk,bkd->bqd"}> : () -> ()
    %cst_34 = arith.constant dense<0.000000e+00> : vector<2x8x8xf32>
    %92 = tpu.matmul %91, %78, %cst_34 {dimension_numbers = #tpu.dot_dimension_numbers<[2], [1], [1], [2], [0, 0, 0, 1, 1, 2], [0], [0]>} : vector<2x8x8xf32>, vector<2x8x8xf32>, vector<2x8x8xf32> -> vector<2x8x8xf32>
    "tpu.trace_stop"() : () -> ()
    %93 = vector.shape_cast %92 : vector<2x8x8xf32> to vector<16x8xf32>
    %94 = vector.extract_strided_slice %70 {offsets = [0, 8], sizes = [16, 8], strides = [1, 1]} : vector<16x32xf32> to vector<16x8xf32>
    %95 = vector.shape_cast %94 : vector<16x8xf32> to vector<2x8x8xf32>
    %96 = vector.extract_strided_slice %71 {offsets = [0, 8], sizes = [16, 8], strides = [1, 1]} : vector<16x32xf32> to vector<16x8xf32>
    %97 = vector.shape_cast %96 : vector<16x8xf32> to vector<2x8x8xf32>
    %98 = vector.extract_strided_slice %72 {offsets = [0, 8], sizes = [16, 8], strides = [1, 1]} : vector<16x32xf32> to vector<16x8xf32>
    %99 = vector.shape_cast %98 : vector<16x8xf32> to vector<2x8x8xf32>
    "tpu.trace_start"() <{level = 10 : i32, message = "bqd,bkd->bqk"}> : () -> ()
    %cst_35 = arith.constant dense<0.000000e+00> : vector<2x8x8xf32>
    %100 = tpu.matmul %95, %97, %cst_35 {dimension_numbers = #tpu.dot_dimension_numbers<[2], [2], [1], [1], [0, 0, 0, 1, 1, 1], [0], [0]>} : vector<2x8x8xf32>, vector<2x8x8xf32>, vector<2x8x8xf32> -> vector<2x8x8xf32>
    "tpu.trace_stop"() : () -> ()
    %101 = vector.broadcast %6 : vector<2x1x8xf32> to vector<2x8x8xf32>
    %102 = arith.addf %100, %101 : vector<2x8x8xf32>
    %cst_36 = arith.constant dense<0xFF800000> : vector<2x8xf32>
    %103 = vector.multi_reduction <maximumf>, %102, %cst_36 [2] : vector<2x8x8xf32> to vector<2x8xf32>
    %104 = vector.shape_cast %103 : vector<2x8xf32> to vector<2x8x1xf32>
    %105 = vector.broadcast %104 : vector<2x8x1xf32> to vector<2x8x8xf32>
    %106 = arith.subf %102, %105 : vector<2x8x8xf32>
    %107 = math.exp %106 : vector<2x8x8xf32>
    %cst_37 = arith.constant dense<0.000000e+00> : vector<2x8xf32>
    %108 = vector.multi_reduction <add>, %107, %cst_37 [2] : vector<2x8x8xf32> to vector<2x8xf32>
    %109 = vector.shape_cast %108 : vector<2x8xf32> to vector<2x8x1xf32>
    %110 = tpu.reciprocal %109 {approx = true} : vector<2x8x1xf32> -> vector<2x8x1xf32>
    %111 = vector.broadcast %110 : vector<2x8x1xf32> to vector<2x8x8xf32>
    %112 = arith.mulf %107, %111 : vector<2x8x8xf32>
    "tpu.trace_start"() <{level = 10 : i32, message = "bqk,bkd->bqd"}> : () -> ()
    %cst_38 = arith.constant dense<0.000000e+00> : vector<2x8x8xf32>
    %113 = tpu.matmul %112, %99, %cst_38 {dimension_numbers = #tpu.dot_dimension_numbers<[2], [1], [1], [2], [0, 0, 0, 1, 1, 2], [0], [0]>} : vector<2x8x8xf32>, vector<2x8x8xf32>, vector<2x8x8xf32> -> vector<2x8x8xf32>
    "tpu.trace_stop"() : () -> ()
    %114 = vector.shape_cast %113 : vector<2x8x8xf32> to vector<16x8xf32>
    %115 = vector.extract_strided_slice %70 {offsets = [0, 16], sizes = [16, 8], strides = [1, 1]} : vector<16x32xf32> to vector<16x8xf32>
    %116 = vector.shape_cast %115 : vector<16x8xf32> to vector<2x8x8xf32>
    %117 = vector.extract_strided_slice %71 {offsets = [0, 16], sizes = [16, 8], strides = [1, 1]} : vector<16x32xf32> to vector<16x8xf32>
    %118 = vector.shape_cast %117 : vector<16x8xf32> to vector<2x8x8xf32>
    %119 = vector.extract_strided_slice %72 {offsets = [0, 16], sizes = [16, 8], strides = [1, 1]} : vector<16x32xf32> to vector<16x8xf32>
    %120 = vector.shape_cast %119 : vector<16x8xf32> to vector<2x8x8xf32>
    "tpu.trace_start"() <{level = 10 : i32, message = "bqd,bkd->bqk"}> : () -> ()
    %cst_39 = arith.constant dense<0.000000e+00> : vector<2x8x8xf32>
    %121 = tpu.matmul %116, %118, %cst_39 {dimension_numbers = #tpu.dot_dimension_numbers<[2], [2], [1], [1], [0, 0, 0, 1, 1, 1], [0], [0]>} : vector<2x8x8xf32>, vector<2x8x8xf32>, vector<2x8x8xf32> -> vector<2x8x8xf32>
    "tpu.trace_stop"() : () -> ()
    %122 = vector.broadcast %6 : vector<2x1x8xf32> to vector<2x8x8xf32>
    %123 = arith.addf %121, %122 : vector<2x8x8xf32>
    %cst_40 = arith.constant dense<0xFF800000> : vector<2x8xf32>
    %124 = vector.multi_reduction <maximumf>, %123, %cst_40 [2] : vector<2x8x8xf32> to vector<2x8xf32>
    %125 = vector.shape_cast %124 : vector<2x8xf32> to vector<2x8x1xf32>
    %126 = vector.broadcast %125 : vector<2x8x1xf32> to vector<2x8x8xf32>
    %127 = arith.subf %123, %126 : vector<2x8x8xf32>
    %128 = math.exp %127 : vector<2x8x8xf32>
    %cst_41 = arith.constant dense<0.000000e+00> : vector<2x8xf32>
    %129 = vector.multi_reduction <add>, %128, %cst_41 [2] : vector<2x8x8xf32> to vector<2x8xf32>
    %130 = vector.shape_cast %129 : vector<2x8xf32> to vector<2x8x1xf32>
    %131 = tpu.reciprocal %130 {approx = true} : vector<2x8x1xf32> -> vector<2x8x1xf32>
    %132 = vector.broadcast %131 : vector<2x8x1xf32> to vector<2x8x8xf32>
    %133 = arith.mulf %128, %132 : vector<2x8x8xf32>
    "tpu.trace_start"() <{level = 10 : i32, message = "bqk,bkd->bqd"}> : () -> ()
    %cst_42 = arith.constant dense<0.000000e+00> : vector<2x8x8xf32>
    %134 = tpu.matmul %133, %120, %cst_42 {dimension_numbers = #tpu.dot_dimension_numbers<[2], [1], [1], [2], [0, 0, 0, 1, 1, 2], [0], [0]>} : vector<2x8x8xf32>, vector<2x8x8xf32>, vector<2x8x8xf32> -> vector<2x8x8xf32>
    "tpu.trace_stop"() : () -> ()
    %135 = vector.shape_cast %134 : vector<2x8x8xf32> to vector<16x8xf32>
    %136 = vector.extract_strided_slice %70 {offsets = [0, 24], sizes = [16, 8], strides = [1, 1]} : vector<16x32xf32> to vector<16x8xf32>
    %137 = vector.shape_cast %136 : vector<16x8xf32> to vector<2x8x8xf32>
    %138 = vector.extract_strided_slice %71 {offsets = [0, 24], sizes = [16, 8], strides = [1, 1]} : vector<16x32xf32> to vector<16x8xf32>
    %139 = vector.shape_cast %138 : vector<16x8xf32> to vector<2x8x8xf32>
    %140 = vector.extract_strided_slice %72 {offsets = [0, 24], sizes = [16, 8], strides = [1, 1]} : vector<16x32xf32> to vector<16x8xf32>
    %141 = vector.shape_cast %140 : vector<16x8xf32> to vector<2x8x8xf32>
    "tpu.trace_start"() <{level = 10 : i32, message = "bqd,bkd->bqk"}> : () -> ()
    %cst_43 = arith.constant dense<0.000000e+00> : vector<2x8x8xf32>
    %142 = tpu.matmul %137, %139, %cst_43 {dimension_numbers = #tpu.dot_dimension_numbers<[2], [2], [1], [1], [0, 0, 0, 1, 1, 1], [0], [0]>} : vector<2x8x8xf32>, vector<2x8x8xf32>, vector<2x8x8xf32> -> vector<2x8x8xf32>
    "tpu.trace_stop"() : () -> ()
    %143 = vector.broadcast %6 : vector<2x1x8xf32> to vector<2x8x8xf32>
    %144 = arith.addf %142, %143 : vector<2x8x8xf32>
    %cst_44 = arith.constant dense<0xFF800000> : vector<2x8xf32>
    %145 = vector.multi_reduction <maximumf>, %144, %cst_44 [2] : vector<2x8x8xf32> to vector<2x8xf32>
    %146 = vector.shape_cast %145 : vector<2x8xf32> to vector<2x8x1xf32>
    %147 = vector.broadcast %146 : vector<2x8x1xf32> to vector<2x8x8xf32>
    %148 = arith.subf %144, %147 : vector<2x8x8xf32>
    %149 = math.exp %148 : vector<2x8x8xf32>
    %cst_45 = arith.constant dense<0.000000e+00> : vector<2x8xf32>
    %150 = vector.multi_reduction <add>, %149, %cst_45 [2] : vector<2x8x8xf32> to vector<2x8xf32>
    %151 = vector.shape_cast %150 : vector<2x8xf32> to vector<2x8x1xf32>
    %152 = tpu.reciprocal %151 {approx = true} : vector<2x8x1xf32> -> vector<2x8x1xf32>
    %153 = vector.broadcast %152 : vector<2x8x1xf32> to vector<2x8x8xf32>
    %154 = arith.mulf %149, %153 : vector<2x8x8xf32>
    "tpu.trace_start"() <{level = 10 : i32, message = "bqk,bkd->bqd"}> : () -> ()
    %cst_46 = arith.constant dense<0.000000e+00> : vector<2x8x8xf32>
    %155 = tpu.matmul %154, %141, %cst_46 {dimension_numbers = #tpu.dot_dimension_numbers<[2], [1], [1], [2], [0, 0, 0, 1, 1, 2], [0], [0]>} : vector<2x8x8xf32>, vector<2x8x8xf32>, vector<2x8x8xf32> -> vector<2x8x8xf32>
    "tpu.trace_stop"() : () -> ()
    %156 = vector.shape_cast %155 : vector<2x8x8xf32> to vector<16x8xf32>
    %157 = tpu.concatenate %93, %114, %135, %156 in 1 : vector<16x8xf32>, vector<16x8xf32>, vector<16x8xf32>, vector<16x8xf32> -> vector<16x32xf32>
    %c0_47 = arith.constant 0 : index
    %c0_48 = arith.constant 0 : index
    %c0_49 = arith.constant 0 : index
    %158 = vector.load %arg10[%c0_47, %c0_48, %c0_49] : memref<2x32x32xf32, #tpu.memory_space<vmem>>, vector<1x32x32xf32>
    %159 = vector.shape_cast %158 : vector<1x32x32xf32> to vector<32x32xf32>
    %cst_50 = arith.constant dense<0.000000e+00> : vector<16x32xf32>
    %160 = tpu.matmul %157, %159, %cst_50 {dimension_numbers = #tpu.dot_dimension_numbers<[1], [0], [0], [1], [0, 0, 1, 1], [], []>} : vector<16x32xf32>, vector<32x32xf32>, vector<16x32xf32> -> vector<16x32xf32>
    %c0_51 = arith.constant 0 : index
    %c0_52 = arith.constant 0 : index
    %c0_53 = arith.constant 0 : index
    %161 = vector.load %arg11[%c0_51, %c0_52, %c0_53] : memref<2x1x32xf32, #tpu.memory_space<vmem>>, vector<1x1x32xf32>
    %162 = vector.shape_cast %161 : vector<1x1x32xf32> to vector<1x32xf32>
    %163 = vector.broadcast %162 : vector<1x32xf32> to vector<16x32xf32>
    %164 = arith.addf %160, %163 : vector<16x32xf32>
    %165 = arith.addf %62, %164 : vector<16x32xf32>
    %c0_54 = arith.constant 0 : index
    %c0_55 = arith.constant 0 : index
    %c0_56 = arith.constant 0 : index
    %166 = vector.load %arg12[%c0_54, %c0_55, %c0_56] : memref<2x1x32xf32, #tpu.memory_space<vmem>>, vector<1x1x32xf32>
    %167 = vector.shape_cast %166 : vector<1x1x32xf32> to vector<1x32xf32>
    %c0_57 = arith.constant 0 : index
    %c0_58 = arith.constant 0 : index
    %c0_59 = arith.constant 0 : index
    %168 = vector.load %arg13[%c0_57, %c0_58, %c0_59] : memref<2x1x32xf32, #tpu.memory_space<vmem>>, vector<1x1x32xf32>
    %169 = vector.shape_cast %168 : vector<1x1x32xf32> to vector<1x32xf32>
    %cst_60 = arith.constant dense<0.000000e+00> : vector<16xf32>
    %170 = vector.multi_reduction <add>, %165, %cst_60 [1] : vector<16x32xf32> to vector<16xf32>
    %171 = vector.shape_cast %170 : vector<16xf32> to vector<16x1xf32>
    %cst_61 = arith.constant 3.200000e+01 : f32
    %172 = vector.broadcast %cst_61 : f32 to vector<16x1xf32>
    %173 = arith.divf %171, %172 : vector<16x1xf32>
    %174 = vector.broadcast %173 : vector<16x1xf32> to vector<16x32xf32>
    %175 = arith.subf %165, %174 : vector<16x32xf32>
    %176 = arith.mulf %175, %175 : vector<16x32xf32>
    %cst_62 = arith.constant dense<0.000000e+00> : vector<16xf32>
    %177 = vector.multi_reduction <add>, %176, %cst_62 [1] : vector<16x32xf32> to vector<16xf32>
    %178 = vector.shape_cast %177 : vector<16xf32> to vector<16x1xf32>
    %cst_63 = arith.constant 3.200000e+01 : f32
    %179 = vector.broadcast %cst_63 : f32 to vector<16x1xf32>
    %180 = arith.divf %178, %179 : vector<16x1xf32>
    %cst_64 = arith.constant 9.99999974E-6 : f32
    %181 = vector.broadcast %cst_64 : f32 to vector<16x1xf32>
    %182 = arith.addf %180, %181 : vector<16x1xf32>
    %183 = math.rsqrt %182 : vector<16x1xf32>
    %184 = vector.broadcast %183 : vector<16x1xf32> to vector<16x32xf32>
    %185 = arith.mulf %175, %184 : vector<16x32xf32>
    %186 = vector.broadcast %167 : vector<1x32xf32> to vector<16x32xf32>
    %187 = arith.mulf %185, %186 : vector<16x32xf32>
    %188 = vector.broadcast %169 : vector<1x32xf32> to vector<16x32xf32>
    %189 = arith.addf %187, %188 : vector<16x32xf32>
    %c0_65 = arith.constant 0 : index
    %c0_66 = arith.constant 0 : index
    %c0_67 = arith.constant 0 : index
    %190 = vector.load %arg14[%c0_65, %c0_66, %c0_67] : memref<2x32x64xf32, #tpu.memory_space<vmem>>, vector<1x32x64xf32>
    %191 = vector.shape_cast %190 : vector<1x32x64xf32> to vector<32x64xf32>
    %cst_68 = arith.constant dense<0.000000e+00> : vector<16x64xf32>
    %192 = tpu.matmul %189, %191, %cst_68 {dimension_numbers = #tpu.dot_dimension_numbers<[1], [0], [0], [1], [0, 0, 1, 1], [], []>} : vector<16x32xf32>, vector<32x64xf32>, vector<16x64xf32> -> vector<16x64xf32>
    %c0_69 = arith.constant 0 : index
    %c0_70 = arith.constant 0 : index
    %c0_71 = arith.constant 0 : index
    %193 = vector.load %arg15[%c0_69, %c0_70, %c0_71] : memref<2x1x64xf32, #tpu.memory_space<vmem>>, vector<1x1x64xf32>
    %194 = vector.shape_cast %193 : vector<1x1x64xf32> to vector<1x64xf32>
    %195 = vector.broadcast %194 : vector<1x64xf32> to vector<16x64xf32>
    %196 = arith.addf %192, %195 : vector<16x64xf32>
    %197 = arith.mulf %196, %196 : vector<16x64xf32>
    %198 = arith.mulf %196, %197 : vector<16x64xf32>
    %cst_72 = arith.constant 4.471500e-02 : f32
    %199 = vector.broadcast %cst_72 : f32 to vector<16x64xf32>
    %200 = arith.mulf %199, %198 : vector<16x64xf32>
    %201 = arith.addf %196, %200 : vector<16x64xf32>
    %cst_73 = arith.constant 0.797884583 : f32
    %202 = vector.broadcast %cst_73 : f32 to vector<16x64xf32>
    %203 = arith.mulf %202, %201 : vector<16x64xf32>
    %204 = math.tanh %203 : vector<16x64xf32>
    %cst_74 = arith.constant 1.000000e+00 : f32
    %205 = vector.broadcast %cst_74 : f32 to vector<16x64xf32>
    %206 = arith.addf %205, %204 : vector<16x64xf32>
    %cst_75 = arith.constant 5.000000e-01 : f32
    %207 = vector.broadcast %cst_75 : f32 to vector<16x64xf32>
    %208 = arith.mulf %207, %206 : vector<16x64xf32>
    %209 = arith.mulf %196, %208 : vector<16x64xf32>
    %c0_76 = arith.constant 0 : index
    %c0_77 = arith.constant 0 : index
    %c0_78 = arith.constant 0 : index
    %210 = vector.load %arg16[%c0_76, %c0_77, %c0_78] : memref<2x64x32xf32, #tpu.memory_space<vmem>>, vector<1x64x32xf32>
    %211 = vector.shape_cast %210 : vector<1x64x32xf32> to vector<64x32xf32>
    %cst_79 = arith.constant dense<0.000000e+00> : vector<16x32xf32>
    %212 = tpu.matmul %209, %211, %cst_79 {dimension_numbers = #tpu.dot_dimension_numbers<[1], [0], [0], [1], [0, 0, 1, 1], [], []>} : vector<16x64xf32>, vector<64x32xf32>, vector<16x32xf32> -> vector<16x32xf32>
    %c0_80 = arith.constant 0 : index
    %c0_81 = arith.constant 0 : index
    %c0_82 = arith.constant 0 : index
    %213 = vector.load %arg17[%c0_80, %c0_81, %c0_82] : memref<2x1x32xf32, #tpu.memory_space<vmem>>, vector<1x1x32xf32>
    %214 = vector.shape_cast %213 : vector<1x1x32xf32> to vector<1x32xf32>
    %215 = vector.broadcast %214 : vector<1x32xf32> to vector<16x32xf32>
    %216 = arith.addf %212, %215 : vector<16x32xf32>
    %217 = arith.addf %189, %216 : vector<16x32xf32>
    %c0_83 = arith.constant 0 : index
    %c0_84 = arith.constant 0 : index
    %c0_85 = arith.constant 0 : index
    %218 = vector.load %arg18[%c0_83, %c0_84, %c0_85] : memref<2x1x32xf32, #tpu.memory_space<vmem>>, vector<1x1x32xf32>
    %219 = vector.shape_cast %218 : vector<1x1x32xf32> to vector<1x32xf32>
    %c0_86 = arith.constant 0 : index
    %c0_87 = arith.constant 0 : index
    %c0_88 = arith.constant 0 : index
    %220 = vector.load %arg19[%c0_86, %c0_87, %c0_88] : memref<2x1x32xf32, #tpu.memory_space<vmem>>, vector<1x1x32xf32>
    %221 = vector.shape_cast %220 : vector<1x1x32xf32> to vector<1x32xf32>
    %cst_89 = arith.constant dense<0.000000e+00> : vector<16xf32>
    %222 = vector.multi_reduction <add>, %217, %cst_89 [1] : vector<16x32xf32> to vector<16xf32>
    %223 = vector.shape_cast %222 : vector<16xf32> to vector<16x1xf32>
    %cst_90 = arith.constant 3.200000e+01 : f32
    %224 = vector.broadcast %cst_90 : f32 to vector<16x1xf32>
    %225 = arith.divf %223, %224 : vector<16x1xf32>
    %226 = vector.broadcast %225 : vector<16x1xf32> to vector<16x32xf32>
    %227 = arith.subf %217, %226 : vector<16x32xf32>
    %228 = arith.mulf %227, %227 : vector<16x32xf32>
    %cst_91 = arith.constant dense<0.000000e+00> : vector<16xf32>
    %229 = vector.multi_reduction <add>, %228, %cst_91 [1] : vector<16x32xf32> to vector<16xf32>
    %230 = vector.shape_cast %229 : vector<16xf32> to vector<16x1xf32>
    %cst_92 = arith.constant 3.200000e+01 : f32
    %231 = vector.broadcast %cst_92 : f32 to vector<16x1xf32>
    %232 = arith.divf %230, %231 : vector<16x1xf32>
    %cst_93 = arith.constant 9.99999974E-6 : f32
    %233 = vector.broadcast %cst_93 : f32 to vector<16x1xf32>
    %234 = arith.addf %232, %233 : vector<16x1xf32>
    %235 = math.rsqrt %234 : vector<16x1xf32>
    %236 = vector.broadcast %235 : vector<16x1xf32> to vector<16x32xf32>
    %237 = arith.mulf %227, %236 : vector<16x32xf32>
    %238 = vector.broadcast %219 : vector<1x32xf32> to vector<16x32xf32>
    %239 = arith.mulf %237, %238 : vector<16x32xf32>
    %240 = vector.broadcast %221 : vector<1x32xf32> to vector<16x32xf32>
    %241 = arith.addf %239, %240 : vector<16x32xf32>
    %c1 = arith.constant 1 : index
    %c0_94 = arith.constant 0 : index
    %c0_95 = arith.constant 0 : index
    %242 = vector.load %arg8[%c1, %c0_94, %c0_95] : memref<2x32x96xf32, #tpu.memory_space<vmem>>, vector<1x32x96xf32>
    %243 = vector.shape_cast %242 : vector<1x32x96xf32> to vector<32x96xf32>
    %cst_96 = arith.constant dense<0.000000e+00> : vector<16x96xf32>
    %244 = tpu.matmul %241, %243, %cst_96 {dimension_numbers = #tpu.dot_dimension_numbers<[1], [0], [0], [1], [0, 0, 1, 1], [], []>} : vector<16x32xf32>, vector<32x96xf32>, vector<16x96xf32> -> vector<16x96xf32>
    %c1_97 = arith.constant 1 : index
    %c0_98 = arith.constant 0 : index
    %c0_99 = arith.constant 0 : index
    %245 = vector.load %arg9[%c1_97, %c0_98, %c0_99] : memref<2x1x96xf32, #tpu.memory_space<vmem>>, vector<1x1x96xf32>
    %246 = vector.shape_cast %245 : vector<1x1x96xf32> to vector<1x96xf32>
    %247 = vector.broadcast %246 : vector<1x96xf32> to vector<16x96xf32>
    %248 = arith.addf %244, %247 : vector<16x96xf32>
    %249 = vector.extract_strided_slice %248 {offsets = [0, 0], sizes = [16, 32], strides = [1, 1]} : vector<16x96xf32> to vector<16x32xf32>
    %250 = vector.extract_strided_slice %248 {offsets = [0, 32], sizes = [16, 32], strides = [1, 1]} : vector<16x96xf32> to vector<16x32xf32>
    %251 = vector.extract_strided_slice %248 {offsets = [0, 64], sizes = [16, 32], strides = [1, 1]} : vector<16x96xf32> to vector<16x32xf32>
    %252 = vector.extract_strided_slice %249 {offsets = [0, 0], sizes = [16, 8], strides = [1, 1]} : vector<16x32xf32> to vector<16x8xf32>
    %253 = vector.shape_cast %252 : vector<16x8xf32> to vector<2x8x8xf32>
    %254 = vector.extract_strided_slice %250 {offsets = [0, 0], sizes = [16, 8], strides = [1, 1]} : vector<16x32xf32> to vector<16x8xf32>
    %255 = vector.shape_cast %254 : vector<16x8xf32> to vector<2x8x8xf32>
    %256 = vector.extract_strided_slice %251 {offsets = [0, 0], sizes = [16, 8], strides = [1, 1]} : vector<16x32xf32> to vector<16x8xf32>
    %257 = vector.shape_cast %256 : vector<16x8xf32> to vector<2x8x8xf32>
    "tpu.trace_start"() <{level = 10 : i32, message = "bqd,bkd->bqk"}> : () -> ()
    %cst_100 = arith.constant dense<0.000000e+00> : vector<2x8x8xf32>
    %258 = tpu.matmul %253, %255, %cst_100 {dimension_numbers = #tpu.dot_dimension_numbers<[2], [2], [1], [1], [0, 0, 0, 1, 1, 1], [0], [0]>} : vector<2x8x8xf32>, vector<2x8x8xf32>, vector<2x8x8xf32> -> vector<2x8x8xf32>
    "tpu.trace_stop"() : () -> ()
    %259 = vector.broadcast %6 : vector<2x1x8xf32> to vector<2x8x8xf32>
    %260 = arith.addf %258, %259 : vector<2x8x8xf32>
    %cst_101 = arith.constant dense<0xFF800000> : vector<2x8xf32>
    %261 = vector.multi_reduction <maximumf>, %260, %cst_101 [2] : vector<2x8x8xf32> to vector<2x8xf32>
    %262 = vector.shape_cast %261 : vector<2x8xf32> to vector<2x8x1xf32>
    %263 = vector.broadcast %262 : vector<2x8x1xf32> to vector<2x8x8xf32>
    %264 = arith.subf %260, %263 : vector<2x8x8xf32>
    %265 = math.exp %264 : vector<2x8x8xf32>
    %cst_102 = arith.constant dense<0.000000e+00> : vector<2x8xf32>
    %266 = vector.multi_reduction <add>, %265, %cst_102 [2] : vector<2x8x8xf32> to vector<2x8xf32>
    %267 = vector.shape_cast %266 : vector<2x8xf32> to vector<2x8x1xf32>
    %268 = tpu.reciprocal %267 {approx = true} : vector<2x8x1xf32> -> vector<2x8x1xf32>
    %269 = vector.broadcast %268 : vector<2x8x1xf32> to vector<2x8x8xf32>
    %270 = arith.mulf %265, %269 : vector<2x8x8xf32>
    "tpu.trace_start"() <{level = 10 : i32, message = "bqk,bkd->bqd"}> : () -> ()
    %cst_103 = arith.constant dense<0.000000e+00> : vector<2x8x8xf32>
    %271 = tpu.matmul %270, %257, %cst_103 {dimension_numbers = #tpu.dot_dimension_numbers<[2], [1], [1], [2], [0, 0, 0, 1, 1, 2], [0], [0]>} : vector<2x8x8xf32>, vector<2x8x8xf32>, vector<2x8x8xf32> -> vector<2x8x8xf32>
    "tpu.trace_stop"() : () -> ()
    %272 = vector.shape_cast %271 : vector<2x8x8xf32> to vector<16x8xf32>
    %273 = vector.extract_strided_slice %249 {offsets = [0, 8], sizes = [16, 8], strides = [1, 1]} : vector<16x32xf32> to vector<16x8xf32>
    %274 = vector.shape_cast %273 : vector<16x8xf32> to vector<2x8x8xf32>
    %275 = vector.extract_strided_slice %250 {offsets = [0, 8], sizes = [16, 8], strides = [1, 1]} : vector<16x32xf32> to vector<16x8xf32>
    %276 = vector.shape_cast %275 : vector<16x8xf32> to vector<2x8x8xf32>
    %277 = vector.extract_strided_slice %251 {offsets = [0, 8], sizes = [16, 8], strides = [1, 1]} : vector<16x32xf32> to vector<16x8xf32>
    %278 = vector.shape_cast %277 : vector<16x8xf32> to vector<2x8x8xf32>
    "tpu.trace_start"() <{level = 10 : i32, message = "bqd,bkd->bqk"}> : () -> ()
    %cst_104 = arith.constant dense<0.000000e+00> : vector<2x8x8xf32>
    %279 = tpu.matmul %274, %276, %cst_104 {dimension_numbers = #tpu.dot_dimension_numbers<[2], [2], [1], [1], [0, 0, 0, 1, 1, 1], [0], [0]>} : vector<2x8x8xf32>, vector<2x8x8xf32>, vector<2x8x8xf32> -> vector<2x8x8xf32>
    "tpu.trace_stop"() : () -> ()
    %280 = vector.broadcast %6 : vector<2x1x8xf32> to vector<2x8x8xf32>
    %281 = arith.addf %279, %280 : vector<2x8x8xf32>
    %cst_105 = arith.constant dense<0xFF800000> : vector<2x8xf32>
    %282 = vector.multi_reduction <maximumf>, %281, %cst_105 [2] : vector<2x8x8xf32> to vector<2x8xf32>
    %283 = vector.shape_cast %282 : vector<2x8xf32> to vector<2x8x1xf32>
    %284 = vector.broadcast %283 : vector<2x8x1xf32> to vector<2x8x8xf32>
    %285 = arith.subf %281, %284 : vector<2x8x8xf32>
    %286 = math.exp %285 : vector<2x8x8xf32>
    %cst_106 = arith.constant dense<0.000000e+00> : vector<2x8xf32>
    %287 = vector.multi_reduction <add>, %286, %cst_106 [2] : vector<2x8x8xf32> to vector<2x8xf32>
    %288 = vector.shape_cast %287 : vector<2x8xf32> to vector<2x8x1xf32>
    %289 = tpu.reciprocal %288 {approx = true} : vector<2x8x1xf32> -> vector<2x8x1xf32>
    %290 = vector.broadcast %289 : vector<2x8x1xf32> to vector<2x8x8xf32>
    %291 = arith.mulf %286, %290 : vector<2x8x8xf32>
    "tpu.trace_start"() <{level = 10 : i32, message = "bqk,bkd->bqd"}> : () -> ()
    %cst_107 = arith.constant dense<0.000000e+00> : vector<2x8x8xf32>
    %292 = tpu.matmul %291, %278, %cst_107 {dimension_numbers = #tpu.dot_dimension_numbers<[2], [1], [1], [2], [0, 0, 0, 1, 1, 2], [0], [0]>} : vector<2x8x8xf32>, vector<2x8x8xf32>, vector<2x8x8xf32> -> vector<2x8x8xf32>
    "tpu.trace_stop"() : () -> ()
    %293 = vector.shape_cast %292 : vector<2x8x8xf32> to vector<16x8xf32>
    %294 = vector.extract_strided_slice %249 {offsets = [0, 16], sizes = [16, 8], strides = [1, 1]} : vector<16x32xf32> to vector<16x8xf32>
    %295 = vector.shape_cast %294 : vector<16x8xf32> to vector<2x8x8xf32>
    %296 = vector.extract_strided_slice %250 {offsets = [0, 16], sizes = [16, 8], strides = [1, 1]} : vector<16x32xf32> to vector<16x8xf32>
    %297 = vector.shape_cast %296 : vector<16x8xf32> to vector<2x8x8xf32>
    %298 = vector.extract_strided_slice %251 {offsets = [0, 16], sizes = [16, 8], strides = [1, 1]} : vector<16x32xf32> to vector<16x8xf32>
    %299 = vector.shape_cast %298 : vector<16x8xf32> to vector<2x8x8xf32>
    "tpu.trace_start"() <{level = 10 : i32, message = "bqd,bkd->bqk"}> : () -> ()
    %cst_108 = arith.constant dense<0.000000e+00> : vector<2x8x8xf32>
    %300 = tpu.matmul %295, %297, %cst_108 {dimension_numbers = #tpu.dot_dimension_numbers<[2], [2], [1], [1], [0, 0, 0, 1, 1, 1], [0], [0]>} : vector<2x8x8xf32>, vector<2x8x8xf32>, vector<2x8x8xf32> -> vector<2x8x8xf32>
    "tpu.trace_stop"() : () -> ()
    %301 = vector.broadcast %6 : vector<2x1x8xf32> to vector<2x8x8xf32>
    %302 = arith.addf %300, %301 : vector<2x8x8xf32>
    %cst_109 = arith.constant dense<0xFF800000> : vector<2x8xf32>
    %303 = vector.multi_reduction <maximumf>, %302, %cst_109 [2] : vector<2x8x8xf32> to vector<2x8xf32>
    %304 = vector.shape_cast %303 : vector<2x8xf32> to vector<2x8x1xf32>
    %305 = vector.broadcast %304 : vector<2x8x1xf32> to vector<2x8x8xf32>
    %306 = arith.subf %302, %305 : vector<2x8x8xf32>
    %307 = math.exp %306 : vector<2x8x8xf32>
    %cst_110 = arith.constant dense<0.000000e+00> : vector<2x8xf32>
    %308 = vector.multi_reduction <add>, %307, %cst_110 [2] : vector<2x8x8xf32> to vector<2x8xf32>
    %309 = vector.shape_cast %308 : vector<2x8xf32> to vector<2x8x1xf32>
    %310 = tpu.reciprocal %309 {approx = true} : vector<2x8x1xf32> -> vector<2x8x1xf32>
    %311 = vector.broadcast %310 : vector<2x8x1xf32> to vector<2x8x8xf32>
    %312 = arith.mulf %307, %311 : vector<2x8x8xf32>
    "tpu.trace_start"() <{level = 10 : i32, message = "bqk,bkd->bqd"}> : () -> ()
    %cst_111 = arith.constant dense<0.000000e+00> : vector<2x8x8xf32>
    %313 = tpu.matmul %312, %299, %cst_111 {dimension_numbers = #tpu.dot_dimension_numbers<[2], [1], [1], [2], [0, 0, 0, 1, 1, 2], [0], [0]>} : vector<2x8x8xf32>, vector<2x8x8xf32>, vector<2x8x8xf32> -> vector<2x8x8xf32>
    "tpu.trace_stop"() : () -> ()
    %314 = vector.shape_cast %313 : vector<2x8x8xf32> to vector<16x8xf32>
    %315 = vector.extract_strided_slice %249 {offsets = [0, 24], sizes = [16, 8], strides = [1, 1]} : vector<16x32xf32> to vector<16x8xf32>
    %316 = vector.shape_cast %315 : vector<16x8xf32> to vector<2x8x8xf32>
    %317 = vector.extract_strided_slice %250 {offsets = [0, 24], sizes = [16, 8], strides = [1, 1]} : vector<16x32xf32> to vector<16x8xf32>
    %318 = vector.shape_cast %317 : vector<16x8xf32> to vector<2x8x8xf32>
    %319 = vector.extract_strided_slice %251 {offsets = [0, 24], sizes = [16, 8], strides = [1, 1]} : vector<16x32xf32> to vector<16x8xf32>
    %320 = vector.shape_cast %319 : vector<16x8xf32> to vector<2x8x8xf32>
    "tpu.trace_start"() <{level = 10 : i32, message = "bqd,bkd->bqk"}> : () -> ()
    %cst_112 = arith.constant dense<0.000000e+00> : vector<2x8x8xf32>
    %321 = tpu.matmul %316, %318, %cst_112 {dimension_numbers = #tpu.dot_dimension_numbers<[2], [2], [1], [1], [0, 0, 0, 1, 1, 1], [0], [0]>} : vector<2x8x8xf32>, vector<2x8x8xf32>, vector<2x8x8xf32> -> vector<2x8x8xf32>
    "tpu.trace_stop"() : () -> ()
    %322 = vector.broadcast %6 : vector<2x1x8xf32> to vector<2x8x8xf32>
    %323 = arith.addf %321, %322 : vector<2x8x8xf32>
    %cst_113 = arith.constant dense<0xFF800000> : vector<2x8xf32>
    %324 = vector.multi_reduction <maximumf>, %323, %cst_113 [2] : vector<2x8x8xf32> to vector<2x8xf32>
    %325 = vector.shape_cast %324 : vector<2x8xf32> to vector<2x8x1xf32>
    %326 = vector.broadcast %325 : vector<2x8x1xf32> to vector<2x8x8xf32>
    %327 = arith.subf %323, %326 : vector<2x8x8xf32>
    %328 = math.exp %327 : vector<2x8x8xf32>
    %cst_114 = arith.constant dense<0.000000e+00> : vector<2x8xf32>
    %329 = vector.multi_reduction <add>, %328, %cst_114 [2] : vector<2x8x8xf32> to vector<2x8xf32>
    %330 = vector.shape_cast %329 : vector<2x8xf32> to vector<2x8x1xf32>
    %331 = tpu.reciprocal %330 {approx = true} : vector<2x8x1xf32> -> vector<2x8x1xf32>
    %332 = vector.broadcast %331 : vector<2x8x1xf32> to vector<2x8x8xf32>
    %333 = arith.mulf %328, %332 : vector<2x8x8xf32>
    "tpu.trace_start"() <{level = 10 : i32, message = "bqk,bkd->bqd"}> : () -> ()
    %cst_115 = arith.constant dense<0.000000e+00> : vector<2x8x8xf32>
    %334 = tpu.matmul %333, %320, %cst_115 {dimension_numbers = #tpu.dot_dimension_numbers<[2], [1], [1], [2], [0, 0, 0, 1, 1, 2], [0], [0]>} : vector<2x8x8xf32>, vector<2x8x8xf32>, vector<2x8x8xf32> -> vector<2x8x8xf32>
    "tpu.trace_stop"() : () -> ()
    %335 = vector.shape_cast %334 : vector<2x8x8xf32> to vector<16x8xf32>
    %336 = tpu.concatenate %272, %293, %314, %335 in 1 : vector<16x8xf32>, vector<16x8xf32>, vector<16x8xf32>, vector<16x8xf32> -> vector<16x32xf32>
    %c1_116 = arith.constant 1 : index
    %c0_117 = arith.constant 0 : index
    %c0_118 = arith.constant 0 : index
    %337 = vector.load %arg10[%c1_116, %c0_117, %c0_118] : memref<2x32x32xf32, #tpu.memory_space<vmem>>, vector<1x32x32xf32>
    %338 = vector.shape_cast %337 : vector<1x32x32xf32> to vector<32x32xf32>
    %cst_119 = arith.constant dense<0.000000e+00> : vector<16x32xf32>
    %339 = tpu.matmul %336, %338, %cst_119 {dimension_numbers = #tpu.dot_dimension_numbers<[1], [0], [0], [1], [0, 0, 1, 1], [], []>} : vector<16x32xf32>, vector<32x32xf32>, vector<16x32xf32> -> vector<16x32xf32>
    %c1_120 = arith.constant 1 : index
    %c0_121 = arith.constant 0 : index
    %c0_122 = arith.constant 0 : index
    %340 = vector.load %arg11[%c1_120, %c0_121, %c0_122] : memref<2x1x32xf32, #tpu.memory_space<vmem>>, vector<1x1x32xf32>
    %341 = vector.shape_cast %340 : vector<1x1x32xf32> to vector<1x32xf32>
    %342 = vector.broadcast %341 : vector<1x32xf32> to vector<16x32xf32>
    %343 = arith.addf %339, %342 : vector<16x32xf32>
    %344 = arith.addf %241, %343 : vector<16x32xf32>
    %c1_123 = arith.constant 1 : index
    %c0_124 = arith.constant 0 : index
    %c0_125 = arith.constant 0 : index
    %345 = vector.load %arg12[%c1_123, %c0_124, %c0_125] : memref<2x1x32xf32, #tpu.memory_space<vmem>>, vector<1x1x32xf32>
    %346 = vector.shape_cast %345 : vector<1x1x32xf32> to vector<1x32xf32>
    %c1_126 = arith.constant 1 : index
    %c0_127 = arith.constant 0 : index
    %c0_128 = arith.constant 0 : index
    %347 = vector.load %arg13[%c1_126, %c0_127, %c0_128] : memref<2x1x32xf32, #tpu.memory_space<vmem>>, vector<1x1x32xf32>
    %348 = vector.shape_cast %347 : vector<1x1x32xf32> to vector<1x32xf32>
    %cst_129 = arith.constant dense<0.000000e+00> : vector<16xf32>
    %349 = vector.multi_reduction <add>, %344, %cst_129 [1] : vector<16x32xf32> to vector<16xf32>
    %350 = vector.shape_cast %349 : vector<16xf32> to vector<16x1xf32>
    %cst_130 = arith.constant 3.200000e+01 : f32
    %351 = vector.broadcast %cst_130 : f32 to vector<16x1xf32>
    %352 = arith.divf %350, %351 : vector<16x1xf32>
    %353 = vector.broadcast %352 : vector<16x1xf32> to vector<16x32xf32>
    %354 = arith.subf %344, %353 : vector<16x32xf32>
    %355 = arith.mulf %354, %354 : vector<16x32xf32>
    %cst_131 = arith.constant dense<0.000000e+00> : vector<16xf32>
    %356 = vector.multi_reduction <add>, %355, %cst_131 [1] : vector<16x32xf32> to vector<16xf32>
    %357 = vector.shape_cast %356 : vector<16xf32> to vector<16x1xf32>
    %cst_132 = arith.constant 3.200000e+01 : f32
    %358 = vector.broadcast %cst_132 : f32 to vector<16x1xf32>
    %359 = arith.divf %357, %358 : vector<16x1xf32>
    %cst_133 = arith.constant 9.99999974E-6 : f32
    %360 = vector.broadcast %cst_133 : f32 to vector<16x1xf32>
    %361 = arith.addf %359, %360 : vector<16x1xf32>
    %362 = math.rsqrt %361 : vector<16x1xf32>
    %363 = vector.broadcast %362 : vector<16x1xf32> to vector<16x32xf32>
    %364 = arith.mulf %354, %363 : vector<16x32xf32>
    %365 = vector.broadcast %346 : vector<1x32xf32> to vector<16x32xf32>
    %366 = arith.mulf %364, %365 : vector<16x32xf32>
    %367 = vector.broadcast %348 : vector<1x32xf32> to vector<16x32xf32>
    %368 = arith.addf %366, %367 : vector<16x32xf32>
    %c1_134 = arith.constant 1 : index
    %c0_135 = arith.constant 0 : index
    %c0_136 = arith.constant 0 : index
    %369 = vector.load %arg14[%c1_134, %c0_135, %c0_136] : memref<2x32x64xf32, #tpu.memory_space<vmem>>, vector<1x32x64xf32>
    %370 = vector.shape_cast %369 : vector<1x32x64xf32> to vector<32x64xf32>
    %cst_137 = arith.constant dense<0.000000e+00> : vector<16x64xf32>
    %371 = tpu.matmul %368, %370, %cst_137 {dimension_numbers = #tpu.dot_dimension_numbers<[1], [0], [0], [1], [0, 0, 1, 1], [], []>} : vector<16x32xf32>, vector<32x64xf32>, vector<16x64xf32> -> vector<16x64xf32>
    %c1_138 = arith.constant 1 : index
    %c0_139 = arith.constant 0 : index
    %c0_140 = arith.constant 0 : index
    %372 = vector.load %arg15[%c1_138, %c0_139, %c0_140] : memref<2x1x64xf32, #tpu.memory_space<vmem>>, vector<1x1x64xf32>
    %373 = vector.shape_cast %372 : vector<1x1x64xf32> to vector<1x64xf32>
    %374 = vector.broadcast %373 : vector<1x64xf32> to vector<16x64xf32>
    %375 = arith.addf %371, %374 : vector<16x64xf32>
    %376 = arith.mulf %375, %375 : vector<16x64xf32>
    %377 = arith.mulf %375, %376 : vector<16x64xf32>
    %cst_141 = arith.constant 4.471500e-02 : f32
    %378 = vector.broadcast %cst_141 : f32 to vector<16x64xf32>
    %379 = arith.mulf %378, %377 : vector<16x64xf32>
    %380 = arith.addf %375, %379 : vector<16x64xf32>
    %cst_142 = arith.constant 0.797884583 : f32
    %381 = vector.broadcast %cst_142 : f32 to vector<16x64xf32>
    %382 = arith.mulf %381, %380 : vector<16x64xf32>
    %383 = math.tanh %382 : vector<16x64xf32>
    %cst_143 = arith.constant 1.000000e+00 : f32
    %384 = vector.broadcast %cst_143 : f32 to vector<16x64xf32>
    %385 = arith.addf %384, %383 : vector<16x64xf32>
    %cst_144 = arith.constant 5.000000e-01 : f32
    %386 = vector.broadcast %cst_144 : f32 to vector<16x64xf32>
    %387 = arith.mulf %386, %385 : vector<16x64xf32>
    %388 = arith.mulf %375, %387 : vector<16x64xf32>
    %c1_145 = arith.constant 1 : index
    %c0_146 = arith.constant 0 : index
    %c0_147 = arith.constant 0 : index
    %389 = vector.load %arg16[%c1_145, %c0_146, %c0_147] : memref<2x64x32xf32, #tpu.memory_space<vmem>>, vector<1x64x32xf32>
    %390 = vector.shape_cast %389 : vector<1x64x32xf32> to vector<64x32xf32>
    %cst_148 = arith.constant dense<0.000000e+00> : vector<16x32xf32>
    %391 = tpu.matmul %388, %390, %cst_148 {dimension_numbers = #tpu.dot_dimension_numbers<[1], [0], [0], [1], [0, 0, 1, 1], [], []>} : vector<16x64xf32>, vector<64x32xf32>, vector<16x32xf32> -> vector<16x32xf32>
    %c1_149 = arith.constant 1 : index
    %c0_150 = arith.constant 0 : index
    %c0_151 = arith.constant 0 : index
    %392 = vector.load %arg17[%c1_149, %c0_150, %c0_151] : memref<2x1x32xf32, #tpu.memory_space<vmem>>, vector<1x1x32xf32>
    %393 = vector.shape_cast %392 : vector<1x1x32xf32> to vector<1x32xf32>
    %394 = vector.broadcast %393 : vector<1x32xf32> to vector<16x32xf32>
    %395 = arith.addf %391, %394 : vector<16x32xf32>
    %396 = arith.addf %368, %395 : vector<16x32xf32>
    %c1_152 = arith.constant 1 : index
    %c0_153 = arith.constant 0 : index
    %c0_154 = arith.constant 0 : index
    %397 = vector.load %arg18[%c1_152, %c0_153, %c0_154] : memref<2x1x32xf32, #tpu.memory_space<vmem>>, vector<1x1x32xf32>
    %398 = vector.shape_cast %397 : vector<1x1x32xf32> to vector<1x32xf32>
    %c1_155 = arith.constant 1 : index
    %c0_156 = arith.constant 0 : index
    %c0_157 = arith.constant 0 : index
    %399 = vector.load %arg19[%c1_155, %c0_156, %c0_157] : memref<2x1x32xf32, #tpu.memory_space<vmem>>, vector<1x1x32xf32>
    %400 = vector.shape_cast %399 : vector<1x1x32xf32> to vector<1x32xf32>
    %cst_158 = arith.constant dense<0.000000e+00> : vector<16xf32>
    %401 = vector.multi_reduction <add>, %396, %cst_158 [1] : vector<16x32xf32> to vector<16xf32>
    %402 = vector.shape_cast %401 : vector<16xf32> to vector<16x1xf32>
    %cst_159 = arith.constant 3.200000e+01 : f32
    %403 = vector.broadcast %cst_159 : f32 to vector<16x1xf32>
    %404 = arith.divf %402, %403 : vector<16x1xf32>
    %405 = vector.broadcast %404 : vector<16x1xf32> to vector<16x32xf32>
    %406 = arith.subf %396, %405 : vector<16x32xf32>
    %407 = arith.mulf %406, %406 : vector<16x32xf32>
    %cst_160 = arith.constant dense<0.000000e+00> : vector<16xf32>
    %408 = vector.multi_reduction <add>, %407, %cst_160 [1] : vector<16x32xf32> to vector<16xf32>
    %409 = vector.shape_cast %408 : vector<16xf32> to vector<16x1xf32>
    %cst_161 = arith.constant 3.200000e+01 : f32
    %410 = vector.broadcast %cst_161 : f32 to vector<16x1xf32>
    %411 = arith.divf %409, %410 : vector<16x1xf32>
    %cst_162 = arith.constant 9.99999974E-6 : f32
    %412 = vector.broadcast %cst_162 : f32 to vector<16x1xf32>
    %413 = arith.addf %411, %412 : vector<16x1xf32>
    %414 = math.rsqrt %413 : vector<16x1xf32>
    %415 = vector.broadcast %414 : vector<16x1xf32> to vector<16x32xf32>
    %416 = arith.mulf %406, %415 : vector<16x32xf32>
    %417 = vector.broadcast %398 : vector<1x32xf32> to vector<16x32xf32>
    %418 = arith.mulf %416, %417 : vector<16x32xf32>
    %419 = vector.broadcast %400 : vector<1x32xf32> to vector<16x32xf32>
    %420 = arith.addf %418, %419 : vector<16x32xf32>
    %c0_163 = arith.constant 0 : index
    %c0_164 = arith.constant 0 : index
    %421 = vector.load %arg20[%c0_163, %c0_164] : memref<16x32xf32, #tpu.memory_space<vmem>>, vector<16x32xf32>
    %422 = vector.extract_strided_slice %421 {offsets = [0, 0], sizes = [8, 32], strides = [1, 1]} : vector<16x32xf32> to vector<8x32xf32>
    %423 = vector.shape_cast %422 : vector<8x32xf32> to vector<1x8x32xf32>
    %424 = vector.shape_cast %423 : vector<1x8x32xf32> to vector<1x8x32xf32>
    %425 = vector.broadcast %424 : vector<1x8x32xf32> to vector<2x8x32xf32>
    %426 = vector.shape_cast %425 : vector<2x8x32xf32> to vector<16x32xf32>
    %427 = arith.addf %420, %426 : vector<16x32xf32>
    %c0_165 = arith.constant 0 : index
    %c0_166 = arith.constant 0 : index
    %428 = vector.load %arg21[%c0_165, %c0_166] : memref<1x32xf32, #tpu.memory_space<vmem>>, vector<1x32xf32>
    %c0_167 = arith.constant 0 : index
    %c0_168 = arith.constant 0 : index
    %429 = vector.load %arg22[%c0_167, %c0_168] : memref<1x32xf32, #tpu.memory_space<vmem>>, vector<1x32xf32>
    %cst_169 = arith.constant dense<0.000000e+00> : vector<16xf32>
    %430 = vector.multi_reduction <add>, %427, %cst_169 [1] : vector<16x32xf32> to vector<16xf32>
    %431 = vector.shape_cast %430 : vector<16xf32> to vector<16x1xf32>
    %cst_170 = arith.constant 3.200000e+01 : f32
    %432 = vector.broadcast %cst_170 : f32 to vector<16x1xf32>
    %433 = arith.divf %431, %432 : vector<16x1xf32>
    %434 = vector.broadcast %433 : vector<16x1xf32> to vector<16x32xf32>
    %435 = arith.subf %427, %434 : vector<16x32xf32>
    %436 = arith.mulf %435, %435 : vector<16x32xf32>
    %cst_171 = arith.constant dense<0.000000e+00> : vector<16xf32>
    %437 = vector.multi_reduction <add>, %436, %cst_171 [1] : vector<16x32xf32> to vector<16xf32>
    %438 = vector.shape_cast %437 : vector<16xf32> to vector<16x1xf32>
    %cst_172 = arith.constant 3.200000e+01 : f32
    %439 = vector.broadcast %cst_172 : f32 to vector<16x1xf32>
    %440 = arith.divf %438, %439 : vector<16x1xf32>
    %cst_173 = arith.constant 9.99999974E-6 : f32
    %441 = vector.broadcast %cst_173 : f32 to vector<16x1xf32>
    %442 = arith.addf %440, %441 : vector<16x1xf32>
    %443 = math.rsqrt %442 : vector<16x1xf32>
    %444 = vector.broadcast %443 : vector<16x1xf32> to vector<16x32xf32>
    %445 = arith.mulf %435, %444 : vector<16x32xf32>
    %446 = vector.broadcast %428 : vector<1x32xf32> to vector<16x32xf32>
    %447 = arith.mulf %445, %446 : vector<16x32xf32>
    %448 = vector.broadcast %429 : vector<1x32xf32> to vector<16x32xf32>
    %449 = arith.addf %447, %448 : vector<16x32xf32>
    %c0_174 = arith.constant 0 : index
    %c0_175 = arith.constant 0 : index
    %c0_176 = arith.constant 0 : index
    %450 = vector.load %arg23[%c0_174, %c0_175, %c0_176] : memref<2x32x96xf32, #tpu.memory_space<vmem>>, vector<1x32x96xf32>
    %451 = vector.shape_cast %450 : vector<1x32x96xf32> to vector<32x96xf32>
    %cst_177 = arith.constant dense<0.000000e+00> : vector<16x96xf32>
    %452 = tpu.matmul %449, %451, %cst_177 {dimension_numbers = #tpu.dot_dimension_numbers<[1], [0], [0], [1], [0, 0, 1, 1], [], []>} : vector<16x32xf32>, vector<32x96xf32>, vector<16x96xf32> -> vector<16x96xf32>
    %c0_178 = arith.constant 0 : index
    %c0_179 = arith.constant 0 : index
    %c0_180 = arith.constant 0 : index
    %453 = vector.load %arg24[%c0_178, %c0_179, %c0_180] : memref<2x1x96xf32, #tpu.memory_space<vmem>>, vector<1x1x96xf32>
    %454 = vector.shape_cast %453 : vector<1x1x96xf32> to vector<1x96xf32>
    %455 = vector.broadcast %454 : vector<1x96xf32> to vector<16x96xf32>
    %456 = arith.addf %452, %455 : vector<16x96xf32>
    %457 = vector.extract_strided_slice %456 {offsets = [0, 0], sizes = [16, 32], strides = [1, 1]} : vector<16x96xf32> to vector<16x32xf32>
    %458 = vector.extract_strided_slice %456 {offsets = [0, 32], sizes = [16, 32], strides = [1, 1]} : vector<16x96xf32> to vector<16x32xf32>
    %459 = vector.extract_strided_slice %456 {offsets = [0, 64], sizes = [16, 32], strides = [1, 1]} : vector<16x96xf32> to vector<16x32xf32>
    %460 = vector.extract_strided_slice %457 {offsets = [0, 0], sizes = [16, 8], strides = [1, 1]} : vector<16x32xf32> to vector<16x8xf32>
    %461 = vector.shape_cast %460 : vector<16x8xf32> to vector<2x8x8xf32>
    %462 = vector.extract_strided_slice %458 {offsets = [0, 0], sizes = [16, 8], strides = [1, 1]} : vector<16x32xf32> to vector<16x8xf32>
    %463 = vector.shape_cast %462 : vector<16x8xf32> to vector<2x8x8xf32>
    %464 = vector.extract_strided_slice %459 {offsets = [0, 0], sizes = [16, 8], strides = [1, 1]} : vector<16x32xf32> to vector<16x8xf32>
    %465 = vector.shape_cast %464 : vector<16x8xf32> to vector<2x8x8xf32>
    "tpu.trace_start"() <{level = 10 : i32, message = "bqd,bkd->bqk"}> : () -> ()
    %cst_181 = arith.constant dense<0.000000e+00> : vector<2x8x8xf32>
    %466 = tpu.matmul %461, %463, %cst_181 {dimension_numbers = #tpu.dot_dimension_numbers<[2], [2], [1], [1], [0, 0, 0, 1, 1, 1], [0], [0]>} : vector<2x8x8xf32>, vector<2x8x8xf32>, vector<2x8x8xf32> -> vector<2x8x8xf32>
    "tpu.trace_stop"() : () -> ()
    %467 = vector.broadcast %6 : vector<2x1x8xf32> to vector<2x8x8xf32>
    %468 = arith.addf %466, %467 : vector<2x8x8xf32>
    %cst_182 = arith.constant dense<0xFF800000> : vector<2x8xf32>
    %469 = vector.multi_reduction <maximumf>, %468, %cst_182 [2] : vector<2x8x8xf32> to vector<2x8xf32>
    %470 = vector.shape_cast %469 : vector<2x8xf32> to vector<2x8x1xf32>
    %471 = vector.broadcast %470 : vector<2x8x1xf32> to vector<2x8x8xf32>
    %472 = arith.subf %468, %471 : vector<2x8x8xf32>
    %473 = math.exp %472 : vector<2x8x8xf32>
    %cst_183 = arith.constant dense<0.000000e+00> : vector<2x8xf32>
    %474 = vector.multi_reduction <add>, %473, %cst_183 [2] : vector<2x8x8xf32> to vector<2x8xf32>
    %475 = vector.shape_cast %474 : vector<2x8xf32> to vector<2x8x1xf32>
    %476 = tpu.reciprocal %475 {approx = true} : vector<2x8x1xf32> -> vector<2x8x1xf32>
    %477 = vector.broadcast %476 : vector<2x8x1xf32> to vector<2x8x8xf32>
    %478 = arith.mulf %473, %477 : vector<2x8x8xf32>
    "tpu.trace_start"() <{level = 10 : i32, message = "bqk,bkd->bqd"}> : () -> ()
    %cst_184 = arith.constant dense<0.000000e+00> : vector<2x8x8xf32>
    %479 = tpu.matmul %478, %465, %cst_184 {dimension_numbers = #tpu.dot_dimension_numbers<[2], [1], [1], [2], [0, 0, 0, 1, 1, 2], [0], [0]>} : vector<2x8x8xf32>, vector<2x8x8xf32>, vector<2x8x8xf32> -> vector<2x8x8xf32>
    "tpu.trace_stop"() : () -> ()
    %480 = vector.shape_cast %479 : vector<2x8x8xf32> to vector<16x8xf32>
    %481 = vector.extract_strided_slice %457 {offsets = [0, 8], sizes = [16, 8], strides = [1, 1]} : vector<16x32xf32> to vector<16x8xf32>
    %482 = vector.shape_cast %481 : vector<16x8xf32> to vector<2x8x8xf32>
    %483 = vector.extract_strided_slice %458 {offsets = [0, 8], sizes = [16, 8], strides = [1, 1]} : vector<16x32xf32> to vector<16x8xf32>
    %484 = vector.shape_cast %483 : vector<16x8xf32> to vector<2x8x8xf32>
    %485 = vector.extract_strided_slice %459 {offsets = [0, 8], sizes = [16, 8], strides = [1, 1]} : vector<16x32xf32> to vector<16x8xf32>
    %486 = vector.shape_cast %485 : vector<16x8xf32> to vector<2x8x8xf32>
    "tpu.trace_start"() <{level = 10 : i32, message = "bqd,bkd->bqk"}> : () -> ()
    %cst_185 = arith.constant dense<0.000000e+00> : vector<2x8x8xf32>
    %487 = tpu.matmul %482, %484, %cst_185 {dimension_numbers = #tpu.dot_dimension_numbers<[2], [2], [1], [1], [0, 0, 0, 1, 1, 1], [0], [0]>} : vector<2x8x8xf32>, vector<2x8x8xf32>, vector<2x8x8xf32> -> vector<2x8x8xf32>
    "tpu.trace_stop"() : () -> ()
    %488 = vector.broadcast %6 : vector<2x1x8xf32> to vector<2x8x8xf32>
    %489 = arith.addf %487, %488 : vector<2x8x8xf32>
    %cst_186 = arith.constant dense<0xFF800000> : vector<2x8xf32>
    %490 = vector.multi_reduction <maximumf>, %489, %cst_186 [2] : vector<2x8x8xf32> to vector<2x8xf32>
    %491 = vector.shape_cast %490 : vector<2x8xf32> to vector<2x8x1xf32>
    %492 = vector.broadcast %491 : vector<2x8x1xf32> to vector<2x8x8xf32>
    %493 = arith.subf %489, %492 : vector<2x8x8xf32>
    %494 = math.exp %493 : vector<2x8x8xf32>
    %cst_187 = arith.constant dense<0.000000e+00> : vector<2x8xf32>
    %495 = vector.multi_reduction <add>, %494, %cst_187 [2] : vector<2x8x8xf32> to vector<2x8xf32>
    %496 = vector.shape_cast %495 : vector<2x8xf32> to vector<2x8x1xf32>
    %497 = tpu.reciprocal %496 {approx = true} : vector<2x8x1xf32> -> vector<2x8x1xf32>
    %498 = vector.broadcast %497 : vector<2x8x1xf32> to vector<2x8x8xf32>
    %499 = arith.mulf %494, %498 : vector<2x8x8xf32>
    "tpu.trace_start"() <{level = 10 : i32, message = "bqk,bkd->bqd"}> : () -> ()
    %cst_188 = arith.constant dense<0.000000e+00> : vector<2x8x8xf32>
    %500 = tpu.matmul %499, %486, %cst_188 {dimension_numbers = #tpu.dot_dimension_numbers<[2], [1], [1], [2], [0, 0, 0, 1, 1, 2], [0], [0]>} : vector<2x8x8xf32>, vector<2x8x8xf32>, vector<2x8x8xf32> -> vector<2x8x8xf32>
    "tpu.trace_stop"() : () -> ()
    %501 = vector.shape_cast %500 : vector<2x8x8xf32> to vector<16x8xf32>
    %502 = vector.extract_strided_slice %457 {offsets = [0, 16], sizes = [16, 8], strides = [1, 1]} : vector<16x32xf32> to vector<16x8xf32>
    %503 = vector.shape_cast %502 : vector<16x8xf32> to vector<2x8x8xf32>
    %504 = vector.extract_strided_slice %458 {offsets = [0, 16], sizes = [16, 8], strides = [1, 1]} : vector<16x32xf32> to vector<16x8xf32>
    %505 = vector.shape_cast %504 : vector<16x8xf32> to vector<2x8x8xf32>
    %506 = vector.extract_strided_slice %459 {offsets = [0, 16], sizes = [16, 8], strides = [1, 1]} : vector<16x32xf32> to vector<16x8xf32>
    %507 = vector.shape_cast %506 : vector<16x8xf32> to vector<2x8x8xf32>
    "tpu.trace_start"() <{level = 10 : i32, message = "bqd,bkd->bqk"}> : () -> ()
    %cst_189 = arith.constant dense<0.000000e+00> : vector<2x8x8xf32>
    %508 = tpu.matmul %503, %505, %cst_189 {dimension_numbers = #tpu.dot_dimension_numbers<[2], [2], [1], [1], [0, 0, 0, 1, 1, 1], [0], [0]>} : vector<2x8x8xf32>, vector<2x8x8xf32>, vector<2x8x8xf32> -> vector<2x8x8xf32>
    "tpu.trace_stop"() : () -> ()
    %509 = vector.broadcast %6 : vector<2x1x8xf32> to vector<2x8x8xf32>
    %510 = arith.addf %508, %509 : vector<2x8x8xf32>
    %cst_190 = arith.constant dense<0xFF800000> : vector<2x8xf32>
    %511 = vector.multi_reduction <maximumf>, %510, %cst_190 [2] : vector<2x8x8xf32> to vector<2x8xf32>
    %512 = vector.shape_cast %511 : vector<2x8xf32> to vector<2x8x1xf32>
    %513 = vector.broadcast %512 : vector<2x8x1xf32> to vector<2x8x8xf32>
    %514 = arith.subf %510, %513 : vector<2x8x8xf32>
    %515 = math.exp %514 : vector<2x8x8xf32>
    %cst_191 = arith.constant dense<0.000000e+00> : vector<2x8xf32>
    %516 = vector.multi_reduction <add>, %515, %cst_191 [2] : vector<2x8x8xf32> to vector<2x8xf32>
    %517 = vector.shape_cast %516 : vector<2x8xf32> to vector<2x8x1xf32>
    %518 = tpu.reciprocal %517 {approx = true} : vector<2x8x1xf32> -> vector<2x8x1xf32>
    %519 = vector.broadcast %518 : vector<2x8x1xf32> to vector<2x8x8xf32>
    %520 = arith.mulf %515, %519 : vector<2x8x8xf32>
    "tpu.trace_start"() <{level = 10 : i32, message = "bqk,bkd->bqd"}> : () -> ()
    %cst_192 = arith.constant dense<0.000000e+00> : vector<2x8x8xf32>
    %521 = tpu.matmul %520, %507, %cst_192 {dimension_numbers = #tpu.dot_dimension_numbers<[2], [1], [1], [2], [0, 0, 0, 1, 1, 2], [0], [0]>} : vector<2x8x8xf32>, vector<2x8x8xf32>, vector<2x8x8xf32> -> vector<2x8x8xf32>
    "tpu.trace_stop"() : () -> ()
    %522 = vector.shape_cast %521 : vector<2x8x8xf32> to vector<16x8xf32>
    %523 = vector.extract_strided_slice %457 {offsets = [0, 24], sizes = [16, 8], strides = [1, 1]} : vector<16x32xf32> to vector<16x8xf32>
    %524 = vector.shape_cast %523 : vector<16x8xf32> to vector<2x8x8xf32>
    %525 = vector.extract_strided_slice %458 {offsets = [0, 24], sizes = [16, 8], strides = [1, 1]} : vector<16x32xf32> to vector<16x8xf32>
    %526 = vector.shape_cast %525 : vector<16x8xf32> to vector<2x8x8xf32>
    %527 = vector.extract_strided_slice %459 {offsets = [0, 24], sizes = [16, 8], strides = [1, 1]} : vector<16x32xf32> to vector<16x8xf32>
    %528 = vector.shape_cast %527 : vector<16x8xf32> to vector<2x8x8xf32>
    "tpu.trace_start"() <{level = 10 : i32, message = "bqd,bkd->bqk"}> : () -> ()
    %cst_193 = arith.constant dense<0.000000e+00> : vector<2x8x8xf32>
    %529 = tpu.matmul %524, %526, %cst_193 {dimension_numbers = #tpu.dot_dimension_numbers<[2], [2], [1], [1], [0, 0, 0, 1, 1, 1], [0], [0]>} : vector<2x8x8xf32>, vector<2x8x8xf32>, vector<2x8x8xf32> -> vector<2x8x8xf32>
    "tpu.trace_stop"() : () -> ()
    %530 = vector.broadcast %6 : vector<2x1x8xf32> to vector<2x8x8xf32>
    %531 = arith.addf %529, %530 : vector<2x8x8xf32>
    %cst_194 = arith.constant dense<0xFF800000> : vector<2x8xf32>
    %532 = vector.multi_reduction <maximumf>, %531, %cst_194 [2] : vector<2x8x8xf32> to vector<2x8xf32>
    %533 = vector.shape_cast %532 : vector<2x8xf32> to vector<2x8x1xf32>
    %534 = vector.broadcast %533 : vector<2x8x1xf32> to vector<2x8x8xf32>
    %535 = arith.subf %531, %534 : vector<2x8x8xf32>
    %536 = math.exp %535 : vector<2x8x8xf32>
    %cst_195 = arith.constant dense<0.000000e+00> : vector<2x8xf32>
    %537 = vector.multi_reduction <add>, %536, %cst_195 [2] : vector<2x8x8xf32> to vector<2x8xf32>
    %538 = vector.shape_cast %537 : vector<2x8xf32> to vector<2x8x1xf32>
    %539 = tpu.reciprocal %538 {approx = true} : vector<2x8x1xf32> -> vector<2x8x1xf32>
    %540 = vector.broadcast %539 : vector<2x8x1xf32> to vector<2x8x8xf32>
    %541 = arith.mulf %536, %540 : vector<2x8x8xf32>
    "tpu.trace_start"() <{level = 10 : i32, message = "bqk,bkd->bqd"}> : () -> ()
    %cst_196 = arith.constant dense<0.000000e+00> : vector<2x8x8xf32>
    %542 = tpu.matmul %541, %528, %cst_196 {dimension_numbers = #tpu.dot_dimension_numbers<[2], [1], [1], [2], [0, 0, 0, 1, 1, 2], [0], [0]>} : vector<2x8x8xf32>, vector<2x8x8xf32>, vector<2x8x8xf32> -> vector<2x8x8xf32>
    "tpu.trace_stop"() : () -> ()
    %543 = vector.shape_cast %542 : vector<2x8x8xf32> to vector<16x8xf32>
    %544 = tpu.concatenate %480, %501, %522, %543 in 1 : vector<16x8xf32>, vector<16x8xf32>, vector<16x8xf32>, vector<16x8xf32> -> vector<16x32xf32>
    %c0_197 = arith.constant 0 : index
    %c0_198 = arith.constant 0 : index
    %c0_199 = arith.constant 0 : index
    %545 = vector.load %arg25[%c0_197, %c0_198, %c0_199] : memref<2x32x32xf32, #tpu.memory_space<vmem>>, vector<1x32x32xf32>
    %546 = vector.shape_cast %545 : vector<1x32x32xf32> to vector<32x32xf32>
    %cst_200 = arith.constant dense<0.000000e+00> : vector<16x32xf32>
    %547 = tpu.matmul %544, %546, %cst_200 {dimension_numbers = #tpu.dot_dimension_numbers<[1], [0], [0], [1], [0, 0, 1, 1], [], []>} : vector<16x32xf32>, vector<32x32xf32>, vector<16x32xf32> -> vector<16x32xf32>
    %c0_201 = arith.constant 0 : index
    %c0_202 = arith.constant 0 : index
    %c0_203 = arith.constant 0 : index
    %548 = vector.load %arg26[%c0_201, %c0_202, %c0_203] : memref<2x1x32xf32, #tpu.memory_space<vmem>>, vector<1x1x32xf32>
    %549 = vector.shape_cast %548 : vector<1x1x32xf32> to vector<1x32xf32>
    %550 = vector.broadcast %549 : vector<1x32xf32> to vector<16x32xf32>
    %551 = arith.addf %547, %550 : vector<16x32xf32>
    %552 = arith.addf %449, %551 : vector<16x32xf32>
    %c0_204 = arith.constant 0 : index
    %c0_205 = arith.constant 0 : index
    %c0_206 = arith.constant 0 : index
    %553 = vector.load %arg27[%c0_204, %c0_205, %c0_206] : memref<2x1x32xf32, #tpu.memory_space<vmem>>, vector<1x1x32xf32>
    %554 = vector.shape_cast %553 : vector<1x1x32xf32> to vector<1x32xf32>
    %c0_207 = arith.constant 0 : index
    %c0_208 = arith.constant 0 : index
    %c0_209 = arith.constant 0 : index
    %555 = vector.load %arg28[%c0_207, %c0_208, %c0_209] : memref<2x1x32xf32, #tpu.memory_space<vmem>>, vector<1x1x32xf32>
    %556 = vector.shape_cast %555 : vector<1x1x32xf32> to vector<1x32xf32>
    %cst_210 = arith.constant dense<0.000000e+00> : vector<16xf32>
    %557 = vector.multi_reduction <add>, %552, %cst_210 [1] : vector<16x32xf32> to vector<16xf32>
    %558 = vector.shape_cast %557 : vector<16xf32> to vector<16x1xf32>
    %cst_211 = arith.constant 3.200000e+01 : f32
    %559 = vector.broadcast %cst_211 : f32 to vector<16x1xf32>
    %560 = arith.divf %558, %559 : vector<16x1xf32>
    %561 = vector.broadcast %560 : vector<16x1xf32> to vector<16x32xf32>
    %562 = arith.subf %552, %561 : vector<16x32xf32>
    %563 = arith.mulf %562, %562 : vector<16x32xf32>
    %cst_212 = arith.constant dense<0.000000e+00> : vector<16xf32>
    %564 = vector.multi_reduction <add>, %563, %cst_212 [1] : vector<16x32xf32> to vector<16xf32>
    %565 = vector.shape_cast %564 : vector<16xf32> to vector<16x1xf32>
    %cst_213 = arith.constant 3.200000e+01 : f32
    %566 = vector.broadcast %cst_213 : f32 to vector<16x1xf32>
    %567 = arith.divf %565, %566 : vector<16x1xf32>
    %cst_214 = arith.constant 9.99999974E-6 : f32
    %568 = vector.broadcast %cst_214 : f32 to vector<16x1xf32>
    %569 = arith.addf %567, %568 : vector<16x1xf32>
    %570 = math.rsqrt %569 : vector<16x1xf32>
    %571 = vector.broadcast %570 : vector<16x1xf32> to vector<16x32xf32>
    %572 = arith.mulf %562, %571 : vector<16x32xf32>
    %573 = vector.broadcast %554 : vector<1x32xf32> to vector<16x32xf32>
    %574 = arith.mulf %572, %573 : vector<16x32xf32>
    %575 = vector.broadcast %556 : vector<1x32xf32> to vector<16x32xf32>
    %576 = arith.addf %574, %575 : vector<16x32xf32>
    %c0_215 = arith.constant 0 : index
    %c0_216 = arith.constant 0 : index
    %c0_217 = arith.constant 0 : index
    %577 = vector.load %arg29[%c0_215, %c0_216, %c0_217] : memref<2x32x64xf32, #tpu.memory_space<vmem>>, vector<1x32x64xf32>
    %578 = vector.shape_cast %577 : vector<1x32x64xf32> to vector<32x64xf32>
    %cst_218 = arith.constant dense<0.000000e+00> : vector<16x64xf32>
    %579 = tpu.matmul %576, %578, %cst_218 {dimension_numbers = #tpu.dot_dimension_numbers<[1], [0], [0], [1], [0, 0, 1, 1], [], []>} : vector<16x32xf32>, vector<32x64xf32>, vector<16x64xf32> -> vector<16x64xf32>
    %c0_219 = arith.constant 0 : index
    %c0_220 = arith.constant 0 : index
    %c0_221 = arith.constant 0 : index
    %580 = vector.load %arg30[%c0_219, %c0_220, %c0_221] : memref<2x1x64xf32, #tpu.memory_space<vmem>>, vector<1x1x64xf32>
    %581 = vector.shape_cast %580 : vector<1x1x64xf32> to vector<1x64xf32>
    %582 = vector.broadcast %581 : vector<1x64xf32> to vector<16x64xf32>
    %583 = arith.addf %579, %582 : vector<16x64xf32>
    %584 = arith.mulf %583, %583 : vector<16x64xf32>
    %585 = arith.mulf %583, %584 : vector<16x64xf32>
    %cst_222 = arith.constant 4.471500e-02 : f32
    %586 = vector.broadcast %cst_222 : f32 to vector<16x64xf32>
    %587 = arith.mulf %586, %585 : vector<16x64xf32>
    %588 = arith.addf %583, %587 : vector<16x64xf32>
    %cst_223 = arith.constant 0.797884583 : f32
    %589 = vector.broadcast %cst_223 : f32 to vector<16x64xf32>
    %590 = arith.mulf %589, %588 : vector<16x64xf32>
    %591 = math.tanh %590 : vector<16x64xf32>
    %cst_224 = arith.constant 1.000000e+00 : f32
    %592 = vector.broadcast %cst_224 : f32 to vector<16x64xf32>
    %593 = arith.addf %592, %591 : vector<16x64xf32>
    %cst_225 = arith.constant 5.000000e-01 : f32
    %594 = vector.broadcast %cst_225 : f32 to vector<16x64xf32>
    %595 = arith.mulf %594, %593 : vector<16x64xf32>
    %596 = arith.mulf %583, %595 : vector<16x64xf32>
    %c0_226 = arith.constant 0 : index
    %c0_227 = arith.constant 0 : index
    %c0_228 = arith.constant 0 : index
    %597 = vector.load %arg31[%c0_226, %c0_227, %c0_228] : memref<2x64x32xf32, #tpu.memory_space<vmem>>, vector<1x64x32xf32>
    %598 = vector.shape_cast %597 : vector<1x64x32xf32> to vector<64x32xf32>
    %cst_229 = arith.constant dense<0.000000e+00> : vector<16x32xf32>
    %599 = tpu.matmul %596, %598, %cst_229 {dimension_numbers = #tpu.dot_dimension_numbers<[1], [0], [0], [1], [0, 0, 1, 1], [], []>} : vector<16x64xf32>, vector<64x32xf32>, vector<16x32xf32> -> vector<16x32xf32>
    %c0_230 = arith.constant 0 : index
    %c0_231 = arith.constant 0 : index
    %c0_232 = arith.constant 0 : index
    %600 = vector.load %arg32[%c0_230, %c0_231, %c0_232] : memref<2x1x32xf32, #tpu.memory_space<vmem>>, vector<1x1x32xf32>
    %601 = vector.shape_cast %600 : vector<1x1x32xf32> to vector<1x32xf32>
    %602 = vector.broadcast %601 : vector<1x32xf32> to vector<16x32xf32>
    %603 = arith.addf %599, %602 : vector<16x32xf32>
    %604 = arith.addf %576, %603 : vector<16x32xf32>
    %c0_233 = arith.constant 0 : index
    %c0_234 = arith.constant 0 : index
    %c0_235 = arith.constant 0 : index
    %605 = vector.load %arg33[%c0_233, %c0_234, %c0_235] : memref<2x1x32xf32, #tpu.memory_space<vmem>>, vector<1x1x32xf32>
    %606 = vector.shape_cast %605 : vector<1x1x32xf32> to vector<1x32xf32>
    %c0_236 = arith.constant 0 : index
    %c0_237 = arith.constant 0 : index
    %c0_238 = arith.constant 0 : index
    %607 = vector.load %arg34[%c0_236, %c0_237, %c0_238] : memref<2x1x32xf32, #tpu.memory_space<vmem>>, vector<1x1x32xf32>
    %608 = vector.shape_cast %607 : vector<1x1x32xf32> to vector<1x32xf32>
    %cst_239 = arith.constant dense<0.000000e+00> : vector<16xf32>
    %609 = vector.multi_reduction <add>, %604, %cst_239 [1] : vector<16x32xf32> to vector<16xf32>
    %610 = vector.shape_cast %609 : vector<16xf32> to vector<16x1xf32>
    %cst_240 = arith.constant 3.200000e+01 : f32
    %611 = vector.broadcast %cst_240 : f32 to vector<16x1xf32>
    %612 = arith.divf %610, %611 : vector<16x1xf32>
    %613 = vector.broadcast %612 : vector<16x1xf32> to vector<16x32xf32>
    %614 = arith.subf %604, %613 : vector<16x32xf32>
    %615 = arith.mulf %614, %614 : vector<16x32xf32>
    %cst_241 = arith.constant dense<0.000000e+00> : vector<16xf32>
    %616 = vector.multi_reduction <add>, %615, %cst_241 [1] : vector<16x32xf32> to vector<16xf32>
    %617 = vector.shape_cast %616 : vector<16xf32> to vector<16x1xf32>
    %cst_242 = arith.constant 3.200000e+01 : f32
    %618 = vector.broadcast %cst_242 : f32 to vector<16x1xf32>
    %619 = arith.divf %617, %618 : vector<16x1xf32>
    %cst_243 = arith.constant 9.99999974E-6 : f32
    %620 = vector.broadcast %cst_243 : f32 to vector<16x1xf32>
    %621 = arith.addf %619, %620 : vector<16x1xf32>
    %622 = math.rsqrt %621 : vector<16x1xf32>
    %623 = vector.broadcast %622 : vector<16x1xf32> to vector<16x32xf32>
    %624 = arith.mulf %614, %623 : vector<16x32xf32>
    %625 = vector.broadcast %606 : vector<1x32xf32> to vector<16x32xf32>
    %626 = arith.mulf %624, %625 : vector<16x32xf32>
    %627 = vector.broadcast %608 : vector<1x32xf32> to vector<16x32xf32>
    %628 = arith.addf %626, %627 : vector<16x32xf32>
    %c1_244 = arith.constant 1 : index
    %c0_245 = arith.constant 0 : index
    %c0_246 = arith.constant 0 : index
    %629 = vector.load %arg23[%c1_244, %c0_245, %c0_246] : memref<2x32x96xf32, #tpu.memory_space<vmem>>, vector<1x32x96xf32>
    %630 = vector.shape_cast %629 : vector<1x32x96xf32> to vector<32x96xf32>
    %cst_247 = arith.constant dense<0.000000e+00> : vector<16x96xf32>
    %631 = tpu.matmul %628, %630, %cst_247 {dimension_numbers = #tpu.dot_dimension_numbers<[1], [0], [0], [1], [0, 0, 1, 1], [], []>} : vector<16x32xf32>, vector<32x96xf32>, vector<16x96xf32> -> vector<16x96xf32>
    %c1_248 = arith.constant 1 : index
    %c0_249 = arith.constant 0 : index
    %c0_250 = arith.constant 0 : index
    %632 = vector.load %arg24[%c1_248, %c0_249, %c0_250] : memref<2x1x96xf32, #tpu.memory_space<vmem>>, vector<1x1x96xf32>
    %633 = vector.shape_cast %632 : vector<1x1x96xf32> to vector<1x96xf32>
    %634 = vector.broadcast %633 : vector<1x96xf32> to vector<16x96xf32>
    %635 = arith.addf %631, %634 : vector<16x96xf32>
    %636 = vector.extract_strided_slice %635 {offsets = [0, 0], sizes = [16, 32], strides = [1, 1]} : vector<16x96xf32> to vector<16x32xf32>
    %637 = vector.extract_strided_slice %635 {offsets = [0, 32], sizes = [16, 32], strides = [1, 1]} : vector<16x96xf32> to vector<16x32xf32>
    %638 = vector.extract_strided_slice %635 {offsets = [0, 64], sizes = [16, 32], strides = [1, 1]} : vector<16x96xf32> to vector<16x32xf32>
    %639 = vector.extract_strided_slice %636 {offsets = [0, 0], sizes = [16, 8], strides = [1, 1]} : vector<16x32xf32> to vector<16x8xf32>
    %640 = vector.shape_cast %639 : vector<16x8xf32> to vector<2x8x8xf32>
    %641 = vector.extract_strided_slice %637 {offsets = [0, 0], sizes = [16, 8], strides = [1, 1]} : vector<16x32xf32> to vector<16x8xf32>
    %642 = vector.shape_cast %641 : vector<16x8xf32> to vector<2x8x8xf32>
    %643 = vector.extract_strided_slice %638 {offsets = [0, 0], sizes = [16, 8], strides = [1, 1]} : vector<16x32xf32> to vector<16x8xf32>
    %644 = vector.shape_cast %643 : vector<16x8xf32> to vector<2x8x8xf32>
    "tpu.trace_start"() <{level = 10 : i32, message = "bqd,bkd->bqk"}> : () -> ()
    %cst_251 = arith.constant dense<0.000000e+00> : vector<2x8x8xf32>
    %645 = tpu.matmul %640, %642, %cst_251 {dimension_numbers = #tpu.dot_dimension_numbers<[2], [2], [1], [1], [0, 0, 0, 1, 1, 1], [0], [0]>} : vector<2x8x8xf32>, vector<2x8x8xf32>, vector<2x8x8xf32> -> vector<2x8x8xf32>
    "tpu.trace_stop"() : () -> ()
    %646 = vector.broadcast %6 : vector<2x1x8xf32> to vector<2x8x8xf32>
    %647 = arith.addf %645, %646 : vector<2x8x8xf32>
    %cst_252 = arith.constant dense<0xFF800000> : vector<2x8xf32>
    %648 = vector.multi_reduction <maximumf>, %647, %cst_252 [2] : vector<2x8x8xf32> to vector<2x8xf32>
    %649 = vector.shape_cast %648 : vector<2x8xf32> to vector<2x8x1xf32>
    %650 = vector.broadcast %649 : vector<2x8x1xf32> to vector<2x8x8xf32>
    %651 = arith.subf %647, %650 : vector<2x8x8xf32>
    %652 = math.exp %651 : vector<2x8x8xf32>
    %cst_253 = arith.constant dense<0.000000e+00> : vector<2x8xf32>
    %653 = vector.multi_reduction <add>, %652, %cst_253 [2] : vector<2x8x8xf32> to vector<2x8xf32>
    %654 = vector.shape_cast %653 : vector<2x8xf32> to vector<2x8x1xf32>
    %655 = tpu.reciprocal %654 {approx = true} : vector<2x8x1xf32> -> vector<2x8x1xf32>
    %656 = vector.broadcast %655 : vector<2x8x1xf32> to vector<2x8x8xf32>
    %657 = arith.mulf %652, %656 : vector<2x8x8xf32>
    "tpu.trace_start"() <{level = 10 : i32, message = "bqk,bkd->bqd"}> : () -> ()
    %cst_254 = arith.constant dense<0.000000e+00> : vector<2x8x8xf32>
    %658 = tpu.matmul %657, %644, %cst_254 {dimension_numbers = #tpu.dot_dimension_numbers<[2], [1], [1], [2], [0, 0, 0, 1, 1, 2], [0], [0]>} : vector<2x8x8xf32>, vector<2x8x8xf32>, vector<2x8x8xf32> -> vector<2x8x8xf32>
    "tpu.trace_stop"() : () -> ()
    %659 = vector.shape_cast %658 : vector<2x8x8xf32> to vector<16x8xf32>
    %660 = vector.extract_strided_slice %636 {offsets = [0, 8], sizes = [16, 8], strides = [1, 1]} : vector<16x32xf32> to vector<16x8xf32>
    %661 = vector.shape_cast %660 : vector<16x8xf32> to vector<2x8x8xf32>
    %662 = vector.extract_strided_slice %637 {offsets = [0, 8], sizes = [16, 8], strides = [1, 1]} : vector<16x32xf32> to vector<16x8xf32>
    %663 = vector.shape_cast %662 : vector<16x8xf32> to vector<2x8x8xf32>
    %664 = vector.extract_strided_slice %638 {offsets = [0, 8], sizes = [16, 8], strides = [1, 1]} : vector<16x32xf32> to vector<16x8xf32>
    %665 = vector.shape_cast %664 : vector<16x8xf32> to vector<2x8x8xf32>
    "tpu.trace_start"() <{level = 10 : i32, message = "bqd,bkd->bqk"}> : () -> ()
    %cst_255 = arith.constant dense<0.000000e+00> : vector<2x8x8xf32>
    %666 = tpu.matmul %661, %663, %cst_255 {dimension_numbers = #tpu.dot_dimension_numbers<[2], [2], [1], [1], [0, 0, 0, 1, 1, 1], [0], [0]>} : vector<2x8x8xf32>, vector<2x8x8xf32>, vector<2x8x8xf32> -> vector<2x8x8xf32>
    "tpu.trace_stop"() : () -> ()
    %667 = vector.broadcast %6 : vector<2x1x8xf32> to vector<2x8x8xf32>
    %668 = arith.addf %666, %667 : vector<2x8x8xf32>
    %cst_256 = arith.constant dense<0xFF800000> : vector<2x8xf32>
    %669 = vector.multi_reduction <maximumf>, %668, %cst_256 [2] : vector<2x8x8xf32> to vector<2x8xf32>
    %670 = vector.shape_cast %669 : vector<2x8xf32> to vector<2x8x1xf32>
    %671 = vector.broadcast %670 : vector<2x8x1xf32> to vector<2x8x8xf32>
    %672 = arith.subf %668, %671 : vector<2x8x8xf32>
    %673 = math.exp %672 : vector<2x8x8xf32>
    %cst_257 = arith.constant dense<0.000000e+00> : vector<2x8xf32>
    %674 = vector.multi_reduction <add>, %673, %cst_257 [2] : vector<2x8x8xf32> to vector<2x8xf32>
    %675 = vector.shape_cast %674 : vector<2x8xf32> to vector<2x8x1xf32>
    %676 = tpu.reciprocal %675 {approx = true} : vector<2x8x1xf32> -> vector<2x8x1xf32>
    %677 = vector.broadcast %676 : vector<2x8x1xf32> to vector<2x8x8xf32>
    %678 = arith.mulf %673, %677 : vector<2x8x8xf32>
    "tpu.trace_start"() <{level = 10 : i32, message = "bqk,bkd->bqd"}> : () -> ()
    %cst_258 = arith.constant dense<0.000000e+00> : vector<2x8x8xf32>
    %679 = tpu.matmul %678, %665, %cst_258 {dimension_numbers = #tpu.dot_dimension_numbers<[2], [1], [1], [2], [0, 0, 0, 1, 1, 2], [0], [0]>} : vector<2x8x8xf32>, vector<2x8x8xf32>, vector<2x8x8xf32> -> vector<2x8x8xf32>
    "tpu.trace_stop"() : () -> ()
    %680 = vector.shape_cast %679 : vector<2x8x8xf32> to vector<16x8xf32>
    %681 = vector.extract_strided_slice %636 {offsets = [0, 16], sizes = [16, 8], strides = [1, 1]} : vector<16x32xf32> to vector<16x8xf32>
    %682 = vector.shape_cast %681 : vector<16x8xf32> to vector<2x8x8xf32>
    %683 = vector.extract_strided_slice %637 {offsets = [0, 16], sizes = [16, 8], strides = [1, 1]} : vector<16x32xf32> to vector<16x8xf32>
    %684 = vector.shape_cast %683 : vector<16x8xf32> to vector<2x8x8xf32>
    %685 = vector.extract_strided_slice %638 {offsets = [0, 16], sizes = [16, 8], strides = [1, 1]} : vector<16x32xf32> to vector<16x8xf32>
    %686 = vector.shape_cast %685 : vector<16x8xf32> to vector<2x8x8xf32>
    "tpu.trace_start"() <{level = 10 : i32, message = "bqd,bkd->bqk"}> : () -> ()
    %cst_259 = arith.constant dense<0.000000e+00> : vector<2x8x8xf32>
    %687 = tpu.matmul %682, %684, %cst_259 {dimension_numbers = #tpu.dot_dimension_numbers<[2], [2], [1], [1], [0, 0, 0, 1, 1, 1], [0], [0]>} : vector<2x8x8xf32>, vector<2x8x8xf32>, vector<2x8x8xf32> -> vector<2x8x8xf32>
    "tpu.trace_stop"() : () -> ()
    %688 = vector.broadcast %6 : vector<2x1x8xf32> to vector<2x8x8xf32>
    %689 = arith.addf %687, %688 : vector<2x8x8xf32>
    %cst_260 = arith.constant dense<0xFF800000> : vector<2x8xf32>
    %690 = vector.multi_reduction <maximumf>, %689, %cst_260 [2] : vector<2x8x8xf32> to vector<2x8xf32>
    %691 = vector.shape_cast %690 : vector<2x8xf32> to vector<2x8x1xf32>
    %692 = vector.broadcast %691 : vector<2x8x1xf32> to vector<2x8x8xf32>
    %693 = arith.subf %689, %692 : vector<2x8x8xf32>
    %694 = math.exp %693 : vector<2x8x8xf32>
    %cst_261 = arith.constant dense<0.000000e+00> : vector<2x8xf32>
    %695 = vector.multi_reduction <add>, %694, %cst_261 [2] : vector<2x8x8xf32> to vector<2x8xf32>
    %696 = vector.shape_cast %695 : vector<2x8xf32> to vector<2x8x1xf32>
    %697 = tpu.reciprocal %696 {approx = true} : vector<2x8x1xf32> -> vector<2x8x1xf32>
    %698 = vector.broadcast %697 : vector<2x8x1xf32> to vector<2x8x8xf32>
    %699 = arith.mulf %694, %698 : vector<2x8x8xf32>
    "tpu.trace_start"() <{level = 10 : i32, message = "bqk,bkd->bqd"}> : () -> ()
    %cst_262 = arith.constant dense<0.000000e+00> : vector<2x8x8xf32>
    %700 = tpu.matmul %699, %686, %cst_262 {dimension_numbers = #tpu.dot_dimension_numbers<[2], [1], [1], [2], [0, 0, 0, 1, 1, 2], [0], [0]>} : vector<2x8x8xf32>, vector<2x8x8xf32>, vector<2x8x8xf32> -> vector<2x8x8xf32>
    "tpu.trace_stop"() : () -> ()
    %701 = vector.shape_cast %700 : vector<2x8x8xf32> to vector<16x8xf32>
    %702 = vector.extract_strided_slice %636 {offsets = [0, 24], sizes = [16, 8], strides = [1, 1]} : vector<16x32xf32> to vector<16x8xf32>
    %703 = vector.shape_cast %702 : vector<16x8xf32> to vector<2x8x8xf32>
    %704 = vector.extract_strided_slice %637 {offsets = [0, 24], sizes = [16, 8], strides = [1, 1]} : vector<16x32xf32> to vector<16x8xf32>
    %705 = vector.shape_cast %704 : vector<16x8xf32> to vector<2x8x8xf32>
    %706 = vector.extract_strided_slice %638 {offsets = [0, 24], sizes = [16, 8], strides = [1, 1]} : vector<16x32xf32> to vector<16x8xf32>
    %707 = vector.shape_cast %706 : vector<16x8xf32> to vector<2x8x8xf32>
    "tpu.trace_start"() <{level = 10 : i32, message = "bqd,bkd->bqk"}> : () -> ()
    %cst_263 = arith.constant dense<0.000000e+00> : vector<2x8x8xf32>
    %708 = tpu.matmul %703, %705, %cst_263 {dimension_numbers = #tpu.dot_dimension_numbers<[2], [2], [1], [1], [0, 0, 0, 1, 1, 1], [0], [0]>} : vector<2x8x8xf32>, vector<2x8x8xf32>, vector<2x8x8xf32> -> vector<2x8x8xf32>
    "tpu.trace_stop"() : () -> ()
    %709 = vector.broadcast %6 : vector<2x1x8xf32> to vector<2x8x8xf32>
    %710 = arith.addf %708, %709 : vector<2x8x8xf32>
    %cst_264 = arith.constant dense<0xFF800000> : vector<2x8xf32>
    %711 = vector.multi_reduction <maximumf>, %710, %cst_264 [2] : vector<2x8x8xf32> to vector<2x8xf32>
    %712 = vector.shape_cast %711 : vector<2x8xf32> to vector<2x8x1xf32>
    %713 = vector.broadcast %712 : vector<2x8x1xf32> to vector<2x8x8xf32>
    %714 = arith.subf %710, %713 : vector<2x8x8xf32>
    %715 = math.exp %714 : vector<2x8x8xf32>
    %cst_265 = arith.constant dense<0.000000e+00> : vector<2x8xf32>
    %716 = vector.multi_reduction <add>, %715, %cst_265 [2] : vector<2x8x8xf32> to vector<2x8xf32>
    %717 = vector.shape_cast %716 : vector<2x8xf32> to vector<2x8x1xf32>
    %718 = tpu.reciprocal %717 {approx = true} : vector<2x8x1xf32> -> vector<2x8x1xf32>
    %719 = vector.broadcast %718 : vector<2x8x1xf32> to vector<2x8x8xf32>
    %720 = arith.mulf %715, %719 : vector<2x8x8xf32>
    "tpu.trace_start"() <{level = 10 : i32, message = "bqk,bkd->bqd"}> : () -> ()
    %cst_266 = arith.constant dense<0.000000e+00> : vector<2x8x8xf32>
    %721 = tpu.matmul %720, %707, %cst_266 {dimension_numbers = #tpu.dot_dimension_numbers<[2], [1], [1], [2], [0, 0, 0, 1, 1, 2], [0], [0]>} : vector<2x8x8xf32>, vector<2x8x8xf32>, vector<2x8x8xf32> -> vector<2x8x8xf32>
    "tpu.trace_stop"() : () -> ()
    %722 = vector.shape_cast %721 : vector<2x8x8xf32> to vector<16x8xf32>
    %723 = tpu.concatenate %659, %680, %701, %722 in 1 : vector<16x8xf32>, vector<16x8xf32>, vector<16x8xf32>, vector<16x8xf32> -> vector<16x32xf32>
    %c1_267 = arith.constant 1 : index
    %c0_268 = arith.constant 0 : index
    %c0_269 = arith.constant 0 : index
    %724 = vector.load %arg25[%c1_267, %c0_268, %c0_269] : memref<2x32x32xf32, #tpu.memory_space<vmem>>, vector<1x32x32xf32>
    %725 = vector.shape_cast %724 : vector<1x32x32xf32> to vector<32x32xf32>
    %cst_270 = arith.constant dense<0.000000e+00> : vector<16x32xf32>
    %726 = tpu.matmul %723, %725, %cst_270 {dimension_numbers = #tpu.dot_dimension_numbers<[1], [0], [0], [1], [0, 0, 1, 1], [], []>} : vector<16x32xf32>, vector<32x32xf32>, vector<16x32xf32> -> vector<16x32xf32>
    %c1_271 = arith.constant 1 : index
    %c0_272 = arith.constant 0 : index
    %c0_273 = arith.constant 0 : index
    %727 = vector.load %arg26[%c1_271, %c0_272, %c0_273] : memref<2x1x32xf32, #tpu.memory_space<vmem>>, vector<1x1x32xf32>
    %728 = vector.shape_cast %727 : vector<1x1x32xf32> to vector<1x32xf32>
    %729 = vector.broadcast %728 : vector<1x32xf32> to vector<16x32xf32>
    %730 = arith.addf %726, %729 : vector<16x32xf32>
    %731 = arith.addf %628, %730 : vector<16x32xf32>
    %c1_274 = arith.constant 1 : index
    %c0_275 = arith.constant 0 : index
    %c0_276 = arith.constant 0 : index
    %732 = vector.load %arg27[%c1_274, %c0_275, %c0_276] : memref<2x1x32xf32, #tpu.memory_space<vmem>>, vector<1x1x32xf32>
    %733 = vector.shape_cast %732 : vector<1x1x32xf32> to vector<1x32xf32>
    %c1_277 = arith.constant 1 : index
    %c0_278 = arith.constant 0 : index
    %c0_279 = arith.constant 0 : index
    %734 = vector.load %arg28[%c1_277, %c0_278, %c0_279] : memref<2x1x32xf32, #tpu.memory_space<vmem>>, vector<1x1x32xf32>
    %735 = vector.shape_cast %734 : vector<1x1x32xf32> to vector<1x32xf32>
    %cst_280 = arith.constant dense<0.000000e+00> : vector<16xf32>
    %736 = vector.multi_reduction <add>, %731, %cst_280 [1] : vector<16x32xf32> to vector<16xf32>
    %737 = vector.shape_cast %736 : vector<16xf32> to vector<16x1xf32>
    %cst_281 = arith.constant 3.200000e+01 : f32
    %738 = vector.broadcast %cst_281 : f32 to vector<16x1xf32>
    %739 = arith.divf %737, %738 : vector<16x1xf32>
    %740 = vector.broadcast %739 : vector<16x1xf32> to vector<16x32xf32>
    %741 = arith.subf %731, %740 : vector<16x32xf32>
    %742 = arith.mulf %741, %741 : vector<16x32xf32>
    %cst_282 = arith.constant dense<0.000000e+00> : vector<16xf32>
    %743 = vector.multi_reduction <add>, %742, %cst_282 [1] : vector<16x32xf32> to vector<16xf32>
    %744 = vector.shape_cast %743 : vector<16xf32> to vector<16x1xf32>
    %cst_283 = arith.constant 3.200000e+01 : f32
    %745 = vector.broadcast %cst_283 : f32 to vector<16x1xf32>
    %746 = arith.divf %744, %745 : vector<16x1xf32>
    %cst_284 = arith.constant 9.99999974E-6 : f32
    %747 = vector.broadcast %cst_284 : f32 to vector<16x1xf32>
    %748 = arith.addf %746, %747 : vector<16x1xf32>
    %749 = math.rsqrt %748 : vector<16x1xf32>
    %750 = vector.broadcast %749 : vector<16x1xf32> to vector<16x32xf32>
    %751 = arith.mulf %741, %750 : vector<16x32xf32>
    %752 = vector.broadcast %733 : vector<1x32xf32> to vector<16x32xf32>
    %753 = arith.mulf %751, %752 : vector<16x32xf32>
    %754 = vector.broadcast %735 : vector<1x32xf32> to vector<16x32xf32>
    %755 = arith.addf %753, %754 : vector<16x32xf32>
    %c1_285 = arith.constant 1 : index
    %c0_286 = arith.constant 0 : index
    %c0_287 = arith.constant 0 : index
    %756 = vector.load %arg29[%c1_285, %c0_286, %c0_287] : memref<2x32x64xf32, #tpu.memory_space<vmem>>, vector<1x32x64xf32>
    %757 = vector.shape_cast %756 : vector<1x32x64xf32> to vector<32x64xf32>
    %cst_288 = arith.constant dense<0.000000e+00> : vector<16x64xf32>
    %758 = tpu.matmul %755, %757, %cst_288 {dimension_numbers = #tpu.dot_dimension_numbers<[1], [0], [0], [1], [0, 0, 1, 1], [], []>} : vector<16x32xf32>, vector<32x64xf32>, vector<16x64xf32> -> vector<16x64xf32>
    %c1_289 = arith.constant 1 : index
    %c0_290 = arith.constant 0 : index
    %c0_291 = arith.constant 0 : index
    %759 = vector.load %arg30[%c1_289, %c0_290, %c0_291] : memref<2x1x64xf32, #tpu.memory_space<vmem>>, vector<1x1x64xf32>
    %760 = vector.shape_cast %759 : vector<1x1x64xf32> to vector<1x64xf32>
    %761 = vector.broadcast %760 : vector<1x64xf32> to vector<16x64xf32>
    %762 = arith.addf %758, %761 : vector<16x64xf32>
    %763 = arith.mulf %762, %762 : vector<16x64xf32>
    %764 = arith.mulf %762, %763 : vector<16x64xf32>
    %cst_292 = arith.constant 4.471500e-02 : f32
    %765 = vector.broadcast %cst_292 : f32 to vector<16x64xf32>
    %766 = arith.mulf %765, %764 : vector<16x64xf32>
    %767 = arith.addf %762, %766 : vector<16x64xf32>
    %cst_293 = arith.constant 0.797884583 : f32
    %768 = vector.broadcast %cst_293 : f32 to vector<16x64xf32>
    %769 = arith.mulf %768, %767 : vector<16x64xf32>
    %770 = math.tanh %769 : vector<16x64xf32>
    %cst_294 = arith.constant 1.000000e+00 : f32
    %771 = vector.broadcast %cst_294 : f32 to vector<16x64xf32>
    %772 = arith.addf %771, %770 : vector<16x64xf32>
    %cst_295 = arith.constant 5.000000e-01 : f32
    %773 = vector.broadcast %cst_295 : f32 to vector<16x64xf32>
    %774 = arith.mulf %773, %772 : vector<16x64xf32>
    %775 = arith.mulf %762, %774 : vector<16x64xf32>
    %c1_296 = arith.constant 1 : index
    %c0_297 = arith.constant 0 : index
    %c0_298 = arith.constant 0 : index
    %776 = vector.load %arg31[%c1_296, %c0_297, %c0_298] : memref<2x64x32xf32, #tpu.memory_space<vmem>>, vector<1x64x32xf32>
    %777 = vector.shape_cast %776 : vector<1x64x32xf32> to vector<64x32xf32>
    %cst_299 = arith.constant dense<0.000000e+00> : vector<16x32xf32>
    %778 = tpu.matmul %775, %777, %cst_299 {dimension_numbers = #tpu.dot_dimension_numbers<[1], [0], [0], [1], [0, 0, 1, 1], [], []>} : vector<16x64xf32>, vector<64x32xf32>, vector<16x32xf32> -> vector<16x32xf32>
    %c1_300 = arith.constant 1 : index
    %c0_301 = arith.constant 0 : index
    %c0_302 = arith.constant 0 : index
    %779 = vector.load %arg32[%c1_300, %c0_301, %c0_302] : memref<2x1x32xf32, #tpu.memory_space<vmem>>, vector<1x1x32xf32>
    %780 = vector.shape_cast %779 : vector<1x1x32xf32> to vector<1x32xf32>
    %781 = vector.broadcast %780 : vector<1x32xf32> to vector<16x32xf32>
    %782 = arith.addf %778, %781 : vector<16x32xf32>
    %783 = arith.addf %755, %782 : vector<16x32xf32>
    %c1_303 = arith.constant 1 : index
    %c0_304 = arith.constant 0 : index
    %c0_305 = arith.constant 0 : index
    %784 = vector.load %arg33[%c1_303, %c0_304, %c0_305] : memref<2x1x32xf32, #tpu.memory_space<vmem>>, vector<1x1x32xf32>
    %785 = vector.shape_cast %784 : vector<1x1x32xf32> to vector<1x32xf32>
    %c1_306 = arith.constant 1 : index
    %c0_307 = arith.constant 0 : index
    %c0_308 = arith.constant 0 : index
    %786 = vector.load %arg34[%c1_306, %c0_307, %c0_308] : memref<2x1x32xf32, #tpu.memory_space<vmem>>, vector<1x1x32xf32>
    %787 = vector.shape_cast %786 : vector<1x1x32xf32> to vector<1x32xf32>
    %cst_309 = arith.constant dense<0.000000e+00> : vector<16xf32>
    %788 = vector.multi_reduction <add>, %783, %cst_309 [1] : vector<16x32xf32> to vector<16xf32>
    %789 = vector.shape_cast %788 : vector<16xf32> to vector<16x1xf32>
    %cst_310 = arith.constant 3.200000e+01 : f32
    %790 = vector.broadcast %cst_310 : f32 to vector<16x1xf32>
    %791 = arith.divf %789, %790 : vector<16x1xf32>
    %792 = vector.broadcast %791 : vector<16x1xf32> to vector<16x32xf32>
    %793 = arith.subf %783, %792 : vector<16x32xf32>
    %794 = arith.mulf %793, %793 : vector<16x32xf32>
    %cst_311 = arith.constant dense<0.000000e+00> : vector<16xf32>
    %795 = vector.multi_reduction <add>, %794, %cst_311 [1] : vector<16x32xf32> to vector<16xf32>
    %796 = vector.shape_cast %795 : vector<16xf32> to vector<16x1xf32>
    %cst_312 = arith.constant 3.200000e+01 : f32
    %797 = vector.broadcast %cst_312 : f32 to vector<16x1xf32>
    %798 = arith.divf %796, %797 : vector<16x1xf32>
    %cst_313 = arith.constant 9.99999974E-6 : f32
    %799 = vector.broadcast %cst_313 : f32 to vector<16x1xf32>
    %800 = arith.addf %798, %799 : vector<16x1xf32>
    %801 = math.rsqrt %800 : vector<16x1xf32>
    %802 = vector.broadcast %801 : vector<16x1xf32> to vector<16x32xf32>
    %803 = arith.mulf %793, %802 : vector<16x32xf32>
    %804 = vector.broadcast %785 : vector<1x32xf32> to vector<16x32xf32>
    %805 = arith.mulf %803, %804 : vector<16x32xf32>
    %806 = vector.broadcast %787 : vector<1x32xf32> to vector<16x32xf32>
    %807 = arith.addf %805, %806 : vector<16x32xf32>
    %c0_314 = arith.constant 0 : index
    %c0_315 = arith.constant 0 : index
    %808 = vector.load %arg2[%c0_314, %c0_315] : memref<2x8xi32, #tpu.memory_space<vmem>>, vector<2x8xi32>
    %c0_316 = arith.constant 0 : index
    %c0_317 = arith.constant 0 : index
    %809 = vector.load %arg35[%c0_316, %c0_317] : memref<128x32xf32, #tpu.memory_space<vmem>>, vector<128x32xf32>
    %c0_318 = arith.constant 0 : index
    %c0_319 = arith.constant 0 : index
    %810 = vector.load %arg36[%c0_318, %c0_319] : memref<16x32xf32, #tpu.memory_space<vmem>>, vector<16x32xf32>
    %811 = tpu.iota {dimensions = array<i32: 2>} : vector<2x8x128xi32>
    %812 = vector.shape_cast %808 : vector<2x8xi32> to vector<2x8x1xi32>
    %813 = vector.broadcast %812 : vector<2x8x1xi32> to vector<2x8x128xi32>
    %814 = arith.cmpi eq, %811, %813 : vector<2x8x128xi32>
    %815 = arith.extui %814 : vector<2x8x128xi1> to vector<2x8x128xi32>
    %816 = arith.sitofp %815 : vector<2x8x128xi32> to vector<2x8x128xf32>
    %817 = vector.shape_cast %816 : vector<2x8x128xf32> to vector<16x128xf32>
    %cst_320 = arith.constant dense<0.000000e+00> : vector<16x32xf32>
    %818 = tpu.matmul %817, %809, %cst_320 {dimension_numbers = #tpu.dot_dimension_numbers<[1], [0], [0], [1], [0, 0, 1, 1], [], []>} : vector<16x128xf32>, vector<128x32xf32>, vector<16x32xf32> -> vector<16x32xf32>
    %819 = vector.extract_strided_slice %810 {offsets = [0, 0], sizes = [8, 32], strides = [1, 1]} : vector<16x32xf32> to vector<8x32xf32>
    %820 = vector.shape_cast %819 : vector<8x32xf32> to vector<1x8x32xf32>
    %821 = vector.shape_cast %820 : vector<1x8x32xf32> to vector<1x8x32xf32>
    %822 = vector.broadcast %821 : vector<1x8x32xf32> to vector<2x8x32xf32>
    %823 = vector.shape_cast %822 : vector<2x8x32xf32> to vector<16x32xf32>
    %824 = arith.addf %818, %823 : vector<16x32xf32>
    %c0_321 = arith.constant 0 : index
    %c0_322 = arith.constant 0 : index
    %825 = vector.load %arg37[%c0_321, %c0_322] : memref<1x32xf32, #tpu.memory_space<vmem>>, vector<1x32xf32>
    %c0_323 = arith.constant 0 : index
    %c0_324 = arith.constant 0 : index
    %826 = vector.load %arg38[%c0_323, %c0_324] : memref<1x32xf32, #tpu.memory_space<vmem>>, vector<1x32xf32>
    %cst_325 = arith.constant dense<0.000000e+00> : vector<16xf32>
    %827 = vector.multi_reduction <add>, %824, %cst_325 [1] : vector<16x32xf32> to vector<16xf32>
    %828 = vector.shape_cast %827 : vector<16xf32> to vector<16x1xf32>
    %cst_326 = arith.constant 3.200000e+01 : f32
    %829 = vector.broadcast %cst_326 : f32 to vector<16x1xf32>
    %830 = arith.divf %828, %829 : vector<16x1xf32>
    %831 = vector.broadcast %830 : vector<16x1xf32> to vector<16x32xf32>
    %832 = arith.subf %824, %831 : vector<16x32xf32>
    %833 = arith.mulf %832, %832 : vector<16x32xf32>
    %cst_327 = arith.constant dense<0.000000e+00> : vector<16xf32>
    %834 = vector.multi_reduction <add>, %833, %cst_327 [1] : vector<16x32xf32> to vector<16xf32>
    %835 = vector.shape_cast %834 : vector<16xf32> to vector<16x1xf32>
    %cst_328 = arith.constant 3.200000e+01 : f32
    %836 = vector.broadcast %cst_328 : f32 to vector<16x1xf32>
    %837 = arith.divf %835, %836 : vector<16x1xf32>
    %cst_329 = arith.constant 9.99999974E-6 : f32
    %838 = vector.broadcast %cst_329 : f32 to vector<16x1xf32>
    %839 = arith.addf %837, %838 : vector<16x1xf32>
    %840 = math.rsqrt %839 : vector<16x1xf32>
    %841 = vector.broadcast %840 : vector<16x1xf32> to vector<16x32xf32>
    %842 = arith.mulf %832, %841 : vector<16x32xf32>
    %843 = vector.broadcast %825 : vector<1x32xf32> to vector<16x32xf32>
    %844 = arith.mulf %842, %843 : vector<16x32xf32>
    %845 = vector.broadcast %826 : vector<1x32xf32> to vector<16x32xf32>
    %846 = arith.addf %844, %845 : vector<16x32xf32>
    %c0_330 = arith.constant 0 : index
    %c0_331 = arith.constant 0 : index
    %c0_332 = arith.constant 0 : index
    %847 = vector.load %arg39[%c0_330, %c0_331, %c0_332] : memref<2x32x96xf32, #tpu.memory_space<vmem>>, vector<1x32x96xf32>
    %848 = vector.shape_cast %847 : vector<1x32x96xf32> to vector<32x96xf32>
    %cst_333 = arith.constant dense<0.000000e+00> : vector<16x96xf32>
    %849 = tpu.matmul %846, %848, %cst_333 {dimension_numbers = #tpu.dot_dimension_numbers<[1], [0], [0], [1], [0, 0, 1, 1], [], []>} : vector<16x32xf32>, vector<32x96xf32>, vector<16x96xf32> -> vector<16x96xf32>
    %c0_334 = arith.constant 0 : index
    %c0_335 = arith.constant 0 : index
    %c0_336 = arith.constant 0 : index
    %850 = vector.load %arg40[%c0_334, %c0_335, %c0_336] : memref<2x1x96xf32, #tpu.memory_space<vmem>>, vector<1x1x96xf32>
    %851 = vector.shape_cast %850 : vector<1x1x96xf32> to vector<1x96xf32>
    %852 = vector.broadcast %851 : vector<1x96xf32> to vector<16x96xf32>
    %853 = arith.addf %849, %852 : vector<16x96xf32>
    %854 = vector.extract_strided_slice %853 {offsets = [0, 0], sizes = [16, 32], strides = [1, 1]} : vector<16x96xf32> to vector<16x32xf32>
    %855 = vector.extract_strided_slice %853 {offsets = [0, 32], sizes = [16, 32], strides = [1, 1]} : vector<16x96xf32> to vector<16x32xf32>
    %856 = vector.extract_strided_slice %853 {offsets = [0, 64], sizes = [16, 32], strides = [1, 1]} : vector<16x96xf32> to vector<16x32xf32>
    %857 = vector.extract_strided_slice %854 {offsets = [0, 0], sizes = [16, 8], strides = [1, 1]} : vector<16x32xf32> to vector<16x8xf32>
    %858 = vector.shape_cast %857 : vector<16x8xf32> to vector<2x8x8xf32>
    %859 = vector.extract_strided_slice %855 {offsets = [0, 0], sizes = [16, 8], strides = [1, 1]} : vector<16x32xf32> to vector<16x8xf32>
    %860 = vector.shape_cast %859 : vector<16x8xf32> to vector<2x8x8xf32>
    %861 = vector.extract_strided_slice %856 {offsets = [0, 0], sizes = [16, 8], strides = [1, 1]} : vector<16x32xf32> to vector<16x8xf32>
    %862 = vector.shape_cast %861 : vector<16x8xf32> to vector<2x8x8xf32>
    "tpu.trace_start"() <{level = 10 : i32, message = "bqd,bkd->bqk"}> : () -> ()
    %cst_337 = arith.constant dense<0.000000e+00> : vector<2x8x8xf32>
    %863 = tpu.matmul %858, %860, %cst_337 {dimension_numbers = #tpu.dot_dimension_numbers<[2], [2], [1], [1], [0, 0, 0, 1, 1, 1], [0], [0]>} : vector<2x8x8xf32>, vector<2x8x8xf32>, vector<2x8x8xf32> -> vector<2x8x8xf32>
    "tpu.trace_stop"() : () -> ()
    %864 = arith.addf %863, %23 : vector<2x8x8xf32>
    %cst_338 = arith.constant dense<0xFF800000> : vector<2x8xf32>
    %865 = vector.multi_reduction <maximumf>, %864, %cst_338 [2] : vector<2x8x8xf32> to vector<2x8xf32>
    %866 = vector.shape_cast %865 : vector<2x8xf32> to vector<2x8x1xf32>
    %867 = vector.broadcast %866 : vector<2x8x1xf32> to vector<2x8x8xf32>
    %868 = arith.subf %864, %867 : vector<2x8x8xf32>
    %869 = math.exp %868 : vector<2x8x8xf32>
    %cst_339 = arith.constant dense<0.000000e+00> : vector<2x8xf32>
    %870 = vector.multi_reduction <add>, %869, %cst_339 [2] : vector<2x8x8xf32> to vector<2x8xf32>
    %871 = vector.shape_cast %870 : vector<2x8xf32> to vector<2x8x1xf32>
    %872 = tpu.reciprocal %871 {approx = true} : vector<2x8x1xf32> -> vector<2x8x1xf32>
    %873 = vector.broadcast %872 : vector<2x8x1xf32> to vector<2x8x8xf32>
    %874 = arith.mulf %869, %873 : vector<2x8x8xf32>
    "tpu.trace_start"() <{level = 10 : i32, message = "bqk,bkd->bqd"}> : () -> ()
    %cst_340 = arith.constant dense<0.000000e+00> : vector<2x8x8xf32>
    %875 = tpu.matmul %874, %862, %cst_340 {dimension_numbers = #tpu.dot_dimension_numbers<[2], [1], [1], [2], [0, 0, 0, 1, 1, 2], [0], [0]>} : vector<2x8x8xf32>, vector<2x8x8xf32>, vector<2x8x8xf32> -> vector<2x8x8xf32>
    "tpu.trace_stop"() : () -> ()
    %876 = vector.shape_cast %875 : vector<2x8x8xf32> to vector<16x8xf32>
    %877 = vector.extract_strided_slice %854 {offsets = [0, 8], sizes = [16, 8], strides = [1, 1]} : vector<16x32xf32> to vector<16x8xf32>
    %878 = vector.shape_cast %877 : vector<16x8xf32> to vector<2x8x8xf32>
    %879 = vector.extract_strided_slice %855 {offsets = [0, 8], sizes = [16, 8], strides = [1, 1]} : vector<16x32xf32> to vector<16x8xf32>
    %880 = vector.shape_cast %879 : vector<16x8xf32> to vector<2x8x8xf32>
    %881 = vector.extract_strided_slice %856 {offsets = [0, 8], sizes = [16, 8], strides = [1, 1]} : vector<16x32xf32> to vector<16x8xf32>
    %882 = vector.shape_cast %881 : vector<16x8xf32> to vector<2x8x8xf32>
    "tpu.trace_start"() <{level = 10 : i32, message = "bqd,bkd->bqk"}> : () -> ()
    %cst_341 = arith.constant dense<0.000000e+00> : vector<2x8x8xf32>
    %883 = tpu.matmul %878, %880, %cst_341 {dimension_numbers = #tpu.dot_dimension_numbers<[2], [2], [1], [1], [0, 0, 0, 1, 1, 1], [0], [0]>} : vector<2x8x8xf32>, vector<2x8x8xf32>, vector<2x8x8xf32> -> vector<2x8x8xf32>
    "tpu.trace_stop"() : () -> ()
    %884 = arith.addf %883, %23 : vector<2x8x8xf32>
    %cst_342 = arith.constant dense<0xFF800000> : vector<2x8xf32>
    %885 = vector.multi_reduction <maximumf>, %884, %cst_342 [2] : vector<2x8x8xf32> to vector<2x8xf32>
    %886 = vector.shape_cast %885 : vector<2x8xf32> to vector<2x8x1xf32>
    %887 = vector.broadcast %886 : vector<2x8x1xf32> to vector<2x8x8xf32>
    %888 = arith.subf %884, %887 : vector<2x8x8xf32>
    %889 = math.exp %888 : vector<2x8x8xf32>
    %cst_343 = arith.constant dense<0.000000e+00> : vector<2x8xf32>
    %890 = vector.multi_reduction <add>, %889, %cst_343 [2] : vector<2x8x8xf32> to vector<2x8xf32>
    %891 = vector.shape_cast %890 : vector<2x8xf32> to vector<2x8x1xf32>
    %892 = tpu.reciprocal %891 {approx = true} : vector<2x8x1xf32> -> vector<2x8x1xf32>
    %893 = vector.broadcast %892 : vector<2x8x1xf32> to vector<2x8x8xf32>
    %894 = arith.mulf %889, %893 : vector<2x8x8xf32>
    "tpu.trace_start"() <{level = 10 : i32, message = "bqk,bkd->bqd"}> : () -> ()
    %cst_344 = arith.constant dense<0.000000e+00> : vector<2x8x8xf32>
    %895 = tpu.matmul %894, %882, %cst_344 {dimension_numbers = #tpu.dot_dimension_numbers<[2], [1], [1], [2], [0, 0, 0, 1, 1, 2], [0], [0]>} : vector<2x8x8xf32>, vector<2x8x8xf32>, vector<2x8x8xf32> -> vector<2x8x8xf32>
    "tpu.trace_stop"() : () -> ()
    %896 = vector.shape_cast %895 : vector<2x8x8xf32> to vector<16x8xf32>
    %897 = vector.extract_strided_slice %854 {offsets = [0, 16], sizes = [16, 8], strides = [1, 1]} : vector<16x32xf32> to vector<16x8xf32>
    %898 = vector.shape_cast %897 : vector<16x8xf32> to vector<2x8x8xf32>
    %899 = vector.extract_strided_slice %855 {offsets = [0, 16], sizes = [16, 8], strides = [1, 1]} : vector<16x32xf32> to vector<16x8xf32>
    %900 = vector.shape_cast %899 : vector<16x8xf32> to vector<2x8x8xf32>
    %901 = vector.extract_strided_slice %856 {offsets = [0, 16], sizes = [16, 8], strides = [1, 1]} : vector<16x32xf32> to vector<16x8xf32>
    %902 = vector.shape_cast %901 : vector<16x8xf32> to vector<2x8x8xf32>
    "tpu.trace_start"() <{level = 10 : i32, message = "bqd,bkd->bqk"}> : () -> ()
    %cst_345 = arith.constant dense<0.000000e+00> : vector<2x8x8xf32>
    %903 = tpu.matmul %898, %900, %cst_345 {dimension_numbers = #tpu.dot_dimension_numbers<[2], [2], [1], [1], [0, 0, 0, 1, 1, 1], [0], [0]>} : vector<2x8x8xf32>, vector<2x8x8xf32>, vector<2x8x8xf32> -> vector<2x8x8xf32>
    "tpu.trace_stop"() : () -> ()
    %904 = arith.addf %903, %23 : vector<2x8x8xf32>
    %cst_346 = arith.constant dense<0xFF800000> : vector<2x8xf32>
    %905 = vector.multi_reduction <maximumf>, %904, %cst_346 [2] : vector<2x8x8xf32> to vector<2x8xf32>
    %906 = vector.shape_cast %905 : vector<2x8xf32> to vector<2x8x1xf32>
    %907 = vector.broadcast %906 : vector<2x8x1xf32> to vector<2x8x8xf32>
    %908 = arith.subf %904, %907 : vector<2x8x8xf32>
    %909 = math.exp %908 : vector<2x8x8xf32>
    %cst_347 = arith.constant dense<0.000000e+00> : vector<2x8xf32>
    %910 = vector.multi_reduction <add>, %909, %cst_347 [2] : vector<2x8x8xf32> to vector<2x8xf32>
    %911 = vector.shape_cast %910 : vector<2x8xf32> to vector<2x8x1xf32>
    %912 = tpu.reciprocal %911 {approx = true} : vector<2x8x1xf32> -> vector<2x8x1xf32>
    %913 = vector.broadcast %912 : vector<2x8x1xf32> to vector<2x8x8xf32>
    %914 = arith.mulf %909, %913 : vector<2x8x8xf32>
    "tpu.trace_start"() <{level = 10 : i32, message = "bqk,bkd->bqd"}> : () -> ()
    %cst_348 = arith.constant dense<0.000000e+00> : vector<2x8x8xf32>
    %915 = tpu.matmul %914, %902, %cst_348 {dimension_numbers = #tpu.dot_dimension_numbers<[2], [1], [1], [2], [0, 0, 0, 1, 1, 2], [0], [0]>} : vector<2x8x8xf32>, vector<2x8x8xf32>, vector<2x8x8xf32> -> vector<2x8x8xf32>
    "tpu.trace_stop"() : () -> ()
    %916 = vector.shape_cast %915 : vector<2x8x8xf32> to vector<16x8xf32>
    %917 = vector.extract_strided_slice %854 {offsets = [0, 24], sizes = [16, 8], strides = [1, 1]} : vector<16x32xf32> to vector<16x8xf32>
    %918 = vector.shape_cast %917 : vector<16x8xf32> to vector<2x8x8xf32>
    %919 = vector.extract_strided_slice %855 {offsets = [0, 24], sizes = [16, 8], strides = [1, 1]} : vector<16x32xf32> to vector<16x8xf32>
    %920 = vector.shape_cast %919 : vector<16x8xf32> to vector<2x8x8xf32>
    %921 = vector.extract_strided_slice %856 {offsets = [0, 24], sizes = [16, 8], strides = [1, 1]} : vector<16x32xf32> to vector<16x8xf32>
    %922 = vector.shape_cast %921 : vector<16x8xf32> to vector<2x8x8xf32>
    "tpu.trace_start"() <{level = 10 : i32, message = "bqd,bkd->bqk"}> : () -> ()
    %cst_349 = arith.constant dense<0.000000e+00> : vector<2x8x8xf32>
    %923 = tpu.matmul %918, %920, %cst_349 {dimension_numbers = #tpu.dot_dimension_numbers<[2], [2], [1], [1], [0, 0, 0, 1, 1, 1], [0], [0]>} : vector<2x8x8xf32>, vector<2x8x8xf32>, vector<2x8x8xf32> -> vector<2x8x8xf32>
    "tpu.trace_stop"() : () -> ()
    %924 = arith.addf %923, %23 : vector<2x8x8xf32>
    %cst_350 = arith.constant dense<0xFF800000> : vector<2x8xf32>
    %925 = vector.multi_reduction <maximumf>, %924, %cst_350 [2] : vector<2x8x8xf32> to vector<2x8xf32>
    %926 = vector.shape_cast %925 : vector<2x8xf32> to vector<2x8x1xf32>
    %927 = vector.broadcast %926 : vector<2x8x1xf32> to vector<2x8x8xf32>
    %928 = arith.subf %924, %927 : vector<2x8x8xf32>
    %929 = math.exp %928 : vector<2x8x8xf32>
    %cst_351 = arith.constant dense<0.000000e+00> : vector<2x8xf32>
    %930 = vector.multi_reduction <add>, %929, %cst_351 [2] : vector<2x8x8xf32> to vector<2x8xf32>
    %931 = vector.shape_cast %930 : vector<2x8xf32> to vector<2x8x1xf32>
    %932 = tpu.reciprocal %931 {approx = true} : vector<2x8x1xf32> -> vector<2x8x1xf32>
    %933 = vector.broadcast %932 : vector<2x8x1xf32> to vector<2x8x8xf32>
    %934 = arith.mulf %929, %933 : vector<2x8x8xf32>
    "tpu.trace_start"() <{level = 10 : i32, message = "bqk,bkd->bqd"}> : () -> ()
    %cst_352 = arith.constant dense<0.000000e+00> : vector<2x8x8xf32>
    %935 = tpu.matmul %934, %922, %cst_352 {dimension_numbers = #tpu.dot_dimension_numbers<[2], [1], [1], [2], [0, 0, 0, 1, 1, 2], [0], [0]>} : vector<2x8x8xf32>, vector<2x8x8xf32>, vector<2x8x8xf32> -> vector<2x8x8xf32>
    "tpu.trace_stop"() : () -> ()
    %936 = vector.shape_cast %935 : vector<2x8x8xf32> to vector<16x8xf32>
    %937 = tpu.concatenate %876, %896, %916, %936 in 1 : vector<16x8xf32>, vector<16x8xf32>, vector<16x8xf32>, vector<16x8xf32> -> vector<16x32xf32>
    %c0_353 = arith.constant 0 : index
    %c0_354 = arith.constant 0 : index
    %c0_355 = arith.constant 0 : index
    %938 = vector.load %arg41[%c0_353, %c0_354, %c0_355] : memref<2x32x32xf32, #tpu.memory_space<vmem>>, vector<1x32x32xf32>
    %939 = vector.shape_cast %938 : vector<1x32x32xf32> to vector<32x32xf32>
    %cst_356 = arith.constant dense<0.000000e+00> : vector<16x32xf32>
    %940 = tpu.matmul %937, %939, %cst_356 {dimension_numbers = #tpu.dot_dimension_numbers<[1], [0], [0], [1], [0, 0, 1, 1], [], []>} : vector<16x32xf32>, vector<32x32xf32>, vector<16x32xf32> -> vector<16x32xf32>
    %c0_357 = arith.constant 0 : index
    %c0_358 = arith.constant 0 : index
    %c0_359 = arith.constant 0 : index
    %941 = vector.load %arg42[%c0_357, %c0_358, %c0_359] : memref<2x1x32xf32, #tpu.memory_space<vmem>>, vector<1x1x32xf32>
    %942 = vector.shape_cast %941 : vector<1x1x32xf32> to vector<1x32xf32>
    %943 = vector.broadcast %942 : vector<1x32xf32> to vector<16x32xf32>
    %944 = arith.addf %940, %943 : vector<16x32xf32>
    %945 = arith.addf %846, %944 : vector<16x32xf32>
    %c0_360 = arith.constant 0 : index
    %c0_361 = arith.constant 0 : index
    %c0_362 = arith.constant 0 : index
    %946 = vector.load %arg43[%c0_360, %c0_361, %c0_362] : memref<2x1x32xf32, #tpu.memory_space<vmem>>, vector<1x1x32xf32>
    %947 = vector.shape_cast %946 : vector<1x1x32xf32> to vector<1x32xf32>
    %c0_363 = arith.constant 0 : index
    %c0_364 = arith.constant 0 : index
    %c0_365 = arith.constant 0 : index
    %948 = vector.load %arg44[%c0_363, %c0_364, %c0_365] : memref<2x1x32xf32, #tpu.memory_space<vmem>>, vector<1x1x32xf32>
    %949 = vector.shape_cast %948 : vector<1x1x32xf32> to vector<1x32xf32>
    %cst_366 = arith.constant dense<0.000000e+00> : vector<16xf32>
    %950 = vector.multi_reduction <add>, %945, %cst_366 [1] : vector<16x32xf32> to vector<16xf32>
    %951 = vector.shape_cast %950 : vector<16xf32> to vector<16x1xf32>
    %cst_367 = arith.constant 3.200000e+01 : f32
    %952 = vector.broadcast %cst_367 : f32 to vector<16x1xf32>
    %953 = arith.divf %951, %952 : vector<16x1xf32>
    %954 = vector.broadcast %953 : vector<16x1xf32> to vector<16x32xf32>
    %955 = arith.subf %945, %954 : vector<16x32xf32>
    %956 = arith.mulf %955, %955 : vector<16x32xf32>
    %cst_368 = arith.constant dense<0.000000e+00> : vector<16xf32>
    %957 = vector.multi_reduction <add>, %956, %cst_368 [1] : vector<16x32xf32> to vector<16xf32>
    %958 = vector.shape_cast %957 : vector<16xf32> to vector<16x1xf32>
    %cst_369 = arith.constant 3.200000e+01 : f32
    %959 = vector.broadcast %cst_369 : f32 to vector<16x1xf32>
    %960 = arith.divf %958, %959 : vector<16x1xf32>
    %cst_370 = arith.constant 9.99999974E-6 : f32
    %961 = vector.broadcast %cst_370 : f32 to vector<16x1xf32>
    %962 = arith.addf %960, %961 : vector<16x1xf32>
    %963 = math.rsqrt %962 : vector<16x1xf32>
    %964 = vector.broadcast %963 : vector<16x1xf32> to vector<16x32xf32>
    %965 = arith.mulf %955, %964 : vector<16x32xf32>
    %966 = vector.broadcast %947 : vector<1x32xf32> to vector<16x32xf32>
    %967 = arith.mulf %965, %966 : vector<16x32xf32>
    %968 = vector.broadcast %949 : vector<1x32xf32> to vector<16x32xf32>
    %969 = arith.addf %967, %968 : vector<16x32xf32>
    %c0_371 = arith.constant 0 : index
    %c0_372 = arith.constant 0 : index
    %c0_373 = arith.constant 0 : index
    %970 = vector.load %arg45[%c0_371, %c0_372, %c0_373] : memref<2x32x32xf32, #tpu.memory_space<vmem>>, vector<1x32x32xf32>
    %971 = vector.shape_cast %970 : vector<1x32x32xf32> to vector<32x32xf32>
    %cst_374 = arith.constant dense<0.000000e+00> : vector<16x32xf32>
    %972 = tpu.matmul %969, %971, %cst_374 {dimension_numbers = #tpu.dot_dimension_numbers<[1], [0], [0], [1], [0, 0, 1, 1], [], []>} : vector<16x32xf32>, vector<32x32xf32>, vector<16x32xf32> -> vector<16x32xf32>
    %c0_375 = arith.constant 0 : index
    %c0_376 = arith.constant 0 : index
    %c0_377 = arith.constant 0 : index
    %973 = vector.load %arg46[%c0_375, %c0_376, %c0_377] : memref<2x1x32xf32, #tpu.memory_space<vmem>>, vector<1x1x32xf32>
    %974 = vector.shape_cast %973 : vector<1x1x32xf32> to vector<1x32xf32>
    %975 = vector.broadcast %974 : vector<1x32xf32> to vector<16x32xf32>
    %976 = arith.addf %972, %975 : vector<16x32xf32>
    %c0_378 = arith.constant 0 : index
    %c0_379 = arith.constant 0 : index
    %c0_380 = arith.constant 0 : index
    %977 = vector.load %arg47[%c0_378, %c0_379, %c0_380] : memref<2x32x64xf32, #tpu.memory_space<vmem>>, vector<1x32x64xf32>
    %978 = vector.shape_cast %977 : vector<1x32x64xf32> to vector<32x64xf32>
    %cst_381 = arith.constant dense<0.000000e+00> : vector<16x64xf32>
    %979 = tpu.matmul %807, %978, %cst_381 {dimension_numbers = #tpu.dot_dimension_numbers<[1], [0], [0], [1], [0, 0, 1, 1], [], []>} : vector<16x32xf32>, vector<32x64xf32>, vector<16x64xf32> -> vector<16x64xf32>
    %c0_382 = arith.constant 0 : index
    %c0_383 = arith.constant 0 : index
    %c0_384 = arith.constant 0 : index
    %980 = vector.load %arg48[%c0_382, %c0_383, %c0_384] : memref<2x1x64xf32, #tpu.memory_space<vmem>>, vector<1x1x64xf32>
    %981 = vector.shape_cast %980 : vector<1x1x64xf32> to vector<1x64xf32>
    %982 = vector.broadcast %981 : vector<1x64xf32> to vector<16x64xf32>
    %983 = arith.addf %979, %982 : vector<16x64xf32>
    %984 = vector.extract_strided_slice %983 {offsets = [0, 0], sizes = [16, 32], strides = [1, 1]} : vector<16x64xf32> to vector<16x32xf32>
    %985 = vector.extract_strided_slice %983 {offsets = [0, 32], sizes = [16, 32], strides = [1, 1]} : vector<16x64xf32> to vector<16x32xf32>
    %986 = vector.extract_strided_slice %976 {offsets = [0, 0], sizes = [16, 8], strides = [1, 1]} : vector<16x32xf32> to vector<16x8xf32>
    %987 = vector.shape_cast %986 : vector<16x8xf32> to vector<2x8x8xf32>
    %988 = vector.extract_strided_slice %984 {offsets = [0, 0], sizes = [16, 8], strides = [1, 1]} : vector<16x32xf32> to vector<16x8xf32>
    %989 = vector.shape_cast %988 : vector<16x8xf32> to vector<2x8x8xf32>
    %990 = vector.extract_strided_slice %985 {offsets = [0, 0], sizes = [16, 8], strides = [1, 1]} : vector<16x32xf32> to vector<16x8xf32>
    %991 = vector.shape_cast %990 : vector<16x8xf32> to vector<2x8x8xf32>
    "tpu.trace_start"() <{level = 10 : i32, message = "bqd,bkd->bqk"}> : () -> ()
    %cst_385 = arith.constant dense<0.000000e+00> : vector<2x8x8xf32>
    %992 = tpu.matmul %987, %989, %cst_385 {dimension_numbers = #tpu.dot_dimension_numbers<[2], [2], [1], [1], [0, 0, 0, 1, 1, 1], [0], [0]>} : vector<2x8x8xf32>, vector<2x8x8xf32>, vector<2x8x8xf32> -> vector<2x8x8xf32>
    "tpu.trace_stop"() : () -> ()
    %993 = vector.broadcast %6 : vector<2x1x8xf32> to vector<2x8x8xf32>
    %994 = arith.addf %992, %993 : vector<2x8x8xf32>
    %cst_386 = arith.constant dense<0xFF800000> : vector<2x8xf32>
    %995 = vector.multi_reduction <maximumf>, %994, %cst_386 [2] : vector<2x8x8xf32> to vector<2x8xf32>
    %996 = vector.shape_cast %995 : vector<2x8xf32> to vector<2x8x1xf32>
    %997 = vector.broadcast %996 : vector<2x8x1xf32> to vector<2x8x8xf32>
    %998 = arith.subf %994, %997 : vector<2x8x8xf32>
    %999 = math.exp %998 : vector<2x8x8xf32>
    %cst_387 = arith.constant dense<0.000000e+00> : vector<2x8xf32>
    %1000 = vector.multi_reduction <add>, %999, %cst_387 [2] : vector<2x8x8xf32> to vector<2x8xf32>
    %1001 = vector.shape_cast %1000 : vector<2x8xf32> to vector<2x8x1xf32>
    %1002 = tpu.reciprocal %1001 {approx = true} : vector<2x8x1xf32> -> vector<2x8x1xf32>
    %1003 = vector.broadcast %1002 : vector<2x8x1xf32> to vector<2x8x8xf32>
    %1004 = arith.mulf %999, %1003 : vector<2x8x8xf32>
    "tpu.trace_start"() <{level = 10 : i32, message = "bqk,bkd->bqd"}> : () -> ()
    %cst_388 = arith.constant dense<0.000000e+00> : vector<2x8x8xf32>
    %1005 = tpu.matmul %1004, %991, %cst_388 {dimension_numbers = #tpu.dot_dimension_numbers<[2], [1], [1], [2], [0, 0, 0, 1, 1, 2], [0], [0]>} : vector<2x8x8xf32>, vector<2x8x8xf32>, vector<2x8x8xf32> -> vector<2x8x8xf32>
    "tpu.trace_stop"() : () -> ()
    %1006 = vector.shape_cast %1005 : vector<2x8x8xf32> to vector<16x8xf32>
    %1007 = vector.extract_strided_slice %976 {offsets = [0, 8], sizes = [16, 8], strides = [1, 1]} : vector<16x32xf32> to vector<16x8xf32>
    %1008 = vector.shape_cast %1007 : vector<16x8xf32> to vector<2x8x8xf32>
    %1009 = vector.extract_strided_slice %984 {offsets = [0, 8], sizes = [16, 8], strides = [1, 1]} : vector<16x32xf32> to vector<16x8xf32>
    %1010 = vector.shape_cast %1009 : vector<16x8xf32> to vector<2x8x8xf32>
    %1011 = vector.extract_strided_slice %985 {offsets = [0, 8], sizes = [16, 8], strides = [1, 1]} : vector<16x32xf32> to vector<16x8xf32>
    %1012 = vector.shape_cast %1011 : vector<16x8xf32> to vector<2x8x8xf32>
    "tpu.trace_start"() <{level = 10 : i32, message = "bqd,bkd->bqk"}> : () -> ()
    %cst_389 = arith.constant dense<0.000000e+00> : vector<2x8x8xf32>
    %1013 = tpu.matmul %1008, %1010, %cst_389 {dimension_numbers = #tpu.dot_dimension_numbers<[2], [2], [1], [1], [0, 0, 0, 1, 1, 1], [0], [0]>} : vector<2x8x8xf32>, vector<2x8x8xf32>, vector<2x8x8xf32> -> vector<2x8x8xf32>
    "tpu.trace_stop"() : () -> ()
    %1014 = vector.broadcast %6 : vector<2x1x8xf32> to vector<2x8x8xf32>
    %1015 = arith.addf %1013, %1014 : vector<2x8x8xf32>
    %cst_390 = arith.constant dense<0xFF800000> : vector<2x8xf32>
    %1016 = vector.multi_reduction <maximumf>, %1015, %cst_390 [2] : vector<2x8x8xf32> to vector<2x8xf32>
    %1017 = vector.shape_cast %1016 : vector<2x8xf32> to vector<2x8x1xf32>
    %1018 = vector.broadcast %1017 : vector<2x8x1xf32> to vector<2x8x8xf32>
    %1019 = arith.subf %1015, %1018 : vector<2x8x8xf32>
    %1020 = math.exp %1019 : vector<2x8x8xf32>
    %cst_391 = arith.constant dense<0.000000e+00> : vector<2x8xf32>
    %1021 = vector.multi_reduction <add>, %1020, %cst_391 [2] : vector<2x8x8xf32> to vector<2x8xf32>
    %1022 = vector.shape_cast %1021 : vector<2x8xf32> to vector<2x8x1xf32>
    %1023 = tpu.reciprocal %1022 {approx = true} : vector<2x8x1xf32> -> vector<2x8x1xf32>
    %1024 = vector.broadcast %1023 : vector<2x8x1xf32> to vector<2x8x8xf32>
    %1025 = arith.mulf %1020, %1024 : vector<2x8x8xf32>
    "tpu.trace_start"() <{level = 10 : i32, message = "bqk,bkd->bqd"}> : () -> ()
    %cst_392 = arith.constant dense<0.000000e+00> : vector<2x8x8xf32>
    %1026 = tpu.matmul %1025, %1012, %cst_392 {dimension_numbers = #tpu.dot_dimension_numbers<[2], [1], [1], [2], [0, 0, 0, 1, 1, 2], [0], [0]>} : vector<2x8x8xf32>, vector<2x8x8xf32>, vector<2x8x8xf32> -> vector<2x8x8xf32>
    "tpu.trace_stop"() : () -> ()
    %1027 = vector.shape_cast %1026 : vector<2x8x8xf32> to vector<16x8xf32>
    %1028 = vector.extract_strided_slice %976 {offsets = [0, 16], sizes = [16, 8], strides = [1, 1]} : vector<16x32xf32> to vector<16x8xf32>
    %1029 = vector.shape_cast %1028 : vector<16x8xf32> to vector<2x8x8xf32>
    %1030 = vector.extract_strided_slice %984 {offsets = [0, 16], sizes = [16, 8], strides = [1, 1]} : vector<16x32xf32> to vector<16x8xf32>
    %1031 = vector.shape_cast %1030 : vector<16x8xf32> to vector<2x8x8xf32>
    %1032 = vector.extract_strided_slice %985 {offsets = [0, 16], sizes = [16, 8], strides = [1, 1]} : vector<16x32xf32> to vector<16x8xf32>
    %1033 = vector.shape_cast %1032 : vector<16x8xf32> to vector<2x8x8xf32>
    "tpu.trace_start"() <{level = 10 : i32, message = "bqd,bkd->bqk"}> : () -> ()
    %cst_393 = arith.constant dense<0.000000e+00> : vector<2x8x8xf32>
    %1034 = tpu.matmul %1029, %1031, %cst_393 {dimension_numbers = #tpu.dot_dimension_numbers<[2], [2], [1], [1], [0, 0, 0, 1, 1, 1], [0], [0]>} : vector<2x8x8xf32>, vector<2x8x8xf32>, vector<2x8x8xf32> -> vector<2x8x8xf32>
    "tpu.trace_stop"() : () -> ()
    %1035 = vector.broadcast %6 : vector<2x1x8xf32> to vector<2x8x8xf32>
    %1036 = arith.addf %1034, %1035 : vector<2x8x8xf32>
    %cst_394 = arith.constant dense<0xFF800000> : vector<2x8xf32>
    %1037 = vector.multi_reduction <maximumf>, %1036, %cst_394 [2] : vector<2x8x8xf32> to vector<2x8xf32>
    %1038 = vector.shape_cast %1037 : vector<2x8xf32> to vector<2x8x1xf32>
    %1039 = vector.broadcast %1038 : vector<2x8x1xf32> to vector<2x8x8xf32>
    %1040 = arith.subf %1036, %1039 : vector<2x8x8xf32>
    %1041 = math.exp %1040 : vector<2x8x8xf32>
    %cst_395 = arith.constant dense<0.000000e+00> : vector<2x8xf32>
    %1042 = vector.multi_reduction <add>, %1041, %cst_395 [2] : vector<2x8x8xf32> to vector<2x8xf32>
    %1043 = vector.shape_cast %1042 : vector<2x8xf32> to vector<2x8x1xf32>
    %1044 = tpu.reciprocal %1043 {approx = true} : vector<2x8x1xf32> -> vector<2x8x1xf32>
    %1045 = vector.broadcast %1044 : vector<2x8x1xf32> to vector<2x8x8xf32>
    %1046 = arith.mulf %1041, %1045 : vector<2x8x8xf32>
    "tpu.trace_start"() <{level = 10 : i32, message = "bqk,bkd->bqd"}> : () -> ()
    %cst_396 = arith.constant dense<0.000000e+00> : vector<2x8x8xf32>
    %1047 = tpu.matmul %1046, %1033, %cst_396 {dimension_numbers = #tpu.dot_dimension_numbers<[2], [1], [1], [2], [0, 0, 0, 1, 1, 2], [0], [0]>} : vector<2x8x8xf32>, vector<2x8x8xf32>, vector<2x8x8xf32> -> vector<2x8x8xf32>
    "tpu.trace_stop"() : () -> ()
    %1048 = vector.shape_cast %1047 : vector<2x8x8xf32> to vector<16x8xf32>
    %1049 = vector.extract_strided_slice %976 {offsets = [0, 24], sizes = [16, 8], strides = [1, 1]} : vector<16x32xf32> to vector<16x8xf32>
    %1050 = vector.shape_cast %1049 : vector<16x8xf32> to vector<2x8x8xf32>
    %1051 = vector.extract_strided_slice %984 {offsets = [0, 24], sizes = [16, 8], strides = [1, 1]} : vector<16x32xf32> to vector<16x8xf32>
    %1052 = vector.shape_cast %1051 : vector<16x8xf32> to vector<2x8x8xf32>
    %1053 = vector.extract_strided_slice %985 {offsets = [0, 24], sizes = [16, 8], strides = [1, 1]} : vector<16x32xf32> to vector<16x8xf32>
    %1054 = vector.shape_cast %1053 : vector<16x8xf32> to vector<2x8x8xf32>
    "tpu.trace_start"() <{level = 10 : i32, message = "bqd,bkd->bqk"}> : () -> ()
    %cst_397 = arith.constant dense<0.000000e+00> : vector<2x8x8xf32>
    %1055 = tpu.matmul %1050, %1052, %cst_397 {dimension_numbers = #tpu.dot_dimension_numbers<[2], [2], [1], [1], [0, 0, 0, 1, 1, 1], [0], [0]>} : vector<2x8x8xf32>, vector<2x8x8xf32>, vector<2x8x8xf32> -> vector<2x8x8xf32>
    "tpu.trace_stop"() : () -> ()
    %1056 = vector.broadcast %6 : vector<2x1x8xf32> to vector<2x8x8xf32>
    %1057 = arith.addf %1055, %1056 : vector<2x8x8xf32>
    %cst_398 = arith.constant dense<0xFF800000> : vector<2x8xf32>
    %1058 = vector.multi_reduction <maximumf>, %1057, %cst_398 [2] : vector<2x8x8xf32> to vector<2x8xf32>
    %1059 = vector.shape_cast %1058 : vector<2x8xf32> to vector<2x8x1xf32>
    %1060 = vector.broadcast %1059 : vector<2x8x1xf32> to vector<2x8x8xf32>
    %1061 = arith.subf %1057, %1060 : vector<2x8x8xf32>
    %1062 = math.exp %1061 : vector<2x8x8xf32>
    %cst_399 = arith.constant dense<0.000000e+00> : vector<2x8xf32>
    %1063 = vector.multi_reduction <add>, %1062, %cst_399 [2] : vector<2x8x8xf32> to vector<2x8xf32>
    %1064 = vector.shape_cast %1063 : vector<2x8xf32> to vector<2x8x1xf32>
    %1065 = tpu.reciprocal %1064 {approx = true} : vector<2x8x1xf32> -> vector<2x8x1xf32>
    %1066 = vector.broadcast %1065 : vector<2x8x1xf32> to vector<2x8x8xf32>
    %1067 = arith.mulf %1062, %1066 : vector<2x8x8xf32>
    "tpu.trace_start"() <{level = 10 : i32, message = "bqk,bkd->bqd"}> : () -> ()
    %cst_400 = arith.constant dense<0.000000e+00> : vector<2x8x8xf32>
    %1068 = tpu.matmul %1067, %1054, %cst_400 {dimension_numbers = #tpu.dot_dimension_numbers<[2], [1], [1], [2], [0, 0, 0, 1, 1, 2], [0], [0]>} : vector<2x8x8xf32>, vector<2x8x8xf32>, vector<2x8x8xf32> -> vector<2x8x8xf32>
    "tpu.trace_stop"() : () -> ()
    %1069 = vector.shape_cast %1068 : vector<2x8x8xf32> to vector<16x8xf32>
    %1070 = tpu.concatenate %1006, %1027, %1048, %1069 in 1 : vector<16x8xf32>, vector<16x8xf32>, vector<16x8xf32>, vector<16x8xf32> -> vector<16x32xf32>
    %c0_401 = arith.constant 0 : index
    %c0_402 = arith.constant 0 : index
    %c0_403 = arith.constant 0 : index
    %1071 = vector.load %arg49[%c0_401, %c0_402, %c0_403] : memref<2x32x32xf32, #tpu.memory_space<vmem>>, vector<1x32x32xf32>
    %1072 = vector.shape_cast %1071 : vector<1x32x32xf32> to vector<32x32xf32>
    %cst_404 = arith.constant dense<0.000000e+00> : vector<16x32xf32>
    %1073 = tpu.matmul %1070, %1072, %cst_404 {dimension_numbers = #tpu.dot_dimension_numbers<[1], [0], [0], [1], [0, 0, 1, 1], [], []>} : vector<16x32xf32>, vector<32x32xf32>, vector<16x32xf32> -> vector<16x32xf32>
    %c0_405 = arith.constant 0 : index
    %c0_406 = arith.constant 0 : index
    %c0_407 = arith.constant 0 : index
    %1074 = vector.load %arg50[%c0_405, %c0_406, %c0_407] : memref<2x1x32xf32, #tpu.memory_space<vmem>>, vector<1x1x32xf32>
    %1075 = vector.shape_cast %1074 : vector<1x1x32xf32> to vector<1x32xf32>
    %1076 = vector.broadcast %1075 : vector<1x32xf32> to vector<16x32xf32>
    %1077 = arith.addf %1073, %1076 : vector<16x32xf32>
    %1078 = arith.addf %969, %1077 : vector<16x32xf32>
    %c0_408 = arith.constant 0 : index
    %c0_409 = arith.constant 0 : index
    %c0_410 = arith.constant 0 : index
    %1079 = vector.load %arg51[%c0_408, %c0_409, %c0_410] : memref<2x1x32xf32, #tpu.memory_space<vmem>>, vector<1x1x32xf32>
    %1080 = vector.shape_cast %1079 : vector<1x1x32xf32> to vector<1x32xf32>
    %c0_411 = arith.constant 0 : index
    %c0_412 = arith.constant 0 : index
    %c0_413 = arith.constant 0 : index
    %1081 = vector.load %arg52[%c0_411, %c0_412, %c0_413] : memref<2x1x32xf32, #tpu.memory_space<vmem>>, vector<1x1x32xf32>
    %1082 = vector.shape_cast %1081 : vector<1x1x32xf32> to vector<1x32xf32>
    %cst_414 = arith.constant dense<0.000000e+00> : vector<16xf32>
    %1083 = vector.multi_reduction <add>, %1078, %cst_414 [1] : vector<16x32xf32> to vector<16xf32>
    %1084 = vector.shape_cast %1083 : vector<16xf32> to vector<16x1xf32>
    %cst_415 = arith.constant 3.200000e+01 : f32
    %1085 = vector.broadcast %cst_415 : f32 to vector<16x1xf32>
    %1086 = arith.divf %1084, %1085 : vector<16x1xf32>
    %1087 = vector.broadcast %1086 : vector<16x1xf32> to vector<16x32xf32>
    %1088 = arith.subf %1078, %1087 : vector<16x32xf32>
    %1089 = arith.mulf %1088, %1088 : vector<16x32xf32>
    %cst_416 = arith.constant dense<0.000000e+00> : vector<16xf32>
    %1090 = vector.multi_reduction <add>, %1089, %cst_416 [1] : vector<16x32xf32> to vector<16xf32>
    %1091 = vector.shape_cast %1090 : vector<16xf32> to vector<16x1xf32>
    %cst_417 = arith.constant 3.200000e+01 : f32
    %1092 = vector.broadcast %cst_417 : f32 to vector<16x1xf32>
    %1093 = arith.divf %1091, %1092 : vector<16x1xf32>
    %cst_418 = arith.constant 9.99999974E-6 : f32
    %1094 = vector.broadcast %cst_418 : f32 to vector<16x1xf32>
    %1095 = arith.addf %1093, %1094 : vector<16x1xf32>
    %1096 = math.rsqrt %1095 : vector<16x1xf32>
    %1097 = vector.broadcast %1096 : vector<16x1xf32> to vector<16x32xf32>
    %1098 = arith.mulf %1088, %1097 : vector<16x32xf32>
    %1099 = vector.broadcast %1080 : vector<1x32xf32> to vector<16x32xf32>
    %1100 = arith.mulf %1098, %1099 : vector<16x32xf32>
    %1101 = vector.broadcast %1082 : vector<1x32xf32> to vector<16x32xf32>
    %1102 = arith.addf %1100, %1101 : vector<16x32xf32>
    %c0_419 = arith.constant 0 : index
    %c0_420 = arith.constant 0 : index
    %c0_421 = arith.constant 0 : index
    %1103 = vector.load %arg53[%c0_419, %c0_420, %c0_421] : memref<2x32x64xf32, #tpu.memory_space<vmem>>, vector<1x32x64xf32>
    %1104 = vector.shape_cast %1103 : vector<1x32x64xf32> to vector<32x64xf32>
    %cst_422 = arith.constant dense<0.000000e+00> : vector<16x64xf32>
    %1105 = tpu.matmul %1102, %1104, %cst_422 {dimension_numbers = #tpu.dot_dimension_numbers<[1], [0], [0], [1], [0, 0, 1, 1], [], []>} : vector<16x32xf32>, vector<32x64xf32>, vector<16x64xf32> -> vector<16x64xf32>
    %c0_423 = arith.constant 0 : index
    %c0_424 = arith.constant 0 : index
    %c0_425 = arith.constant 0 : index
    %1106 = vector.load %arg54[%c0_423, %c0_424, %c0_425] : memref<2x1x64xf32, #tpu.memory_space<vmem>>, vector<1x1x64xf32>
    %1107 = vector.shape_cast %1106 : vector<1x1x64xf32> to vector<1x64xf32>
    %1108 = vector.broadcast %1107 : vector<1x64xf32> to vector<16x64xf32>
    %1109 = arith.addf %1105, %1108 : vector<16x64xf32>
    %1110 = arith.mulf %1109, %1109 : vector<16x64xf32>
    %1111 = arith.mulf %1109, %1110 : vector<16x64xf32>
    %cst_426 = arith.constant 4.471500e-02 : f32
    %1112 = vector.broadcast %cst_426 : f32 to vector<16x64xf32>
    %1113 = arith.mulf %1112, %1111 : vector<16x64xf32>
    %1114 = arith.addf %1109, %1113 : vector<16x64xf32>
    %cst_427 = arith.constant 0.797884583 : f32
    %1115 = vector.broadcast %cst_427 : f32 to vector<16x64xf32>
    %1116 = arith.mulf %1115, %1114 : vector<16x64xf32>
    %1117 = math.tanh %1116 : vector<16x64xf32>
    %cst_428 = arith.constant 1.000000e+00 : f32
    %1118 = vector.broadcast %cst_428 : f32 to vector<16x64xf32>
    %1119 = arith.addf %1118, %1117 : vector<16x64xf32>
    %cst_429 = arith.constant 5.000000e-01 : f32
    %1120 = vector.broadcast %cst_429 : f32 to vector<16x64xf32>
    %1121 = arith.mulf %1120, %1119 : vector<16x64xf32>
    %1122 = arith.mulf %1109, %1121 : vector<16x64xf32>
    %c0_430 = arith.constant 0 : index
    %c0_431 = arith.constant 0 : index
    %c0_432 = arith.constant 0 : index
    %1123 = vector.load %arg55[%c0_430, %c0_431, %c0_432] : memref<2x64x32xf32, #tpu.memory_space<vmem>>, vector<1x64x32xf32>
    %1124 = vector.shape_cast %1123 : vector<1x64x32xf32> to vector<64x32xf32>
    %cst_433 = arith.constant dense<0.000000e+00> : vector<16x32xf32>
    %1125 = tpu.matmul %1122, %1124, %cst_433 {dimension_numbers = #tpu.dot_dimension_numbers<[1], [0], [0], [1], [0, 0, 1, 1], [], []>} : vector<16x64xf32>, vector<64x32xf32>, vector<16x32xf32> -> vector<16x32xf32>
    %c0_434 = arith.constant 0 : index
    %c0_435 = arith.constant 0 : index
    %c0_436 = arith.constant 0 : index
    %1126 = vector.load %arg56[%c0_434, %c0_435, %c0_436] : memref<2x1x32xf32, #tpu.memory_space<vmem>>, vector<1x1x32xf32>
    %1127 = vector.shape_cast %1126 : vector<1x1x32xf32> to vector<1x32xf32>
    %1128 = vector.broadcast %1127 : vector<1x32xf32> to vector<16x32xf32>
    %1129 = arith.addf %1125, %1128 : vector<16x32xf32>
    %1130 = arith.addf %1102, %1129 : vector<16x32xf32>
    %c0_437 = arith.constant 0 : index
    %c0_438 = arith.constant 0 : index
    %c0_439 = arith.constant 0 : index
    %1131 = vector.load %arg57[%c0_437, %c0_438, %c0_439] : memref<2x1x32xf32, #tpu.memory_space<vmem>>, vector<1x1x32xf32>
    %1132 = vector.shape_cast %1131 : vector<1x1x32xf32> to vector<1x32xf32>
    %c0_440 = arith.constant 0 : index
    %c0_441 = arith.constant 0 : index
    %c0_442 = arith.constant 0 : index
    %1133 = vector.load %arg58[%c0_440, %c0_441, %c0_442] : memref<2x1x32xf32, #tpu.memory_space<vmem>>, vector<1x1x32xf32>
    %1134 = vector.shape_cast %1133 : vector<1x1x32xf32> to vector<1x32xf32>
    %cst_443 = arith.constant dense<0.000000e+00> : vector<16xf32>
    %1135 = vector.multi_reduction <add>, %1130, %cst_443 [1] : vector<16x32xf32> to vector<16xf32>
    %1136 = vector.shape_cast %1135 : vector<16xf32> to vector<16x1xf32>
    %cst_444 = arith.constant 3.200000e+01 : f32
    %1137 = vector.broadcast %cst_444 : f32 to vector<16x1xf32>
    %1138 = arith.divf %1136, %1137 : vector<16x1xf32>
    %1139 = vector.broadcast %1138 : vector<16x1xf32> to vector<16x32xf32>
    %1140 = arith.subf %1130, %1139 : vector<16x32xf32>
    %1141 = arith.mulf %1140, %1140 : vector<16x32xf32>
    %cst_445 = arith.constant dense<0.000000e+00> : vector<16xf32>
    %1142 = vector.multi_reduction <add>, %1141, %cst_445 [1] : vector<16x32xf32> to vector<16xf32>
    %1143 = vector.shape_cast %1142 : vector<16xf32> to vector<16x1xf32>
    %cst_446 = arith.constant 3.200000e+01 : f32
    %1144 = vector.broadcast %cst_446 : f32 to vector<16x1xf32>
    %1145 = arith.divf %1143, %1144 : vector<16x1xf32>
    %cst_447 = arith.constant 9.99999974E-6 : f32
    %1146 = vector.broadcast %cst_447 : f32 to vector<16x1xf32>
    %1147 = arith.addf %1145, %1146 : vector<16x1xf32>
    %1148 = math.rsqrt %1147 : vector<16x1xf32>
    %1149 = vector.broadcast %1148 : vector<16x1xf32> to vector<16x32xf32>
    %1150 = arith.mulf %1140, %1149 : vector<16x32xf32>
    %1151 = vector.broadcast %1132 : vector<1x32xf32> to vector<16x32xf32>
    %1152 = arith.mulf %1150, %1151 : vector<16x32xf32>
    %1153 = vector.broadcast %1134 : vector<1x32xf32> to vector<16x32xf32>
    %1154 = arith.addf %1152, %1153 : vector<16x32xf32>
    %c1_448 = arith.constant 1 : index
    %c0_449 = arith.constant 0 : index
    %c0_450 = arith.constant 0 : index
    %1155 = vector.load %arg39[%c1_448, %c0_449, %c0_450] : memref<2x32x96xf32, #tpu.memory_space<vmem>>, vector<1x32x96xf32>
    %1156 = vector.shape_cast %1155 : vector<1x32x96xf32> to vector<32x96xf32>
    %cst_451 = arith.constant dense<0.000000e+00> : vector<16x96xf32>
    %1157 = tpu.matmul %1154, %1156, %cst_451 {dimension_numbers = #tpu.dot_dimension_numbers<[1], [0], [0], [1], [0, 0, 1, 1], [], []>} : vector<16x32xf32>, vector<32x96xf32>, vector<16x96xf32> -> vector<16x96xf32>
    %c1_452 = arith.constant 1 : index
    %c0_453 = arith.constant 0 : index
    %c0_454 = arith.constant 0 : index
    %1158 = vector.load %arg40[%c1_452, %c0_453, %c0_454] : memref<2x1x96xf32, #tpu.memory_space<vmem>>, vector<1x1x96xf32>
    %1159 = vector.shape_cast %1158 : vector<1x1x96xf32> to vector<1x96xf32>
    %1160 = vector.broadcast %1159 : vector<1x96xf32> to vector<16x96xf32>
    %1161 = arith.addf %1157, %1160 : vector<16x96xf32>
    %1162 = vector.extract_strided_slice %1161 {offsets = [0, 0], sizes = [16, 32], strides = [1, 1]} : vector<16x96xf32> to vector<16x32xf32>
    %1163 = vector.extract_strided_slice %1161 {offsets = [0, 32], sizes = [16, 32], strides = [1, 1]} : vector<16x96xf32> to vector<16x32xf32>
    %1164 = vector.extract_strided_slice %1161 {offsets = [0, 64], sizes = [16, 32], strides = [1, 1]} : vector<16x96xf32> to vector<16x32xf32>
    %1165 = vector.extract_strided_slice %1162 {offsets = [0, 0], sizes = [16, 8], strides = [1, 1]} : vector<16x32xf32> to vector<16x8xf32>
    %1166 = vector.shape_cast %1165 : vector<16x8xf32> to vector<2x8x8xf32>
    %1167 = vector.extract_strided_slice %1163 {offsets = [0, 0], sizes = [16, 8], strides = [1, 1]} : vector<16x32xf32> to vector<16x8xf32>
    %1168 = vector.shape_cast %1167 : vector<16x8xf32> to vector<2x8x8xf32>
    %1169 = vector.extract_strided_slice %1164 {offsets = [0, 0], sizes = [16, 8], strides = [1, 1]} : vector<16x32xf32> to vector<16x8xf32>
    %1170 = vector.shape_cast %1169 : vector<16x8xf32> to vector<2x8x8xf32>
    "tpu.trace_start"() <{level = 10 : i32, message = "bqd,bkd->bqk"}> : () -> ()
    %cst_455 = arith.constant dense<0.000000e+00> : vector<2x8x8xf32>
    %1171 = tpu.matmul %1166, %1168, %cst_455 {dimension_numbers = #tpu.dot_dimension_numbers<[2], [2], [1], [1], [0, 0, 0, 1, 1, 1], [0], [0]>} : vector<2x8x8xf32>, vector<2x8x8xf32>, vector<2x8x8xf32> -> vector<2x8x8xf32>
    "tpu.trace_stop"() : () -> ()
    %1172 = arith.addf %1171, %23 : vector<2x8x8xf32>
    %cst_456 = arith.constant dense<0xFF800000> : vector<2x8xf32>
    %1173 = vector.multi_reduction <maximumf>, %1172, %cst_456 [2] : vector<2x8x8xf32> to vector<2x8xf32>
    %1174 = vector.shape_cast %1173 : vector<2x8xf32> to vector<2x8x1xf32>
    %1175 = vector.broadcast %1174 : vector<2x8x1xf32> to vector<2x8x8xf32>
    %1176 = arith.subf %1172, %1175 : vector<2x8x8xf32>
    %1177 = math.exp %1176 : vector<2x8x8xf32>
    %cst_457 = arith.constant dense<0.000000e+00> : vector<2x8xf32>
    %1178 = vector.multi_reduction <add>, %1177, %cst_457 [2] : vector<2x8x8xf32> to vector<2x8xf32>
    %1179 = vector.shape_cast %1178 : vector<2x8xf32> to vector<2x8x1xf32>
    %1180 = tpu.reciprocal %1179 {approx = true} : vector<2x8x1xf32> -> vector<2x8x1xf32>
    %1181 = vector.broadcast %1180 : vector<2x8x1xf32> to vector<2x8x8xf32>
    %1182 = arith.mulf %1177, %1181 : vector<2x8x8xf32>
    "tpu.trace_start"() <{level = 10 : i32, message = "bqk,bkd->bqd"}> : () -> ()
    %cst_458 = arith.constant dense<0.000000e+00> : vector<2x8x8xf32>
    %1183 = tpu.matmul %1182, %1170, %cst_458 {dimension_numbers = #tpu.dot_dimension_numbers<[2], [1], [1], [2], [0, 0, 0, 1, 1, 2], [0], [0]>} : vector<2x8x8xf32>, vector<2x8x8xf32>, vector<2x8x8xf32> -> vector<2x8x8xf32>
    "tpu.trace_stop"() : () -> ()
    %1184 = vector.shape_cast %1183 : vector<2x8x8xf32> to vector<16x8xf32>
    %1185 = vector.extract_strided_slice %1162 {offsets = [0, 8], sizes = [16, 8], strides = [1, 1]} : vector<16x32xf32> to vector<16x8xf32>
    %1186 = vector.shape_cast %1185 : vector<16x8xf32> to vector<2x8x8xf32>
    %1187 = vector.extract_strided_slice %1163 {offsets = [0, 8], sizes = [16, 8], strides = [1, 1]} : vector<16x32xf32> to vector<16x8xf32>
    %1188 = vector.shape_cast %1187 : vector<16x8xf32> to vector<2x8x8xf32>
    %1189 = vector.extract_strided_slice %1164 {offsets = [0, 8], sizes = [16, 8], strides = [1, 1]} : vector<16x32xf32> to vector<16x8xf32>
    %1190 = vector.shape_cast %1189 : vector<16x8xf32> to vector<2x8x8xf32>
    "tpu.trace_start"() <{level = 10 : i32, message = "bqd,bkd->bqk"}> : () -> ()
    %cst_459 = arith.constant dense<0.000000e+00> : vector<2x8x8xf32>
    %1191 = tpu.matmul %1186, %1188, %cst_459 {dimension_numbers = #tpu.dot_dimension_numbers<[2], [2], [1], [1], [0, 0, 0, 1, 1, 1], [0], [0]>} : vector<2x8x8xf32>, vector<2x8x8xf32>, vector<2x8x8xf32> -> vector<2x8x8xf32>
    "tpu.trace_stop"() : () -> ()
    %1192 = arith.addf %1191, %23 : vector<2x8x8xf32>
    %cst_460 = arith.constant dense<0xFF800000> : vector<2x8xf32>
    %1193 = vector.multi_reduction <maximumf>, %1192, %cst_460 [2] : vector<2x8x8xf32> to vector<2x8xf32>
    %1194 = vector.shape_cast %1193 : vector<2x8xf32> to vector<2x8x1xf32>
    %1195 = vector.broadcast %1194 : vector<2x8x1xf32> to vector<2x8x8xf32>
    %1196 = arith.subf %1192, %1195 : vector<2x8x8xf32>
    %1197 = math.exp %1196 : vector<2x8x8xf32>
    %cst_461 = arith.constant dense<0.000000e+00> : vector<2x8xf32>
    %1198 = vector.multi_reduction <add>, %1197, %cst_461 [2] : vector<2x8x8xf32> to vector<2x8xf32>
    %1199 = vector.shape_cast %1198 : vector<2x8xf32> to vector<2x8x1xf32>
    %1200 = tpu.reciprocal %1199 {approx = true} : vector<2x8x1xf32> -> vector<2x8x1xf32>
    %1201 = vector.broadcast %1200 : vector<2x8x1xf32> to vector<2x8x8xf32>
    %1202 = arith.mulf %1197, %1201 : vector<2x8x8xf32>
    "tpu.trace_start"() <{level = 10 : i32, message = "bqk,bkd->bqd"}> : () -> ()
    %cst_462 = arith.constant dense<0.000000e+00> : vector<2x8x8xf32>
    %1203 = tpu.matmul %1202, %1190, %cst_462 {dimension_numbers = #tpu.dot_dimension_numbers<[2], [1], [1], [2], [0, 0, 0, 1, 1, 2], [0], [0]>} : vector<2x8x8xf32>, vector<2x8x8xf32>, vector<2x8x8xf32> -> vector<2x8x8xf32>
    "tpu.trace_stop"() : () -> ()
    %1204 = vector.shape_cast %1203 : vector<2x8x8xf32> to vector<16x8xf32>
    %1205 = vector.extract_strided_slice %1162 {offsets = [0, 16], sizes = [16, 8], strides = [1, 1]} : vector<16x32xf32> to vector<16x8xf32>
    %1206 = vector.shape_cast %1205 : vector<16x8xf32> to vector<2x8x8xf32>
    %1207 = vector.extract_strided_slice %1163 {offsets = [0, 16], sizes = [16, 8], strides = [1, 1]} : vector<16x32xf32> to vector<16x8xf32>
    %1208 = vector.shape_cast %1207 : vector<16x8xf32> to vector<2x8x8xf32>
    %1209 = vector.extract_strided_slice %1164 {offsets = [0, 16], sizes = [16, 8], strides = [1, 1]} : vector<16x32xf32> to vector<16x8xf32>
    %1210 = vector.shape_cast %1209 : vector<16x8xf32> to vector<2x8x8xf32>
    "tpu.trace_start"() <{level = 10 : i32, message = "bqd,bkd->bqk"}> : () -> ()
    %cst_463 = arith.constant dense<0.000000e+00> : vector<2x8x8xf32>
    %1211 = tpu.matmul %1206, %1208, %cst_463 {dimension_numbers = #tpu.dot_dimension_numbers<[2], [2], [1], [1], [0, 0, 0, 1, 1, 1], [0], [0]>} : vector<2x8x8xf32>, vector<2x8x8xf32>, vector<2x8x8xf32> -> vector<2x8x8xf32>
    "tpu.trace_stop"() : () -> ()
    %1212 = arith.addf %1211, %23 : vector<2x8x8xf32>
    %cst_464 = arith.constant dense<0xFF800000> : vector<2x8xf32>
    %1213 = vector.multi_reduction <maximumf>, %1212, %cst_464 [2] : vector<2x8x8xf32> to vector<2x8xf32>
    %1214 = vector.shape_cast %1213 : vector<2x8xf32> to vector<2x8x1xf32>
    %1215 = vector.broadcast %1214 : vector<2x8x1xf32> to vector<2x8x8xf32>
    %1216 = arith.subf %1212, %1215 : vector<2x8x8xf32>
    %1217 = math.exp %1216 : vector<2x8x8xf32>
    %cst_465 = arith.constant dense<0.000000e+00> : vector<2x8xf32>
    %1218 = vector.multi_reduction <add>, %1217, %cst_465 [2] : vector<2x8x8xf32> to vector<2x8xf32>
    %1219 = vector.shape_cast %1218 : vector<2x8xf32> to vector<2x8x1xf32>
    %1220 = tpu.reciprocal %1219 {approx = true} : vector<2x8x1xf32> -> vector<2x8x1xf32>
    %1221 = vector.broadcast %1220 : vector<2x8x1xf32> to vector<2x8x8xf32>
    %1222 = arith.mulf %1217, %1221 : vector<2x8x8xf32>
    "tpu.trace_start"() <{level = 10 : i32, message = "bqk,bkd->bqd"}> : () -> ()
    %cst_466 = arith.constant dense<0.000000e+00> : vector<2x8x8xf32>
    %1223 = tpu.matmul %1222, %1210, %cst_466 {dimension_numbers = #tpu.dot_dimension_numbers<[2], [1], [1], [2], [0, 0, 0, 1, 1, 2], [0], [0]>} : vector<2x8x8xf32>, vector<2x8x8xf32>, vector<2x8x8xf32> -> vector<2x8x8xf32>
    "tpu.trace_stop"() : () -> ()
    %1224 = vector.shape_cast %1223 : vector<2x8x8xf32> to vector<16x8xf32>
    %1225 = vector.extract_strided_slice %1162 {offsets = [0, 24], sizes = [16, 8], strides = [1, 1]} : vector<16x32xf32> to vector<16x8xf32>
    %1226 = vector.shape_cast %1225 : vector<16x8xf32> to vector<2x8x8xf32>
    %1227 = vector.extract_strided_slice %1163 {offsets = [0, 24], sizes = [16, 8], strides = [1, 1]} : vector<16x32xf32> to vector<16x8xf32>
    %1228 = vector.shape_cast %1227 : vector<16x8xf32> to vector<2x8x8xf32>
    %1229 = vector.extract_strided_slice %1164 {offsets = [0, 24], sizes = [16, 8], strides = [1, 1]} : vector<16x32xf32> to vector<16x8xf32>
    %1230 = vector.shape_cast %1229 : vector<16x8xf32> to vector<2x8x8xf32>
    "tpu.trace_start"() <{level = 10 : i32, message = "bqd,bkd->bqk"}> : () -> ()
    %cst_467 = arith.constant dense<0.000000e+00> : vector<2x8x8xf32>
    %1231 = tpu.matmul %1226, %1228, %cst_467 {dimension_numbers = #tpu.dot_dimension_numbers<[2], [2], [1], [1], [0, 0, 0, 1, 1, 1], [0], [0]>} : vector<2x8x8xf32>, vector<2x8x8xf32>, vector<2x8x8xf32> -> vector<2x8x8xf32>
    "tpu.trace_stop"() : () -> ()
    %1232 = arith.addf %1231, %23 : vector<2x8x8xf32>
    %cst_468 = arith.constant dense<0xFF800000> : vector<2x8xf32>
    %1233 = vector.multi_reduction <maximumf>, %1232, %cst_468 [2] : vector<2x8x8xf32> to vector<2x8xf32>
    %1234 = vector.shape_cast %1233 : vector<2x8xf32> to vector<2x8x1xf32>
    %1235 = vector.broadcast %1234 : vector<2x8x1xf32> to vector<2x8x8xf32>
    %1236 = arith.subf %1232, %1235 : vector<2x8x8xf32>
    %1237 = math.exp %1236 : vector<2x8x8xf32>
    %cst_469 = arith.constant dense<0.000000e+00> : vector<2x8xf32>
    %1238 = vector.multi_reduction <add>, %1237, %cst_469 [2] : vector<2x8x8xf32> to vector<2x8xf32>
    %1239 = vector.shape_cast %1238 : vector<2x8xf32> to vector<2x8x1xf32>
    %1240 = tpu.reciprocal %1239 {approx = true} : vector<2x8x1xf32> -> vector<2x8x1xf32>
    %1241 = vector.broadcast %1240 : vector<2x8x1xf32> to vector<2x8x8xf32>
    %1242 = arith.mulf %1237, %1241 : vector<2x8x8xf32>
    "tpu.trace_start"() <{level = 10 : i32, message = "bqk,bkd->bqd"}> : () -> ()
    %cst_470 = arith.constant dense<0.000000e+00> : vector<2x8x8xf32>
    %1243 = tpu.matmul %1242, %1230, %cst_470 {dimension_numbers = #tpu.dot_dimension_numbers<[2], [1], [1], [2], [0, 0, 0, 1, 1, 2], [0], [0]>} : vector<2x8x8xf32>, vector<2x8x8xf32>, vector<2x8x8xf32> -> vector<2x8x8xf32>
    "tpu.trace_stop"() : () -> ()
    %1244 = vector.shape_cast %1243 : vector<2x8x8xf32> to vector<16x8xf32>
    %1245 = tpu.concatenate %1184, %1204, %1224, %1244 in 1 : vector<16x8xf32>, vector<16x8xf32>, vector<16x8xf32>, vector<16x8xf32> -> vector<16x32xf32>
    %c1_471 = arith.constant 1 : index
    %c0_472 = arith.constant 0 : index
    %c0_473 = arith.constant 0 : index
    %1246 = vector.load %arg41[%c1_471, %c0_472, %c0_473] : memref<2x32x32xf32, #tpu.memory_space<vmem>>, vector<1x32x32xf32>
    %1247 = vector.shape_cast %1246 : vector<1x32x32xf32> to vector<32x32xf32>
    %cst_474 = arith.constant dense<0.000000e+00> : vector<16x32xf32>
    %1248 = tpu.matmul %1245, %1247, %cst_474 {dimension_numbers = #tpu.dot_dimension_numbers<[1], [0], [0], [1], [0, 0, 1, 1], [], []>} : vector<16x32xf32>, vector<32x32xf32>, vector<16x32xf32> -> vector<16x32xf32>
    %c1_475 = arith.constant 1 : index
    %c0_476 = arith.constant 0 : index
    %c0_477 = arith.constant 0 : index
    %1249 = vector.load %arg42[%c1_475, %c0_476, %c0_477] : memref<2x1x32xf32, #tpu.memory_space<vmem>>, vector<1x1x32xf32>
    %1250 = vector.shape_cast %1249 : vector<1x1x32xf32> to vector<1x32xf32>
    %1251 = vector.broadcast %1250 : vector<1x32xf32> to vector<16x32xf32>
    %1252 = arith.addf %1248, %1251 : vector<16x32xf32>
    %1253 = arith.addf %1154, %1252 : vector<16x32xf32>
    %c1_478 = arith.constant 1 : index
    %c0_479 = arith.constant 0 : index
    %c0_480 = arith.constant 0 : index
    %1254 = vector.load %arg43[%c1_478, %c0_479, %c0_480] : memref<2x1x32xf32, #tpu.memory_space<vmem>>, vector<1x1x32xf32>
    %1255 = vector.shape_cast %1254 : vector<1x1x32xf32> to vector<1x32xf32>
    %c1_481 = arith.constant 1 : index
    %c0_482 = arith.constant 0 : index
    %c0_483 = arith.constant 0 : index
    %1256 = vector.load %arg44[%c1_481, %c0_482, %c0_483] : memref<2x1x32xf32, #tpu.memory_space<vmem>>, vector<1x1x32xf32>
    %1257 = vector.shape_cast %1256 : vector<1x1x32xf32> to vector<1x32xf32>
    %cst_484 = arith.constant dense<0.000000e+00> : vector<16xf32>
    %1258 = vector.multi_reduction <add>, %1253, %cst_484 [1] : vector<16x32xf32> to vector<16xf32>
    %1259 = vector.shape_cast %1258 : vector<16xf32> to vector<16x1xf32>
    %cst_485 = arith.constant 3.200000e+01 : f32
    %1260 = vector.broadcast %cst_485 : f32 to vector<16x1xf32>
    %1261 = arith.divf %1259, %1260 : vector<16x1xf32>
    %1262 = vector.broadcast %1261 : vector<16x1xf32> to vector<16x32xf32>
    %1263 = arith.subf %1253, %1262 : vector<16x32xf32>
    %1264 = arith.mulf %1263, %1263 : vector<16x32xf32>
    %cst_486 = arith.constant dense<0.000000e+00> : vector<16xf32>
    %1265 = vector.multi_reduction <add>, %1264, %cst_486 [1] : vector<16x32xf32> to vector<16xf32>
    %1266 = vector.shape_cast %1265 : vector<16xf32> to vector<16x1xf32>
    %cst_487 = arith.constant 3.200000e+01 : f32
    %1267 = vector.broadcast %cst_487 : f32 to vector<16x1xf32>
    %1268 = arith.divf %1266, %1267 : vector<16x1xf32>
    %cst_488 = arith.constant 9.99999974E-6 : f32
    %1269 = vector.broadcast %cst_488 : f32 to vector<16x1xf32>
    %1270 = arith.addf %1268, %1269 : vector<16x1xf32>
    %1271 = math.rsqrt %1270 : vector<16x1xf32>
    %1272 = vector.broadcast %1271 : vector<16x1xf32> to vector<16x32xf32>
    %1273 = arith.mulf %1263, %1272 : vector<16x32xf32>
    %1274 = vector.broadcast %1255 : vector<1x32xf32> to vector<16x32xf32>
    %1275 = arith.mulf %1273, %1274 : vector<16x32xf32>
    %1276 = vector.broadcast %1257 : vector<1x32xf32> to vector<16x32xf32>
    %1277 = arith.addf %1275, %1276 : vector<16x32xf32>
    %c1_489 = arith.constant 1 : index
    %c0_490 = arith.constant 0 : index
    %c0_491 = arith.constant 0 : index
    %1278 = vector.load %arg45[%c1_489, %c0_490, %c0_491] : memref<2x32x32xf32, #tpu.memory_space<vmem>>, vector<1x32x32xf32>
    %1279 = vector.shape_cast %1278 : vector<1x32x32xf32> to vector<32x32xf32>
    %cst_492 = arith.constant dense<0.000000e+00> : vector<16x32xf32>
    %1280 = tpu.matmul %1277, %1279, %cst_492 {dimension_numbers = #tpu.dot_dimension_numbers<[1], [0], [0], [1], [0, 0, 1, 1], [], []>} : vector<16x32xf32>, vector<32x32xf32>, vector<16x32xf32> -> vector<16x32xf32>
    %c1_493 = arith.constant 1 : index
    %c0_494 = arith.constant 0 : index
    %c0_495 = arith.constant 0 : index
    %1281 = vector.load %arg46[%c1_493, %c0_494, %c0_495] : memref<2x1x32xf32, #tpu.memory_space<vmem>>, vector<1x1x32xf32>
    %1282 = vector.shape_cast %1281 : vector<1x1x32xf32> to vector<1x32xf32>
    %1283 = vector.broadcast %1282 : vector<1x32xf32> to vector<16x32xf32>
    %1284 = arith.addf %1280, %1283 : vector<16x32xf32>
    %c1_496 = arith.constant 1 : index
    %c0_497 = arith.constant 0 : index
    %c0_498 = arith.constant 0 : index
    %1285 = vector.load %arg47[%c1_496, %c0_497, %c0_498] : memref<2x32x64xf32, #tpu.memory_space<vmem>>, vector<1x32x64xf32>
    %1286 = vector.shape_cast %1285 : vector<1x32x64xf32> to vector<32x64xf32>
    %cst_499 = arith.constant dense<0.000000e+00> : vector<16x64xf32>
    %1287 = tpu.matmul %807, %1286, %cst_499 {dimension_numbers = #tpu.dot_dimension_numbers<[1], [0], [0], [1], [0, 0, 1, 1], [], []>} : vector<16x32xf32>, vector<32x64xf32>, vector<16x64xf32> -> vector<16x64xf32>
    %c1_500 = arith.constant 1 : index
    %c0_501 = arith.constant 0 : index
    %c0_502 = arith.constant 0 : index
    %1288 = vector.load %arg48[%c1_500, %c0_501, %c0_502] : memref<2x1x64xf32, #tpu.memory_space<vmem>>, vector<1x1x64xf32>
    %1289 = vector.shape_cast %1288 : vector<1x1x64xf32> to vector<1x64xf32>
    %1290 = vector.broadcast %1289 : vector<1x64xf32> to vector<16x64xf32>
    %1291 = arith.addf %1287, %1290 : vector<16x64xf32>
    %1292 = vector.extract_strided_slice %1291 {offsets = [0, 0], sizes = [16, 32], strides = [1, 1]} : vector<16x64xf32> to vector<16x32xf32>
    %1293 = vector.extract_strided_slice %1291 {offsets = [0, 32], sizes = [16, 32], strides = [1, 1]} : vector<16x64xf32> to vector<16x32xf32>
    %1294 = vector.extract_strided_slice %1284 {offsets = [0, 0], sizes = [16, 8], strides = [1, 1]} : vector<16x32xf32> to vector<16x8xf32>
    %1295 = vector.shape_cast %1294 : vector<16x8xf32> to vector<2x8x8xf32>
    %1296 = vector.extract_strided_slice %1292 {offsets = [0, 0], sizes = [16, 8], strides = [1, 1]} : vector<16x32xf32> to vector<16x8xf32>
    %1297 = vector.shape_cast %1296 : vector<16x8xf32> to vector<2x8x8xf32>
    %1298 = vector.extract_strided_slice %1293 {offsets = [0, 0], sizes = [16, 8], strides = [1, 1]} : vector<16x32xf32> to vector<16x8xf32>
    %1299 = vector.shape_cast %1298 : vector<16x8xf32> to vector<2x8x8xf32>
    "tpu.trace_start"() <{level = 10 : i32, message = "bqd,bkd->bqk"}> : () -> ()
    %cst_503 = arith.constant dense<0.000000e+00> : vector<2x8x8xf32>
    %1300 = tpu.matmul %1295, %1297, %cst_503 {dimension_numbers = #tpu.dot_dimension_numbers<[2], [2], [1], [1], [0, 0, 0, 1, 1, 1], [0], [0]>} : vector<2x8x8xf32>, vector<2x8x8xf32>, vector<2x8x8xf32> -> vector<2x8x8xf32>
    "tpu.trace_stop"() : () -> ()
    %1301 = vector.broadcast %6 : vector<2x1x8xf32> to vector<2x8x8xf32>
    %1302 = arith.addf %1300, %1301 : vector<2x8x8xf32>
    %cst_504 = arith.constant dense<0xFF800000> : vector<2x8xf32>
    %1303 = vector.multi_reduction <maximumf>, %1302, %cst_504 [2] : vector<2x8x8xf32> to vector<2x8xf32>
    %1304 = vector.shape_cast %1303 : vector<2x8xf32> to vector<2x8x1xf32>
    %1305 = vector.broadcast %1304 : vector<2x8x1xf32> to vector<2x8x8xf32>
    %1306 = arith.subf %1302, %1305 : vector<2x8x8xf32>
    %1307 = math.exp %1306 : vector<2x8x8xf32>
    %cst_505 = arith.constant dense<0.000000e+00> : vector<2x8xf32>
    %1308 = vector.multi_reduction <add>, %1307, %cst_505 [2] : vector<2x8x8xf32> to vector<2x8xf32>
    %1309 = vector.shape_cast %1308 : vector<2x8xf32> to vector<2x8x1xf32>
    %1310 = tpu.reciprocal %1309 {approx = true} : vector<2x8x1xf32> -> vector<2x8x1xf32>
    %1311 = vector.broadcast %1310 : vector<2x8x1xf32> to vector<2x8x8xf32>
    %1312 = arith.mulf %1307, %1311 : vector<2x8x8xf32>
    "tpu.trace_start"() <{level = 10 : i32, message = "bqk,bkd->bqd"}> : () -> ()
    %cst_506 = arith.constant dense<0.000000e+00> : vector<2x8x8xf32>
    %1313 = tpu.matmul %1312, %1299, %cst_506 {dimension_numbers = #tpu.dot_dimension_numbers<[2], [1], [1], [2], [0, 0, 0, 1, 1, 2], [0], [0]>} : vector<2x8x8xf32>, vector<2x8x8xf32>, vector<2x8x8xf32> -> vector<2x8x8xf32>
    "tpu.trace_stop"() : () -> ()
    %1314 = vector.shape_cast %1313 : vector<2x8x8xf32> to vector<16x8xf32>
    %1315 = vector.extract_strided_slice %1284 {offsets = [0, 8], sizes = [16, 8], strides = [1, 1]} : vector<16x32xf32> to vector<16x8xf32>
    %1316 = vector.shape_cast %1315 : vector<16x8xf32> to vector<2x8x8xf32>
    %1317 = vector.extract_strided_slice %1292 {offsets = [0, 8], sizes = [16, 8], strides = [1, 1]} : vector<16x32xf32> to vector<16x8xf32>
    %1318 = vector.shape_cast %1317 : vector<16x8xf32> to vector<2x8x8xf32>
    %1319 = vector.extract_strided_slice %1293 {offsets = [0, 8], sizes = [16, 8], strides = [1, 1]} : vector<16x32xf32> to vector<16x8xf32>
    %1320 = vector.shape_cast %1319 : vector<16x8xf32> to vector<2x8x8xf32>
    "tpu.trace_start"() <{level = 10 : i32, message = "bqd,bkd->bqk"}> : () -> ()
    %cst_507 = arith.constant dense<0.000000e+00> : vector<2x8x8xf32>
    %1321 = tpu.matmul %1316, %1318, %cst_507 {dimension_numbers = #tpu.dot_dimension_numbers<[2], [2], [1], [1], [0, 0, 0, 1, 1, 1], [0], [0]>} : vector<2x8x8xf32>, vector<2x8x8xf32>, vector<2x8x8xf32> -> vector<2x8x8xf32>
    "tpu.trace_stop"() : () -> ()
    %1322 = vector.broadcast %6 : vector<2x1x8xf32> to vector<2x8x8xf32>
    %1323 = arith.addf %1321, %1322 : vector<2x8x8xf32>
    %cst_508 = arith.constant dense<0xFF800000> : vector<2x8xf32>
    %1324 = vector.multi_reduction <maximumf>, %1323, %cst_508 [2] : vector<2x8x8xf32> to vector<2x8xf32>
    %1325 = vector.shape_cast %1324 : vector<2x8xf32> to vector<2x8x1xf32>
    %1326 = vector.broadcast %1325 : vector<2x8x1xf32> to vector<2x8x8xf32>
    %1327 = arith.subf %1323, %1326 : vector<2x8x8xf32>
    %1328 = math.exp %1327 : vector<2x8x8xf32>
    %cst_509 = arith.constant dense<0.000000e+00> : vector<2x8xf32>
    %1329 = vector.multi_reduction <add>, %1328, %cst_509 [2] : vector<2x8x8xf32> to vector<2x8xf32>
    %1330 = vector.shape_cast %1329 : vector<2x8xf32> to vector<2x8x1xf32>
    %1331 = tpu.reciprocal %1330 {approx = true} : vector<2x8x1xf32> -> vector<2x8x1xf32>
    %1332 = vector.broadcast %1331 : vector<2x8x1xf32> to vector<2x8x8xf32>
    %1333 = arith.mulf %1328, %1332 : vector<2x8x8xf32>
    "tpu.trace_start"() <{level = 10 : i32, message = "bqk,bkd->bqd"}> : () -> ()
    %cst_510 = arith.constant dense<0.000000e+00> : vector<2x8x8xf32>
    %1334 = tpu.matmul %1333, %1320, %cst_510 {dimension_numbers = #tpu.dot_dimension_numbers<[2], [1], [1], [2], [0, 0, 0, 1, 1, 2], [0], [0]>} : vector<2x8x8xf32>, vector<2x8x8xf32>, vector<2x8x8xf32> -> vector<2x8x8xf32>
    "tpu.trace_stop"() : () -> ()
    %1335 = vector.shape_cast %1334 : vector<2x8x8xf32> to vector<16x8xf32>
    %1336 = vector.extract_strided_slice %1284 {offsets = [0, 16], sizes = [16, 8], strides = [1, 1]} : vector<16x32xf32> to vector<16x8xf32>
    %1337 = vector.shape_cast %1336 : vector<16x8xf32> to vector<2x8x8xf32>
    %1338 = vector.extract_strided_slice %1292 {offsets = [0, 16], sizes = [16, 8], strides = [1, 1]} : vector<16x32xf32> to vector<16x8xf32>
    %1339 = vector.shape_cast %1338 : vector<16x8xf32> to vector<2x8x8xf32>
    %1340 = vector.extract_strided_slice %1293 {offsets = [0, 16], sizes = [16, 8], strides = [1, 1]} : vector<16x32xf32> to vector<16x8xf32>
    %1341 = vector.shape_cast %1340 : vector<16x8xf32> to vector<2x8x8xf32>
    "tpu.trace_start"() <{level = 10 : i32, message = "bqd,bkd->bqk"}> : () -> ()
    %cst_511 = arith.constant dense<0.000000e+00> : vector<2x8x8xf32>
    %1342 = tpu.matmul %1337, %1339, %cst_511 {dimension_numbers = #tpu.dot_dimension_numbers<[2], [2], [1], [1], [0, 0, 0, 1, 1, 1], [0], [0]>} : vector<2x8x8xf32>, vector<2x8x8xf32>, vector<2x8x8xf32> -> vector<2x8x8xf32>
    "tpu.trace_stop"() : () -> ()
    %1343 = vector.broadcast %6 : vector<2x1x8xf32> to vector<2x8x8xf32>
    %1344 = arith.addf %1342, %1343 : vector<2x8x8xf32>
    %cst_512 = arith.constant dense<0xFF800000> : vector<2x8xf32>
    %1345 = vector.multi_reduction <maximumf>, %1344, %cst_512 [2] : vector<2x8x8xf32> to vector<2x8xf32>
    %1346 = vector.shape_cast %1345 : vector<2x8xf32> to vector<2x8x1xf32>
    %1347 = vector.broadcast %1346 : vector<2x8x1xf32> to vector<2x8x8xf32>
    %1348 = arith.subf %1344, %1347 : vector<2x8x8xf32>
    %1349 = math.exp %1348 : vector<2x8x8xf32>
    %cst_513 = arith.constant dense<0.000000e+00> : vector<2x8xf32>
    %1350 = vector.multi_reduction <add>, %1349, %cst_513 [2] : vector<2x8x8xf32> to vector<2x8xf32>
    %1351 = vector.shape_cast %1350 : vector<2x8xf32> to vector<2x8x1xf32>
    %1352 = tpu.reciprocal %1351 {approx = true} : vector<2x8x1xf32> -> vector<2x8x1xf32>
    %1353 = vector.broadcast %1352 : vector<2x8x1xf32> to vector<2x8x8xf32>
    %1354 = arith.mulf %1349, %1353 : vector<2x8x8xf32>
    "tpu.trace_start"() <{level = 10 : i32, message = "bqk,bkd->bqd"}> : () -> ()
    %cst_514 = arith.constant dense<0.000000e+00> : vector<2x8x8xf32>
    %1355 = tpu.matmul %1354, %1341, %cst_514 {dimension_numbers = #tpu.dot_dimension_numbers<[2], [1], [1], [2], [0, 0, 0, 1, 1, 2], [0], [0]>} : vector<2x8x8xf32>, vector<2x8x8xf32>, vector<2x8x8xf32> -> vector<2x8x8xf32>
    "tpu.trace_stop"() : () -> ()
    %1356 = vector.shape_cast %1355 : vector<2x8x8xf32> to vector<16x8xf32>
    %1357 = vector.extract_strided_slice %1284 {offsets = [0, 24], sizes = [16, 8], strides = [1, 1]} : vector<16x32xf32> to vector<16x8xf32>
    %1358 = vector.shape_cast %1357 : vector<16x8xf32> to vector<2x8x8xf32>
    %1359 = vector.extract_strided_slice %1292 {offsets = [0, 24], sizes = [16, 8], strides = [1, 1]} : vector<16x32xf32> to vector<16x8xf32>
    %1360 = vector.shape_cast %1359 : vector<16x8xf32> to vector<2x8x8xf32>
    %1361 = vector.extract_strided_slice %1293 {offsets = [0, 24], sizes = [16, 8], strides = [1, 1]} : vector<16x32xf32> to vector<16x8xf32>
    %1362 = vector.shape_cast %1361 : vector<16x8xf32> to vector<2x8x8xf32>
    "tpu.trace_start"() <{level = 10 : i32, message = "bqd,bkd->bqk"}> : () -> ()
    %cst_515 = arith.constant dense<0.000000e+00> : vector<2x8x8xf32>
    %1363 = tpu.matmul %1358, %1360, %cst_515 {dimension_numbers = #tpu.dot_dimension_numbers<[2], [2], [1], [1], [0, 0, 0, 1, 1, 1], [0], [0]>} : vector<2x8x8xf32>, vector<2x8x8xf32>, vector<2x8x8xf32> -> vector<2x8x8xf32>
    "tpu.trace_stop"() : () -> ()
    %1364 = vector.broadcast %6 : vector<2x1x8xf32> to vector<2x8x8xf32>
    %1365 = arith.addf %1363, %1364 : vector<2x8x8xf32>
    %cst_516 = arith.constant dense<0xFF800000> : vector<2x8xf32>
    %1366 = vector.multi_reduction <maximumf>, %1365, %cst_516 [2] : vector<2x8x8xf32> to vector<2x8xf32>
    %1367 = vector.shape_cast %1366 : vector<2x8xf32> to vector<2x8x1xf32>
    %1368 = vector.broadcast %1367 : vector<2x8x1xf32> to vector<2x8x8xf32>
    %1369 = arith.subf %1365, %1368 : vector<2x8x8xf32>
    %1370 = math.exp %1369 : vector<2x8x8xf32>
    %cst_517 = arith.constant dense<0.000000e+00> : vector<2x8xf32>
    %1371 = vector.multi_reduction <add>, %1370, %cst_517 [2] : vector<2x8x8xf32> to vector<2x8xf32>
    %1372 = vector.shape_cast %1371 : vector<2x8xf32> to vector<2x8x1xf32>
    %1373 = tpu.reciprocal %1372 {approx = true} : vector<2x8x1xf32> -> vector<2x8x1xf32>
    %1374 = vector.broadcast %1373 : vector<2x8x1xf32> to vector<2x8x8xf32>
    %1375 = arith.mulf %1370, %1374 : vector<2x8x8xf32>
    "tpu.trace_start"() <{level = 10 : i32, message = "bqk,bkd->bqd"}> : () -> ()
    %cst_518 = arith.constant dense<0.000000e+00> : vector<2x8x8xf32>
    %1376 = tpu.matmul %1375, %1362, %cst_518 {dimension_numbers = #tpu.dot_dimension_numbers<[2], [1], [1], [2], [0, 0, 0, 1, 1, 2], [0], [0]>} : vector<2x8x8xf32>, vector<2x8x8xf32>, vector<2x8x8xf32> -> vector<2x8x8xf32>
    "tpu.trace_stop"() : () -> ()
    %1377 = vector.shape_cast %1376 : vector<2x8x8xf32> to vector<16x8xf32>
    %1378 = tpu.concatenate %1314, %1335, %1356, %1377 in 1 : vector<16x8xf32>, vector<16x8xf32>, vector<16x8xf32>, vector<16x8xf32> -> vector<16x32xf32>
    %c1_519 = arith.constant 1 : index
    %c0_520 = arith.constant 0 : index
    %c0_521 = arith.constant 0 : index
    %1379 = vector.load %arg49[%c1_519, %c0_520, %c0_521] : memref<2x32x32xf32, #tpu.memory_space<vmem>>, vector<1x32x32xf32>
    %1380 = vector.shape_cast %1379 : vector<1x32x32xf32> to vector<32x32xf32>
    %cst_522 = arith.constant dense<0.000000e+00> : vector<16x32xf32>
    %1381 = tpu.matmul %1378, %1380, %cst_522 {dimension_numbers = #tpu.dot_dimension_numbers<[1], [0], [0], [1], [0, 0, 1, 1], [], []>} : vector<16x32xf32>, vector<32x32xf32>, vector<16x32xf32> -> vector<16x32xf32>
    %c1_523 = arith.constant 1 : index
    %c0_524 = arith.constant 0 : index
    %c0_525 = arith.constant 0 : index
    %1382 = vector.load %arg50[%c1_523, %c0_524, %c0_525] : memref<2x1x32xf32, #tpu.memory_space<vmem>>, vector<1x1x32xf32>
    %1383 = vector.shape_cast %1382 : vector<1x1x32xf32> to vector<1x32xf32>
    %1384 = vector.broadcast %1383 : vector<1x32xf32> to vector<16x32xf32>
    %1385 = arith.addf %1381, %1384 : vector<16x32xf32>
    %1386 = arith.addf %1277, %1385 : vector<16x32xf32>
    %c1_526 = arith.constant 1 : index
    %c0_527 = arith.constant 0 : index
    %c0_528 = arith.constant 0 : index
    %1387 = vector.load %arg51[%c1_526, %c0_527, %c0_528] : memref<2x1x32xf32, #tpu.memory_space<vmem>>, vector<1x1x32xf32>
    %1388 = vector.shape_cast %1387 : vector<1x1x32xf32> to vector<1x32xf32>
    %c1_529 = arith.constant 1 : index
    %c0_530 = arith.constant 0 : index
    %c0_531 = arith.constant 0 : index
    %1389 = vector.load %arg52[%c1_529, %c0_530, %c0_531] : memref<2x1x32xf32, #tpu.memory_space<vmem>>, vector<1x1x32xf32>
    %1390 = vector.shape_cast %1389 : vector<1x1x32xf32> to vector<1x32xf32>
    %cst_532 = arith.constant dense<0.000000e+00> : vector<16xf32>
    %1391 = vector.multi_reduction <add>, %1386, %cst_532 [1] : vector<16x32xf32> to vector<16xf32>
    %1392 = vector.shape_cast %1391 : vector<16xf32> to vector<16x1xf32>
    %cst_533 = arith.constant 3.200000e+01 : f32
    %1393 = vector.broadcast %cst_533 : f32 to vector<16x1xf32>
    %1394 = arith.divf %1392, %1393 : vector<16x1xf32>
    %1395 = vector.broadcast %1394 : vector<16x1xf32> to vector<16x32xf32>
    %1396 = arith.subf %1386, %1395 : vector<16x32xf32>
    %1397 = arith.mulf %1396, %1396 : vector<16x32xf32>
    %cst_534 = arith.constant dense<0.000000e+00> : vector<16xf32>
    %1398 = vector.multi_reduction <add>, %1397, %cst_534 [1] : vector<16x32xf32> to vector<16xf32>
    %1399 = vector.shape_cast %1398 : vector<16xf32> to vector<16x1xf32>
    %cst_535 = arith.constant 3.200000e+01 : f32
    %1400 = vector.broadcast %cst_535 : f32 to vector<16x1xf32>
    %1401 = arith.divf %1399, %1400 : vector<16x1xf32>
    %cst_536 = arith.constant 9.99999974E-6 : f32
    %1402 = vector.broadcast %cst_536 : f32 to vector<16x1xf32>
    %1403 = arith.addf %1401, %1402 : vector<16x1xf32>
    %1404 = math.rsqrt %1403 : vector<16x1xf32>
    %1405 = vector.broadcast %1404 : vector<16x1xf32> to vector<16x32xf32>
    %1406 = arith.mulf %1396, %1405 : vector<16x32xf32>
    %1407 = vector.broadcast %1388 : vector<1x32xf32> to vector<16x32xf32>
    %1408 = arith.mulf %1406, %1407 : vector<16x32xf32>
    %1409 = vector.broadcast %1390 : vector<1x32xf32> to vector<16x32xf32>
    %1410 = arith.addf %1408, %1409 : vector<16x32xf32>
    %c1_537 = arith.constant 1 : index
    %c0_538 = arith.constant 0 : index
    %c0_539 = arith.constant 0 : index
    %1411 = vector.load %arg53[%c1_537, %c0_538, %c0_539] : memref<2x32x64xf32, #tpu.memory_space<vmem>>, vector<1x32x64xf32>
    %1412 = vector.shape_cast %1411 : vector<1x32x64xf32> to vector<32x64xf32>
    %cst_540 = arith.constant dense<0.000000e+00> : vector<16x64xf32>
    %1413 = tpu.matmul %1410, %1412, %cst_540 {dimension_numbers = #tpu.dot_dimension_numbers<[1], [0], [0], [1], [0, 0, 1, 1], [], []>} : vector<16x32xf32>, vector<32x64xf32>, vector<16x64xf32> -> vector<16x64xf32>
    %c1_541 = arith.constant 1 : index
    %c0_542 = arith.constant 0 : index
    %c0_543 = arith.constant 0 : index
    %1414 = vector.load %arg54[%c1_541, %c0_542, %c0_543] : memref<2x1x64xf32, #tpu.memory_space<vmem>>, vector<1x1x64xf32>
    %1415 = vector.shape_cast %1414 : vector<1x1x64xf32> to vector<1x64xf32>
    %1416 = vector.broadcast %1415 : vector<1x64xf32> to vector<16x64xf32>
    %1417 = arith.addf %1413, %1416 : vector<16x64xf32>
    %1418 = arith.mulf %1417, %1417 : vector<16x64xf32>
    %1419 = arith.mulf %1417, %1418 : vector<16x64xf32>
    %cst_544 = arith.constant 4.471500e-02 : f32
    %1420 = vector.broadcast %cst_544 : f32 to vector<16x64xf32>
    %1421 = arith.mulf %1420, %1419 : vector<16x64xf32>
    %1422 = arith.addf %1417, %1421 : vector<16x64xf32>
    %cst_545 = arith.constant 0.797884583 : f32
    %1423 = vector.broadcast %cst_545 : f32 to vector<16x64xf32>
    %1424 = arith.mulf %1423, %1422 : vector<16x64xf32>
    %1425 = math.tanh %1424 : vector<16x64xf32>
    %cst_546 = arith.constant 1.000000e+00 : f32
    %1426 = vector.broadcast %cst_546 : f32 to vector<16x64xf32>
    %1427 = arith.addf %1426, %1425 : vector<16x64xf32>
    %cst_547 = arith.constant 5.000000e-01 : f32
    %1428 = vector.broadcast %cst_547 : f32 to vector<16x64xf32>
    %1429 = arith.mulf %1428, %1427 : vector<16x64xf32>
    %1430 = arith.mulf %1417, %1429 : vector<16x64xf32>
    %c1_548 = arith.constant 1 : index
    %c0_549 = arith.constant 0 : index
    %c0_550 = arith.constant 0 : index
    %1431 = vector.load %arg55[%c1_548, %c0_549, %c0_550] : memref<2x64x32xf32, #tpu.memory_space<vmem>>, vector<1x64x32xf32>
    %1432 = vector.shape_cast %1431 : vector<1x64x32xf32> to vector<64x32xf32>
    %cst_551 = arith.constant dense<0.000000e+00> : vector<16x32xf32>
    %1433 = tpu.matmul %1430, %1432, %cst_551 {dimension_numbers = #tpu.dot_dimension_numbers<[1], [0], [0], [1], [0, 0, 1, 1], [], []>} : vector<16x64xf32>, vector<64x32xf32>, vector<16x32xf32> -> vector<16x32xf32>
    %c1_552 = arith.constant 1 : index
    %c0_553 = arith.constant 0 : index
    %c0_554 = arith.constant 0 : index
    %1434 = vector.load %arg56[%c1_552, %c0_553, %c0_554] : memref<2x1x32xf32, #tpu.memory_space<vmem>>, vector<1x1x32xf32>
    %1435 = vector.shape_cast %1434 : vector<1x1x32xf32> to vector<1x32xf32>
    %1436 = vector.broadcast %1435 : vector<1x32xf32> to vector<16x32xf32>
    %1437 = arith.addf %1433, %1436 : vector<16x32xf32>
    %1438 = arith.addf %1410, %1437 : vector<16x32xf32>
    %c1_555 = arith.constant 1 : index
    %c0_556 = arith.constant 0 : index
    %c0_557 = arith.constant 0 : index
    %1439 = vector.load %arg57[%c1_555, %c0_556, %c0_557] : memref<2x1x32xf32, #tpu.memory_space<vmem>>, vector<1x1x32xf32>
    %1440 = vector.shape_cast %1439 : vector<1x1x32xf32> to vector<1x32xf32>
    %c1_558 = arith.constant 1 : index
    %c0_559 = arith.constant 0 : index
    %c0_560 = arith.constant 0 : index
    %1441 = vector.load %arg58[%c1_558, %c0_559, %c0_560] : memref<2x1x32xf32, #tpu.memory_space<vmem>>, vector<1x1x32xf32>
    %1442 = vector.shape_cast %1441 : vector<1x1x32xf32> to vector<1x32xf32>
    %cst_561 = arith.constant dense<0.000000e+00> : vector<16xf32>
    %1443 = vector.multi_reduction <add>, %1438, %cst_561 [1] : vector<16x32xf32> to vector<16xf32>
    %1444 = vector.shape_cast %1443 : vector<16xf32> to vector<16x1xf32>
    %cst_562 = arith.constant 3.200000e+01 : f32
    %1445 = vector.broadcast %cst_562 : f32 to vector<16x1xf32>
    %1446 = arith.divf %1444, %1445 : vector<16x1xf32>
    %1447 = vector.broadcast %1446 : vector<16x1xf32> to vector<16x32xf32>
    %1448 = arith.subf %1438, %1447 : vector<16x32xf32>
    %1449 = arith.mulf %1448, %1448 : vector<16x32xf32>
    %cst_563 = arith.constant dense<0.000000e+00> : vector<16xf32>
    %1450 = vector.multi_reduction <add>, %1449, %cst_563 [1] : vector<16x32xf32> to vector<16xf32>
    %1451 = vector.shape_cast %1450 : vector<16xf32> to vector<16x1xf32>
    %cst_564 = arith.constant 3.200000e+01 : f32
    %1452 = vector.broadcast %cst_564 : f32 to vector<16x1xf32>
    %1453 = arith.divf %1451, %1452 : vector<16x1xf32>
    %cst_565 = arith.constant 9.99999974E-6 : f32
    %1454 = vector.broadcast %cst_565 : f32 to vector<16x1xf32>
    %1455 = arith.addf %1453, %1454 : vector<16x1xf32>
    %1456 = math.rsqrt %1455 : vector<16x1xf32>
    %1457 = vector.broadcast %1456 : vector<16x1xf32> to vector<16x32xf32>
    %1458 = arith.mulf %1448, %1457 : vector<16x32xf32>
    %1459 = vector.broadcast %1440 : vector<1x32xf32> to vector<16x32xf32>
    %1460 = arith.mulf %1458, %1459 : vector<16x32xf32>
    %1461 = vector.broadcast %1442 : vector<1x32xf32> to vector<16x32xf32>
    %1462 = arith.addf %1460, %1461 : vector<16x32xf32>
    %c0_566 = arith.constant 0 : index
    %c0_567 = arith.constant 0 : index
    %1463 = vector.load %arg59[%c0_566, %c0_567] : memref<32x128xf32, #tpu.memory_space<vmem>>, vector<32x128xf32>
    %cst_568 = arith.constant dense<0.000000e+00> : vector<16x128xf32>
    %1464 = tpu.matmul %1462, %1463, %cst_568 {dimension_numbers = #tpu.dot_dimension_numbers<[1], [0], [0], [1], [0, 0, 1, 1], [], []>} : vector<16x32xf32>, vector<32x128xf32>, vector<16x128xf32> -> vector<16x128xf32>
    %c0_569 = arith.constant 0 : index
    %c0_570 = arith.constant 0 : index
    %1465 = vector.load %arg60[%c0_569, %c0_570] : memref<1x128xf32, #tpu.memory_space<vmem>>, vector<1x128xf32>
    %1466 = vector.broadcast %1465 : vector<1x128xf32> to vector<16x128xf32>
    %1467 = arith.addf %1464, %1466 : vector<16x128xf32>
    %1468 = vector.shape_cast %1467 : vector<16x128xf32> to vector<2x8x128xf32>
    %c0_571 = arith.constant 0 : index
    %c0_572 = arith.constant 0 : index
    %c0_573 = arith.constant 0 : index
    %1469 = vector.load %arg61[%c0_571, %c0_572, %c0_573] : memref<2x8x128xf32, #tpu.memory_space<vmem>>, vector<2x8x128xf32>
    tpu.vector_store %arg61[%c0_571, %c0_572, %c0_573], %1468 {strides = array<i32>} : memref<2x8x128xf32, #tpu.memory_space<vmem>>, vector<2x8x128xf32>,
    return
  }
}

</mosaic_0001>

<llo_original>
// kernel: forward.1
$region0: #{forward.1}
  #allocation0 [shape = 'u32[]', space=smem, size = 0x4, offset = 0x4, fixed_abs, tag = 'smem constant byte address 0x4 - core index']
  #allocation1 [shape = 'u32[72,128]{1,0:T(1,128)}', space=vmem, size = 0x9000, scoped, tag = 'internal scratch']
  %s0 = inlined_call_operand.smem [shape: u32[62], index: -1, kind: input, shape index: {}]
  %s1 = sld [smem:[%s0]]
  %s2 = scalar_lea.smem %s0, 1
  %s3 = sld [smem:[%s2]]
  %s4 = scalar_lea.smem %s0, 2
  %s5 = sld [smem:[%s4]]
  %s6 = scalar_lea.smem %s0, 3
  %s7 = sld [smem:[%s6]]
  %s8 = scalar_lea.smem %s0, 4
  %s9 = sld [smem:[%s8]]
  %s10 = scalar_lea.smem %s0, 5
  %s11 = sld [smem:[%s10]]
  %s12 = scalar_lea.smem %s0, 6
  %s13 = sld [smem:[%s12]]
  %s14 = scalar_lea.smem %s0, 7
  %s15 = sld [smem:[%s14]]
  %s16 = scalar_lea.smem %s0, 8
  %s17 = sld [smem:[%s16]]
  %s18 = scalar_lea.smem %s0, 9
  %s19 = sld [smem:[%s18]]
  %s20 = scalar_lea.smem %s0, 10
  %s21 = sld [smem:[%s20]]
  %s22 = scalar_lea.smem %s0, 11
  %s23 = sld [smem:[%s22]]
  %s24 = scalar_lea.smem %s0, 12
  %s25 = sld [smem:[%s24]]
  %s26 = scalar_lea.smem %s0, 13
  %s27 = sld [smem:[%s26]]
  %s28 = scalar_lea.smem %s0, 14
  %s29 = sld [smem:[%s28]]
  %s30 = scalar_lea.smem %s0, 15
  %s31 = sld [smem:[%s30]]
  %s32 = scalar_lea.smem %s0, 16
  %s33 = sld [smem:[%s32]]
  %s34 = scalar_lea.smem %s0, 17
  %s35 = sld [smem:[%s34]]
  %s36 = scalar_lea.smem %s0, 18
  %s37 = sld [smem:[%s36]]
  %s38 = scalar_lea.smem %s0, 19
  %s39 = sld [smem:[%s38]]
  %s40 = scalar_lea.smem %s0, 20
  %s41 = sld [smem:[%s40]]
  %s42 = scalar_lea.smem %s0, 21
  %s43 = sld [smem:[%s42]]
  %s44 = scalar_lea.smem %s0, 22
  %s45 = sld [smem:[%s44]]
  %s46 = scalar_lea.smem %s0, 23
  %s47 = sld [smem:[%s46]]
  %s48 = scalar_lea.smem %s0, 24
  %s49 = sld [smem:[%s48]]
  %s50 = scalar_lea.smem %s0, 25
  %s51 = sld [smem:[%s50]]
  %s52 = scalar_lea.smem %s0, 26
  %s53 = sld [smem:[%s52]]
  %s54 = scalar_lea.smem %s0, 27
  %s55 = sld [smem:[%s54]]
  %s56 = scalar_lea.smem %s0, 28
  %s57 = sld [smem:[%s56]]
  %s58 = scalar_lea.smem %s0, 29
  %s59 = sld [smem:[%s58]]
  %s60 = scalar_lea.smem %s0, 30
  %s61 = sld [smem:[%s60]]
  %s62 = scalar_lea.smem %s0, 31
  %s63 = sld [smem:[%s62]]
  %s64 = scalar_lea.smem %s0, 32
  %s65 = sld [smem:[%s64]]
  %s66 = scalar_lea.smem %s0, 33
  %s67 = sld [smem:[%s66]]
  %s68 = scalar_lea.smem %s0, 34
  %s69 = sld [smem:[%s68]]
  %s70 = scalar_lea.smem %s0, 35
  %s71 = sld [smem:[%s70]]
  %s72 = scalar_lea.smem %s0, 36
  %s73 = sld [smem:[%s72]]
  %s74 = scalar_lea.smem %s0, 37
  %s75 = sld [smem:[%s74]]
  %s76 = scalar_lea.smem %s0, 38
  %s77 = sld [smem:[%s76]]
  %s78 = scalar_lea.smem %s0, 39
  %s79 = sld [smem:[%s78]]
  %s80 = scalar_lea.smem %s0, 40
  %s81 = sld [smem:[%s80]]
  %s82 = scalar_lea.smem %s0, 41
  %s83 = sld [smem:[%s82]]
  %s84 = scalar_lea.smem %s0, 42
  %s85 = sld [smem:[%s84]]
  %s86 = scalar_lea.smem %s0, 43
  %s87 = sld [smem:[%s86]]
  %s88 = scalar_lea.smem %s0, 44
  %s89 = sld [smem:[%s88]]
  %s90 = scalar_lea.smem %s0, 45
  %s91 = sld [smem:[%s90]]
  %s92 = scalar_lea.smem %s0, 46
  %s93 = sld [smem:[%s92]]
  %s94 = scalar_lea.smem %s0, 47
  %s95 = sld [smem:[%s94]]
  %s96 = scalar_lea.smem %s0, 48
  %s97 = sld [smem:[%s96]]
  %s98 = scalar_lea.smem %s0, 49
  %s99 = sld [smem:[%s98]]
  %s100 = scalar_lea.smem %s0, 50
  %s101 = sld [smem:[%s100]]
  %s102 = scalar_lea.smem %s0, 51
  %s103 = sld [smem:[%s102]]
  %s104 = scalar_lea.smem %s0, 52
  %s105 = sld [smem:[%s104]]
  %s106 = scalar_lea.smem %s0, 53
  %s107 = sld [smem:[%s106]]
  %s108 = scalar_lea.smem %s0, 54
  %s109 = sld [smem:[%s108]]
  %s110 = scalar_lea.smem %s0, 55
  %s111 = sld [smem:[%s110]]
  %s112 = scalar_lea.smem %s0, 56
  %s113 = sld [smem:[%s112]]
  %s114 = scalar_lea.smem %s0, 57
  %s115 = sld [smem:[%s114]]
  %s116 = scalar_lea.smem %s0, 58
  %s117 = sld [smem:[%s116]]
  %s118 = scalar_lea.smem %s0, 59
  %s119 = sld [smem:[%s118]]
  %s120 = scalar_lea.smem %s0, 60
  %s121 = sld [smem:[%s120]]
  %s122 = scalar_lea.smem %s0, 61
  %s123 = sld [smem:[%s122]]
  %s124 = sld [smem:[#allocation0]]
  $region394: #{forward.1} parent=0
    _
  %s126 = ssub.s32 1, %s124
  %s127 = scalar_select 0, %s126, %s124
  $region1: #{forward.1} parent=0
    #allocation2 [shape = 'u8[8192]{0}', space=vmem, size = 0x2000, scoped, tag = 'input window, operand 5, single buffered']
    #allocation3 [shape = 's32[1]{0}', space=sflag, size = 0x4, scoped, tag = 'scoped memory for forward.1']
    #allocation4 [shape = 's32[1]{0}', space=sflag, size = 0x4, scoped, tag = 'scoped memory for forward.1']
    #allocation5 [shape = 'u8[1024]{0}', space=vmem, size = 0x400, scoped, tag = 'input window, operand 9, single buffered']
    #allocation6 [shape = 's32[1]{0}', space=sflag, size = 0x4, scoped, tag = 'scoped memory for forward.1']
    #allocation7 [shape = 'u8[1024]{0}', space=vmem, size = 0x400, scoped, tag = 'input window, operand 11, single buffered']
    #allocation8 [shape = 'u8[1024]{0}', space=vmem, size = 0x400, scoped, tag = 'input window, operand 13, single buffered']
    #allocation9 [shape = 's32[1]{0}', space=sflag, size = 0x4, scoped, tag = 'scoped memory for forward.1']
    #allocation10 [shape = 'u8[1024]{0}', space=vmem, size = 0x400, scoped, tag = 'input window, operand 15, single buffered']
    #allocation11 [shape = 'u8[1024]{0}', space=vmem, size = 0x400, scoped, tag = 'input window, operand 17, single buffered']
    #allocation12 [shape = 's32[1]{0}', space=sflag, size = 0x4, scoped, tag = 'scoped memory for forward.1']
    #allocation13 [shape = 'u8[8192]{0}', space=vmem, size = 0x2000, scoped, tag = 'input window, operand 20, single buffered']
    #allocation14 [shape = 'u8[512]{0}', space=vmem, size = 0x400, scoped, tag = 'input window, operand 21, single buffered']
    #allocation15 [shape = 's32[1]{0}', space=sflag, size = 0x4, scoped, tag = 'scoped memory for forward.1']
    #allocation16 [shape = 'u8[512]{0}', space=vmem, size = 0x400, scoped, tag = 'input window, operand 22, single buffered']
    #allocation17 [shape = 'u8[1024]{0}', space=vmem, size = 0x400, scoped, tag = 'input window, operand 24, single buffered']
    #allocation18 [shape = 's32[1]{0}', space=sflag, size = 0x4, scoped, tag = 'scoped memory for forward.1']
    #allocation19 [shape = 'u8[1024]{0}', space=vmem, size = 0x400, scoped, tag = 'input window, operand 26, single buffered']
    #allocation20 [shape = 'u8[1024]{0}', space=vmem, size = 0x400, scoped, tag = 'input window, operand 27, single buffered']
    #allocation21 [shape = 's32[1]{0}', space=sflag, size = 0x4, scoped, tag = 'scoped memory for forward.1']
    #allocation22 [shape = 'u8[1024]{0}', space=vmem, size = 0x400, scoped, tag = 'input window, operand 28, single buffered']
    #allocation23 [shape = 'u8[1024]{0}', space=vmem, size = 0x400, scoped, tag = 'input window, operand 30, single buffered']
    #allocation24 [shape = 's32[1]{0}', space=sflag, size = 0x4, scoped, tag = 'scoped memory for forward.1']
    #allocation25 [shape = 'u8[1024]{0}', space=vmem, size = 0x400, scoped, tag = 'input window, operand 32, single buffered']
    #allocation26 [shape = 'u8[1024]{0}', space=vmem, size = 0x400, scoped, tag = 'input window, operand 33, single buffered']
    #allocation27 [shape = 's32[1]{0}', space=sflag, size = 0x4, scoped, tag = 'scoped memory for forward.1']
    #allocation28 [shape = 'u8[1024]{0}', space=vmem, size = 0x400, scoped, tag = 'input window, operand 34, single buffered']
    #allocation29 [shape = 'u8[8192]{0}', space=vmem, size = 0x2000, scoped, tag = 'input window, operand 36, single buffered']
    #allocation30 [shape = 's32[1]{0}', space=sflag, size = 0x4, scoped, tag = 'scoped memory for forward.1']
    #allocation31 [shape = 'u8[512]{0}', space=vmem, size = 0x400, scoped, tag = 'input window, operand 37, single buffered']
    #allocation32 [shape = 'u8[512]{0}', space=vmem, size = 0x400, scoped, tag = 'input window, operand 38, single buffered']
    #allocation33 [shape = 's32[1]{0}', space=sflag, size = 0x4, scoped, tag = 'scoped memory for forward.1']
    #allocation34 [shape = 'u8[1024]{0}', space=vmem, size = 0x400, scoped, tag = 'input window, operand 40, single buffered']
    #allocation35 [shape = 'u8[1024]{0}', space=vmem, size = 0x400, scoped, tag = 'input window, operand 42, single buffered']
    #allocation36 [shape = 's32[1]{0}', space=sflag, size = 0x4, scoped, tag = 'scoped memory for forward.1']
    #allocation37 [shape = 'u8[1024]{0}', space=vmem, size = 0x400, scoped, tag = 'input window, operand 43, single buffered']
    #allocation38 [shape = 'u8[1024]{0}', space=vmem, size = 0x400, scoped, tag = 'input window, operand 44, single buffered']
    #allocation39 [shape = 's32[1]{0}', space=sflag, size = 0x4, scoped, tag = 'scoped memory for forward.1']
    #allocation40 [shape = 'u8[1024]{0}', space=vmem, size = 0x400, scoped, tag = 'input window, operand 46, single buffered']
    #allocation41 [shape = 'u8[1024]{0}', space=vmem, size = 0x400, scoped, tag = 'input window, operand 48, single buffered']
    #allocation42 [shape = 's32[1]{0}', space=sflag, size = 0x4, scoped, tag = 'scoped memory for forward.1']
    #allocation43 [shape = 'u8[1024]{0}', space=vmem, size = 0x400, scoped, tag = 'input window, operand 50, single buffered']
    #allocation44 [shape = 'u8[1024]{0}', space=vmem, size = 0x400, scoped, tag = 'input window, operand 51, single buffered']
    #allocation45 [shape = 's32[1]{0}', space=sflag, size = 0x4, scoped, tag = 'scoped memory for forward.1']
    #allocation46 [shape = 'u8[1024]{0}', space=vmem, size = 0x400, scoped, tag = 'input window, operand 52, single buffered']
    #allocation47 [shape = 'u8[32768]{0}', space=vmem, size = 0x8000, scoped, tag = 'input window, operand 53, single buffered']
    #allocation48 [shape = 's32[1]{0}', space=sflag, size = 0x4, scoped, tag = 'scoped memory for forward.1']
    #allocation49 [shape = 'u8[1024]{0}', space=vmem, size = 0x400, scoped, tag = 'input window, operand 54, single buffered']
    #allocation50 [shape = 'u8[1024]{0}', space=vmem, size = 0x400, scoped, tag = 'input window, operand 56, single buffered']
    #allocation51 [shape = 's32[1]{0}', space=sflag, size = 0x4, scoped, tag = 'scoped memory for forward.1']
    #allocation52 [shape = 'u8[1024]{0}', space=vmem, size = 0x400, scoped, tag = 'input window, operand 57, single buffered']
    #allocation53 [shape = 'u8[1024]{0}', space=vmem, size = 0x400, scoped, tag = 'input window, operand 58, single buffered']
    #allocation54 [shape = 's32[1]{0}', space=sflag, size = 0x4, scoped, tag = 'scoped memory for forward.1']
    #allocation55 [shape = 'u8[512]{0}', space=vmem, size = 0x400, scoped, tag = 'input window, operand 60, single buffered']
    #allocation56 [shape = 'u8[8192]{0}', space=vmem, size = 0x2000, scoped, tag = 'output window, operand 0, single buffered']
    %128 = vsyncpa [#allocation3], 0
    %129 = vsyncpa [#allocation6], 0
    %130 = vsyncpa [#allocation9], 0
    %131 = vsyncpa [#allocation12], 0
    %132 = vsyncpa [#allocation15], 0
    %133 = vsyncpa [#allocation18], 0
    %134 = vsyncpa [#allocation21], 0
    %135 = vsyncpa [#allocation24], 0
    %136 = vsyncpa [#allocation27], 0
    %137 = vsyncpa [#allocation30], 0
    %138 = vsyncpa [#allocation33], 0
    %139 = vsyncpa [#allocation36], 0
    %140 = vsyncpa [#allocation39], 0
    %141 = vsyncpa [#allocation42], 0
    %142 = vsyncpa [#allocation45], 0
    %143 = vsyncpa [#allocation48], 0
    %144 = vsyncpa [#allocation51], 0
    %145 = vsyncpa [#allocation54], 0
    %146 = vsyncpa [#allocation4], 0
    // Predicated region
    $region2: #{forward.1} parent=1 // pred_check
      _
    $region3: #{forward.1} parent=1 // pred_check_branch
      %148 = sbr.rel (0) target = $region5
    $region4: #{forward.1} parent=1 // pred_region
      _
    $region5: #{forward.1} parent=1 // pred_fallthru
      _
    // Predicated region
    $region6: #{forward.1} parent=1 // pred_check
      _
    $region7: #{forward.1} parent=1 // pred_check_branch
      %150 = sbr.rel (0) target = $region9
    $region8: #{forward.1} parent=1 // pred_region
      _
    $region9: #{forward.1} parent=1 // pred_fallthru
      _
    // Predicated region
    $region10: #{forward.1} parent=1 // pred_check
      _
    $region11: #{forward.1} parent=1 // pred_check_branch
      %152 = sbr.rel (0) target = $region13
    $region12: #{forward.1} parent=1 // pred_region
      _
    $region13: #{forward.1} parent=1 // pred_fallthru
      _
    // Predicated region
    $region14: #{forward.1} parent=1 // pred_check
      _
    $region15: #{forward.1} parent=1 // pred_check_branch
      %154 = sbr.rel (0) target = $region17
    $region16: #{forward.1} parent=1 // pred_region
      _
    $region17: #{forward.1} parent=1 // pred_fallthru
      _
    // Predicated region
    $region18: #{forward.1} parent=1 // pred_check
      _
    $region19: #{forward.1} parent=1 // pred_check_branch
      %156 = sbr.rel (0) target = $region21
    $region20: #{forward.1} parent=1 // pred_region
      _
    $region21: #{forward.1} parent=1 // pred_fallthru
      _
    // Predicated region
    $region22: #{forward.1} parent=1 // pred_check
      _
    $region23: #{forward.1} parent=1 // pred_check_branch
      %158 = sbr.rel (0) target = $region25
    $region24: #{forward.1} parent=1 // pred_region
      %160 = vsyncadd [#allocation3], 0
      %s161 = sshll.u32 %s11, 4
      %s162 = int_to_ptr.hbm [resolvable:$true] %s161
      %s163 = sshll.u32 [#allocation2], 4
      %s164 = int_to_ptr.vmem [resolvable:$true] %s163
      %169 = dma.hbm_to_vmem [thread:$0]  %s162, 256, %s164, [#allocation3], 128, 128, 8
    $region25: #{forward.1} parent=1 // pred_fallthru
      _
    // Predicated region
    $region26: #{forward.1} parent=1 // pred_check
      _
    $region27: #{forward.1} parent=1 // pred_check_branch
      %171 = sbr.rel (0) target = $region29
    $region28: #{forward.1} parent=1 // pred_region
      _
    $region29: #{forward.1} parent=1 // pred_fallthru
      _
    // Predicated region
    $region30: #{forward.1} parent=1 // pred_check
      _
    $region31: #{forward.1} parent=1 // pred_check_branch
      %173 = sbr.rel (0) target = $region33
    $region32: #{forward.1} parent=1 // pred_region
      _
    $region33: #{forward.1} parent=1 // pred_fallthru
      _
    // Predicated region
    $region34: #{forward.1} parent=1 // pred_check
      _
    $region35: #{forward.1} parent=1 // pred_check_branch
      %175 = sbr.rel (0) target = $region37
    $region36: #{forward.1} parent=1 // pred_region
      _
    $region37: #{forward.1} parent=1 // pred_fallthru
      _
    // Predicated region
    $region38: #{forward.1} parent=1 // pred_check
      _
    $region39: #{forward.1} parent=1 // pred_check_branch
      %177 = sbr.rel (0) target = $region41
    $region40: #{forward.1} parent=1 // pred_region
      %179 = vsyncadd [#allocation6], 0
      %s180 = sshll.u32 %s19, 4
      %s181 = int_to_ptr.hbm [resolvable:$true] %s180
      %s182 = sshll.u32 [#allocation5], 4
      %s183 = int_to_ptr.vmem [resolvable:$true] %s182
      %188 = dma.hbm_to_vmem [thread:$0]  %s181, 32, %s183, [#allocation6], 16, 16, 1
    $region41: #{forward.1} parent=1 // pred_fallthru
      _
    // Predicated region
    $region42: #{forward.1} parent=1 // pred_check
      _
    $region43: #{forward.1} parent=1 // pred_check_branch
      %190 = sbr.rel (0) target = $region45
    $region44: #{forward.1} parent=1 // pred_region
      _
    $region45: #{forward.1} parent=1 // pred_fallthru
      _
    // Predicated region
    $region46: #{forward.1} parent=1 // pred_check
      _
    $region47: #{forward.1} parent=1 // pred_check_branch
      %192 = sbr.rel (0) target = $region49
    $region48: #{forward.1} parent=1 // pred_region
      %194 = vsyncadd [#allocation6], 0
      %s195 = sshll.u32 %s23, 4
      %s196 = int_to_ptr.hbm [resolvable:$true] %s195
      %s197 = sshll.u32 [#allocation7], 4
      %s198 = int_to_ptr.vmem [resolvable:$true] %s197
      %203 = dma.hbm_to_vmem [thread:$0]  %s196, 32, %s198, [#allocation6], 16, 16, 1
    $region49: #{forward.1} parent=1 // pred_fallthru
      _
    // Predicated region
    $region50: #{forward.1} parent=1 // pred_check
      _
    $region51: #{forward.1} parent=1 // pred_check_branch
      %205 = sbr.rel (0) target = $region53
    $region52: #{forward.1} parent=1 // pred_region
      _
    $region53: #{forward.1} parent=1 // pred_fallthru
      _
    // Predicated region
    $region54: #{forward.1} parent=1 // pred_check
      _
    $region55: #{forward.1} parent=1 // pred_check_branch
      %207 = sbr.rel (0) target = $region57
    $region56: #{forward.1} parent=1 // pred_region
      %209 = vsyncadd [#allocation9], 0
      %s210 = sshll.u32 %s27, 4
      %s211 = int_to_ptr.hbm [resolvable:$true] %s210
      %s212 = sshll.u32 [#allocation8], 4
      %s213 = int_to_ptr.vmem [resolvable:$true] %s212
      %218 = dma.hbm_to_vmem [thread:$0]  %s211, 32, %s213, [#allocation9], 16, 16, 1
    $region57: #{forward.1} parent=1 // pred_fallthru
      _
    // Predicated region
    $region58: #{forward.1} parent=1 // pred_check
      _
    $region59: #{forward.1} parent=1 // pred_check_branch
      %220 = sbr.rel (0) target = $region61
    $region60: #{forward.1} parent=1 // pred_region
      _
    $region61: #{forward.1} parent=1 // pred_fallthru
      _
    // Predicated region
    $region62: #{forward.1} parent=1 // pred_check
      _
    $region63: #{forward.1} parent=1 // pred_check_branch
      %222 = sbr.rel (0) target = $region65
    $region64: #{forward.1} parent=1 // pred_region
      %224 = vsyncadd [#allocation9], 0
      %s225 = sshll.u32 %s31, 4
      %s226 = int_to_ptr.hbm [resolvable:$true] %s225
      %s227 = sshll.u32 [#allocation10], 4
      %s228 = int_to_ptr.vmem [resolvable:$true] %s227
      %233 = dma.hbm_to_vmem [thread:$0]  %s226, 32, %s228, [#allocation9], 16, 16, 1
    $region65: #{forward.1} parent=1 // pred_fallthru
      _
    // Predicated region
    $region66: #{forward.1} parent=1 // pred_check
      _
    $region67: #{forward.1} parent=1 // pred_check_branch
      %235 = sbr.rel (0) target = $region69
    $region68: #{forward.1} parent=1 // pred_region
      _
    $region69: #{forward.1} parent=1 // pred_fallthru
      _
    // Predicated region
    $region70: #{forward.1} parent=1 // pred_check
      _
    $region71: #{forward.1} parent=1 // pred_check_branch
      %237 = sbr.rel (0) target = $region73
    $region72: #{forward.1} parent=1 // pred_region
      %239 = vsyncadd [#allocation12], 0
      %s240 = sshll.u32 %s35, 4
      %s241 = int_to_ptr.hbm [resolvable:$true] %s240
      %s242 = sshll.u32 [#allocation11], 4
      %s243 = int_to_ptr.vmem [resolvable:$true] %s242
      %248 = dma.hbm_to_vmem [thread:$0]  %s241, 32, %s243, [#allocation12], 16, 16, 1
    $region73: #{forward.1} parent=1 // pred_fallthru
      _
    // Predicated region
    $region74: #{forward.1} parent=1 // pred_check
      _
    $region75: #{forward.1} parent=1 // pred_check_branch
      %250 = sbr.rel (0) target = $region77
    $region76: #{forward.1} parent=1 // pred_region
      _
    $region77: #{forward.1} parent=1 // pred_fallthru
      _
    // Predicated region
    $region78: #{forward.1} parent=1 // pred_check
      _
    $region79: #{forward.1} parent=1 // pred_check_branch
      %252 = sbr.rel (0) target = $region81
    $region80: #{forward.1} parent=1 // pred_region
      _
    $region81: #{forward.1} parent=1 // pred_fallthru
      _
    // Predicated region
    $region82: #{forward.1} parent=1 // pred_check
      _
    $region83: #{forward.1} parent=1 // pred_check_branch
      %254 = sbr.rel (0) target = $region85
    $region84: #{forward.1} parent=1 // pred_region
      %256 = vsyncadd [#allocation12], 0
      %s257 = sshll.u32 %s41, 4
      %s258 = int_to_ptr.hbm [resolvable:$true] %s257
      %s259 = sshll.u32 [#allocation13], 4
      %s260 = int_to_ptr.vmem [resolvable:$true] %s259
      %265 = dma.hbm_to_vmem [thread:$0]  %s258, 256, %s260, [#allocation12], 128, 128, 8
    $region85: #{forward.1} parent=1 // pred_fallthru
      _
    // Predicated region
    $region86: #{forward.1} parent=1 // pred_check
      _
    $region87: #{forward.1} parent=1 // pred_check_branch
      %267 = sbr.rel (0) target = $region89
    $region88: #{forward.1} parent=1 // pred_region
      %269 = vsyncadd [#allocation15], 0
      %s271 = sshll.u32 %s43, 4
      %s272 = int_to_ptr.hbm [resolvable:$true] %s271
      %s273 = sshll.u32 [#allocation14], 4
      %s274 = int_to_ptr.vmem [resolvable:$true] %s273
      %276 = dma.hbm_to_vmem [thread:$0]  %s272, 16, %s274, [#allocation15]
    $region89: #{forward.1} parent=1 // pred_fallthru
      _
    // Predicated region
    $region90: #{forward.1} parent=1 // pred_check
      _
    $region91: #{forward.1} parent=1 // pred_check_branch
      %278 = sbr.rel (0) target = $region93
    $region92: #{forward.1} parent=1 // pred_region
      %280 = vsyncadd [#allocation15], 0
      %s282 = sshll.u32 %s45, 4
      %s283 = int_to_ptr.hbm [resolvable:$true] %s282
      %s284 = sshll.u32 [#allocation16], 4
      %s285 = int_to_ptr.vmem [resolvable:$true] %s284
      %287 = dma.hbm_to_vmem [thread:$0]  %s283, 16, %s285, [#allocation15]
    $region93: #{forward.1} parent=1 // pred_fallthru
      _
    // Predicated region
    $region94: #{forward.1} parent=1 // pred_check
      _
    $region95: #{forward.1} parent=1 // pred_check_branch
      %289 = sbr.rel (0) target = $region97
    $region96: #{forward.1} parent=1 // pred_region
      _
    $region97: #{forward.1} parent=1 // pred_fallthru
      _
    // Predicated region
    $region98: #{forward.1} parent=1 // pred_check
      _
    $region99: #{forward.1} parent=1 // pred_check_branch
      %291 = sbr.rel (0) target = $region101
    $region100: #{forward.1} parent=1 // pred_region
      %293 = vsyncadd [#allocation18], 0
      %s294 = sshll.u32 %s49, 4
      %s295 = int_to_ptr.hbm [resolvable:$true] %s294
      %s296 = sshll.u32 [#allocation17], 4
      %s297 = int_to_ptr.vmem [resolvable:$true] %s296
      %302 = dma.hbm_to_vmem [thread:$0]  %s295, 32, %s297, [#allocation18], 16, 16, 1
    $region101: #{forward.1} parent=1 // pred_fallthru
      _
    // Predicated region
    $region102: #{forward.1} parent=1 // pred_check
      _
    $region103: #{forward.1} parent=1 // pred_check_branch
      %304 = sbr.rel (0) target = $region105
    $region104: #{forward.1} parent=1 // pred_region
      _
    $region105: #{forward.1} parent=1 // pred_fallthru
      _
    // Predicated region
    $region106: #{forward.1} parent=1 // pred_check
      _
    $region107: #{forward.1} parent=1 // pred_check_branch
      %306 = sbr.rel (0) target = $region109
    $region108: #{forward.1} parent=1 // pred_region
      %308 = vsyncadd [#allocation18], 0
      %s309 = sshll.u32 %s53, 4
      %s310 = int_to_ptr.hbm [resolvable:$true] %s309
      %s311 = sshll.u32 [#allocation19], 4
      %s312 = int_to_ptr.vmem [resolvable:$true] %s311
      %317 = dma.hbm_to_vmem [thread:$0]  %s310, 32, %s312, [#allocation18], 16, 16, 1
    $region109: #{forward.1} parent=1 // pred_fallthru
      _
    // Predicated region
    $region110: #{forward.1} parent=1 // pred_check
      _
    $region111: #{forward.1} parent=1 // pred_check_branch
      %319 = sbr.rel (0) target = $region113
    $region112: #{forward.1} parent=1 // pred_region
      %321 = vsyncadd [#allocation21], 0
      %s322 = sshll.u32 %s55, 4
      %s323 = int_to_ptr.hbm [resolvable:$true] %s322
      %s324 = sshll.u32 [#allocation20], 4
      %s325 = int_to_ptr.vmem [resolvable:$true] %s324
      %330 = dma.hbm_to_vmem [thread:$0]  %s323, 32, %s325, [#allocation21], 16, 16, 1
    $region113: #{forward.1} parent=1 // pred_fallthru
      _
    // Predicated region
    $region114: #{forward.1} parent=1 // pred_check
      _
    $region115: #{forward.1} parent=1 // pred_check_branch
      %332 = sbr.rel (0) target = $region117
    $region116: #{forward.1} parent=1 // pred_region
      %334 = vsyncadd [#allocation21], 0
      %s335 = sshll.u32 %s57, 4
      %s336 = int_to_ptr.hbm [resolvable:$true] %s335
      %s337 = sshll.u32 [#allocation22], 4
      %s338 = int_to_ptr.vmem [resolvable:$true] %s337
      %343 = dma.hbm_to_vmem [thread:$0]  %s336, 32, %s338, [#allocation21], 16, 16, 1
    $region117: #{forward.1} parent=1 // pred_fallthru
      _
    // Predicated region
    $region118: #{forward.1} parent=1 // pred_check
      _
    $region119: #{forward.1} parent=1 // pred_check_branch
      %345 = sbr.rel (0) target = $region121
    $region120: #{forward.1} parent=1 // pred_region
      _
    $region121: #{forward.1} parent=1 // pred_fallthru
      _
    // Predicated region
    $region122: #{forward.1} parent=1 // pred_check
      _
    $region123: #{forward.1} parent=1 // pred_check_branch
      %347 = sbr.rel (0) target = $region125
    $region124: #{forward.1} parent=1 // pred_region
      %349 = vsyncadd [#allocation24], 0
      %s350 = sshll.u32 %s61, 4
      %s351 = int_to_ptr.hbm [resolvable:$true] %s350
      %s352 = sshll.u32 [#allocation23], 4
      %s353 = int_to_ptr.vmem [resolvable:$true] %s352
      %358 = dma.hbm_to_vmem [thread:$0]  %s351, 32, %s353, [#allocation24], 16, 16, 1
    $region125: #{forward.1} parent=1 // pred_fallthru
      _
    // Predicated region
    $region126: #{forward.1} parent=1 // pred_check
      _
    $region127: #{forward.1} parent=1 // pred_check_branch
      %360 = sbr.rel (0) target = $region129
    $region128: #{forward.1} parent=1 // pred_region
      _
    $region129: #{forward.1} parent=1 // pred_fallthru
      _
    // Predicated region
    $region130: #{forward.1} parent=1 // pred_check
      _
    $region131: #{forward.1} parent=1 // pred_check_branch
      %362 = sbr.rel (0) target = $region133
    $region132: #{forward.1} parent=1 // pred_region
      %364 = vsyncadd [#allocation24], 0
      %s365 = sshll.u32 %s65, 4
      %s366 = int_to_ptr.hbm [resolvable:$true] %s365
      %s367 = sshll.u32 [#allocation25], 4
      %s368 = int_to_ptr.vmem [resolvable:$true] %s367
      %373 = dma.hbm_to_vmem [thread:$0]  %s366, 32, %s368, [#allocation24], 16, 16, 1
    $region133: #{forward.1} parent=1 // pred_fallthru
      _
    // Predicated region
    $region134: #{forward.1} parent=1 // pred_check
      _
    $region135: #{forward.1} parent=1 // pred_check_branch
      %375 = sbr.rel (0) target = $region137
    $region136: #{forward.1} parent=1 // pred_region
      %377 = vsyncadd [#allocation27], 0
      %s378 = sshll.u32 %s67, 4
      %s379 = int_to_ptr.hbm [resolvable:$true] %s378
      %s380 = sshll.u32 [#allocation26], 4
      %s381 = int_to_ptr.vmem [resolvable:$true] %s380
      %386 = dma.hbm_to_vmem [thread:$0]  %s379, 32, %s381, [#allocation27], 16, 16, 1
    $region137: #{forward.1} parent=1 // pred_fallthru
      _
    // Predicated region
    $region138: #{forward.1} parent=1 // pred_check
      _
    $region139: #{forward.1} parent=1 // pred_check_branch
      %388 = sbr.rel (0) target = $region141
    $region140: #{forward.1} parent=1 // pred_region
      %390 = vsyncadd [#allocation27], 0
      %s391 = sshll.u32 %s69, 4
      %s392 = int_to_ptr.hbm [resolvable:$true] %s391
      %s393 = sshll.u32 [#allocation28], 4
      %s394 = int_to_ptr.vmem [resolvable:$true] %s393
      %399 = dma.hbm_to_vmem [thread:$0]  %s392, 32, %s394, [#allocation27], 16, 16, 1
    $region141: #{forward.1} parent=1 // pred_fallthru
      _
    // Predicated region
    $region142: #{forward.1} parent=1 // pred_check
      _
    $region143: #{forward.1} parent=1 // pred_check_branch
      %401 = sbr.rel (0) target = $region145
    $region144: #{forward.1} parent=1 // pred_region
      _
    $region145: #{forward.1} parent=1 // pred_fallthru
      _
    // Predicated region
    $region146: #{forward.1} parent=1 // pred_check
      _
    $region147: #{forward.1} parent=1 // pred_check_branch
      %403 = sbr.rel (0) target = $region149
    $region148: #{forward.1} parent=1 // pred_region
      %405 = vsyncadd [#allocation30], 0
      %s406 = sshll.u32 %s73, 4
      %s407 = int_to_ptr.hbm [resolvable:$true] %s406
      %s408 = sshll.u32 [#allocation29], 4
      %s409 = int_to_ptr.vmem [resolvable:$true] %s408
      %414 = dma.hbm_to_vmem [thread:$0]  %s407, 256, %s409, [#allocation30], 128, 128, 8
    $region149: #{forward.1} parent=1 // pred_fallthru
      _
    // Predicated region
    $region150: #{forward.1} parent=1 // pred_check
      _
    $region151: #{forward.1} parent=1 // pred_check_branch
      %416 = sbr.rel (0) target = $region153
    $region152: #{forward.1} parent=1 // pred_region
      %418 = vsyncadd [#allocation30], 0
      %s420 = sshll.u32 %s75, 4
      %s421 = int_to_ptr.hbm [resolvable:$true] %s420
      %s422 = sshll.u32 [#allocation31], 4
      %s423 = int_to_ptr.vmem [resolvable:$true] %s422
      %425 = dma.hbm_to_vmem [thread:$0]  %s421, 16, %s423, [#allocation30]
    $region153: #{forward.1} parent=1 // pred_fallthru
      _
    // Predicated region
    $region154: #{forward.1} parent=1 // pred_check
      _
    $region155: #{forward.1} parent=1 // pred_check_branch
      %427 = sbr.rel (0) target = $region157
    $region156: #{forward.1} parent=1 // pred_region
      %429 = vsyncadd [#allocation33], 0
      %s431 = sshll.u32 %s77, 4
      %s432 = int_to_ptr.hbm [resolvable:$true] %s431
      %s433 = sshll.u32 [#allocation32], 4
      %s434 = int_to_ptr.vmem [resolvable:$true] %s433
      %436 = dma.hbm_to_vmem [thread:$0]  %s432, 16, %s434, [#allocation33]
    $region157: #{forward.1} parent=1 // pred_fallthru
      _
    // Predicated region
    $region158: #{forward.1} parent=1 // pred_check
      _
    $region159: #{forward.1} parent=1 // pred_check_branch
      %438 = sbr.rel (0) target = $region161
    $region160: #{forward.1} parent=1 // pred_region
      _
    $region161: #{forward.1} parent=1 // pred_fallthru
      _
    // Predicated region
    $region162: #{forward.1} parent=1 // pred_check
      _
    $region163: #{forward.1} parent=1 // pred_check_branch
      %440 = sbr.rel (0) target = $region165
    $region164: #{forward.1} parent=1 // pred_region
      %442 = vsyncadd [#allocation33], 0
      %s443 = sshll.u32 %s81, 4
      %s444 = int_to_ptr.hbm [resolvable:$true] %s443
      %s445 = sshll.u32 [#allocation34], 4
      %s446 = int_to_ptr.vmem [resolvable:$true] %s445
      %451 = dma.hbm_to_vmem [thread:$0]  %s444, 32, %s446, [#allocation33], 16, 16, 1
    $region165: #{forward.1} parent=1 // pred_fallthru
      _
    // Predicated region
    $region166: #{forward.1} parent=1 // pred_check
      _
    $region167: #{forward.1} parent=1 // pred_check_branch
      %453 = sbr.rel (0) target = $region169
    $region168: #{forward.1} parent=1 // pred_region
      _
    $region169: #{forward.1} parent=1 // pred_fallthru
      _
    // Predicated region
    $region170: #{forward.1} parent=1 // pred_check
      _
    $region171: #{forward.1} parent=1 // pred_check_branch
      %455 = sbr.rel (0) target = $region173
    $region172: #{forward.1} parent=1 // pred_region
      %457 = vsyncadd [#allocation36], 0
      %s458 = sshll.u32 %s85, 4
      %s459 = int_to_ptr.hbm [resolvable:$true] %s458
      %s460 = sshll.u32 [#allocation35], 4
      %s461 = int_to_ptr.vmem [resolvable:$true] %s460
      %466 = dma.hbm_to_vmem [thread:$0]  %s459, 32, %s461, [#allocation36], 16, 16, 1
    $region173: #{forward.1} parent=1 // pred_fallthru
      _
    // Predicated region
    $region174: #{forward.1} parent=1 // pred_check
      _
    $region175: #{forward.1} parent=1 // pred_check_branch
      %468 = sbr.rel (0) target = $region177
    $region176: #{forward.1} parent=1 // pred_region
      %470 = vsyncadd [#allocation36], 0
      %s471 = sshll.u32 %s87, 4
      %s472 = int_to_ptr.hbm [resolvable:$true] %s471
      %s473 = sshll.u32 [#allocation37], 4
      %s474 = int_to_ptr.vmem [resolvable:$true] %s473
      %479 = dma.hbm_to_vmem [thread:$0]  %s472, 32, %s474, [#allocation36], 16, 16, 1
    $region177: #{forward.1} parent=1 // pred_fallthru
      _
    // Predicated region
    $region178: #{forward.1} parent=1 // pred_check
      _
    $region179: #{forward.1} parent=1 // pred_check_branch
      %481 = sbr.rel (0) target = $region181
    $region180: #{forward.1} parent=1 // pred_region
      %483 = vsyncadd [#allocation39], 0
      %s484 = sshll.u32 %s89, 4
      %s485 = int_to_ptr.hbm [resolvable:$true] %s484
      %s486 = sshll.u32 [#allocation38], 4
      %s487 = int_to_ptr.vmem [resolvable:$true] %s486
      %492 = dma.hbm_to_vmem [thread:$0]  %s485, 32, %s487, [#allocation39], 16, 16, 1
    $region181: #{forward.1} parent=1 // pred_fallthru
      _
    // Predicated region
    $region182: #{forward.1} parent=1 // pred_check
      _
    $region183: #{forward.1} parent=1 // pred_check_branch
      %494 = sbr.rel (0) target = $region185
    $region184: #{forward.1} parent=1 // pred_region
      _
    $region185: #{forward.1} parent=1 // pred_fallthru
      _
    // Predicated region
    $region186: #{forward.1} parent=1 // pred_check
      _
    $region187: #{forward.1} parent=1 // pred_check_branch
      %496 = sbr.rel (0) target = $region189
    $region188: #{forward.1} parent=1 // pred_region
      %498 = vsyncadd [#allocation39], 0
      %s499 = sshll.u32 %s93, 4
      %s500 = int_to_ptr.hbm [resolvable:$true] %s499
      %s501 = sshll.u32 [#allocation40], 4
      %s502 = int_to_ptr.vmem [resolvable:$true] %s501
      %507 = dma.hbm_to_vmem [thread:$0]  %s500, 32, %s502, [#allocation39], 16, 16, 1
    $region189: #{forward.1} parent=1 // pred_fallthru
      _
    // Predicated region
    $region190: #{forward.1} parent=1 // pred_check
      _
    $region191: #{forward.1} parent=1 // pred_check_branch
      %509 = sbr.rel (0) target = $region193
    $region192: #{forward.1} parent=1 // pred_region
      _
    $region193: #{forward.1} parent=1 // pred_fallthru
      _
    // Predicated region
    $region194: #{forward.1} parent=1 // pred_check
      _
    $region195: #{forward.1} parent=1 // pred_check_branch
      %511 = sbr.rel (0) target = $region197
    $region196: #{forward.1} parent=1 // pred_region
      %513 = vsyncadd [#allocation42], 0
      %s514 = sshll.u32 %s97, 4
      %s515 = int_to_ptr.hbm [resolvable:$true] %s514
      %s516 = sshll.u32 [#allocation41], 4
      %s517 = int_to_ptr.vmem [resolvable:$true] %s516
      %522 = dma.hbm_to_vmem [thread:$0]  %s515, 32, %s517, [#allocation42], 16, 16, 1
    $region197: #{forward.1} parent=1 // pred_fallthru
      _
    // Predicated region
    $region198: #{forward.1} parent=1 // pred_check
      _
    $region199: #{forward.1} parent=1 // pred_check_branch
      %524 = sbr.rel (0) target = $region201
    $region200: #{forward.1} parent=1 // pred_region
      _
    $region201: #{forward.1} parent=1 // pred_fallthru
      _
    // Predicated region
    $region202: #{forward.1} parent=1 // pred_check
      _
    $region203: #{forward.1} parent=1 // pred_check_branch
      %526 = sbr.rel (0) target = $region205
    $region204: #{forward.1} parent=1 // pred_region
      %528 = vsyncadd [#allocation42], 0
      %s529 = sshll.u32 %s101, 4
      %s530 = int_to_ptr.hbm [resolvable:$true] %s529
      %s531 = sshll.u32 [#allocation43], 4
      %s532 = int_to_ptr.vmem [resolvable:$true] %s531
      %537 = dma.hbm_to_vmem [thread:$0]  %s530, 32, %s532, [#allocation42], 16, 16, 1
    $region205: #{forward.1} parent=1 // pred_fallthru
      _
    // Predicated region
    $region206: #{forward.1} parent=1 // pred_check
      _
    $region207: #{forward.1} parent=1 // pred_check_branch
      %539 = sbr.rel (0) target = $region209
    $region208: #{forward.1} parent=1 // pred_region
      %541 = vsyncadd [#allocation45], 0
      %s542 = sshll.u32 %s103, 4
      %s543 = int_to_ptr.hbm [resolvable:$true] %s542
      %s544 = sshll.u32 [#allocation44], 4
      %s545 = int_to_ptr.vmem [resolvable:$true] %s544
      %550 = dma.hbm_to_vmem [thread:$0]  %s543, 32, %s545, [#allocation45], 16, 16, 1
    $region209: #{forward.1} parent=1 // pred_fallthru
      _
    // Predicated region
    $region210: #{forward.1} parent=1 // pred_check
      _
    $region211: #{forward.1} parent=1 // pred_check_branch
      %552 = sbr.rel (0) target = $region213
    $region212: #{forward.1} parent=1 // pred_region
      %554 = vsyncadd [#allocation45], 0
      %s555 = sshll.u32 %s105, 4
      %s556 = int_to_ptr.hbm [resolvable:$true] %s555
      %s557 = sshll.u32 [#allocation46], 4
      %s558 = int_to_ptr.vmem [resolvable:$true] %s557
      %563 = dma.hbm_to_vmem [thread:$0]  %s556, 32, %s558, [#allocation45], 16, 16, 1
    $region213: #{forward.1} parent=1 // pred_fallthru
      _
    // Predicated region
    $region214: #{forward.1} parent=1 // pred_check
      _
    $region215: #{forward.1} parent=1 // pred_check_branch
      %565 = sbr.rel (0) target = $region217
    $region216: #{forward.1} parent=1 // pred_region
      %567 = vsyncadd [#allocation48], 0
      %s568 = sshll.u32 %s107, 4
      %s569 = int_to_ptr.hbm [resolvable:$true] %s568
      %s570 = sshll.u32 [#allocation47], 4
      %s571 = int_to_ptr.vmem [resolvable:$true] %s570
      %576 = dma.hbm_to_vmem [thread:$0]  %s569, 1024, %s571, [#allocation48], 128, 128, 8
    $region217: #{forward.1} parent=1 // pred_fallthru
      _
    // Predicated region
    $region218: #{forward.1} parent=1 // pred_check
      _
    $region219: #{forward.1} parent=1 // pred_check_branch
      %578 = sbr.rel (0) target = $region221
    $region220: #{forward.1} parent=1 // pred_region
      %580 = vsyncadd [#allocation48], 0
      %s581 = sshll.u32 %s109, 4
      %s582 = int_to_ptr.hbm [resolvable:$true] %s581
      %s583 = sshll.u32 [#allocation49], 4
      %s584 = int_to_ptr.vmem [resolvable:$true] %s583
      %589 = dma.hbm_to_vmem [thread:$0]  %s582, 32, %s584, [#allocation48], 16, 16, 1
    $region221: #{forward.1} parent=1 // pred_fallthru
      _
    // Predicated region
    $region222: #{forward.1} parent=1 // pred_check
      _
    $region223: #{forward.1} parent=1 // pred_check_branch
      %591 = sbr.rel (0) target = $region225
    $region224: #{forward.1} parent=1 // pred_region
      _
    $region225: #{forward.1} parent=1 // pred_fallthru
      _
    // Predicated region
    $region226: #{forward.1} parent=1 // pred_check
      _
    $region227: #{forward.1} parent=1 // pred_check_branch
      %593 = sbr.rel (0) target = $region229
    $region228: #{forward.1} parent=1 // pred_region
      %595 = vsyncadd [#allocation51], 0
      %s596 = sshll.u32 %s113, 4
      %s597 = int_to_ptr.hbm [resolvable:$true] %s596
      %s598 = sshll.u32 [#allocation50], 4
      %s599 = int_to_ptr.vmem [resolvable:$true] %s598
      %604 = dma.hbm_to_vmem [thread:$0]  %s597, 32, %s599, [#allocation51], 16, 16, 1
    $region229: #{forward.1} parent=1 // pred_fallthru
      _
    // Predicated region
    $region230: #{forward.1} parent=1 // pred_check
      _
    $region231: #{forward.1} parent=1 // pred_check_branch
      %606 = sbr.rel (0) target = $region233
    $region232: #{forward.1} parent=1 // pred_region
      %608 = vsyncadd [#allocation51], 0
      %s609 = sshll.u32 %s115, 4
      %s610 = int_to_ptr.hbm [resolvable:$true] %s609
      %s611 = sshll.u32 [#allocation52], 4
      %s612 = int_to_ptr.vmem [resolvable:$true] %s611
      %617 = dma.hbm_to_vmem [thread:$0]  %s610, 32, %s612, [#allocation51], 16, 16, 1
    $region233: #{forward.1} parent=1 // pred_fallthru
      _
    // Predicated region
    $region234: #{forward.1} parent=1 // pred_check
      _
    $region235: #{forward.1} parent=1 // pred_check_branch
      %619 = sbr.rel (0) target = $region237
    $region236: #{forward.1} parent=1 // pred_region
      %621 = vsyncadd [#allocation54], 0
      %s622 = sshll.u32 %s117, 4
      %s623 = int_to_ptr.hbm [resolvable:$true] %s622
      %s624 = sshll.u32 [#allocation53], 4
      %s625 = int_to_ptr.vmem [resolvable:$true] %s624
      %630 = dma.hbm_to_vmem [thread:$0]  %s623, 32, %s625, [#allocation54], 16, 16, 1
    $region237: #{forward.1} parent=1 // pred_fallthru
      _
    // Predicated region
    $region238: #{forward.1} parent=1 // pred_check
      _
    $region239: #{forward.1} parent=1 // pred_check_branch
      %632 = sbr.rel (0) target = $region241
    $region240: #{forward.1} parent=1 // pred_region
      _
    $region241: #{forward.1} parent=1 // pred_fallthru
      _
    // Predicated region
    $region242: #{forward.1} parent=1 // pred_check
      _
    $region243: #{forward.1} parent=1 // pred_check_branch
      %634 = sbr.rel (0) target = $region245
    $region244: #{forward.1} parent=1 // pred_region
      %636 = vsyncadd [#allocation54], 0
      %s638 = sshll.u32 %s121, 4
      %s639 = int_to_ptr.hbm [resolvable:$true] %s638
      %s640 = sshll.u32 [#allocation55], 4
      %s641 = int_to_ptr.vmem [resolvable:$true] %s640
      %643 = dma.hbm_to_vmem [thread:$0]  %s639, 16, %s641, [#allocation54]
    $region245: #{forward.1} parent=1 // pred_fallthru
      _
    // Predicated region
    $region246: #{forward.1} parent=1 // pred_check
      _
    $region247: #{forward.1} parent=1 // pred_check_branch
      %645 = sbr.rel (0) target = $region249
    $region248: #{forward.1} parent=1 // pred_region
      %647 = dma.done [#allocation3], 256
    $region249: #{forward.1} parent=1 // pred_fallthru
      _
    // Predicated region
    $region250: #{forward.1} parent=1 // pred_check
      _
    $region251: #{forward.1} parent=1 // pred_check_branch
      %649 = sbr.rel (0) target = $region253
    $region252: #{forward.1} parent=1 // pred_region
      %651 = dma.done [#allocation6], 32
    $region253: #{forward.1} parent=1 // pred_fallthru
      _
    // Predicated region
    $region254: #{forward.1} parent=1 // pred_check
      _
    $region255: #{forward.1} parent=1 // pred_check_branch
      %653 = sbr.rel (0) target = $region257
    $region256: #{forward.1} parent=1 // pred_region
      %655 = dma.done [#allocation6], 32
    $region257: #{forward.1} parent=1 // pred_fallthru
      _
    // Predicated region
    $region258: #{forward.1} parent=1 // pred_check
      _
    $region259: #{forward.1} parent=1 // pred_check_branch
      %657 = sbr.rel (0) target = $region261
    $region260: #{forward.1} parent=1 // pred_region
      %659 = dma.done [#allocation9], 32
    $region261: #{forward.1} parent=1 // pred_fallthru
      _
    // Predicated region
    $region262: #{forward.1} parent=1 // pred_check
      _
    $region263: #{forward.1} parent=1 // pred_check_branch
      %661 = sbr.rel (0) target = $region265
    $region264: #{forward.1} parent=1 // pred_region
      %663 = dma.done [#allocation9], 32
    $region265: #{forward.1} parent=1 // pred_fallthru
      _
    // Predicated region
    $region266: #{forward.1} parent=1 // pred_check
      _
    $region267: #{forward.1} parent=1 // pred_check_branch
      %665 = sbr.rel (0) target = $region269
    $region268: #{forward.1} parent=1 // pred_region
      %667 = dma.done [#allocation12], 32
    $region269: #{forward.1} parent=1 // pred_fallthru
      _
    // Predicated region
    $region270: #{forward.1} parent=1 // pred_check
      _
    $region271: #{forward.1} parent=1 // pred_check_branch
      %669 = sbr.rel (0) target = $region273
    $region272: #{forward.1} parent=1 // pred_region
      %671 = dma.done [#allocation12], 256
    $region273: #{forward.1} parent=1 // pred_fallthru
      _
    // Predicated region
    $region274: #{forward.1} parent=1 // pred_check
      _
    $region275: #{forward.1} parent=1 // pred_check_branch
      %673 = sbr.rel (0) target = $region277
    $region276: #{forward.1} parent=1 // pred_region
      %675 = dma.done [#allocation15], 16
    $region277: #{forward.1} parent=1 // pred_fallthru
      _
    // Predicated region
    $region278: #{forward.1} parent=1 // pred_check
      _
    $region279: #{forward.1} parent=1 // pred_check_branch
      %677 = sbr.rel (0) target = $region281
    $region280: #{forward.1} parent=1 // pred_region
      %679 = dma.done [#allocation15], 16
    $region281: #{forward.1} parent=1 // pred_fallthru
      _
    // Predicated region
    $region282: #{forward.1} parent=1 // pred_check
      _
    $region283: #{forward.1} parent=1 // pred_check_branch
      %681 = sbr.rel (0) target = $region285
    $region284: #{forward.1} parent=1 // pred_region
      %683 = dma.done [#allocation18], 32
    $region285: #{forward.1} parent=1 // pred_fallthru
      _
    // Predicated region
    $region286: #{forward.1} parent=1 // pred_check
      _
    $region287: #{forward.1} parent=1 // pred_check_branch
      %685 = sbr.rel (0) target = $region289
    $region288: #{forward.1} parent=1 // pred_region
      %687 = dma.done [#allocation18], 32
    $region289: #{forward.1} parent=1 // pred_fallthru
      _
    // Predicated region
    $region290: #{forward.1} parent=1 // pred_check
      _
    $region291: #{forward.1} parent=1 // pred_check_branch
      %689 = sbr.rel (0) target = $region293
    $region292: #{forward.1} parent=1 // pred_region
      %691 = dma.done [#allocation21], 32
    $region293: #{forward.1} parent=1 // pred_fallthru
      _
    // Predicated region
    $region294: #{forward.1} parent=1 // pred_check
      _
    $region295: #{forward.1} parent=1 // pred_check_branch
      %693 = sbr.rel (0) target = $region297
    $region296: #{forward.1} parent=1 // pred_region
      %695 = dma.done [#allocation21], 32
    $region297: #{forward.1} parent=1 // pred_fallthru
      _
    // Predicated region
    $region298: #{forward.1} parent=1 // pred_check
      _
    $region299: #{forward.1} parent=1 // pred_check_branch
      %697 = sbr.rel (0) target = $region301
    $region300: #{forward.1} parent=1 // pred_region
      %699 = dma.done [#allocation24], 32
    $region301: #{forward.1} parent=1 // pred_fallthru
      _
    // Predicated region
    $region302: #{forward.1} parent=1 // pred_check
      _
    $region303: #{forward.1} parent=1 // pred_check_branch
      %701 = sbr.rel (0) target = $region305
    $region304: #{forward.1} parent=1 // pred_region
      %703 = dma.done [#allocation24], 32
    $region305: #{forward.1} parent=1 // pred_fallthru
      _
    // Predicated region
    $region306: #{forward.1} parent=1 // pred_check
      _
    $region307: #{forward.1} parent=1 // pred_check_branch
      %705 = sbr.rel (0) target = $region309
    $region308: #{forward.1} parent=1 // pred_region
      %707 = dma.done [#allocation27], 32
    $region309: #{forward.1} parent=1 // pred_fallthru
      _
    // Predicated region
    $region310: #{forward.1} parent=1 // pred_check
      _
    $region311: #{forward.1} parent=1 // pred_check_branch
      %709 = sbr.rel (0) target = $region313
    $region312: #{forward.1} parent=1 // pred_region
      %711 = dma.done [#allocation27], 32
    $region313: #{forward.1} parent=1 // pred_fallthru
      _
    // Predicated region
    $region314: #{forward.1} parent=1 // pred_check
      _
    $region315: #{forward.1} parent=1 // pred_check_branch
      %713 = sbr.rel (0) target = $region317
    $region316: #{forward.1} parent=1 // pred_region
      %715 = dma.done [#allocation30], 256
    $region317: #{forward.1} parent=1 // pred_fallthru
      _
    // Predicated region
    $region318: #{forward.1} parent=1 // pred_check
      _
    $region319: #{forward.1} parent=1 // pred_check_branch
      %717 = sbr.rel (0) target = $region321
    $region320: #{forward.1} parent=1 // pred_region
      %719 = dma.done [#allocation30], 16
    $region321: #{forward.1} parent=1 // pred_fallthru
      _
    // Predicated region
    $region322: #{forward.1} parent=1 // pred_check
      _
    $region323: #{forward.1} parent=1 // pred_check_branch
      %721 = sbr.rel (0) target = $region325
    $region324: #{forward.1} parent=1 // pred_region
      %723 = dma.done [#allocation33], 16
    $region325: #{forward.1} parent=1 // pred_fallthru
      _
    // Predicated region
    $region326: #{forward.1} parent=1 // pred_check
      _
    $region327: #{forward.1} parent=1 // pred_check_branch
      %725 = sbr.rel (0) target = $region329
    $region328: #{forward.1} parent=1 // pred_region
      %727 = dma.done [#allocation33], 32
    $region329: #{forward.1} parent=1 // pred_fallthru
      _
    // Predicated region
    $region330: #{forward.1} parent=1 // pred_check
      _
    $region331: #{forward.1} parent=1 // pred_check_branch
      %729 = sbr.rel (0) target = $region333
    $region332: #{forward.1} parent=1 // pred_region
      %731 = dma.done [#allocation36], 32
    $region333: #{forward.1} parent=1 // pred_fallthru
      _
    // Predicated region
    $region334: #{forward.1} parent=1 // pred_check
      _
    $region335: #{forward.1} parent=1 // pred_check_branch
      %733 = sbr.rel (0) target = $region337
    $region336: #{forward.1} parent=1 // pred_region
      %735 = dma.done [#allocation36], 32
    $region337: #{forward.1} parent=1 // pred_fallthru
      _
    // Predicated region
    $region338: #{forward.1} parent=1 // pred_check
      _
    $region339: #{forward.1} parent=1 // pred_check_branch
      %737 = sbr.rel (0) target = $region341
    $region340: #{forward.1} parent=1 // pred_region
      %739 = dma.done [#allocation39], 32
    $region341: #{forward.1} parent=1 // pred_fallthru
      _
    // Predicated region
    $region342: #{forward.1} parent=1 // pred_check
      _
    $region343: #{forward.1} parent=1 // pred_check_branch
      %741 = sbr.rel (0) target = $region345
    $region344: #{forward.1} parent=1 // pred_region
      %743 = dma.done [#allocation39], 32
    $region345: #{forward.1} parent=1 // pred_fallthru
      _
    // Predicated region
    $region346: #{forward.1} parent=1 // pred_check
      _
    $region347: #{forward.1} parent=1 // pred_check_branch
      %745 = sbr.rel (0) target = $region349
    $region348: #{forward.1} parent=1 // pred_region
      %747 = dma.done [#allocation42], 32
    $region349: #{forward.1} parent=1 // pred_fallthru
      _
    // Predicated region
    $region350: #{forward.1} parent=1 // pred_check
      _
    $region351: #{forward.1} parent=1 // pred_check_branch
      %749 = sbr.rel (0) target = $region353
    $region352: #{forward.1} parent=1 // pred_region
      %751 = dma.done [#allocation42], 32
    $region353: #{forward.1} parent=1 // pred_fallthru
      _
    // Predicated region
    $region354: #{forward.1} parent=1 // pred_check
      _
    $region355: #{forward.1} parent=1 // pred_check_branch
      %753 = sbr.rel (0) target = $region357
    $region356: #{forward.1} parent=1 // pred_region
      %755 = dma.done [#allocation45], 32
    $region357: #{forward.1} parent=1 // pred_fallthru
      _
    // Predicated region
    $region358: #{forward.1} parent=1 // pred_check
      _
    $region359: #{forward.1} parent=1 // pred_check_branch
      %757 = sbr.rel (0) target = $region361
    $region360: #{forward.1} parent=1 // pred_region
      %759 = dma.done [#allocation45], 32
    $region361: #{forward.1} parent=1 // pred_fallthru
      _
    // Predicated region
    $region362: #{forward.1} parent=1 // pred_check
      _
    $region363: #{forward.1} parent=1 // pred_check_branch
      %761 = sbr.rel (0) target = $region365
    $region364: #{forward.1} parent=1 // pred_region
      %763 = dma.done [#allocation48], 1024
    $region365: #{forward.1} parent=1 // pred_fallthru
      _
    // Predicated region
    $region366: #{forward.1} parent=1 // pred_check
      _
    $region367: #{forward.1} parent=1 // pred_check_branch
      %765 = sbr.rel (0) target = $region369
    $region368: #{forward.1} parent=1 // pred_region
      %767 = dma.done [#allocation48], 32
    $region369: #{forward.1} parent=1 // pred_fallthru
      _
    // Predicated region
    $region370: #{forward.1} parent=1 // pred_check
      _
    $region371: #{forward.1} parent=1 // pred_check_branch
      %769 = sbr.rel (0) target = $region373
    $region372: #{forward.1} parent=1 // pred_region
      %771 = dma.done [#allocation51], 32
    $region373: #{forward.1} parent=1 // pred_fallthru
      _
    // Predicated region
    $region374: #{forward.1} parent=1 // pred_check
      _
    $region375: #{forward.1} parent=1 // pred_check_branch
      %773 = sbr.rel (0) target = $region377
    $region376: #{forward.1} parent=1 // pred_region
      %775 = dma.done [#allocation51], 32
    $region377: #{forward.1} parent=1 // pred_fallthru
      _
    // Predicated region
    $region378: #{forward.1} parent=1 // pred_check
      _
    $region379: #{forward.1} parent=1 // pred_check_branch
      %777 = sbr.rel (0) target = $region381
    $region380: #{forward.1} parent=1 // pred_region
      %779 = dma.done [#allocation54], 32
    $region381: #{forward.1} parent=1 // pred_fallthru
      _
    // Predicated region
    $region382: #{forward.1} parent=1 // pred_check
      _
    $region383: #{forward.1} parent=1 // pred_check_branch
      %781 = sbr.rel (0) target = $region385
    $region384: #{forward.1} parent=1 // pred_region
      %783 = dma.done [#allocation54], 16
    $region385: #{forward.1} parent=1 // pred_fallthru
      _
    %v784 = vld [vmem:[%s3] sm:$0x3]
    %v785 = vcvt.s32.f32 %v784
    %v786 = vsub.f32 1.0, %v785
    %v787 = vmul.f32 %v786, -1e+09
    %v789 = vrot.slane %v787, 1
    %v790 = vld [vmem:[%s7] sm:$0x3]
    %v791 = vcvt.s32.f32 %v790
    %v792 = vsub.f32 1.0, %v791
    %v793 = vmul.f32 %v792, -1e+09
    %v794 = vlaneseq
    %v795 = vshrl.u32 %v794, 7
    %v796 = vlaneseq
    %v797 = vand.u32 %v796, 127
    %vm798 = vcmp.le.s32.totalorder %v797, %v795
    %v799 = vsel %vm798, 0.0, -1e+09
    %v801 = vrot.slane %v793, 1
    %v802 = vperm.slane %v793, 0
    %v803 = vperm.slane %v801, 0
    %v806 = vadd.f32 %v802, %v799
    %v807 = vadd.f32 %v803, %v799
    %v808 = vld [vmem:[%s1] sm:$0x3]
    %v809 = vld [vmem:[%s9] sm:$0xff]
    %v810 = vld [vmem:[%s9 + $0x8] sm:$0xff]
    %v811 = vld [vmem:[%s9 + $0x10] sm:$0xff]
    %v812 = vld [vmem:[%s9 + $0x18] sm:$0xff]
    %v813 = vld [vmem:[%s9 + $0x20] sm:$0xff]
    %v814 = vld [vmem:[%s9 + $0x28] sm:$0xff]
    %v815 = vld [vmem:[%s9 + $0x30] sm:$0xff]
    %v816 = vld [vmem:[%s9 + $0x38] sm:$0xff]
    %v817 = vld [vmem:[%s9 + $0x40] sm:$0xff]
    %v818 = vld [vmem:[%s9 + $0x48] sm:$0xff]
    %v819 = vld [vmem:[%s9 + $0x50] sm:$0xff]
    %v820 = vld [vmem:[%s9 + $0x58] sm:$0xff]
    %v821 = vld [vmem:[%s9 + $0x60] sm:$0xff]
    %v822 = vld [vmem:[%s9 + $0x68] sm:$0xff]
    %v823 = vld [vmem:[%s9 + $0x70] sm:$0xff]
    %v824 = vld [vmem:[%s9 + $0x78] sm:$0xff]
    %v825 = vld [vmem:[#allocation2] sm:$0xff]
    %v826 = vperm.slane %v808, 0
    %v827 = vlaneseq
    %v828 = vshrl.u32 %v827, 7
    %830 = vset.pattern.permute.xlu0 %v828
    %831 = vperm.xlu0 %830, %v826
    %v832 = vpop.permute.xlu0 %831
    %v833 = vperm.slane %v808, 1
    %v834 = vlaneseq
    %v835 = vshrl.u32 %v834, 7
    %837 = vset.pattern.permute.xlu0 %v835
    %838 = vperm.xlu0 %837, %v833
    %v839 = vpop.permute.xlu0 %838
    %vm840 = vcmp.eq.s32.totalorder %v797, %v832
    %vm841 = vcmp.eq.s32.totalorder %v797, %v839
    %v842 = vsel %vm840, 1, 0
    %v843 = vsel %vm841, 1, 0
    %v844 = vcvt.s32.f32 %v842
    %v845 = vcvt.s32.f32 %v843
    %846 = vmatpush.msra.mxu0 %v824
    %847 = vmatpush.msra.mxu0 %v823
    %848 = vmatpush.msra.mxu0 %v822
    %849 = vmatpush.msra.mxu0 %v821
    %850 = vmatpush.msra.mxu0 %v820
    %851 = vmatpush.msra.mxu0 %v819
    %852 = vmatpush.msra.mxu0 %v818
    %853 = vmatpush.msra.mxu0 %v817
    %854 = vmatpush.msra.mxu0 %v816
    %855 = vmatpush.msra.mxu0 %v815
    %856 = vmatpush.msra.mxu0 %v814
    %857 = vmatpush.msra.mxu0 %v813
    %858 = vmatpush.msra.mxu0 %v812
    %859 = vmatpush.msra.mxu0 %v811
    %860 = vmatpush.msra.mxu0 %v810
    %861 = vmatpush.msra.mxu0 %v809
    %862 = vmatmul.f32.gmra.mxu0 %v844
    %v863 = vpop.f32.mrf.mxu0
    %v864 = vadd.f32 %v825, %v863
    %865 = vmatmul.f32.gmra.mxu0 %v845
    %v866 = vpop.f32.mrf.mxu0
    %v867 = vadd.f32 %v825, %v866
    %868 = vdwg.mxu0
    %v869 = vld [vmem:[%s13] sm:$0x1]
    %v870 = vld [vmem:[%s15] sm:$0x1]
    %vm871 = vcmask 261120
    %v872 = vsel %vm871, %v864, 0.0
    %873 = vadd.xlane.f32.xlu0 %v872
    %v874 = vpop.xlane.xlu0 %873
    %v875 = vsel %vm871, %v867, 0.0
    %876 = vadd.xlane.f32.xlu0 %v875
    %v877 = vpop.xlane.xlu0 %876
    %v878 = vrcp.pop 32.0
    %v879 = vmul.f32 32.0, %v878
    %v880 = vsub.f32 1.0, %v879
    %v881 = vmul.f32 %v878, %v880
    %v882 = vadd.f32 %v878, %v881
    %vm883 = vweird.f32 %v878
    %v884 = vsel %vm883, %v878, %v882
    %v885 = vmul.f32 %v874, %v884
    %v886 = vmul.f32 %v877, %v884
    %v887 = vsub.f32 %v864, %v885
    %v888 = vsub.f32 %v867, %v886
    %v889 = vmul.f32 %v887, %v887
    %v890 = vmul.f32 %v888, %v888
    %v891 = vsel %vm871, %v889, 0.0
    %892 = vadd.xlane.f32.xlu0 %v891
    %v893 = vpop.xlane.xlu0 %892
    %v894 = vsel %vm871, %v890, 0.0
    %895 = vadd.xlane.f32.xlu0 %v894
    %v896 = vpop.xlane.xlu0 %895
    %v897 = vmul.f32 %v893, %v884
    %v898 = vmul.f32 %v896, %v884
    %v899 = vadd.f32 %v897, 1e-05
    %v900 = vadd.f32 %v898, 1e-05
    %v901 = vrsqrt.pop %v899
    %v902 = vmul.f32 %v901, %v899
    %v903 = vmul.f32 %v902, %v901
    %v904 = vmul.f32 0.5, %v903
    %v905 = vsub.f32 1.5, %v904
    %v906 = vmul.f32 %v901, %v905
    %vm907 = vweird.f32 %v899
    %vm908 = vweird.f32 %v901
    %vm909 = vmor %vm907, %vm908
    %v910 = vsel %vm909, %v901, %v906
    %v911 = vrsqrt.pop %v900
    %v912 = vmul.f32 %v911, %v900
    %v913 = vmul.f32 %v912, %v911
    %v914 = vmul.f32 0.5, %v913
    %v915 = vsub.f32 1.5, %v914
    %v916 = vmul.f32 %v911, %v915
    %vm917 = vweird.f32 %v900
    %vm918 = vweird.f32 %v911
    %vm919 = vmor %vm917, %vm918
    %v920 = vsel %vm919, %v911, %v916
    %v921 = vmul.f32 %v887, %v910
    %v922 = vmul.f32 %v888, %v920
    %v924 = vperm.slane %v869, 0
    %v926 = vmul.f32 %v921, %v924
    %v927 = vmul.f32 %v922, %v924
    %v929 = vperm.slane %v870, 0
    %v931 = vadd.f32 %v926, %v929
    %v932 = vadd.f32 %v927, %v929
    %v933 = vld [vmem:[%s17] sm:$0xff]
    %v934 = vld [vmem:[%s17 + $0x8] sm:$0xff]
    %v935 = vld [vmem:[%s17 + $0x10] sm:$0xff]
    %v936 = vld [vmem:[%s17 + $0x18] sm:$0xff]
    %v937 = vld [vmem:[#allocation5] sm:$0x1]
    %v939 = vperm.slane %v937, 0
    %v942 = vsel %vm871, %v931, 0
    %v945 = vsel %vm871, %v932, 0
    %947 = vmatpush.msra.mxu0 0.0
    %948 = vmatpush.msra.mxu0 0.0
    %949 = vmatpush.msra.mxu0 0.0
    %950 = vmatpush.msra.mxu0 0.0
    %951 = vmatpush.msra.mxu0 0.0
    %952 = vmatpush.msra.mxu0 0.0
    %953 = vmatpush.msra.mxu0 0.0
    %954 = vmatpush.msra.mxu0 0.0
    %955 = vmatpush.msra.mxu0 0.0
    %956 = vmatpush.msra.mxu0 0.0
    %957 = vmatpush.msra.mxu0 0.0
    %958 = vmatpush.msra.mxu0 0.0
    %959 = vmatpush.msra.mxu0 %v936
    %960 = vmatpush.msra.mxu0 %v935
    %961 = vmatpush.msra.mxu0 %v934
    %962 = vmatpush.msra.mxu0 %v933
    %963 = vmatmul.f32.gmra.mxu0 %v942
    %v964 = vpop.f32.mrf.mxu0
    %v965 = vadd.f32 %v939, %v964
    %966 = vmatmul.f32.gmra.mxu0 %v945
    %v967 = vpop.f32.mrf.mxu0
    %v968 = vadd.f32 %v939, %v967
    %969 = vdwg.mxu0
    %v970 = vperm.slane %v787, 0
    %v971 = vperm.slane %v789, 0
    %975 = vrot.lane.b32.xlu0 %v965, 96
    %v976 = vpop.permute.xlu0 %975
    %vm977 = vcmask 64512
    %v978 = vsel %vm977, %v965, 0
    %v980 = vsel %vm977, %v976, 0
    %982 = vmatpush.xpose.msra.mxu0 0.0
    %983 = vmatpush.xpose.msra.mxu0 0.0
    %984 = vmatpush.xpose.msra.mxu0 0.0
    %985 = vmatpush.xpose.msra.mxu0 0.0
    %986 = vmatpush.xpose.msra.mxu0 0.0
    %987 = vmatpush.xpose.msra.mxu0 0.0
    %988 = vmatpush.xpose.msra.mxu0 0.0
    %989 = vmatpush.xpose.msra.mxu0 0.0
    %990 = vmatpush.xpose.msra.mxu0 0.0
    %991 = vmatpush.xpose.msra.mxu0 0.0
    %992 = vmatpush.xpose.msra.mxu0 0.0
    %993 = vmatpush.xpose.msra.mxu0 0.0
    %994 = vmatpush.xpose.msra.mxu0 0.0
    %995 = vmatpush.xpose.msra.mxu0 0.0
    %996 = vmatpush.xpose.msra.mxu0 0.0
    %997 = vmatpush.xpose.msra.mxu0 %v980
    %998 = vmatmul.f32.gmra.mxu0 %v978
    %v999 = vpop.f32.mrf.mxu0
    %v1000 = vadd.f32 %v970, %v999
    %1001 = vdwg.mxu0
    %1003 = vrot.lane.b32.xlu0 %v968, 96
    %v1004 = vpop.permute.xlu0 %1003
    %v1005 = vsel %vm977, %v968, 0
    %v1007 = vsel %vm977, %v1004, 0
    %1009 = vmatpush.xpose.msra.mxu0 0.0
    %1010 = vmatpush.xpose.msra.mxu0 0.0
    %1011 = vmatpush.xpose.msra.mxu0 0.0
    %1012 = vmatpush.xpose.msra.mxu0 0.0
    %1013 = vmatpush.xpose.msra.mxu0 0.0
    %1014 = vmatpush.xpose.msra.mxu0 0.0
    %1015 = vmatpush.xpose.msra.mxu0 0.0
    %1016 = vmatpush.xpose.msra.mxu0 0.0
    %1017 = vmatpush.xpose.msra.mxu0 0.0
    %1018 = vmatpush.xpose.msra.mxu0 0.0
    %1019 = vmatpush.xpose.msra.mxu0 0.0
    %1020 = vmatpush.xpose.msra.mxu0 0.0
    %1021 = vmatpush.xpose.msra.mxu0 0.0
    %1022 = vmatpush.xpose.msra.mxu0 0.0
    %1023 = vmatpush.xpose.msra.mxu0 0.0
    %1024 = vmatpush.xpose.msra.mxu0 %v1007
    %1025 = vmatmul.f32.gmra.mxu0 %v1005
    %v1026 = vpop.f32.mrf.mxu0
    %v1027 = vadd.f32 %v971, %v1026
    %1028 = vdwg.mxu0
    %v1029 = vsel %vm977, %v1000, -inf
    %1030 = vmax.xlane.f32.xlu0 %v1029
    %v1031 = vpop.xlane.xlu0 %1030
    %v1032 = vsel %vm977, %v1027, -inf
    %1033 = vmax.xlane.f32.xlu0 %v1032
    %v1034 = vpop.xlane.xlu0 %1033
    %v1035 = vsub.f32 %v1000, %v1031
    %v1036 = vsub.f32 %v1027, %v1034
    %v1037 = vmul.f32 %v1035, 1.442695
    %v1038 = vpow.pop %v1037
    %v1039 = vmul.f32 %v1036, 1.442695
    %v1040 = vpow.pop %v1039
    %v1041 = vsel %vm977, %v1038, 0.0
    %1042 = vadd.xlane.f32.xlu0 %v1041
    %v1043 = vpop.xlane.xlu0 %1042
    %v1044 = vsel %vm977, %v1040, 0.0
    %1045 = vadd.xlane.f32.xlu0 %v1044
    %v1046 = vpop.xlane.xlu0 %1045
    %v1047 = vrcp.pop %v1043
    %v1048 = vrcp.pop %v1046
    %v1049 = vmul.f32 %v1038, %v1047
    %v1050 = vmul.f32 %v1040, %v1048
    %1051 = vrot.lane.b32.xlu0 %v965, 64
    %v1052 = vpop.permute.xlu0 %1051
    %v1055 = vsel %vm977, %v1049, 0
    %1057 = vmatpush.msra.mxu0 0.0
    %1058 = vmatpush.msra.mxu0 0.0
    %1059 = vmatpush.msra.mxu0 0.0
    %1060 = vmatpush.msra.mxu0 0.0
    %1061 = vmatpush.msra.mxu0 0.0
    %1062 = vmatpush.msra.mxu0 0.0
    %1063 = vmatpush.msra.mxu0 0.0
    %1064 = vmatpush.msra.mxu0 0.0
    %1065 = vmatpush.msra.mxu0 0.0
    %1066 = vmatpush.msra.mxu0 0.0
    %1067 = vmatpush.msra.mxu0 0.0
    %1068 = vmatpush.msra.mxu0 0.0
    %1069 = vmatpush.msra.mxu0 0.0
    %1070 = vmatpush.msra.mxu0 0.0
    %1071 = vmatpush.msra.mxu0 0.0
    %1072 = vmatpush.msra.mxu0 %v1052
    %1073 = vmatmul.f32.gmra.mxu0 %v1055
    %v1074 = vpop.f32.mrf.mxu0
    %v1075 = vadd.f32 0.0, %v1074
    %1076 = vdwg.mxu0
    %1077 = vrot.lane.b32.xlu0 %v968, 64
    %v1078 = vpop.permute.xlu0 %1077
    %v1081 = vsel %vm977, %v1050, 0
    %1083 = vmatpush.msra.mxu0 0.0
    %1084 = vmatpush.msra.mxu0 0.0
    %1085 = vmatpush.msra.mxu0 0.0
    %1086 = vmatpush.msra.mxu0 0.0
    %1087 = vmatpush.msra.mxu0 0.0
    %1088 = vmatpush.msra.mxu0 0.0
    %1089 = vmatpush.msra.mxu0 0.0
    %1090 = vmatpush.msra.mxu0 0.0
    %1091 = vmatpush.msra.mxu0 0.0
    %1092 = vmatpush.msra.mxu0 0.0
    %1093 = vmatpush.msra.mxu0 0.0
    %1094 = vmatpush.msra.mxu0 0.0
    %1095 = vmatpush.msra.mxu0 0.0
    %1096 = vmatpush.msra.mxu0 0.0
    %1097 = vmatpush.msra.mxu0 0.0
    %1098 = vmatpush.msra.mxu0 %v1078
    %1099 = vmatmul.f32.gmra.mxu0 %v1081
    %v1100 = vpop.f32.mrf.mxu0
    %v1101 = vadd.f32 0.0, %v1100
    %1102 = vdwg.mxu0
    %1103 = vrot.lane.b32.xlu0 %v965, 120
    %v1104 = vpop.permute.xlu0 %1103
    %1105 = vrot.lane.b32.xlu0 %v965, 88
    %v1106 = vpop.permute.xlu0 %1105
    %v1107 = vsel %vm977, %v1104, 0
    %v1109 = vsel %vm977, %v1106, 0
    %1111 = vmatpush.xpose.msra.mxu0 0.0
    %1112 = vmatpush.xpose.msra.mxu0 0.0
    %1113 = vmatpush.xpose.msra.mxu0 0.0
    %1114 = vmatpush.xpose.msra.mxu0 0.0
    %1115 = vmatpush.xpose.msra.mxu0 0.0
    %1116 = vmatpush.xpose.msra.mxu0 0.0
    %1117 = vmatpush.xpose.msra.mxu0 0.0
    %1118 = vmatpush.xpose.msra.mxu0 0.0
    %1119 = vmatpush.xpose.msra.mxu0 0.0
    %1120 = vmatpush.xpose.msra.mxu0 0.0
    %1121 = vmatpush.xpose.msra.mxu0 0.0
    %1122 = vmatpush.xpose.msra.mxu0 0.0
    %1123 = vmatpush.xpose.msra.mxu0 0.0
    %1124 = vmatpush.xpose.msra.mxu0 0.0
    %1125 = vmatpush.xpose.msra.mxu0 0.0
    %1126 = vmatpush.xpose.msra.mxu0 %v1109
    %1127 = vmatmul.f32.gmra.mxu0 %v1107
    %v1128 = vpop.f32.mrf.mxu0
    %v1129 = vadd.f32 %v970, %v1128
    %1130 = vdwg.mxu0
    %1131 = vrot.lane.b32.xlu0 %v968, 120
    %v1132 = vpop.permute.xlu0 %1131
    %1133 = vrot.lane.b32.xlu0 %v968, 88
    %v1134 = vpop.permute.xlu0 %1133
    %v1135 = vsel %vm977, %v1132, 0
    %v1137 = vsel %vm977, %v1134, 0
    %1139 = vmatpush.xpose.msra.mxu0 0.0
    %1140 = vmatpush.xpose.msra.mxu0 0.0
    %1141 = vmatpush.xpose.msra.mxu0 0.0
    %1142 = vmatpush.xpose.msra.mxu0 0.0
    %1143 = vmatpush.xpose.msra.mxu0 0.0
    %1144 = vmatpush.xpose.msra.mxu0 0.0
    %1145 = vmatpush.xpose.msra.mxu0 0.0
    %1146 = vmatpush.xpose.msra.mxu0 0.0
    %1147 = vmatpush.xpose.msra.mxu0 0.0
    %1148 = vmatpush.xpose.msra.mxu0 0.0
    %1149 = vmatpush.xpose.msra.mxu0 0.0
    %1150 = vmatpush.xpose.msra.mxu0 0.0
    %1151 = vmatpush.xpose.msra.mxu0 0.0
    %1152 = vmatpush.xpose.msra.mxu0 0.0
    %1153 = vmatpush.xpose.msra.mxu0 0.0
    %1154 = vmatpush.xpose.msra.mxu0 %v1137
    %1155 = vmatmul.f32.gmra.mxu0 %v1135
    %v1156 = vpop.f32.mrf.mxu0
    %v1157 = vadd.f32 %v971, %v1156
    %1158 = vdwg.mxu0
    %v1159 = vsel %vm977, %v1129, -inf
    %1160 = vmax.xlane.f32.xlu0 %v1159
    %v1161 = vpop.xlane.xlu0 %1160
    %v1162 = vsel %vm977, %v1157, -inf
    %1163 = vmax.xlane.f32.xlu0 %v1162
    %v1164 = vpop.xlane.xlu0 %1163
    %v1165 = vsub.f32 %v1129, %v1161
    %v1166 = vsub.f32 %v1157, %v1164
    %v1167 = vmul.f32 %v1165, 1.442695
    %v1168 = vpow.pop %v1167
    %v1169 = vmul.f32 %v1166, 1.442695
    %v1170 = vpow.pop %v1169
    %v1171 = vsel %vm977, %v1168, 0.0
    %1172 = vadd.xlane.f32.xlu0 %v1171
    %v1173 = vpop.xlane.xlu0 %1172
    %v1174 = vsel %vm977, %v1170, 0.0
    %1175 = vadd.xlane.f32.xlu0 %v1174
    %v1176 = vpop.xlane.xlu0 %1175
    %v1177 = vrcp.pop %v1173
    %v1178 = vrcp.pop %v1176
    %v1179 = vmul.f32 %v1168, %v1177
    %v1180 = vmul.f32 %v1170, %v1178
    %1181 = vrot.lane.b32.xlu0 %v965, 56
    %v1182 = vpop.permute.xlu0 %1181
    %v1185 = vsel %vm977, %v1179, 0
    %1187 = vmatpush.msra.mxu0 0.0
    %1188 = vmatpush.msra.mxu0 0.0
    %1189 = vmatpush.msra.mxu0 0.0
    %1190 = vmatpush.msra.mxu0 0.0
    %1191 = vmatpush.msra.mxu0 0.0
    %1192 = vmatpush.msra.mxu0 0.0
    %1193 = vmatpush.msra.mxu0 0.0
    %1194 = vmatpush.msra.mxu0 0.0
    %1195 = vmatpush.msra.mxu0 0.0
    %1196 = vmatpush.msra.mxu0 0.0
    %1197 = vmatpush.msra.mxu0 0.0
    %1198 = vmatpush.msra.mxu0 0.0
    %1199 = vmatpush.msra.mxu0 0.0
    %1200 = vmatpush.msra.mxu0 0.0
    %1201 = vmatpush.msra.mxu0 0.0
    %1202 = vmatpush.msra.mxu0 %v1182
    %1203 = vmatmul.f32.gmra.mxu0 %v1185
    %v1204 = vpop.f32.mrf.mxu0
    %v1205 = vadd.f32 0.0, %v1204
    %1206 = vdwg.mxu0
    %1207 = vrot.lane.b32.xlu0 %v968, 56
    %v1208 = vpop.permute.xlu0 %1207
    %v1211 = vsel %vm977, %v1180, 0
    %1213 = vmatpush.msra.mxu0 0.0
    %1214 = vmatpush.msra.mxu0 0.0
    %1215 = vmatpush.msra.mxu0 0.0
    %1216 = vmatpush.msra.mxu0 0.0
    %1217 = vmatpush.msra.mxu0 0.0
    %1218 = vmatpush.msra.mxu0 0.0
    %1219 = vmatpush.msra.mxu0 0.0
    %1220 = vmatpush.msra.mxu0 0.0
    %1221 = vmatpush.msra.mxu0 0.0
    %1222 = vmatpush.msra.mxu0 0.0
    %1223 = vmatpush.msra.mxu0 0.0
    %1224 = vmatpush.msra.mxu0 0.0
    %1225 = vmatpush.msra.mxu0 0.0
    %1226 = vmatpush.msra.mxu0 0.0
    %1227 = vmatpush.msra.mxu0 0.0
    %1228 = vmatpush.msra.mxu0 %v1208
    %1229 = vmatmul.f32.gmra.mxu0 %v1211
    %v1230 = vpop.f32.mrf.mxu0
    %v1231 = vadd.f32 0.0, %v1230
    %1232 = vdwg.mxu0
    %1233 = vrot.lane.b32.xlu0 %v965, 112
    %v1234 = vpop.permute.xlu0 %1233
    %1235 = vrot.lane.b32.xlu0 %v965, 80
    %v1236 = vpop.permute.xlu0 %1235
    %v1237 = vsel %vm977, %v1234, 0
    %v1239 = vsel %vm977, %v1236, 0
    %1241 = vmatpush.xpose.msra.mxu0 0.0
    %1242 = vmatpush.xpose.msra.mxu0 0.0
    %1243 = vmatpush.xpose.msra.mxu0 0.0
    %1244 = vmatpush.xpose.msra.mxu0 0.0
    %1245 = vmatpush.xpose.msra.mxu0 0.0
    %1246 = vmatpush.xpose.msra.mxu0 0.0
    %1247 = vmatpush.xpose.msra.mxu0 0.0
    %1248 = vmatpush.xpose.msra.mxu0 0.0
    %1249 = vmatpush.xpose.msra.mxu0 0.0
    %1250 = vmatpush.xpose.msra.mxu0 0.0
    %1251 = vmatpush.xpose.msra.mxu0 0.0
    %1252 = vmatpush.xpose.msra.mxu0 0.0
    %1253 = vmatpush.xpose.msra.mxu0 0.0
    %1254 = vmatpush.xpose.msra.mxu0 0.0
    %1255 = vmatpush.xpose.msra.mxu0 0.0
    %1256 = vmatpush.xpose.msra.mxu0 %v1239
    %1257 = vmatmul.f32.gmra.mxu0 %v1237
    %v1258 = vpop.f32.mrf.mxu0
    %v1259 = vadd.f32 %v970, %v1258
    %1260 = vdwg.mxu0
    %1261 = vrot.lane.b32.xlu0 %v968, 112
    %v1262 = vpop.permute.xlu0 %1261
    %1263 = vrot.lane.b32.xlu0 %v968, 80
    %v1264 = vpop.permute.xlu0 %1263
    %v1265 = vsel %vm977, %v1262, 0
    %v1267 = vsel %vm977, %v1264, 0
    %1269 = vmatpush.xpose.msra.mxu0 0.0
    %1270 = vmatpush.xpose.msra.mxu0 0.0
    %1271 = vmatpush.xpose.msra.mxu0 0.0
    %1272 = vmatpush.xpose.msra.mxu0 0.0
    %1273 = vmatpush.xpose.msra.mxu0 0.0
    %1274 = vmatpush.xpose.msra.mxu0 0.0
    %1275 = vmatpush.xpose.msra.mxu0 0.0
    %1276 = vmatpush.xpose.msra.mxu0 0.0
    %1277 = vmatpush.xpose.msra.mxu0 0.0
    %1278 = vmatpush.xpose.msra.mxu0 0.0
    %1279 = vmatpush.xpose.msra.mxu0 0.0
    %1280 = vmatpush.xpose.msra.mxu0 0.0
    %1281 = vmatpush.xpose.msra.mxu0 0.0
    %1282 = vmatpush.xpose.msra.mxu0 0.0
    %1283 = vmatpush.xpose.msra.mxu0 0.0
    %1284 = vmatpush.xpose.msra.mxu0 %v1267
    %1285 = vmatmul.f32.gmra.mxu0 %v1265
    %v1286 = vpop.f32.mrf.mxu0
    %v1287 = vadd.f32 %v971, %v1286
    %1288 = vdwg.mxu0
    %v1289 = vsel %vm977, %v1259, -inf
    %1290 = vmax.xlane.f32.xlu0 %v1289
    %v1291 = vpop.xlane.xlu0 %1290
    %v1292 = vsel %vm977, %v1287, -inf
    %1293 = vmax.xlane.f32.xlu0 %v1292
    %v1294 = vpop.xlane.xlu0 %1293
    %v1295 = vsub.f32 %v1259, %v1291
    %v1296 = vsub.f32 %v1287, %v1294
    %v1297 = vmul.f32 %v1295, 1.442695
    %v1298 = vpow.pop %v1297
    %v1299 = vmul.f32 %v1296, 1.442695
    %v1300 = vpow.pop %v1299
    %v1301 = vsel %vm977, %v1298, 0.0
    %1302 = vadd.xlane.f32.xlu0 %v1301
    %v1303 = vpop.xlane.xlu0 %1302
    %v1304 = vsel %vm977, %v1300, 0.0
    %1305 = vadd.xlane.f32.xlu0 %v1304
    %v1306 = vpop.xlane.xlu0 %1305
    %v1307 = vrcp.pop %v1303
    %v1308 = vrcp.pop %v1306
    %v1309 = vmul.f32 %v1298, %v1307
    %v1310 = vmul.f32 %v1300, %v1308
    %1311 = vrot.lane.b32.xlu0 %v965, 48
    %v1312 = vpop.permute.xlu0 %1311
    %v1315 = vsel %vm977, %v1309, 0
    %1317 = vmatpush.msra.mxu0 0.0
    %1318 = vmatpush.msra.mxu0 0.0
    %1319 = vmatpush.msra.mxu0 0.0
    %1320 = vmatpush.msra.mxu0 0.0
    %1321 = vmatpush.msra.mxu0 0.0
    %1322 = vmatpush.msra.mxu0 0.0
    %1323 = vmatpush.msra.mxu0 0.0
    %1324 = vmatpush.msra.mxu0 0.0
    %1325 = vmatpush.msra.mxu0 0.0
    %1326 = vmatpush.msra.mxu0 0.0
    %1327 = vmatpush.msra.mxu0 0.0
    %1328 = vmatpush.msra.mxu0 0.0
    %1329 = vmatpush.msra.mxu0 0.0
    %1330 = vmatpush.msra.mxu0 0.0
    %1331 = vmatpush.msra.mxu0 0.0
    %1332 = vmatpush.msra.mxu0 %v1312
    %1333 = vmatmul.f32.gmra.mxu0 %v1315
    %v1334 = vpop.f32.mrf.mxu0
    %v1335 = vadd.f32 0.0, %v1334
    %1336 = vdwg.mxu0
    %1337 = vrot.lane.b32.xlu0 %v968, 48
    %v1338 = vpop.permute.xlu0 %1337
    %v1341 = vsel %vm977, %v1310, 0
    %1343 = vmatpush.msra.mxu0 0.0
    %1344 = vmatpush.msra.mxu0 0.0
    %1345 = vmatpush.msra.mxu0 0.0
    %1346 = vmatpush.msra.mxu0 0.0
    %1347 = vmatpush.msra.mxu0 0.0
    %1348 = vmatpush.msra.mxu0 0.0
    %1349 = vmatpush.msra.mxu0 0.0
    %1350 = vmatpush.msra.mxu0 0.0
    %1351 = vmatpush.msra.mxu0 0.0
    %1352 = vmatpush.msra.mxu0 0.0
    %1353 = vmatpush.msra.mxu0 0.0
    %1354 = vmatpush.msra.mxu0 0.0
    %1355 = vmatpush.msra.mxu0 0.0
    %1356 = vmatpush.msra.mxu0 0.0
    %1357 = vmatpush.msra.mxu0 0.0
    %1358 = vmatpush.msra.mxu0 %v1338
    %1359 = vmatmul.f32.gmra.mxu0 %v1341
    %v1360 = vpop.f32.mrf.mxu0
    %v1361 = vadd.f32 0.0, %v1360
    %1362 = vdwg.mxu0
    %1363 = vrot.lane.b32.xlu0 %v965, 104
    %v1364 = vpop.permute.xlu0 %1363
    %1365 = vrot.lane.b32.xlu0 %v965, 72
    %v1366 = vpop.permute.xlu0 %1365
    %v1367 = vsel %vm977, %v1364, 0
    %v1369 = vsel %vm977, %v1366, 0
    %1371 = vmatpush.xpose.msra.mxu0 0.0
    %1372 = vmatpush.xpose.msra.mxu0 0.0
    %1373 = vmatpush.xpose.msra.mxu0 0.0
    %1374 = vmatpush.xpose.msra.mxu0 0.0
    %1375 = vmatpush.xpose.msra.mxu0 0.0
    %1376 = vmatpush.xpose.msra.mxu0 0.0
    %1377 = vmatpush.xpose.msra.mxu0 0.0
    %1378 = vmatpush.xpose.msra.mxu0 0.0
    %1379 = vmatpush.xpose.msra.mxu0 0.0
    %1380 = vmatpush.xpose.msra.mxu0 0.0
    %1381 = vmatpush.xpose.msra.mxu0 0.0
    %1382 = vmatpush.xpose.msra.mxu0 0.0
    %1383 = vmatpush.xpose.msra.mxu0 0.0
    %1384 = vmatpush.xpose.msra.mxu0 0.0
    %1385 = vmatpush.xpose.msra.mxu0 0.0
    %1386 = vmatpush.xpose.msra.mxu0 %v1369
    %1387 = vmatmul.f32.gmra.mxu0 %v1367
    %v1388 = vpop.f32.mrf.mxu0
    %v1389 = vadd.f32 %v970, %v1388
    %1390 = vdwg.mxu0
    %1391 = vrot.lane.b32.xlu0 %v968, 104
    %v1392 = vpop.permute.xlu0 %1391
    %1393 = vrot.lane.b32.xlu0 %v968, 72
    %v1394 = vpop.permute.xlu0 %1393
    %v1395 = vsel %vm977, %v1392, 0
    %v1397 = vsel %vm977, %v1394, 0
    %1399 = vmatpush.xpose.msra.mxu0 0.0
    %1400 = vmatpush.xpose.msra.mxu0 0.0
    %1401 = vmatpush.xpose.msra.mxu0 0.0
    %1402 = vmatpush.xpose.msra.mxu0 0.0
    %1403 = vmatpush.xpose.msra.mxu0 0.0
    %1404 = vmatpush.xpose.msra.mxu0 0.0
    %1405 = vmatpush.xpose.msra.mxu0 0.0
    %1406 = vmatpush.xpose.msra.mxu0 0.0
    %1407 = vmatpush.xpose.msra.mxu0 0.0
    %1408 = vmatpush.xpose.msra.mxu0 0.0
    %1409 = vmatpush.xpose.msra.mxu0 0.0
    %1410 = vmatpush.xpose.msra.mxu0 0.0
    %1411 = vmatpush.xpose.msra.mxu0 0.0
    %1412 = vmatpush.xpose.msra.mxu0 0.0
    %1413 = vmatpush.xpose.msra.mxu0 0.0
    %1414 = vmatpush.xpose.msra.mxu0 %v1397
    %1415 = vmatmul.f32.gmra.mxu0 %v1395
    %v1416 = vpop.f32.mrf.mxu0
    %v1417 = vadd.f32 %v971, %v1416
    %1418 = vdwg.mxu0
    %v1419 = vsel %vm977, %v1389, -inf
    %1420 = vmax.xlane.f32.xlu0 %v1419
    %v1421 = vpop.xlane.xlu0 %1420
    %v1422 = vsel %vm977, %v1417, -inf
    %1423 = vmax.xlane.f32.xlu0 %v1422
    %v1424 = vpop.xlane.xlu0 %1423
    %v1425 = vsub.f32 %v1389, %v1421
    %v1426 = vsub.f32 %v1417, %v1424
    %v1427 = vmul.f32 %v1425, 1.442695
    %v1428 = vpow.pop %v1427
    %v1429 = vmul.f32 %v1426, 1.442695
    %v1430 = vpow.pop %v1429
    %v1431 = vsel %vm977, %v1428, 0.0
    %1432 = vadd.xlane.f32.xlu0 %v1431
    %v1433 = vpop.xlane.xlu0 %1432
    %v1434 = vsel %vm977, %v1430, 0.0
    %1435 = vadd.xlane.f32.xlu0 %v1434
    %v1436 = vpop.xlane.xlu0 %1435
    %v1437 = vrcp.pop %v1433
    %v1438 = vrcp.pop %v1436
    %v1439 = vmul.f32 %v1428, %v1437
    %v1440 = vmul.f32 %v1430, %v1438
    %1441 = vrot.lane.b32.xlu0 %v965, 40
    %v1442 = vpop.permute.xlu0 %1441
    %v1445 = vsel %vm977, %v1439, 0
    %1447 = vmatpush.msra.mxu0 0.0
    %1448 = vmatpush.msra.mxu0 0.0
    %1449 = vmatpush.msra.mxu0 0.0
    %1450 = vmatpush.msra.mxu0 0.0
    %1451 = vmatpush.msra.mxu0 0.0
    %1452 = vmatpush.msra.mxu0 0.0
    %1453 = vmatpush.msra.mxu0 0.0
    %1454 = vmatpush.msra.mxu0 0.0
    %1455 = vmatpush.msra.mxu0 0.0
    %1456 = vmatpush.msra.mxu0 0.0
    %1457 = vmatpush.msra.mxu0 0.0
    %1458 = vmatpush.msra.mxu0 0.0
    %1459 = vmatpush.msra.mxu0 0.0
    %1460 = vmatpush.msra.mxu0 0.0
    %1461 = vmatpush.msra.mxu0 0.0
    %1462 = vmatpush.msra.mxu0 %v1442
    %1463 = vmatmul.f32.gmra.mxu0 %v1445
    %v1464 = vpop.f32.mrf.mxu0
    %v1465 = vadd.f32 0.0, %v1464
    %1466 = vdwg.mxu0
    %1467 = vrot.lane.b32.xlu0 %v968, 40
    %v1468 = vpop.permute.xlu0 %1467
    %v1471 = vsel %vm977, %v1440, 0
    %1473 = vmatpush.msra.mxu0 0.0
    %1474 = vmatpush.msra.mxu0 0.0
    %1475 = vmatpush.msra.mxu0 0.0
    %1476 = vmatpush.msra.mxu0 0.0
    %1477 = vmatpush.msra.mxu0 0.0
    %1478 = vmatpush.msra.mxu0 0.0
    %1479 = vmatpush.msra.mxu0 0.0
    %1480 = vmatpush.msra.mxu0 0.0
    %1481 = vmatpush.msra.mxu0 0.0
    %1482 = vmatpush.msra.mxu0 0.0
    %1483 = vmatpush.msra.mxu0 0.0
    %1484 = vmatpush.msra.mxu0 0.0
    %1485 = vmatpush.msra.mxu0 0.0
    %1486 = vmatpush.msra.mxu0 0.0
    %1487 = vmatpush.msra.mxu0 0.0
    %1488 = vmatpush.msra.mxu0 %v1468
    %1489 = vmatmul.f32.gmra.mxu0 %v1471
    %v1490 = vpop.f32.mrf.mxu0
    %v1491 = vadd.f32 0.0, %v1490
    %1492 = vdwg.mxu0
    %1495 = vrot.lane.b32.xlu0 %v1205, 8
    %v1496 = vpop.permute.xlu0 %1495
    %1497 = vrot.lane.b32.xlu0 %v1231, 8
    %v1498 = vpop.permute.xlu0 %1497
    %1503 = vrot.lane.b32.xlu0 %v1335, 16
    %v1504 = vpop.permute.xlu0 %1503
    %1505 = vrot.lane.b32.xlu0 %v1361, 16
    %v1506 = vpop.permute.xlu0 %1505
    %1511 = vrot.lane.b32.xlu0 %v1465, 24
    %v1512 = vpop.permute.xlu0 %1511
    %1513 = vrot.lane.b32.xlu0 %v1491, 24
    %v1514 = vpop.permute.xlu0 %1513
    %v1517 = vsel %vm977, %v1075, %v1496
    %v1518 = vsel %vm977, %v1101, %v1498
    %vm1519 = vcmask 130048
    %v1520 = vsel %vm1519, %v1517, %v1504
    %v1521 = vsel %vm1519, %v1518, %v1506
    %vm1522 = vcmask 195584
    %v1523 = vsel %vm1522, %v1520, %v1512
    %v1524 = vsel %vm1522, %v1521, %v1514
    %v1525 = vld [vmem:[%s21] sm:$0xff]
    %v1526 = vld [vmem:[%s21 + $0x8] sm:$0xff]
    %v1527 = vld [vmem:[%s21 + $0x10] sm:$0xff]
    %v1528 = vld [vmem:[%s21 + $0x18] sm:$0xff]
    %v1529 = vld [vmem:[#allocation7] sm:$0x1]
    %v1531 = vperm.slane %v1529, 0
    %v1534 = vsel %vm871, %v1523, 0
    %v1537 = vsel %vm871, %v1524, 0
    %1539 = vmatpush.msra.mxu0 0.0
    %1540 = vmatpush.msra.mxu0 0.0
    %1541 = vmatpush.msra.mxu0 0.0
    %1542 = vmatpush.msra.mxu0 0.0
    %1543 = vmatpush.msra.mxu0 0.0
    %1544 = vmatpush.msra.mxu0 0.0
    %1545 = vmatpush.msra.mxu0 0.0
    %1546 = vmatpush.msra.mxu0 0.0
    %1547 = vmatpush.msra.mxu0 0.0
    %1548 = vmatpush.msra.mxu0 0.0
    %1549 = vmatpush.msra.mxu0 0.0
    %1550 = vmatpush.msra.mxu0 0.0
    %1551 = vmatpush.msra.mxu0 %v1528
    %1552 = vmatpush.msra.mxu0 %v1527
    %1553 = vmatpush.msra.mxu0 %v1526
    %1554 = vmatpush.msra.mxu0 %v1525
    %1555 = vmatmul.f32.gmra.mxu0 %v1534
    %v1556 = vpop.f32.mrf.mxu0
    %v1557 = vadd.f32 %v1531, %v1556
    %1558 = vmatmul.f32.gmra.mxu0 %v1537
    %v1559 = vpop.f32.mrf.mxu0
    %v1560 = vadd.f32 %v1531, %v1559
    %1561 = vdwg.mxu0
    %v1562 = vadd.f32 %v931, %v1557
    %v1563 = vadd.f32 %v932, %v1560
    %v1564 = vld [vmem:[%s25] sm:$0x1]
    %v1565 = vld [vmem:[#allocation8] sm:$0x1]
    %v1566 = vsel %vm871, %v1562, 0.0
    %1567 = vadd.xlane.f32.xlu0 %v1566
    %v1568 = vpop.xlane.xlu0 %1567
    %v1569 = vsel %vm871, %v1563, 0.0
    %1570 = vadd.xlane.f32.xlu0 %v1569
    %v1571 = vpop.xlane.xlu0 %1570
    %v1572 = vmul.f32 %v1568, %v884
    %v1573 = vmul.f32 %v1571, %v884
    %v1574 = vsub.f32 %v1562, %v1572
    %v1575 = vsub.f32 %v1563, %v1573
    %v1576 = vmul.f32 %v1574, %v1574
    %v1577 = vmul.f32 %v1575, %v1575
    %v1578 = vsel %vm871, %v1576, 0.0
    %1579 = vadd.xlane.f32.xlu0 %v1578
    %v1580 = vpop.xlane.xlu0 %1579
    %v1581 = vsel %vm871, %v1577, 0.0
    %1582 = vadd.xlane.f32.xlu0 %v1581
    %v1583 = vpop.xlane.xlu0 %1582
    %v1584 = vmul.f32 %v1580, %v884
    %v1585 = vmul.f32 %v1583, %v884
    %v1586 = vadd.f32 %v1584, 1e-05
    %v1587 = vadd.f32 %v1585, 1e-05
    %v1588 = vrsqrt.pop %v1586
    %v1589 = vmul.f32 %v1588, %v1586
    %v1590 = vmul.f32 %v1589, %v1588
    %v1591 = vmul.f32 0.5, %v1590
    %v1592 = vsub.f32 1.5, %v1591
    %v1593 = vmul.f32 %v1588, %v1592
    %vm1594 = vweird.f32 %v1586
    %vm1595 = vweird.f32 %v1588
    %vm1596 = vmor %vm1594, %vm1595
    %v1597 = vsel %vm1596, %v1588, %v1593
    %v1598 = vrsqrt.pop %v1587
    %v1599 = vmul.f32 %v1598, %v1587
    %v1600 = vmul.f32 %v1599, %v1598
    %v1601 = vmul.f32 0.5, %v1600
    %v1602 = vsub.f32 1.5, %v1601
    %v1603 = vmul.f32 %v1598, %v1602
    %vm1604 = vweird.f32 %v1587
    %vm1605 = vweird.f32 %v1598
    %vm1606 = vmor %vm1604, %vm1605
    %v1607 = vsel %vm1606, %v1598, %v1603
    %v1608 = vmul.f32 %v1574, %v1597
    %v1609 = vmul.f32 %v1575, %v1607
    %v1611 = vperm.slane %v1564, 0
    %v1613 = vmul.f32 %v1608, %v1611
    %v1614 = vmul.f32 %v1609, %v1611
    %v1616 = vperm.slane %v1565, 0
    %v1618 = vadd.f32 %v1613, %v1616
    %v1619 = vadd.f32 %v1614, %v1616
    %v1620 = vld [vmem:[%s29] sm:$0xff]
    %v1621 = vld [vmem:[%s29 + $0x8] sm:$0xff]
    %v1622 = vld [vmem:[%s29 + $0x10] sm:$0xff]
    %v1623 = vld [vmem:[%s29 + $0x18] sm:$0xff]
    %v1624 = vld [vmem:[#allocation10] sm:$0x1]
    %v1626 = vperm.slane %v1624, 0
    %v1629 = vsel %vm871, %v1618, 0
    %v1632 = vsel %vm871, %v1619, 0
    %1634 = vmatpush.msra.mxu0 0.0
    %1635 = vmatpush.msra.mxu0 0.0
    %1636 = vmatpush.msra.mxu0 0.0
    %1637 = vmatpush.msra.mxu0 0.0
    %1638 = vmatpush.msra.mxu0 0.0
    %1639 = vmatpush.msra.mxu0 0.0
    %1640 = vmatpush.msra.mxu0 0.0
    %1641 = vmatpush.msra.mxu0 0.0
    %1642 = vmatpush.msra.mxu0 0.0
    %1643 = vmatpush.msra.mxu0 0.0
    %1644 = vmatpush.msra.mxu0 0.0
    %1645 = vmatpush.msra.mxu0 0.0
    %1646 = vmatpush.msra.mxu0 %v1623
    %1647 = vmatpush.msra.mxu0 %v1622
    %1648 = vmatpush.msra.mxu0 %v1621
    %1649 = vmatpush.msra.mxu0 %v1620
    %1650 = vmatmul.f32.gmra.mxu0 %v1629
    %v1651 = vpop.f32.mrf.mxu0
    %v1652 = vadd.f32 %v1626, %v1651
    %1653 = vmatmul.f32.gmra.mxu0 %v1632
    %v1654 = vpop.f32.mrf.mxu0
    %v1655 = vadd.f32 %v1626, %v1654
    %1656 = vdwg.mxu0
    %v1657 = vmul.f32 %v1652, %v1652
    %v1658 = vmul.f32 %v1655, %v1655
    %v1659 = vmul.f32 %v1652, %v1657
    %v1660 = vmul.f32 %v1655, %v1658
    %v1661 = vmul.f32 %v1659, 0.044715
    %v1662 = vmul.f32 %v1660, 0.044715
    %v1663 = vadd.f32 %v1652, %v1661
    %v1664 = vadd.f32 %v1655, %v1662
    %v1665 = vmul.f32 %v1663, 0.7978846
    %v1666 = vmul.f32 %v1664, 0.7978846
    %v1667 = vtanh.pop %v1665
    %v1668 = vtanh.pop %v1666
    %v1669 = vadd.f32 %v1667, 1.0
    %v1670 = vadd.f32 %v1668, 1.0
    %v1671 = vmul.f32 %v1669, 0.5
    %v1672 = vmul.f32 %v1670, 0.5
    %v1673 = vmul.f32 %v1652, %v1671
    %v1674 = vmul.f32 %v1655, %v1672
    %v1675 = vld [vmem:[%s33] sm:$0xff]
    %v1676 = vld [vmem:[%s33 + $0x8] sm:$0xff]
    %v1677 = vld [vmem:[%s33 + $0x10] sm:$0xff]
    %v1678 = vld [vmem:[%s33 + $0x18] sm:$0xff]
    %v1679 = vld [vmem:[%s33 + $0x20] sm:$0xff]
    %v1680 = vld [vmem:[%s33 + $0x28] sm:$0xff]
    %v1681 = vld [vmem:[%s33 + $0x30] sm:$0xff]
    %v1682 = vld [vmem:[%s33 + $0x38] sm:$0xff]
    %v1683 = vld [vmem:[#allocation11] sm:$0x1]
    %v1685 = vperm.slane %v1683, 0
    %vm1687 = vcmask 523264
    %v1689 = vsel %vm1687, %v1673, 0
    %v1692 = vsel %vm1687, %v1674, 0
    %1694 = vmatpush.msra.mxu0 0.0
    %1695 = vmatpush.msra.mxu0 0.0
    %1696 = vmatpush.msra.mxu0 0.0
    %1697 = vmatpush.msra.mxu0 0.0
    %1698 = vmatpush.msra.mxu0 0.0
    %1699 = vmatpush.msra.mxu0 0.0
    %1700 = vmatpush.msra.mxu0 0.0
    %1701 = vmatpush.msra.mxu0 0.0
    %1702 = vmatpush.msra.mxu0 %v1682
    %1703 = vmatpush.msra.mxu0 %v1681
    %1704 = vmatpush.msra.mxu0 %v1680
    %1705 = vmatpush.msra.mxu0 %v1679
    %1706 = vmatpush.msra.mxu0 %v1678
    %1707 = vmatpush.msra.mxu0 %v1677
    %1708 = vmatpush.msra.mxu0 %v1676
    %1709 = vmatpush.msra.mxu0 %v1675
    %1710 = vmatmul.f32.gmra.mxu0 %v1689
    %v1711 = vpop.f32.mrf.mxu0
    %v1712 = vadd.f32 %v1685, %v1711
    %1713 = vmatmul.f32.gmra.mxu0 %v1692
    %v1714 = vpop.f32.mrf.mxu0
    %v1715 = vadd.f32 %v1685, %v1714
    %1716 = vdwg.mxu0
    %v1717 = vadd.f32 %v1618, %v1712
    %v1718 = vadd.f32 %v1619, %v1715
    %v1719 = vld [vmem:[%s37] sm:$0x1]
    %v1720 = vld [vmem:[%s39] sm:$0x1]
    %v1721 = vsel %vm871, %v1717, 0.0
    %1722 = vadd.xlane.f32.xlu0 %v1721
    %v1723 = vpop.xlane.xlu0 %1722
    %v1724 = vsel %vm871, %v1718, 0.0
    %1725 = vadd.xlane.f32.xlu0 %v1724
    %v1726 = vpop.xlane.xlu0 %1725
    %v1727 = vmul.f32 %v1723, %v884
    %v1728 = vmul.f32 %v1726, %v884
    %v1729 = vsub.f32 %v1717, %v1727
    %v1730 = vsub.f32 %v1718, %v1728
    %v1731 = vmul.f32 %v1729, %v1729
    %v1732 = vmul.f32 %v1730, %v1730
    %v1733 = vsel %vm871, %v1731, 0.0
    %1734 = vadd.xlane.f32.xlu0 %v1733
    %v1735 = vpop.xlane.xlu0 %1734
    %v1736 = vsel %vm871, %v1732, 0.0
    %1737 = vadd.xlane.f32.xlu0 %v1736
    %v1738 = vpop.xlane.xlu0 %1737
    %v1739 = vmul.f32 %v1735, %v884
    %v1740 = vmul.f32 %v1738, %v884
    %v1741 = vadd.f32 %v1739, 1e-05
    %v1742 = vadd.f32 %v1740, 1e-05
    %v1743 = vrsqrt.pop %v1741
    %v1744 = vmul.f32 %v1743, %v1741
    %v1745 = vmul.f32 %v1744, %v1743
    %v1746 = vmul.f32 0.5, %v1745
    %v1747 = vsub.f32 1.5, %v1746
    %v1748 = vmul.f32 %v1743, %v1747
    %vm1749 = vweird.f32 %v1741
    %vm1750 = vweird.f32 %v1743
    %vm1751 = vmor %vm1749, %vm1750
    %v1752 = vsel %vm1751, %v1743, %v1748
    %v1753 = vrsqrt.pop %v1742
    %v1754 = vmul.f32 %v1753, %v1742
    %v1755 = vmul.f32 %v1754, %v1753
    %v1756 = vmul.f32 0.5, %v1755
    %v1757 = vsub.f32 1.5, %v1756
    %v1758 = vmul.f32 %v1753, %v1757
    %vm1759 = vweird.f32 %v1742
    %vm1760 = vweird.f32 %v1753
    %vm1761 = vmor %vm1759, %vm1760
    %v1762 = vsel %vm1761, %v1753, %v1758
    %v1763 = vmul.f32 %v1729, %v1752
    %v1764 = vmul.f32 %v1730, %v1762
    %v1766 = vperm.slane %v1719, 0
    %v1768 = vmul.f32 %v1763, %v1766
    %v1769 = vmul.f32 %v1764, %v1766
    %v1771 = vperm.slane %v1720, 0
    %v1773 = vadd.f32 %v1768, %v1771
    %v1774 = vadd.f32 %v1769, %v1771
    %s1775 = scalar_lea.vmem %s17, 32
    %v1776 = vld [vmem:[%s1775] sm:$0xff]
    %v1777 = vld [vmem:[%s1775 + $0x8] sm:$0xff]
    %v1778 = vld [vmem:[%s1775 + $0x10] sm:$0xff]
    %v1779 = vld [vmem:[%s1775 + $0x18] sm:$0xff]
    %s1780 = scalar_lea.vmem [#allocation5], 1
    %v1781 = vld [vmem:[%s1780] sm:$0x1]
    %v1783 = vperm.slane %v1781, 0
    %v1786 = vsel %vm871, %v1773, 0
    %v1789 = vsel %vm871, %v1774, 0
    %1791 = vmatpush.msra.mxu0 0.0
    %1792 = vmatpush.msra.mxu0 0.0
    %1793 = vmatpush.msra.mxu0 0.0
    %1794 = vmatpush.msra.mxu0 0.0
    %1795 = vmatpush.msra.mxu0 0.0
    %1796 = vmatpush.msra.mxu0 0.0
    %1797 = vmatpush.msra.mxu0 0.0
    %1798 = vmatpush.msra.mxu0 0.0
    %1799 = vmatpush.msra.mxu0 0.0
    %1800 = vmatpush.msra.mxu0 0.0
    %1801 = vmatpush.msra.mxu0 0.0
    %1802 = vmatpush.msra.mxu0 0.0
    %1803 = vmatpush.msra.mxu0 %v1779
    %1804 = vmatpush.msra.mxu0 %v1778
    %1805 = vmatpush.msra.mxu0 %v1777
    %1806 = vmatpush.msra.mxu0 %v1776
    %1807 = vmatmul.f32.gmra.mxu0 %v1786
    %v1808 = vpop.f32.mrf.mxu0
    %v1809 = vadd.f32 %v1783, %v1808
    %1810 = vmatmul.f32.gmra.mxu0 %v1789
    %v1811 = vpop.f32.mrf.mxu0
    %v1812 = vadd.f32 %v1783, %v1811
    %1813 = vdwg.mxu0
    %1815 = vrot.lane.b32.xlu0 %v1809, 96
    %v1816 = vpop.permute.xlu0 %1815
    %v1817 = vsel %vm977, %v1809, 0
    %v1819 = vsel %vm977, %v1816, 0
    %1821 = vmatpush.xpose.msra.mxu0 0.0
    %1822 = vmatpush.xpose.msra.mxu0 0.0
    %1823 = vmatpush.xpose.msra.mxu0 0.0
    %1824 = vmatpush.xpose.msra.mxu0 0.0
    %1825 = vmatpush.xpose.msra.mxu0 0.0
    %1826 = vmatpush.xpose.msra.mxu0 0.0
    %1827 = vmatpush.xpose.msra.mxu0 0.0
    %1828 = vmatpush.xpose.msra.mxu0 0.0
    %1829 = vmatpush.xpose.msra.mxu0 0.0
    %1830 = vmatpush.xpose.msra.mxu0 0.0
    %1831 = vmatpush.xpose.msra.mxu0 0.0
    %1832 = vmatpush.xpose.msra.mxu0 0.0
    %1833 = vmatpush.xpose.msra.mxu0 0.0
    %1834 = vmatpush.xpose.msra.mxu0 0.0
    %1835 = vmatpush.xpose.msra.mxu0 0.0
    %1836 = vmatpush.xpose.msra.mxu0 %v1819
    %1837 = vmatmul.f32.gmra.mxu0 %v1817
    %v1838 = vpop.f32.mrf.mxu0
    %v1839 = vadd.f32 %v970, %v1838
    %1840 = vdwg.mxu0
    %1842 = vrot.lane.b32.xlu0 %v1812, 96
    %v1843 = vpop.permute.xlu0 %1842
    %v1844 = vsel %vm977, %v1812, 0
    %v1846 = vsel %vm977, %v1843, 0
    %1848 = vmatpush.xpose.msra.mxu0 0.0
    %1849 = vmatpush.xpose.msra.mxu0 0.0
    %1850 = vmatpush.xpose.msra.mxu0 0.0
    %1851 = vmatpush.xpose.msra.mxu0 0.0
    %1852 = vmatpush.xpose.msra.mxu0 0.0
    %1853 = vmatpush.xpose.msra.mxu0 0.0
    %1854 = vmatpush.xpose.msra.mxu0 0.0
    %1855 = vmatpush.xpose.msra.mxu0 0.0
    %1856 = vmatpush.xpose.msra.mxu0 0.0
    %1857 = vmatpush.xpose.msra.mxu0 0.0
    %1858 = vmatpush.xpose.msra.mxu0 0.0
    %1859 = vmatpush.xpose.msra.mxu0 0.0
    %1860 = vmatpush.xpose.msra.mxu0 0.0
    %1861 = vmatpush.xpose.msra.mxu0 0.0
    %1862 = vmatpush.xpose.msra.mxu0 0.0
    %1863 = vmatpush.xpose.msra.mxu0 %v1846
    %1864 = vmatmul.f32.gmra.mxu0 %v1844
    %v1865 = vpop.f32.mrf.mxu0
    %v1866 = vadd.f32 %v971, %v1865
    %1867 = vdwg.mxu0
    %v1868 = vsel %vm977, %v1839, -inf
    %1869 = vmax.xlane.f32.xlu0 %v1868
    %v1870 = vpop.xlane.xlu0 %1869
    %v1871 = vsel %vm977, %v1866, -inf
    %1872 = vmax.xlane.f32.xlu0 %v1871
    %v1873 = vpop.xlane.xlu0 %1872
    %v1874 = vsub.f32 %v1839, %v1870
    %v1875 = vsub.f32 %v1866, %v1873
    %v1876 = vmul.f32 %v1874, 1.442695
    %v1877 = vpow.pop %v1876
    %v1878 = vmul.f32 %v1875, 1.442695
    %v1879 = vpow.pop %v1878
    %v1880 = vsel %vm977, %v1877, 0.0
    %1881 = vadd.xlane.f32.xlu0 %v1880
    %v1882 = vpop.xlane.xlu0 %1881
    %v1883 = vsel %vm977, %v1879, 0.0
    %1884 = vadd.xlane.f32.xlu0 %v1883
    %v1885 = vpop.xlane.xlu0 %1884
    %v1886 = vrcp.pop %v1882
    %v1887 = vrcp.pop %v1885
    %v1888 = vmul.f32 %v1877, %v1886
    %v1889 = vmul.f32 %v1879, %v1887
    %1890 = vrot.lane.b32.xlu0 %v1809, 64
    %v1891 = vpop.permute.xlu0 %1890
    %v1894 = vsel %vm977, %v1888, 0
    %1896 = vmatpush.msra.mxu0 0.0
    %1897 = vmatpush.msra.mxu0 0.0
    %1898 = vmatpush.msra.mxu0 0.0
    %1899 = vmatpush.msra.mxu0 0.0
    %1900 = vmatpush.msra.mxu0 0.0
    %1901 = vmatpush.msra.mxu0 0.0
    %1902 = vmatpush.msra.mxu0 0.0
    %1903 = vmatpush.msra.mxu0 0.0
    %1904 = vmatpush.msra.mxu0 0.0
    %1905 = vmatpush.msra.mxu0 0.0
    %1906 = vmatpush.msra.mxu0 0.0
    %1907 = vmatpush.msra.mxu0 0.0
    %1908 = vmatpush.msra.mxu0 0.0
    %1909 = vmatpush.msra.mxu0 0.0
    %1910 = vmatpush.msra.mxu0 0.0
    %1911 = vmatpush.msra.mxu0 %v1891
    %1912 = vmatmul.f32.gmra.mxu0 %v1894
    %v1913 = vpop.f32.mrf.mxu0
    %v1914 = vadd.f32 0.0, %v1913
    %1915 = vdwg.mxu0
    %1916 = vrot.lane.b32.xlu0 %v1812, 64
    %v1917 = vpop.permute.xlu0 %1916
    %v1920 = vsel %vm977, %v1889, 0
    %1922 = vmatpush.msra.mxu0 0.0
    %1923 = vmatpush.msra.mxu0 0.0
    %1924 = vmatpush.msra.mxu0 0.0
    %1925 = vmatpush.msra.mxu0 0.0
    %1926 = vmatpush.msra.mxu0 0.0
    %1927 = vmatpush.msra.mxu0 0.0
    %1928 = vmatpush.msra.mxu0 0.0
    %1929 = vmatpush.msra.mxu0 0.0
    %1930 = vmatpush.msra.mxu0 0.0
    %1931 = vmatpush.msra.mxu0 0.0
    %1932 = vmatpush.msra.mxu0 0.0
    %1933 = vmatpush.msra.mxu0 0.0
    %1934 = vmatpush.msra.mxu0 0.0
    %1935 = vmatpush.msra.mxu0 0.0
    %1936 = vmatpush.msra.mxu0 0.0
    %1937 = vmatpush.msra.mxu0 %v1917
    %1938 = vmatmul.f32.gmra.mxu0 %v1920
    %v1939 = vpop.f32.mrf.mxu0
    %v1940 = vadd.f32 0.0, %v1939
    %1941 = vdwg.mxu0
    %1942 = vrot.lane.b32.xlu0 %v1809, 120
    %v1943 = vpop.permute.xlu0 %1942
    %1944 = vrot.lane.b32.xlu0 %v1809, 88
    %v1945 = vpop.permute.xlu0 %1944
    %v1946 = vsel %vm977, %v1943, 0
    %v1948 = vsel %vm977, %v1945, 0
    %1950 = vmatpush.xpose.msra.mxu0 0.0
    %1951 = vmatpush.xpose.msra.mxu0 0.0
    %1952 = vmatpush.xpose.msra.mxu0 0.0
    %1953 = vmatpush.xpose.msra.mxu0 0.0
    %1954 = vmatpush.xpose.msra.mxu0 0.0
    %1955 = vmatpush.xpose.msra.mxu0 0.0
    %1956 = vmatpush.xpose.msra.mxu0 0.0
    %1957 = vmatpush.xpose.msra.mxu0 0.0
    %1958 = vmatpush.xpose.msra.mxu0 0.0
    %1959 = vmatpush.xpose.msra.mxu0 0.0
    %1960 = vmatpush.xpose.msra.mxu0 0.0
    %1961 = vmatpush.xpose.msra.mxu0 0.0
    %1962 = vmatpush.xpose.msra.mxu0 0.0
    %1963 = vmatpush.xpose.msra.mxu0 0.0
    %1964 = vmatpush.xpose.msra.mxu0 0.0
    %1965 = vmatpush.xpose.msra.mxu0 %v1948
    %1966 = vmatmul.f32.gmra.mxu0 %v1946
    %v1967 = vpop.f32.mrf.mxu0
    %v1968 = vadd.f32 %v970, %v1967
    %1969 = vdwg.mxu0
    %1970 = vrot.lane.b32.xlu0 %v1812, 120
    %v1971 = vpop.permute.xlu0 %1970
    %1972 = vrot.lane.b32.xlu0 %v1812, 88
    %v1973 = vpop.permute.xlu0 %1972
    %v1974 = vsel %vm977, %v1971, 0
    %v1976 = vsel %vm977, %v1973, 0
    %1978 = vmatpush.xpose.msra.mxu0 0.0
    %1979 = vmatpush.xpose.msra.mxu0 0.0
    %1980 = vmatpush.xpose.msra.mxu0 0.0
    %1981 = vmatpush.xpose.msra.mxu0 0.0
    %1982 = vmatpush.xpose.msra.mxu0 0.0
    %1983 = vmatpush.xpose.msra.mxu0 0.0
    %1984 = vmatpush.xpose.msra.mxu0 0.0
    %1985 = vmatpush.xpose.msra.mxu0 0.0
    %1986 = vmatpush.xpose.msra.mxu0 0.0
    %1987 = vmatpush.xpose.msra.mxu0 0.0
    %1988 = vmatpush.xpose.msra.mxu0 0.0
    %1989 = vmatpush.xpose.msra.mxu0 0.0
    %1990 = vmatpush.xpose.msra.mxu0 0.0
    %1991 = vmatpush.xpose.msra.mxu0 0.0
    %1992 = vmatpush.xpose.msra.mxu0 0.0
    %1993 = vmatpush.xpose.msra.mxu0 %v1976
    %1994 = vmatmul.f32.gmra.mxu0 %v1974
    %v1995 = vpop.f32.mrf.mxu0
    %v1996 = vadd.f32 %v971, %v1995
    %1997 = vdwg.mxu0
    %v1998 = vsel %vm977, %v1968, -inf
    %1999 = vmax.xlane.f32.xlu0 %v1998
    %v2000 = vpop.xlane.xlu0 %1999
    %v2001 = vsel %vm977, %v1996, -inf
    %2002 = vmax.xlane.f32.xlu0 %v2001
    %v2003 = vpop.xlane.xlu0 %2002
    %v2004 = vsub.f32 %v1968, %v2000
    %v2005 = vsub.f32 %v1996, %v2003
    %v2006 = vmul.f32 %v2004, 1.442695
    %v2007 = vpow.pop %v2006
    %v2008 = vmul.f32 %v2005, 1.442695
    %v2009 = vpow.pop %v2008
    %v2010 = vsel %vm977, %v2007, 0.0
    %2011 = vadd.xlane.f32.xlu0 %v2010
    %v2012 = vpop.xlane.xlu0 %2011
    %v2013 = vsel %vm977, %v2009, 0.0
    %2014 = vadd.xlane.f32.xlu0 %v2013
    %v2015 = vpop.xlane.xlu0 %2014
    %v2016 = vrcp.pop %v2012
    %v2017 = vrcp.pop %v2015
    %v2018 = vmul.f32 %v2007, %v2016
    %v2019 = vmul.f32 %v2009, %v2017
    %2020 = vrot.lane.b32.xlu0 %v1809, 56
    %v2021 = vpop.permute.xlu0 %2020
    %v2024 = vsel %vm977, %v2018, 0
    %2026 = vmatpush.msra.mxu0 0.0
    %2027 = vmatpush.msra.mxu0 0.0
    %2028 = vmatpush.msra.mxu0 0.0
    %2029 = vmatpush.msra.mxu0 0.0
    %2030 = vmatpush.msra.mxu0 0.0
    %2031 = vmatpush.msra.mxu0 0.0
    %2032 = vmatpush.msra.mxu0 0.0
    %2033 = vmatpush.msra.mxu0 0.0
    %2034 = vmatpush.msra.mxu0 0.0
    %2035 = vmatpush.msra.mxu0 0.0
    %2036 = vmatpush.msra.mxu0 0.0
    %2037 = vmatpush.msra.mxu0 0.0
    %2038 = vmatpush.msra.mxu0 0.0
    %2039 = vmatpush.msra.mxu0 0.0
    %2040 = vmatpush.msra.mxu0 0.0
    %2041 = vmatpush.msra.mxu0 %v2021
    %2042 = vmatmul.f32.gmra.mxu0 %v2024
    %v2043 = vpop.f32.mrf.mxu0
    %v2044 = vadd.f32 0.0, %v2043
    %2045 = vdwg.mxu0
    %2046 = vrot.lane.b32.xlu0 %v1812, 56
    %v2047 = vpop.permute.xlu0 %2046
    %v2050 = vsel %vm977, %v2019, 0
    %2052 = vmatpush.msra.mxu0 0.0
    %2053 = vmatpush.msra.mxu0 0.0
    %2054 = vmatpush.msra.mxu0 0.0
    %2055 = vmatpush.msra.mxu0 0.0
    %2056 = vmatpush.msra.mxu0 0.0
    %2057 = vmatpush.msra.mxu0 0.0
    %2058 = vmatpush.msra.mxu0 0.0
    %2059 = vmatpush.msra.mxu0 0.0
    %2060 = vmatpush.msra.mxu0 0.0
    %2061 = vmatpush.msra.mxu0 0.0
    %2062 = vmatpush.msra.mxu0 0.0
    %2063 = vmatpush.msra.mxu0 0.0
    %2064 = vmatpush.msra.mxu0 0.0
    %2065 = vmatpush.msra.mxu0 0.0
    %2066 = vmatpush.msra.mxu0 0.0
    %2067 = vmatpush.msra.mxu0 %v2047
    %2068 = vmatmul.f32.gmra.mxu0 %v2050
    %v2069 = vpop.f32.mrf.mxu0
    %v2070 = vadd.f32 0.0, %v2069
    %2071 = vdwg.mxu0
    %2072 = vrot.lane.b32.xlu0 %v1809, 112
    %v2073 = vpop.permute.xlu0 %2072
    %2074 = vrot.lane.b32.xlu0 %v1809, 80
    %v2075 = vpop.permute.xlu0 %2074
    %v2076 = vsel %vm977, %v2073, 0
    %v2078 = vsel %vm977, %v2075, 0
    %2080 = vmatpush.xpose.msra.mxu0 0.0
    %2081 = vmatpush.xpose.msra.mxu0 0.0
    %2082 = vmatpush.xpose.msra.mxu0 0.0
    %2083 = vmatpush.xpose.msra.mxu0 0.0
    %2084 = vmatpush.xpose.msra.mxu0 0.0
    %2085 = vmatpush.xpose.msra.mxu0 0.0
    %2086 = vmatpush.xpose.msra.mxu0 0.0
    %2087 = vmatpush.xpose.msra.mxu0 0.0
    %2088 = vmatpush.xpose.msra.mxu0 0.0
    %2089 = vmatpush.xpose.msra.mxu0 0.0
    %2090 = vmatpush.xpose.msra.mxu0 0.0
    %2091 = vmatpush.xpose.msra.mxu0 0.0
    %2092 = vmatpush.xpose.msra.mxu0 0.0
    %2093 = vmatpush.xpose.msra.mxu0 0.0
    %2094 = vmatpush.xpose.msra.mxu0 0.0
    %2095 = vmatpush.xpose.msra.mxu0 %v2078
    %2096 = vmatmul.f32.gmra.mxu0 %v2076
    %v2097 = vpop.f32.mrf.mxu0
    %v2098 = vadd.f32 %v970, %v2097
    %2099 = vdwg.mxu0
    %2100 = vrot.lane.b32.xlu0 %v1812, 112
    %v2101 = vpop.permute.xlu0 %2100
    %2102 = vrot.lane.b32.xlu0 %v1812, 80
    %v2103 = vpop.permute.xlu0 %2102
    %v2104 = vsel %vm977, %v2101, 0
    %v2106 = vsel %vm977, %v2103, 0
    %2108 = vmatpush.xpose.msra.mxu0 0.0
    %2109 = vmatpush.xpose.msra.mxu0 0.0
    %2110 = vmatpush.xpose.msra.mxu0 0.0
    %2111 = vmatpush.xpose.msra.mxu0 0.0
    %2112 = vmatpush.xpose.msra.mxu0 0.0
    %2113 = vmatpush.xpose.msra.mxu0 0.0
    %2114 = vmatpush.xpose.msra.mxu0 0.0
    %2115 = vmatpush.xpose.msra.mxu0 0.0
    %2116 = vmatpush.xpose.msra.mxu0 0.0
    %2117 = vmatpush.xpose.msra.mxu0 0.0
    %2118 = vmatpush.xpose.msra.mxu0 0.0
    %2119 = vmatpush.xpose.msra.mxu0 0.0
    %2120 = vmatpush.xpose.msra.mxu0 0.0
    %2121 = vmatpush.xpose.msra.mxu0 0.0
    %2122 = vmatpush.xpose.msra.mxu0 0.0
    %2123 = vmatpush.xpose.msra.mxu0 %v2106
    %2124 = vmatmul.f32.gmra.mxu0 %v2104
    %v2125 = vpop.f32.mrf.mxu0
    %v2126 = vadd.f32 %v971, %v2125
    %2127 = vdwg.mxu0
    %v2128 = vsel %vm977, %v2098, -inf
    %2129 = vmax.xlane.f32.xlu0 %v2128
    %v2130 = vpop.xlane.xlu0 %2129
    %v2131 = vsel %vm977, %v2126, -inf
    %2132 = vmax.xlane.f32.xlu0 %v2131
    %v2133 = vpop.xlane.xlu0 %2132
    %v2134 = vsub.f32 %v2098, %v2130
    %v2135 = vsub.f32 %v2126, %v2133
    %v2136 = vmul.f32 %v2134, 1.442695
    %v2137 = vpow.pop %v2136
    %v2138 = vmul.f32 %v2135, 1.442695
    %v2139 = vpow.pop %v2138
    %v2140 = vsel %vm977, %v2137, 0.0
    %2141 = vadd.xlane.f32.xlu0 %v2140
    %v2142 = vpop.xlane.xlu0 %2141
    %v2143 = vsel %vm977, %v2139, 0.0
    %2144 = vadd.xlane.f32.xlu0 %v2143
    %v2145 = vpop.xlane.xlu0 %2144
    %v2146 = vrcp.pop %v2142
    %v2147 = vrcp.pop %v2145
    %v2148 = vmul.f32 %v2137, %v2146
    %v2149 = vmul.f32 %v2139, %v2147
    %2150 = vrot.lane.b32.xlu0 %v1809, 48
    %v2151 = vpop.permute.xlu0 %2150
    %v2154 = vsel %vm977, %v2148, 0
    %2156 = vmatpush.msra.mxu0 0.0
    %2157 = vmatpush.msra.mxu0 0.0
    %2158 = vmatpush.msra.mxu0 0.0
    %2159 = vmatpush.msra.mxu0 0.0
    %2160 = vmatpush.msra.mxu0 0.0
    %2161 = vmatpush.msra.mxu0 0.0
    %2162 = vmatpush.msra.mxu0 0.0
    %2163 = vmatpush.msra.mxu0 0.0
    %2164 = vmatpush.msra.mxu0 0.0
    %2165 = vmatpush.msra.mxu0 0.0
    %2166 = vmatpush.msra.mxu0 0.0
    %2167 = vmatpush.msra.mxu0 0.0
    %2168 = vmatpush.msra.mxu0 0.0
    %2169 = vmatpush.msra.mxu0 0.0
    %2170 = vmatpush.msra.mxu0 0.0
    %2171 = vmatpush.msra.mxu0 %v2151
    %2172 = vmatmul.f32.gmra.mxu0 %v2154
    %v2173 = vpop.f32.mrf.mxu0
    %v2174 = vadd.f32 0.0, %v2173
    %2175 = vdwg.mxu0
    %2176 = vrot.lane.b32.xlu0 %v1812, 48
    %v2177 = vpop.permute.xlu0 %2176
    %v2180 = vsel %vm977, %v2149, 0
    %2182 = vmatpush.msra.mxu0 0.0
    %2183 = vmatpush.msra.mxu0 0.0
    %2184 = vmatpush.msra.mxu0 0.0
    %2185 = vmatpush.msra.mxu0 0.0
    %2186 = vmatpush.msra.mxu0 0.0
    %2187 = vmatpush.msra.mxu0 0.0
    %2188 = vmatpush.msra.mxu0 0.0
    %2189 = vmatpush.msra.mxu0 0.0
    %2190 = vmatpush.msra.mxu0 0.0
    %2191 = vmatpush.msra.mxu0 0.0
    %2192 = vmatpush.msra.mxu0 0.0
    %2193 = vmatpush.msra.mxu0 0.0
    %2194 = vmatpush.msra.mxu0 0.0
    %2195 = vmatpush.msra.mxu0 0.0
    %2196 = vmatpush.msra.mxu0 0.0
    %2197 = vmatpush.msra.mxu0 %v2177
    %2198 = vmatmul.f32.gmra.mxu0 %v2180
    %v2199 = vpop.f32.mrf.mxu0
    %v2200 = vadd.f32 0.0, %v2199
    %2201 = vdwg.mxu0
    %2202 = vrot.lane.b32.xlu0 %v1809, 104
    %v2203 = vpop.permute.xlu0 %2202
    %2204 = vrot.lane.b32.xlu0 %v1809, 72
    %v2205 = vpop.permute.xlu0 %2204
    %v2206 = vsel %vm977, %v2203, 0
    %v2208 = vsel %vm977, %v2205, 0
    %2210 = vmatpush.xpose.msra.mxu0 0.0
    %2211 = vmatpush.xpose.msra.mxu0 0.0
    %2212 = vmatpush.xpose.msra.mxu0 0.0
    %2213 = vmatpush.xpose.msra.mxu0 0.0
    %2214 = vmatpush.xpose.msra.mxu0 0.0
    %2215 = vmatpush.xpose.msra.mxu0 0.0
    %2216 = vmatpush.xpose.msra.mxu0 0.0
    %2217 = vmatpush.xpose.msra.mxu0 0.0
    %2218 = vmatpush.xpose.msra.mxu0 0.0
    %2219 = vmatpush.xpose.msra.mxu0 0.0
    %2220 = vmatpush.xpose.msra.mxu0 0.0
    %2221 = vmatpush.xpose.msra.mxu0 0.0
    %2222 = vmatpush.xpose.msra.mxu0 0.0
    %2223 = vmatpush.xpose.msra.mxu0 0.0
    %2224 = vmatpush.xpose.msra.mxu0 0.0
    %2225 = vmatpush.xpose.msra.mxu0 %v2208
    %2226 = vmatmul.f32.gmra.mxu0 %v2206
    %v2227 = vpop.f32.mrf.mxu0
    %v2228 = vadd.f32 %v970, %v2227
    %2229 = vdwg.mxu0
    %2230 = vrot.lane.b32.xlu0 %v1812, 104
    %v2231 = vpop.permute.xlu0 %2230
    %2232 = vrot.lane.b32.xlu0 %v1812, 72
    %v2233 = vpop.permute.xlu0 %2232
    %v2234 = vsel %vm977, %v2231, 0
    %v2236 = vsel %vm977, %v2233, 0
    %2238 = vmatpush.xpose.msra.mxu0 0.0
    %2239 = vmatpush.xpose.msra.mxu0 0.0
    %2240 = vmatpush.xpose.msra.mxu0 0.0
    %2241 = vmatpush.xpose.msra.mxu0 0.0
    %2242 = vmatpush.xpose.msra.mxu0 0.0
    %2243 = vmatpush.xpose.msra.mxu0 0.0
    %2244 = vmatpush.xpose.msra.mxu0 0.0
    %2245 = vmatpush.xpose.msra.mxu0 0.0
    %2246 = vmatpush.xpose.msra.mxu0 0.0
    %2247 = vmatpush.xpose.msra.mxu0 0.0
    %2248 = vmatpush.xpose.msra.mxu0 0.0
    %2249 = vmatpush.xpose.msra.mxu0 0.0
    %2250 = vmatpush.xpose.msra.mxu0 0.0
    %2251 = vmatpush.xpose.msra.mxu0 0.0
    %2252 = vmatpush.xpose.msra.mxu0 0.0
    %2253 = vmatpush.xpose.msra.mxu0 %v2236
    %2254 = vmatmul.f32.gmra.mxu0 %v2234
    %v2255 = vpop.f32.mrf.mxu0
    %v2256 = vadd.f32 %v971, %v2255
    %2257 = vdwg.mxu0
    %v2258 = vsel %vm977, %v2228, -inf
    %2259 = vmax.xlane.f32.xlu0 %v2258
    %v2260 = vpop.xlane.xlu0 %2259
    %v2261 = vsel %vm977, %v2256, -inf
    %2262 = vmax.xlane.f32.xlu0 %v2261
    %v2263 = vpop.xlane.xlu0 %2262
    %v2264 = vsub.f32 %v2228, %v2260
    %v2265 = vsub.f32 %v2256, %v2263
    %v2266 = vmul.f32 %v2264, 1.442695
    %v2267 = vpow.pop %v2266
    %v2268 = vmul.f32 %v2265, 1.442695
    %v2269 = vpow.pop %v2268
    %v2270 = vsel %vm977, %v2267, 0.0
    %2271 = vadd.xlane.f32.xlu0 %v2270
    %v2272 = vpop.xlane.xlu0 %2271
    %v2273 = vsel %vm977, %v2269, 0.0
    %2274 = vadd.xlane.f32.xlu0 %v2273
    %v2275 = vpop.xlane.xlu0 %2274
    %v2276 = vrcp.pop %v2272
    %v2277 = vrcp.pop %v2275
    %v2278 = vmul.f32 %v2267, %v2276
    %v2279 = vmul.f32 %v2269, %v2277
    %2280 = vrot.lane.b32.xlu0 %v1809, 40
    %v2281 = vpop.permute.xlu0 %2280
    %v2284 = vsel %vm977, %v2278, 0
    %2286 = vmatpush.msra.mxu0 0.0
    %2287 = vmatpush.msra.mxu0 0.0
    %2288 = vmatpush.msra.mxu0 0.0
    %2289 = vmatpush.msra.mxu0 0.0
    %2290 = vmatpush.msra.mxu0 0.0
    %2291 = vmatpush.msra.mxu0 0.0
    %2292 = vmatpush.msra.mxu0 0.0
    %2293 = vmatpush.msra.mxu0 0.0
    %2294 = vmatpush.msra.mxu0 0.0
    %2295 = vmatpush.msra.mxu0 0.0
    %2296 = vmatpush.msra.mxu0 0.0
    %2297 = vmatpush.msra.mxu0 0.0
    %2298 = vmatpush.msra.mxu0 0.0
    %2299 = vmatpush.msra.mxu0 0.0
    %2300 = vmatpush.msra.mxu0 0.0
    %2301 = vmatpush.msra.mxu0 %v2281
    %2302 = vmatmul.f32.gmra.mxu0 %v2284
    %v2303 = vpop.f32.mrf.mxu0
    %v2304 = vadd.f32 0.0, %v2303
    %2305 = vdwg.mxu0
    %2306 = vrot.lane.b32.xlu0 %v1812, 40
    %v2307 = vpop.permute.xlu0 %2306
    %v2310 = vsel %vm977, %v2279, 0
    %2312 = vmatpush.msra.mxu0 0.0
    %2313 = vmatpush.msra.mxu0 0.0
    %2314 = vmatpush.msra.mxu0 0.0
    %2315 = vmatpush.msra.mxu0 0.0
    %2316 = vmatpush.msra.mxu0 0.0
    %2317 = vmatpush.msra.mxu0 0.0
    %2318 = vmatpush.msra.mxu0 0.0
    %2319 = vmatpush.msra.mxu0 0.0
    %2320 = vmatpush.msra.mxu0 0.0
    %2321 = vmatpush.msra.mxu0 0.0
    %2322 = vmatpush.msra.mxu0 0.0
    %2323 = vmatpush.msra.mxu0 0.0
    %2324 = vmatpush.msra.mxu0 0.0
    %2325 = vmatpush.msra.mxu0 0.0
    %2326 = vmatpush.msra.mxu0 0.0
    %2327 = vmatpush.msra.mxu0 %v2307
    %2328 = vmatmul.f32.gmra.mxu0 %v2310
    %v2329 = vpop.f32.mrf.mxu0
    %v2330 = vadd.f32 0.0, %v2329
    %2331 = vdwg.mxu0
    %2334 = vrot.lane.b32.xlu0 %v2044, 8
    %v2335 = vpop.permute.xlu0 %2334
    %2336 = vrot.lane.b32.xlu0 %v2070, 8
    %v2337 = vpop.permute.xlu0 %2336
    %2342 = vrot.lane.b32.xlu0 %v2174, 16
    %v2343 = vpop.permute.xlu0 %2342
    %2344 = vrot.lane.b32.xlu0 %v2200, 16
    %v2345 = vpop.permute.xlu0 %2344
    %2350 = vrot.lane.b32.xlu0 %v2304, 24
    %v2351 = vpop.permute.xlu0 %2350
    %2352 = vrot.lane.b32.xlu0 %v2330, 24
    %v2353 = vpop.permute.xlu0 %2352
    %v2356 = vsel %vm977, %v1914, %v2335
    %v2357 = vsel %vm977, %v1940, %v2337
    %v2358 = vsel %vm1519, %v2356, %v2343
    %v2359 = vsel %vm1519, %v2357, %v2345
    %v2360 = vsel %vm1522, %v2358, %v2351
    %v2361 = vsel %vm1522, %v2359, %v2353
    %s2362 = scalar_lea.vmem %s21, 32
    %v2363 = vld [vmem:[%s2362] sm:$0xff]
    %v2364 = vld [vmem:[%s2362 + $0x8] sm:$0xff]
    %v2365 = vld [vmem:[%s2362 + $0x10] sm:$0xff]
    %v2366 = vld [vmem:[%s2362 + $0x18] sm:$0xff]
    %s2367 = scalar_lea.vmem [#allocation7], 1
    %v2368 = vld [vmem:[%s2367] sm:$0x1]
    %v2370 = vperm.slane %v2368, 0
    %v2373 = vsel %vm871, %v2360, 0
    %v2376 = vsel %vm871, %v2361, 0
    %2378 = vmatpush.msra.mxu0 0.0
    %2379 = vmatpush.msra.mxu0 0.0
    %2380 = vmatpush.msra.mxu0 0.0
    %2381 = vmatpush.msra.mxu0 0.0
    %2382 = vmatpush.msra.mxu0 0.0
    %2383 = vmatpush.msra.mxu0 0.0
    %2384 = vmatpush.msra.mxu0 0.0
    %2385 = vmatpush.msra.mxu0 0.0
    %2386 = vmatpush.msra.mxu0 0.0
    %2387 = vmatpush.msra.mxu0 0.0
    %2388 = vmatpush.msra.mxu0 0.0
    %2389 = vmatpush.msra.mxu0 0.0
    %2390 = vmatpush.msra.mxu0 %v2366
    %2391 = vmatpush.msra.mxu0 %v2365
    %2392 = vmatpush.msra.mxu0 %v2364
    %2393 = vmatpush.msra.mxu0 %v2363
    %2394 = vmatmul.f32.gmra.mxu0 %v2373
    %v2395 = vpop.f32.mrf.mxu0
    %v2396 = vadd.f32 %v2370, %v2395
    %2397 = vmatmul.f32.gmra.mxu0 %v2376
    %v2398 = vpop.f32.mrf.mxu0
    %v2399 = vadd.f32 %v2370, %v2398
    %2400 = vdwg.mxu0
    %v2401 = vadd.f32 %v1773, %v2396
    %v2402 = vadd.f32 %v1774, %v2399
    %s2403 = scalar_lea.vmem %s25, 1
    %v2404 = vld [vmem:[%s2403] sm:$0x1]
    %s2405 = scalar_lea.vmem [#allocation8], 1
    %v2406 = vld [vmem:[%s2405] sm:$0x1]
    %v2407 = vsel %vm871, %v2401, 0.0
    %2408 = vadd.xlane.f32.xlu0 %v2407
    %v2409 = vpop.xlane.xlu0 %2408
    %v2410 = vsel %vm871, %v2402, 0.0
    %2411 = vadd.xlane.f32.xlu0 %v2410
    %v2412 = vpop.xlane.xlu0 %2411
    %v2413 = vmul.f32 %v2409, %v884
    %v2414 = vmul.f32 %v2412, %v884
    %v2415 = vsub.f32 %v2401, %v2413
    %v2416 = vsub.f32 %v2402, %v2414
    %v2417 = vmul.f32 %v2415, %v2415
    %v2418 = vmul.f32 %v2416, %v2416
    %v2419 = vsel %vm871, %v2417, 0.0
    %2420 = vadd.xlane.f32.xlu0 %v2419
    %v2421 = vpop.xlane.xlu0 %2420
    %v2422 = vsel %vm871, %v2418, 0.0
    %2423 = vadd.xlane.f32.xlu0 %v2422
    %v2424 = vpop.xlane.xlu0 %2423
    %v2425 = vmul.f32 %v2421, %v884
    %v2426 = vmul.f32 %v2424, %v884
    %v2427 = vadd.f32 %v2425, 1e-05
    %v2428 = vadd.f32 %v2426, 1e-05
    %v2429 = vrsqrt.pop %v2427
    %v2430 = vmul.f32 %v2429, %v2427
    %v2431 = vmul.f32 %v2430, %v2429
    %v2432 = vmul.f32 0.5, %v2431
    %v2433 = vsub.f32 1.5, %v2432
    %v2434 = vmul.f32 %v2429, %v2433
    %vm2435 = vweird.f32 %v2427
    %vm2436 = vweird.f32 %v2429
    %vm2437 = vmor %vm2435, %vm2436
    %v2438 = vsel %vm2437, %v2429, %v2434
    %v2439 = vrsqrt.pop %v2428
    %v2440 = vmul.f32 %v2439, %v2428
    %v2441 = vmul.f32 %v2440, %v2439
    %v2442 = vmul.f32 0.5, %v2441
    %v2443 = vsub.f32 1.5, %v2442
    %v2444 = vmul.f32 %v2439, %v2443
    %vm2445 = vweird.f32 %v2428
    %vm2446 = vweird.f32 %v2439
    %vm2447 = vmor %vm2445, %vm2446
    %v2448 = vsel %vm2447, %v2439, %v2444
    %v2449 = vmul.f32 %v2415, %v2438
    %v2450 = vmul.f32 %v2416, %v2448
    %v2452 = vperm.slane %v2404, 0
    %v2454 = vmul.f32 %v2449, %v2452
    %v2455 = vmul.f32 %v2450, %v2452
    %v2457 = vperm.slane %v2406, 0
    %v2459 = vadd.f32 %v2454, %v2457
    %v2460 = vadd.f32 %v2455, %v2457
    %s2461 = scalar_lea.vmem %s29, 32
    %v2462 = vld [vmem:[%s2461] sm:$0xff]
    %v2463 = vld [vmem:[%s2461 + $0x8] sm:$0xff]
    %v2464 = vld [vmem:[%s2461 + $0x10] sm:$0xff]
    %v2465 = vld [vmem:[%s2461 + $0x18] sm:$0xff]
    %s2466 = scalar_lea.vmem [#allocation10], 1
    %v2467 = vld [vmem:[%s2466] sm:$0x1]
    %v2469 = vperm.slane %v2467, 0
    %v2472 = vsel %vm871, %v2459, 0
    %v2475 = vsel %vm871, %v2460, 0
    %2477 = vmatpush.msra.mxu0 0.0
    %2478 = vmatpush.msra.mxu0 0.0
    %2479 = vmatpush.msra.mxu0 0.0
    %2480 = vmatpush.msra.mxu0 0.0
    %2481 = vmatpush.msra.mxu0 0.0
    %2482 = vmatpush.msra.mxu0 0.0
    %2483 = vmatpush.msra.mxu0 0.0
    %2484 = vmatpush.msra.mxu0 0.0
    %2485 = vmatpush.msra.mxu0 0.0
    %2486 = vmatpush.msra.mxu0 0.0
    %2487 = vmatpush.msra.mxu0 0.0
    %2488 = vmatpush.msra.mxu0 0.0
    %2489 = vmatpush.msra.mxu0 %v2465
    %2490 = vmatpush.msra.mxu0 %v2464
    %2491 = vmatpush.msra.mxu0 %v2463
    %2492 = vmatpush.msra.mxu0 %v2462
    %2493 = vmatmul.f32.gmra.mxu0 %v2472
    %v2494 = vpop.f32.mrf.mxu0
    %v2495 = vadd.f32 %v2469, %v2494
    %2496 = vmatmul.f32.gmra.mxu0 %v2475
    %v2497 = vpop.f32.mrf.mxu0
    %v2498 = vadd.f32 %v2469, %v2497
    %2499 = vdwg.mxu0
    %v2500 = vmul.f32 %v2495, %v2495
    %v2501 = vmul.f32 %v2498, %v2498
    %v2502 = vmul.f32 %v2495, %v2500
    %v2503 = vmul.f32 %v2498, %v2501
    %v2504 = vmul.f32 %v2502, 0.044715
    %v2505 = vmul.f32 %v2503, 0.044715
    %v2506 = vadd.f32 %v2495, %v2504
    %v2507 = vadd.f32 %v2498, %v2505
    %v2508 = vmul.f32 %v2506, 0.7978846
    %v2509 = vmul.f32 %v2507, 0.7978846
    %v2510 = vtanh.pop %v2508
    %v2511 = vtanh.pop %v2509
    %v2512 = vadd.f32 %v2510, 1.0
    %v2513 = vadd.f32 %v2511, 1.0
    %v2514 = vmul.f32 %v2512, 0.5
    %v2515 = vmul.f32 %v2513, 0.5
    %v2516 = vmul.f32 %v2495, %v2514
    %v2517 = vmul.f32 %v2498, %v2515
    %s2518 = scalar_lea.vmem %s33, 64
    %v2519 = vld [vmem:[%s2518] sm:$0xff]
    %v2520 = vld [vmem:[%s2518 + $0x8] sm:$0xff]
    %v2521 = vld [vmem:[%s2518 + $0x10] sm:$0xff]
    %v2522 = vld [vmem:[%s2518 + $0x18] sm:$0xff]
    %v2523 = vld [vmem:[%s2518 + $0x20] sm:$0xff]
    %v2524 = vld [vmem:[%s2518 + $0x28] sm:$0xff]
    %v2525 = vld [vmem:[%s2518 + $0x30] sm:$0xff]
    %v2526 = vld [vmem:[%s2518 + $0x38] sm:$0xff]
    %s2527 = scalar_lea.vmem [#allocation11], 1
    %v2528 = vld [vmem:[%s2527] sm:$0x1]
    %v2530 = vperm.slane %v2528, 0
    %v2533 = vsel %vm1687, %v2516, 0
    %v2536 = vsel %vm1687, %v2517, 0
    %2538 = vmatpush.msra.mxu0 0.0
    %2539 = vmatpush.msra.mxu0 0.0
    %2540 = vmatpush.msra.mxu0 0.0
    %2541 = vmatpush.msra.mxu0 0.0
    %2542 = vmatpush.msra.mxu0 0.0
    %2543 = vmatpush.msra.mxu0 0.0
    %2544 = vmatpush.msra.mxu0 0.0
    %2545 = vmatpush.msra.mxu0 0.0
    %2546 = vmatpush.msra.mxu0 %v2526
    %2547 = vmatpush.msra.mxu0 %v2525
    %2548 = vmatpush.msra.mxu0 %v2524
    %2549 = vmatpush.msra.mxu0 %v2523
    %2550 = vmatpush.msra.mxu0 %v2522
    %2551 = vmatpush.msra.mxu0 %v2521
    %2552 = vmatpush.msra.mxu0 %v2520
    %2553 = vmatpush.msra.mxu0 %v2519
    %2554 = vmatmul.f32.gmra.mxu0 %v2533
    %v2555 = vpop.f32.mrf.mxu0
    %v2556 = vadd.f32 %v2530, %v2555
    %2557 = vmatmul.f32.gmra.mxu0 %v2536
    %v2558 = vpop.f32.mrf.mxu0
    %v2559 = vadd.f32 %v2530, %v2558
    %2560 = vdwg.mxu0
    %v2561 = vadd.f32 %v2459, %v2556
    %v2562 = vadd.f32 %v2460, %v2559
    %s2563 = scalar_lea.vmem %s37, 1
    %v2564 = vld [vmem:[%s2563] sm:$0x1]
    %s2565 = scalar_lea.vmem %s39, 1
    %v2566 = vld [vmem:[%s2565] sm:$0x1]
    %v2567 = vsel %vm871, %v2561, 0.0
    %2568 = vadd.xlane.f32.xlu0 %v2567
    %v2569 = vpop.xlane.xlu0 %2568
    %v2570 = vsel %vm871, %v2562, 0.0
    %2571 = vadd.xlane.f32.xlu0 %v2570
    %v2572 = vpop.xlane.xlu0 %2571
    %v2573 = vmul.f32 %v2569, %v884
    %v2574 = vmul.f32 %v2572, %v884
    %v2575 = vsub.f32 %v2561, %v2573
    %v2576 = vsub.f32 %v2562, %v2574
    %v2577 = vmul.f32 %v2575, %v2575
    %v2578 = vmul.f32 %v2576, %v2576
    %v2579 = vsel %vm871, %v2577, 0.0
    %2580 = vadd.xlane.f32.xlu0 %v2579
    %v2581 = vpop.xlane.xlu0 %2580
    %v2582 = vsel %vm871, %v2578, 0.0
    %2583 = vadd.xlane.f32.xlu0 %v2582
    %v2584 = vpop.xlane.xlu0 %2583
    %v2585 = vmul.f32 %v2581, %v884
    %v2586 = vmul.f32 %v2584, %v884
    %v2587 = vadd.f32 %v2585, 1e-05
    %v2588 = vadd.f32 %v2586, 1e-05
    %v2589 = vrsqrt.pop %v2587
    %v2590 = vmul.f32 %v2589, %v2587
    %v2591 = vmul.f32 %v2590, %v2589
    %v2592 = vmul.f32 0.5, %v2591
    %v2593 = vsub.f32 1.5, %v2592
    %v2594 = vmul.f32 %v2589, %v2593
    %vm2595 = vweird.f32 %v2587
    %vm2596 = vweird.f32 %v2589
    %vm2597 = vmor %vm2595, %vm2596
    %v2598 = vsel %vm2597, %v2589, %v2594
    %v2599 = vrsqrt.pop %v2588
    %v2600 = vmul.f32 %v2599, %v2588
    %v2601 = vmul.f32 %v2600, %v2599
    %v2602 = vmul.f32 0.5, %v2601
    %v2603 = vsub.f32 1.5, %v2602
    %v2604 = vmul.f32 %v2599, %v2603
    %vm2605 = vweird.f32 %v2588
    %vm2606 = vweird.f32 %v2599
    %vm2607 = vmor %vm2605, %vm2606
    %v2608 = vsel %vm2607, %v2599, %v2604
    %v2609 = vmul.f32 %v2575, %v2598
    %v2610 = vmul.f32 %v2576, %v2608
    %v2612 = vperm.slane %v2564, 0
    %v2614 = vmul.f32 %v2609, %v2612
    %v2615 = vmul.f32 %v2610, %v2612
    %v2617 = vperm.slane %v2566, 0
    %v2619 = vadd.f32 %v2614, %v2617
    %v2620 = vadd.f32 %v2615, %v2617
    %v2621 = vld [vmem:[#allocation13] sm:$0xff]
    %v2622 = vadd.f32 %v2619, %v2621
    %v2623 = vadd.f32 %v2620, %v2621
    %v2624 = vld [vmem:[#allocation14] sm:$0x1]
    %v2625 = vld [vmem:[#allocation16] sm:$0x1]
    %v2626 = vsel %vm871, %v2622, 0.0
    %2627 = vadd.xlane.f32.xlu0 %v2626
    %v2628 = vpop.xlane.xlu0 %2627
    %v2629 = vsel %vm871, %v2623, 0.0
    %2630 = vadd.xlane.f32.xlu0 %v2629
    %v2631 = vpop.xlane.xlu0 %2630
    %v2632 = vmul.f32 %v2628, %v884
    %v2633 = vmul.f32 %v2631, %v884
    %v2634 = vsub.f32 %v2622, %v2632
    %v2635 = vsub.f32 %v2623, %v2633
    %v2636 = vmul.f32 %v2634, %v2634
    %v2637 = vmul.f32 %v2635, %v2635
    %v2638 = vsel %vm871, %v2636, 0.0
    %2639 = vadd.xlane.f32.xlu0 %v2638
    %v2640 = vpop.xlane.xlu0 %2639
    %v2641 = vsel %vm871, %v2637, 0.0
    %2642 = vadd.xlane.f32.xlu0 %v2641
    %v2643 = vpop.xlane.xlu0 %2642
    %v2644 = vmul.f32 %v2640, %v884
    %v2645 = vmul.f32 %v2643, %v884
    %v2646 = vadd.f32 %v2644, 1e-05
    %v2647 = vadd.f32 %v2645, 1e-05
    %v2648 = vrsqrt.pop %v2646
    %v2649 = vmul.f32 %v2648, %v2646
    %v2650 = vmul.f32 %v2649, %v2648
    %v2651 = vmul.f32 0.5, %v2650
    %v2652 = vsub.f32 1.5, %v2651
    %v2653 = vmul.f32 %v2648, %v2652
    %vm2654 = vweird.f32 %v2646
    %vm2655 = vweird.f32 %v2648
    %vm2656 = vmor %vm2654, %vm2655
    %v2657 = vsel %vm2656, %v2648, %v2653
    %v2658 = vrsqrt.pop %v2647
    %v2659 = vmul.f32 %v2658, %v2647
    %v2660 = vmul.f32 %v2659, %v2658
    %v2661 = vmul.f32 0.5, %v2660
    %v2662 = vsub.f32 1.5, %v2661
    %v2663 = vmul.f32 %v2658, %v2662
    %vm2664 = vweird.f32 %v2647
    %vm2665 = vweird.f32 %v2658
    %vm2666 = vmor %vm2664, %vm2665
    %v2667 = vsel %vm2666, %v2658, %v2663
    %v2668 = vmul.f32 %v2634, %v2657
    %v2669 = vmul.f32 %v2635, %v2667
    %v2671 = vperm.slane %v2624, 0
    %v2673 = vmul.f32 %v2668, %v2671
    %v2674 = vmul.f32 %v2669, %v2671
    %v2676 = vperm.slane %v2625, 0
    %v2678 = vadd.f32 %v2673, %v2676
    %v2679 = vadd.f32 %v2674, %v2676
    %v2680 = vld [vmem:[%s47] sm:$0xff]
    %v2681 = vld [vmem:[%s47 + $0x8] sm:$0xff]
    %v2682 = vld [vmem:[%s47 + $0x10] sm:$0xff]
    %v2683 = vld [vmem:[%s47 + $0x18] sm:$0xff]
    %v2684 = vld [vmem:[#allocation17] sm:$0x1]
    %v2686 = vperm.slane %v2684, 0
    %v2689 = vsel %vm871, %v2678, 0
    %v2692 = vsel %vm871, %v2679, 0
    %2694 = vmatpush.msra.mxu0 0.0
    %2695 = vmatpush.msra.mxu0 0.0
    %2696 = vmatpush.msra.mxu0 0.0
    %2697 = vmatpush.msra.mxu0 0.0
    %2698 = vmatpush.msra.mxu0 0.0
    %2699 = vmatpush.msra.mxu0 0.0
    %2700 = vmatpush.msra.mxu0 0.0
    %2701 = vmatpush.msra.mxu0 0.0
    %2702 = vmatpush.msra.mxu0 0.0
    %2703 = vmatpush.msra.mxu0 0.0
    %2704 = vmatpush.msra.mxu0 0.0
    %2705 = vmatpush.msra.mxu0 0.0
    %2706 = vmatpush.msra.mxu0 %v2683
    %2707 = vmatpush.msra.mxu0 %v2682
    %2708 = vmatpush.msra.mxu0 %v2681
    %2709 = vmatpush.msra.mxu0 %v2680
    %2710 = vmatmul.f32.gmra.mxu0 %v2689
    %v2711 = vpop.f32.mrf.mxu0
    %v2712 = vadd.f32 %v2686, %v2711
    %2713 = vmatmul.f32.gmra.mxu0 %v2692
    %v2714 = vpop.f32.mrf.mxu0
    %v2715 = vadd.f32 %v2686, %v2714
    %2716 = vdwg.mxu0
    %2718 = vrot.lane.b32.xlu0 %v2712, 96
    %v2719 = vpop.permute.xlu0 %2718
    %v2720 = vsel %vm977, %v2712, 0
    %v2722 = vsel %vm977, %v2719, 0
    %2724 = vmatpush.xpose.msra.mxu0 0.0
    %2725 = vmatpush.xpose.msra.mxu0 0.0
    %2726 = vmatpush.xpose.msra.mxu0 0.0
    %2727 = vmatpush.xpose.msra.mxu0 0.0
    %2728 = vmatpush.xpose.msra.mxu0 0.0
    %2729 = vmatpush.xpose.msra.mxu0 0.0
    %2730 = vmatpush.xpose.msra.mxu0 0.0
    %2731 = vmatpush.xpose.msra.mxu0 0.0
    %2732 = vmatpush.xpose.msra.mxu0 0.0
    %2733 = vmatpush.xpose.msra.mxu0 0.0
    %2734 = vmatpush.xpose.msra.mxu0 0.0
    %2735 = vmatpush.xpose.msra.mxu0 0.0
    %2736 = vmatpush.xpose.msra.mxu0 0.0
    %2737 = vmatpush.xpose.msra.mxu0 0.0
    %2738 = vmatpush.xpose.msra.mxu0 0.0
    %2739 = vmatpush.xpose.msra.mxu0 %v2722
    %2740 = vmatmul.f32.gmra.mxu0 %v2720
    %v2741 = vpop.f32.mrf.mxu0
    %v2742 = vadd.f32 %v970, %v2741
    %2743 = vdwg.mxu0
    %2745 = vrot.lane.b32.xlu0 %v2715, 96
    %v2746 = vpop.permute.xlu0 %2745
    %v2747 = vsel %vm977, %v2715, 0
    %v2749 = vsel %vm977, %v2746, 0
    %2751 = vmatpush.xpose.msra.mxu0 0.0
    %2752 = vmatpush.xpose.msra.mxu0 0.0
    %2753 = vmatpush.xpose.msra.mxu0 0.0
    %2754 = vmatpush.xpose.msra.mxu0 0.0
    %2755 = vmatpush.xpose.msra.mxu0 0.0
    %2756 = vmatpush.xpose.msra.mxu0 0.0
    %2757 = vmatpush.xpose.msra.mxu0 0.0
    %2758 = vmatpush.xpose.msra.mxu0 0.0
    %2759 = vmatpush.xpose.msra.mxu0 0.0
    %2760 = vmatpush.xpose.msra.mxu0 0.0
    %2761 = vmatpush.xpose.msra.mxu0 0.0
    %2762 = vmatpush.xpose.msra.mxu0 0.0
    %2763 = vmatpush.xpose.msra.mxu0 0.0
    %2764 = vmatpush.xpose.msra.mxu0 0.0
    %2765 = vmatpush.xpose.msra.mxu0 0.0
    %2766 = vmatpush.xpose.msra.mxu0 %v2749
    %2767 = vmatmul.f32.gmra.mxu0 %v2747
    %v2768 = vpop.f32.mrf.mxu0
    %v2769 = vadd.f32 %v971, %v2768
    %2770 = vdwg.mxu0
    %v2771 = vsel %vm977, %v2742, -inf
    %2772 = vmax.xlane.f32.xlu0 %v2771
    %v2773 = vpop.xlane.xlu0 %2772
    %v2774 = vsel %vm977, %v2769, -inf
    %2775 = vmax.xlane.f32.xlu0 %v2774
    %v2776 = vpop.xlane.xlu0 %2775
    %v2777 = vsub.f32 %v2742, %v2773
    %v2778 = vsub.f32 %v2769, %v2776
    %v2779 = vmul.f32 %v2777, 1.442695
    %v2780 = vpow.pop %v2779
    %v2781 = vmul.f32 %v2778, 1.442695
    %v2782 = vpow.pop %v2781
    %v2783 = vsel %vm977, %v2780, 0.0
    %2784 = vadd.xlane.f32.xlu0 %v2783
    %v2785 = vpop.xlane.xlu0 %2784
    %v2786 = vsel %vm977, %v2782, 0.0
    %2787 = vadd.xlane.f32.xlu0 %v2786
    %v2788 = vpop.xlane.xlu0 %2787
    %v2789 = vrcp.pop %v2785
    %v2790 = vrcp.pop %v2788
    %v2791 = vmul.f32 %v2780, %v2789
    %v2792 = vmul.f32 %v2782, %v2790
    %2793 = vrot.lane.b32.xlu0 %v2712, 64
    %v2794 = vpop.permute.xlu0 %2793
    %v2797 = vsel %vm977, %v2791, 0
    %2799 = vmatpush.msra.mxu0 0.0
    %2800 = vmatpush.msra.mxu0 0.0
    %2801 = vmatpush.msra.mxu0 0.0
    %2802 = vmatpush.msra.mxu0 0.0
    %2803 = vmatpush.msra.mxu0 0.0
    %2804 = vmatpush.msra.mxu0 0.0
    %2805 = vmatpush.msra.mxu0 0.0
    %2806 = vmatpush.msra.mxu0 0.0
    %2807 = vmatpush.msra.mxu0 0.0
    %2808 = vmatpush.msra.mxu0 0.0
    %2809 = vmatpush.msra.mxu0 0.0
    %2810 = vmatpush.msra.mxu0 0.0
    %2811 = vmatpush.msra.mxu0 0.0
    %2812 = vmatpush.msra.mxu0 0.0
    %2813 = vmatpush.msra.mxu0 0.0
    %2814 = vmatpush.msra.mxu0 %v2794
    %2815 = vmatmul.f32.gmra.mxu0 %v2797
    %v2816 = vpop.f32.mrf.mxu0
    %v2817 = vadd.f32 0.0, %v2816
    %2818 = vdwg.mxu0
    %2819 = vrot.lane.b32.xlu0 %v2715, 64
    %v2820 = vpop.permute.xlu0 %2819
    %v2823 = vsel %vm977, %v2792, 0
    %2825 = vmatpush.msra.mxu0 0.0
    %2826 = vmatpush.msra.mxu0 0.0
    %2827 = vmatpush.msra.mxu0 0.0
    %2828 = vmatpush.msra.mxu0 0.0
    %2829 = vmatpush.msra.mxu0 0.0
    %2830 = vmatpush.msra.mxu0 0.0
    %2831 = vmatpush.msra.mxu0 0.0
    %2832 = vmatpush.msra.mxu0 0.0
    %2833 = vmatpush.msra.mxu0 0.0
    %2834 = vmatpush.msra.mxu0 0.0
    %2835 = vmatpush.msra.mxu0 0.0
    %2836 = vmatpush.msra.mxu0 0.0
    %2837 = vmatpush.msra.mxu0 0.0
    %2838 = vmatpush.msra.mxu0 0.0
    %2839 = vmatpush.msra.mxu0 0.0
    %2840 = vmatpush.msra.mxu0 %v2820
    %2841 = vmatmul.f32.gmra.mxu0 %v2823
    %v2842 = vpop.f32.mrf.mxu0
    %v2843 = vadd.f32 0.0, %v2842
    %2844 = vdwg.mxu0
    %2845 = vrot.lane.b32.xlu0 %v2712, 120
    %v2846 = vpop.permute.xlu0 %2845
    %2847 = vrot.lane.b32.xlu0 %v2712, 88
    %v2848 = vpop.permute.xlu0 %2847
    %v2849 = vsel %vm977, %v2846, 0
    %v2851 = vsel %vm977, %v2848, 0
    %2853 = vmatpush.xpose.msra.mxu0 0.0
    %2854 = vmatpush.xpose.msra.mxu0 0.0
    %2855 = vmatpush.xpose.msra.mxu0 0.0
    %2856 = vmatpush.xpose.msra.mxu0 0.0
    %2857 = vmatpush.xpose.msra.mxu0 0.0
    %2858 = vmatpush.xpose.msra.mxu0 0.0
    %2859 = vmatpush.xpose.msra.mxu0 0.0
    %2860 = vmatpush.xpose.msra.mxu0 0.0
    %2861 = vmatpush.xpose.msra.mxu0 0.0
    %2862 = vmatpush.xpose.msra.mxu0 0.0
    %2863 = vmatpush.xpose.msra.mxu0 0.0
    %2864 = vmatpush.xpose.msra.mxu0 0.0
    %2865 = vmatpush.xpose.msra.mxu0 0.0
    %2866 = vmatpush.xpose.msra.mxu0 0.0
    %2867 = vmatpush.xpose.msra.mxu0 0.0
    %2868 = vmatpush.xpose.msra.mxu0 %v2851
    %2869 = vmatmul.f32.gmra.mxu0 %v2849
    %v2870 = vpop.f32.mrf.mxu0
    %v2871 = vadd.f32 %v970, %v2870
    %2872 = vdwg.mxu0
    %2873 = vrot.lane.b32.xlu0 %v2715, 120
    %v2874 = vpop.permute.xlu0 %2873
    %2875 = vrot.lane.b32.xlu0 %v2715, 88
    %v2876 = vpop.permute.xlu0 %2875
    %v2877 = vsel %vm977, %v2874, 0
    %v2879 = vsel %vm977, %v2876, 0
    %2881 = vmatpush.xpose.msra.mxu0 0.0
    %2882 = vmatpush.xpose.msra.mxu0 0.0
    %2883 = vmatpush.xpose.msra.mxu0 0.0
    %2884 = vmatpush.xpose.msra.mxu0 0.0
    %2885 = vmatpush.xpose.msra.mxu0 0.0
    %2886 = vmatpush.xpose.msra.mxu0 0.0
    %2887 = vmatpush.xpose.msra.mxu0 0.0
    %2888 = vmatpush.xpose.msra.mxu0 0.0
    %2889 = vmatpush.xpose.msra.mxu0 0.0
    %2890 = vmatpush.xpose.msra.mxu0 0.0
    %2891 = vmatpush.xpose.msra.mxu0 0.0
    %2892 = vmatpush.xpose.msra.mxu0 0.0
    %2893 = vmatpush.xpose.msra.mxu0 0.0
    %2894 = vmatpush.xpose.msra.mxu0 0.0
    %2895 = vmatpush.xpose.msra.mxu0 0.0
    %2896 = vmatpush.xpose.msra.mxu0 %v2879
    %2897 = vmatmul.f32.gmra.mxu0 %v2877
    %v2898 = vpop.f32.mrf.mxu0
    %v2899 = vadd.f32 %v971, %v2898
    %2900 = vdwg.mxu0
    %v2901 = vsel %vm977, %v2871, -inf
    %2902 = vmax.xlane.f32.xlu0 %v2901
    %v2903 = vpop.xlane.xlu0 %2902
    %v2904 = vsel %vm977, %v2899, -inf
    %2905 = vmax.xlane.f32.xlu0 %v2904
    %v2906 = vpop.xlane.xlu0 %2905
    %v2907 = vsub.f32 %v2871, %v2903
    %v2908 = vsub.f32 %v2899, %v2906
    %v2909 = vmul.f32 %v2907, 1.442695
    %v2910 = vpow.pop %v2909
    %v2911 = vmul.f32 %v2908, 1.442695
    %v2912 = vpow.pop %v2911
    %v2913 = vsel %vm977, %v2910, 0.0
    %2914 = vadd.xlane.f32.xlu0 %v2913
    %v2915 = vpop.xlane.xlu0 %2914
    %v2916 = vsel %vm977, %v2912, 0.0
    %2917 = vadd.xlane.f32.xlu0 %v2916
    %v2918 = vpop.xlane.xlu0 %2917
    %v2919 = vrcp.pop %v2915
    %v2920 = vrcp.pop %v2918
    %v2921 = vmul.f32 %v2910, %v2919
    %v2922 = vmul.f32 %v2912, %v2920
    %2923 = vrot.lane.b32.xlu0 %v2712, 56
    %v2924 = vpop.permute.xlu0 %2923
    %v2927 = vsel %vm977, %v2921, 0
    %2929 = vmatpush.msra.mxu0 0.0
    %2930 = vmatpush.msra.mxu0 0.0
    %2931 = vmatpush.msra.mxu0 0.0
    %2932 = vmatpush.msra.mxu0 0.0
    %2933 = vmatpush.msra.mxu0 0.0
    %2934 = vmatpush.msra.mxu0 0.0
    %2935 = vmatpush.msra.mxu0 0.0
    %2936 = vmatpush.msra.mxu0 0.0
    %2937 = vmatpush.msra.mxu0 0.0
    %2938 = vmatpush.msra.mxu0 0.0
    %2939 = vmatpush.msra.mxu0 0.0
    %2940 = vmatpush.msra.mxu0 0.0
    %2941 = vmatpush.msra.mxu0 0.0
    %2942 = vmatpush.msra.mxu0 0.0
    %2943 = vmatpush.msra.mxu0 0.0
    %2944 = vmatpush.msra.mxu0 %v2924
    %2945 = vmatmul.f32.gmra.mxu0 %v2927
    %v2946 = vpop.f32.mrf.mxu0
    %v2947 = vadd.f32 0.0, %v2946
    %2948 = vdwg.mxu0
    %2949 = vrot.lane.b32.xlu0 %v2715, 56
    %v2950 = vpop.permute.xlu0 %2949
    %v2953 = vsel %vm977, %v2922, 0
    %2955 = vmatpush.msra.mxu0 0.0
    %2956 = vmatpush.msra.mxu0 0.0
    %2957 = vmatpush.msra.mxu0 0.0
    %2958 = vmatpush.msra.mxu0 0.0
    %2959 = vmatpush.msra.mxu0 0.0
    %2960 = vmatpush.msra.mxu0 0.0
    %2961 = vmatpush.msra.mxu0 0.0
    %2962 = vmatpush.msra.mxu0 0.0
    %2963 = vmatpush.msra.mxu0 0.0
    %2964 = vmatpush.msra.mxu0 0.0
    %2965 = vmatpush.msra.mxu0 0.0
    %2966 = vmatpush.msra.mxu0 0.0
    %2967 = vmatpush.msra.mxu0 0.0
    %2968 = vmatpush.msra.mxu0 0.0
    %2969 = vmatpush.msra.mxu0 0.0
    %2970 = vmatpush.msra.mxu0 %v2950
    %2971 = vmatmul.f32.gmra.mxu0 %v2953
    %v2972 = vpop.f32.mrf.mxu0
    %v2973 = vadd.f32 0.0, %v2972
    %2974 = vdwg.mxu0
    %2975 = vrot.lane.b32.xlu0 %v2712, 112
    %v2976 = vpop.permute.xlu0 %2975
    %2977 = vrot.lane.b32.xlu0 %v2712, 80
    %v2978 = vpop.permute.xlu0 %2977
    %v2979 = vsel %vm977, %v2976, 0
    %v2981 = vsel %vm977, %v2978, 0
    %2983 = vmatpush.xpose.msra.mxu0 0.0
    %2984 = vmatpush.xpose.msra.mxu0 0.0
    %2985 = vmatpush.xpose.msra.mxu0 0.0
    %2986 = vmatpush.xpose.msra.mxu0 0.0
    %2987 = vmatpush.xpose.msra.mxu0 0.0
    %2988 = vmatpush.xpose.msra.mxu0 0.0
    %2989 = vmatpush.xpose.msra.mxu0 0.0
    %2990 = vmatpush.xpose.msra.mxu0 0.0
    %2991 = vmatpush.xpose.msra.mxu0 0.0
    %2992 = vmatpush.xpose.msra.mxu0 0.0
    %2993 = vmatpush.xpose.msra.mxu0 0.0
    %2994 = vmatpush.xpose.msra.mxu0 0.0
    %2995 = vmatpush.xpose.msra.mxu0 0.0
    %2996 = vmatpush.xpose.msra.mxu0 0.0
    %2997 = vmatpush.xpose.msra.mxu0 0.0
    %2998 = vmatpush.xpose.msra.mxu0 %v2981
    %2999 = vmatmul.f32.gmra.mxu0 %v2979
    %v3000 = vpop.f32.mrf.mxu0
    %v3001 = vadd.f32 %v970, %v3000
    %3002 = vdwg.mxu0
    %3003 = vrot.lane.b32.xlu0 %v2715, 112
    %v3004 = vpop.permute.xlu0 %3003
    %3005 = vrot.lane.b32.xlu0 %v2715, 80
    %v3006 = vpop.permute.xlu0 %3005
    %v3007 = vsel %vm977, %v3004, 0
    %v3009 = vsel %vm977, %v3006, 0
    %3011 = vmatpush.xpose.msra.mxu0 0.0
    %3012 = vmatpush.xpose.msra.mxu0 0.0
    %3013 = vmatpush.xpose.msra.mxu0 0.0
    %3014 = vmatpush.xpose.msra.mxu0 0.0
    %3015 = vmatpush.xpose.msra.mxu0 0.0
    %3016 = vmatpush.xpose.msra.mxu0 0.0
    %3017 = vmatpush.xpose.msra.mxu0 0.0
    %3018 = vmatpush.xpose.msra.mxu0 0.0
    %3019 = vmatpush.xpose.msra.mxu0 0.0
    %3020 = vmatpush.xpose.msra.mxu0 0.0
    %3021 = vmatpush.xpose.msra.mxu0 0.0
    %3022 = vmatpush.xpose.msra.mxu0 0.0
    %3023 = vmatpush.xpose.msra.mxu0 0.0
    %3024 = vmatpush.xpose.msra.mxu0 0.0
    %3025 = vmatpush.xpose.msra.mxu0 0.0
    %3026 = vmatpush.xpose.msra.mxu0 %v3009
    %3027 = vmatmul.f32.gmra.mxu0 %v3007
    %v3028 = vpop.f32.mrf.mxu0
    %v3029 = vadd.f32 %v971, %v3028
    %3030 = vdwg.mxu0
    %v3031 = vsel %vm977, %v3001, -inf
    %3032 = vmax.xlane.f32.xlu0 %v3031
    %v3033 = vpop.xlane.xlu0 %3032
    %v3034 = vsel %vm977, %v3029, -inf
    %3035 = vmax.xlane.f32.xlu0 %v3034
    %v3036 = vpop.xlane.xlu0 %3035
    %v3037 = vsub.f32 %v3001, %v3033
    %v3038 = vsub.f32 %v3029, %v3036
    %v3039 = vmul.f32 %v3037, 1.442695
    %v3040 = vpow.pop %v3039
    %v3041 = vmul.f32 %v3038, 1.442695
    %v3042 = vpow.pop %v3041
    %v3043 = vsel %vm977, %v3040, 0.0
    %3044 = vadd.xlane.f32.xlu0 %v3043
    %v3045 = vpop.xlane.xlu0 %3044
    %v3046 = vsel %vm977, %v3042, 0.0
    %3047 = vadd.xlane.f32.xlu0 %v3046
    %v3048 = vpop.xlane.xlu0 %3047
    %v3049 = vrcp.pop %v3045
    %v3050 = vrcp.pop %v3048
    %v3051 = vmul.f32 %v3040, %v3049
    %v3052 = vmul.f32 %v3042, %v3050
    %3053 = vrot.lane.b32.xlu0 %v2712, 48
    %v3054 = vpop.permute.xlu0 %3053
    %v3057 = vsel %vm977, %v3051, 0
    %3059 = vmatpush.msra.mxu0 0.0
    %3060 = vmatpush.msra.mxu0 0.0
    %3061 = vmatpush.msra.mxu0 0.0
    %3062 = vmatpush.msra.mxu0 0.0
    %3063 = vmatpush.msra.mxu0 0.0
    %3064 = vmatpush.msra.mxu0 0.0
    %3065 = vmatpush.msra.mxu0 0.0
    %3066 = vmatpush.msra.mxu0 0.0
    %3067 = vmatpush.msra.mxu0 0.0
    %3068 = vmatpush.msra.mxu0 0.0
    %3069 = vmatpush.msra.mxu0 0.0
    %3070 = vmatpush.msra.mxu0 0.0
    %3071 = vmatpush.msra.mxu0 0.0
    %3072 = vmatpush.msra.mxu0 0.0
    %3073 = vmatpush.msra.mxu0 0.0
    %3074 = vmatpush.msra.mxu0 %v3054
    %3075 = vmatmul.f32.gmra.mxu0 %v3057
    %v3076 = vpop.f32.mrf.mxu0
    %v3077 = vadd.f32 0.0, %v3076
    %3078 = vdwg.mxu0
    %3079 = vrot.lane.b32.xlu0 %v2715, 48
    %v3080 = vpop.permute.xlu0 %3079
    %v3083 = vsel %vm977, %v3052, 0
    %3085 = vmatpush.msra.mxu0 0.0
    %3086 = vmatpush.msra.mxu0 0.0
    %3087 = vmatpush.msra.mxu0 0.0
    %3088 = vmatpush.msra.mxu0 0.0
    %3089 = vmatpush.msra.mxu0 0.0
    %3090 = vmatpush.msra.mxu0 0.0
    %3091 = vmatpush.msra.mxu0 0.0
    %3092 = vmatpush.msra.mxu0 0.0
    %3093 = vmatpush.msra.mxu0 0.0
    %3094 = vmatpush.msra.mxu0 0.0
    %3095 = vmatpush.msra.mxu0 0.0
    %3096 = vmatpush.msra.mxu0 0.0
    %3097 = vmatpush.msra.mxu0 0.0
    %3098 = vmatpush.msra.mxu0 0.0
    %3099 = vmatpush.msra.mxu0 0.0
    %3100 = vmatpush.msra.mxu0 %v3080
    %3101 = vmatmul.f32.gmra.mxu0 %v3083
    %v3102 = vpop.f32.mrf.mxu0
    %v3103 = vadd.f32 0.0, %v3102
    %3104 = vdwg.mxu0
    %3105 = vrot.lane.b32.xlu0 %v2712, 104
    %v3106 = vpop.permute.xlu0 %3105
    %3107 = vrot.lane.b32.xlu0 %v2712, 72
    %v3108 = vpop.permute.xlu0 %3107
    %v3109 = vsel %vm977, %v3106, 0
    %v3111 = vsel %vm977, %v3108, 0
    %3113 = vmatpush.xpose.msra.mxu0 0.0
    %3114 = vmatpush.xpose.msra.mxu0 0.0
    %3115 = vmatpush.xpose.msra.mxu0 0.0
    %3116 = vmatpush.xpose.msra.mxu0 0.0
    %3117 = vmatpush.xpose.msra.mxu0 0.0
    %3118 = vmatpush.xpose.msra.mxu0 0.0
    %3119 = vmatpush.xpose.msra.mxu0 0.0
    %3120 = vmatpush.xpose.msra.mxu0 0.0
    %3121 = vmatpush.xpose.msra.mxu0 0.0
    %3122 = vmatpush.xpose.msra.mxu0 0.0
    %3123 = vmatpush.xpose.msra.mxu0 0.0
    %3124 = vmatpush.xpose.msra.mxu0 0.0
    %3125 = vmatpush.xpose.msra.mxu0 0.0
    %3126 = vmatpush.xpose.msra.mxu0 0.0
    %3127 = vmatpush.xpose.msra.mxu0 0.0
    %3128 = vmatpush.xpose.msra.mxu0 %v3111
    %3129 = vmatmul.f32.gmra.mxu0 %v3109
    %v3130 = vpop.f32.mrf.mxu0
    %v3131 = vadd.f32 %v970, %v3130
    %3132 = vdwg.mxu0
    %3133 = vrot.lane.b32.xlu0 %v2715, 104
    %v3134 = vpop.permute.xlu0 %3133
    %3135 = vrot.lane.b32.xlu0 %v2715, 72
    %v3136 = vpop.permute.xlu0 %3135
    %v3137 = vsel %vm977, %v3134, 0
    %v3139 = vsel %vm977, %v3136, 0
    %3141 = vmatpush.xpose.msra.mxu0 0.0
    %3142 = vmatpush.xpose.msra.mxu0 0.0
    %3143 = vmatpush.xpose.msra.mxu0 0.0
    %3144 = vmatpush.xpose.msra.mxu0 0.0
    %3145 = vmatpush.xpose.msra.mxu0 0.0
    %3146 = vmatpush.xpose.msra.mxu0 0.0
    %3147 = vmatpush.xpose.msra.mxu0 0.0
    %3148 = vmatpush.xpose.msra.mxu0 0.0
    %3149 = vmatpush.xpose.msra.mxu0 0.0
    %3150 = vmatpush.xpose.msra.mxu0 0.0
    %3151 = vmatpush.xpose.msra.mxu0 0.0
    %3152 = vmatpush.xpose.msra.mxu0 0.0
    %3153 = vmatpush.xpose.msra.mxu0 0.0
    %3154 = vmatpush.xpose.msra.mxu0 0.0
    %3155 = vmatpush.xpose.msra.mxu0 0.0
    %3156 = vmatpush.xpose.msra.mxu0 %v3139
    %3157 = vmatmul.f32.gmra.mxu0 %v3137
    %v3158 = vpop.f32.mrf.mxu0
    %v3159 = vadd.f32 %v971, %v3158
    %3160 = vdwg.mxu0
    %v3161 = vsel %vm977, %v3131, -inf
    %3162 = vmax.xlane.f32.xlu0 %v3161
    %v3163 = vpop.xlane.xlu0 %3162
    %v3164 = vsel %vm977, %v3159, -inf
    %3165 = vmax.xlane.f32.xlu0 %v3164
    %v3166 = vpop.xlane.xlu0 %3165
    %v3167 = vsub.f32 %v3131, %v3163
    %v3168 = vsub.f32 %v3159, %v3166
    %v3169 = vmul.f32 %v3167, 1.442695
    %v3170 = vpow.pop %v3169
    %v3171 = vmul.f32 %v3168, 1.442695
    %v3172 = vpow.pop %v3171
    %v3173 = vsel %vm977, %v3170, 0.0
    %3174 = vadd.xlane.f32.xlu0 %v3173
    %v3175 = vpop.xlane.xlu0 %3174
    %v3176 = vsel %vm977, %v3172, 0.0
    %3177 = vadd.xlane.f32.xlu0 %v3176
    %v3178 = vpop.xlane.xlu0 %3177
    %v3179 = vrcp.pop %v3175
    %v3180 = vrcp.pop %v3178
    %v3181 = vmul.f32 %v3170, %v3179
    %v3182 = vmul.f32 %v3172, %v3180
    %3183 = vrot.lane.b32.xlu0 %v2712, 40
    %v3184 = vpop.permute.xlu0 %3183
    %v3187 = vsel %vm977, %v3181, 0
    %3189 = vmatpush.msra.mxu0 0.0
    %3190 = vmatpush.msra.mxu0 0.0
    %3191 = vmatpush.msra.mxu0 0.0
    %3192 = vmatpush.msra.mxu0 0.0
    %3193 = vmatpush.msra.mxu0 0.0
    %3194 = vmatpush.msra.mxu0 0.0
    %3195 = vmatpush.msra.mxu0 0.0
    %3196 = vmatpush.msra.mxu0 0.0
    %3197 = vmatpush.msra.mxu0 0.0
    %3198 = vmatpush.msra.mxu0 0.0
    %3199 = vmatpush.msra.mxu0 0.0
    %3200 = vmatpush.msra.mxu0 0.0
    %3201 = vmatpush.msra.mxu0 0.0
    %3202 = vmatpush.msra.mxu0 0.0
    %3203 = vmatpush.msra.mxu0 0.0
    %3204 = vmatpush.msra.mxu0 %v3184
    %3205 = vmatmul.f32.gmra.mxu0 %v3187
    %v3206 = vpop.f32.mrf.mxu0
    %v3207 = vadd.f32 0.0, %v3206
    %3208 = vdwg.mxu0
    %3209 = vrot.lane.b32.xlu0 %v2715, 40
    %v3210 = vpop.permute.xlu0 %3209
    %v3213 = vsel %vm977, %v3182, 0
    %3215 = vmatpush.msra.mxu0 0.0
    %3216 = vmatpush.msra.mxu0 0.0
    %3217 = vmatpush.msra.mxu0 0.0
    %3218 = vmatpush.msra.mxu0 0.0
    %3219 = vmatpush.msra.mxu0 0.0
    %3220 = vmatpush.msra.mxu0 0.0
    %3221 = vmatpush.msra.mxu0 0.0
    %3222 = vmatpush.msra.mxu0 0.0
    %3223 = vmatpush.msra.mxu0 0.0
    %3224 = vmatpush.msra.mxu0 0.0
    %3225 = vmatpush.msra.mxu0 0.0
    %3226 = vmatpush.msra.mxu0 0.0
    %3227 = vmatpush.msra.mxu0 0.0
    %3228 = vmatpush.msra.mxu0 0.0
    %3229 = vmatpush.msra.mxu0 0.0
    %3230 = vmatpush.msra.mxu0 %v3210
    %3231 = vmatmul.f32.gmra.mxu0 %v3213
    %v3232 = vpop.f32.mrf.mxu0
    %v3233 = vadd.f32 0.0, %v3232
    %3234 = vdwg.mxu0
    %3237 = vrot.lane.b32.xlu0 %v2947, 8
    %v3238 = vpop.permute.xlu0 %3237
    %3239 = vrot.lane.b32.xlu0 %v2973, 8
    %v3240 = vpop.permute.xlu0 %3239
    %3245 = vrot.lane.b32.xlu0 %v3077, 16
    %v3246 = vpop.permute.xlu0 %3245
    %3247 = vrot.lane.b32.xlu0 %v3103, 16
    %v3248 = vpop.permute.xlu0 %3247
    %3253 = vrot.lane.b32.xlu0 %v3207, 24
    %v3254 = vpop.permute.xlu0 %3253
    %3255 = vrot.lane.b32.xlu0 %v3233, 24
    %v3256 = vpop.permute.xlu0 %3255
    %v3259 = vsel %vm977, %v2817, %v3238
    %v3260 = vsel %vm977, %v2843, %v3240
    %v3261 = vsel %vm1519, %v3259, %v3246
    %v3262 = vsel %vm1519, %v3260, %v3248
    %v3263 = vsel %vm1522, %v3261, %v3254
    %v3264 = vsel %vm1522, %v3262, %v3256
    %v3265 = vld [vmem:[%s51] sm:$0xff]
    %v3266 = vld [vmem:[%s51 + $0x8] sm:$0xff]
    %v3267 = vld [vmem:[%s51 + $0x10] sm:$0xff]
    %v3268 = vld [vmem:[%s51 + $0x18] sm:$0xff]
    %v3269 = vld [vmem:[#allocation19] sm:$0x1]
    %v3271 = vperm.slane %v3269, 0
    %v3274 = vsel %vm871, %v3263, 0
    %v3277 = vsel %vm871, %v3264, 0
    %3279 = vmatpush.msra.mxu0 0.0
    %3280 = vmatpush.msra.mxu0 0.0
    %3281 = vmatpush.msra.mxu0 0.0
    %3282 = vmatpush.msra.mxu0 0.0
    %3283 = vmatpush.msra.mxu0 0.0
    %3284 = vmatpush.msra.mxu0 0.0
    %3285 = vmatpush.msra.mxu0 0.0
    %3286 = vmatpush.msra.mxu0 0.0
    %3287 = vmatpush.msra.mxu0 0.0
    %3288 = vmatpush.msra.mxu0 0.0
    %3289 = vmatpush.msra.mxu0 0.0
    %3290 = vmatpush.msra.mxu0 0.0
    %3291 = vmatpush.msra.mxu0 %v3268
    %3292 = vmatpush.msra.mxu0 %v3267
    %3293 = vmatpush.msra.mxu0 %v3266
    %3294 = vmatpush.msra.mxu0 %v3265
    %3295 = vmatmul.f32.gmra.mxu0 %v3274
    %v3296 = vpop.f32.mrf.mxu0
    %v3297 = vadd.f32 %v3271, %v3296
    %3298 = vmatmul.f32.gmra.mxu0 %v3277
    %v3299 = vpop.f32.mrf.mxu0
    %v3300 = vadd.f32 %v3271, %v3299
    %3301 = vdwg.mxu0
    %v3302 = vadd.f32 %v2678, %v3297
    %v3303 = vadd.f32 %v2679, %v3300
    %v3304 = vld [vmem:[#allocation20] sm:$0x1]
    %v3305 = vld [vmem:[#allocation22] sm:$0x1]
    %v3306 = vsel %vm871, %v3302, 0.0
    %3307 = vadd.xlane.f32.xlu0 %v3306
    %v3308 = vpop.xlane.xlu0 %3307
    %v3309 = vsel %vm871, %v3303, 0.0
    %3310 = vadd.xlane.f32.xlu0 %v3309
    %v3311 = vpop.xlane.xlu0 %3310
    %v3312 = vmul.f32 %v3308, %v884
    %v3313 = vmul.f32 %v3311, %v884
    %v3314 = vsub.f32 %v3302, %v3312
    %v3315 = vsub.f32 %v3303, %v3313
    %v3316 = vmul.f32 %v3314, %v3314
    %v3317 = vmul.f32 %v3315, %v3315
    %v3318 = vsel %vm871, %v3316, 0.0
    %3319 = vadd.xlane.f32.xlu0 %v3318
    %v3320 = vpop.xlane.xlu0 %3319
    %v3321 = vsel %vm871, %v3317, 0.0
    %3322 = vadd.xlane.f32.xlu0 %v3321
    %v3323 = vpop.xlane.xlu0 %3322
    %v3324 = vmul.f32 %v3320, %v884
    %v3325 = vmul.f32 %v3323, %v884
    %v3326 = vadd.f32 %v3324, 1e-05
    %v3327 = vadd.f32 %v3325, 1e-05
    %v3328 = vrsqrt.pop %v3326
    %v3329 = vmul.f32 %v3328, %v3326
    %v3330 = vmul.f32 %v3329, %v3328
    %v3331 = vmul.f32 0.5, %v3330
    %v3332 = vsub.f32 1.5, %v3331
    %v3333 = vmul.f32 %v3328, %v3332
    %vm3334 = vweird.f32 %v3326
    %vm3335 = vweird.f32 %v3328
    %vm3336 = vmor %vm3334, %vm3335
    %v3337 = vsel %vm3336, %v3328, %v3333
    %v3338 = vrsqrt.pop %v3327
    %v3339 = vmul.f32 %v3338, %v3327
    %v3340 = vmul.f32 %v3339, %v3338
    %v3341 = vmul.f32 0.5, %v3340
    %v3342 = vsub.f32 1.5, %v3341
    %v3343 = vmul.f32 %v3338, %v3342
    %vm3344 = vweird.f32 %v3327
    %vm3345 = vweird.f32 %v3338
    %vm3346 = vmor %vm3344, %vm3345
    %v3347 = vsel %vm3346, %v3338, %v3343
    %v3348 = vmul.f32 %v3314, %v3337
    %v3349 = vmul.f32 %v3315, %v3347
    %v3351 = vperm.slane %v3304, 0
    %v3353 = vmul.f32 %v3348, %v3351
    %v3354 = vmul.f32 %v3349, %v3351
    %v3356 = vperm.slane %v3305, 0
    %v3358 = vadd.f32 %v3353, %v3356
    %v3359 = vadd.f32 %v3354, %v3356
    %v3360 = vld [vmem:[%s59] sm:$0xff]
    %v3361 = vld [vmem:[%s59 + $0x8] sm:$0xff]
    %v3362 = vld [vmem:[%s59 + $0x10] sm:$0xff]
    %v3363 = vld [vmem:[%s59 + $0x18] sm:$0xff]
    %v3364 = vld [vmem:[#allocation23] sm:$0x1]
    %v3366 = vperm.slane %v3364, 0
    %v3369 = vsel %vm871, %v3358, 0
    %v3372 = vsel %vm871, %v3359, 0
    %3374 = vmatpush.msra.mxu0 0.0
    %3375 = vmatpush.msra.mxu0 0.0
    %3376 = vmatpush.msra.mxu0 0.0
    %3377 = vmatpush.msra.mxu0 0.0
    %3378 = vmatpush.msra.mxu0 0.0
    %3379 = vmatpush.msra.mxu0 0.0
    %3380 = vmatpush.msra.mxu0 0.0
    %3381 = vmatpush.msra.mxu0 0.0
    %3382 = vmatpush.msra.mxu0 0.0
    %3383 = vmatpush.msra.mxu0 0.0
    %3384 = vmatpush.msra.mxu0 0.0
    %3385 = vmatpush.msra.mxu0 0.0
    %3386 = vmatpush.msra.mxu0 %v3363
    %3387 = vmatpush.msra.mxu0 %v3362
    %3388 = vmatpush.msra.mxu0 %v3361
    %3389 = vmatpush.msra.mxu0 %v3360
    %3390 = vmatmul.f32.gmra.mxu0 %v3369
    %v3391 = vpop.f32.mrf.mxu0
    %v3392 = vadd.f32 %v3366, %v3391
    %3393 = vmatmul.f32.gmra.mxu0 %v3372
    %v3394 = vpop.f32.mrf.mxu0
    %v3395 = vadd.f32 %v3366, %v3394
    %3396 = vdwg.mxu0
    %v3397 = vmul.f32 %v3392, %v3392
    %v3398 = vmul.f32 %v3395, %v3395
    %v3399 = vmul.f32 %v3392, %v3397
    %v3400 = vmul.f32 %v3395, %v3398
    %v3401 = vmul.f32 %v3399, 0.044715
    %v3402 = vmul.f32 %v3400, 0.044715
    %v3403 = vadd.f32 %v3392, %v3401
    %v3404 = vadd.f32 %v3395, %v3402
    %v3405 = vmul.f32 %v3403, 0.7978846
    %v3406 = vmul.f32 %v3404, 0.7978846
    %v3407 = vtanh.pop %v3405
    %v3408 = vtanh.pop %v3406
    %v3409 = vadd.f32 %v3407, 1.0
    %v3410 = vadd.f32 %v3408, 1.0
    %v3411 = vmul.f32 %v3409, 0.5
    %v3412 = vmul.f32 %v3410, 0.5
    %v3413 = vmul.f32 %v3392, %v3411
    %v3414 = vmul.f32 %v3395, %v3412
    %v3415 = vld [vmem:[%s63] sm:$0xff]
    %v3416 = vld [vmem:[%s63 + $0x8] sm:$0xff]
    %v3417 = vld [vmem:[%s63 + $0x10] sm:$0xff]
    %v3418 = vld [vmem:[%s63 + $0x18] sm:$0xff]
    %v3419 = vld [vmem:[%s63 + $0x20] sm:$0xff]
    %v3420 = vld [vmem:[%s63 + $0x28] sm:$0xff]
    %v3421 = vld [vmem:[%s63 + $0x30] sm:$0xff]
    %v3422 = vld [vmem:[%s63 + $0x38] sm:$0xff]
    %v3423 = vld [vmem:[#allocation25] sm:$0x1]
    %v3425 = vperm.slane %v3423, 0
    %v3428 = vsel %vm1687, %v3413, 0
    %v3431 = vsel %vm1687, %v3414, 0
    %3433 = vmatpush.msra.mxu0 0.0
    %3434 = vmatpush.msra.mxu0 0.0
    %3435 = vmatpush.msra.mxu0 0.0
    %3436 = vmatpush.msra.mxu0 0.0
    %3437 = vmatpush.msra.mxu0 0.0
    %3438 = vmatpush.msra.mxu0 0.0
    %3439 = vmatpush.msra.mxu0 0.0
    %3440 = vmatpush.msra.mxu0 0.0
    %3441 = vmatpush.msra.mxu0 %v3422
    %3442 = vmatpush.msra.mxu0 %v3421
    %3443 = vmatpush.msra.mxu0 %v3420
    %3444 = vmatpush.msra.mxu0 %v3419
    %3445 = vmatpush.msra.mxu0 %v3418
    %3446 = vmatpush.msra.mxu0 %v3417
    %3447 = vmatpush.msra.mxu0 %v3416
    %3448 = vmatpush.msra.mxu0 %v3415
    %3449 = vmatmul.f32.gmra.mxu0 %v3428
    %v3450 = vpop.f32.mrf.mxu0
    %v3451 = vadd.f32 %v3425, %v3450
    %3452 = vmatmul.f32.gmra.mxu0 %v3431
    %v3453 = vpop.f32.mrf.mxu0
    %v3454 = vadd.f32 %v3425, %v3453
    %3455 = vdwg.mxu0
    %v3456 = vadd.f32 %v3358, %v3451
    %v3457 = vadd.f32 %v3359, %v3454
    %v3458 = vld [vmem:[#allocation26] sm:$0x1]
    %v3459 = vld [vmem:[#allocation28] sm:$0x1]
    %v3460 = vsel %vm871, %v3456, 0.0
    %3461 = vadd.xlane.f32.xlu0 %v3460
    %v3462 = vpop.xlane.xlu0 %3461
    %v3463 = vsel %vm871, %v3457, 0.0
    %3464 = vadd.xlane.f32.xlu0 %v3463
    %v3465 = vpop.xlane.xlu0 %3464
    %v3466 = vmul.f32 %v3462, %v884
    %v3467 = vmul.f32 %v3465, %v884
    %v3468 = vsub.f32 %v3456, %v3466
    %v3469 = vsub.f32 %v3457, %v3467
    %v3470 = vmul.f32 %v3468, %v3468
    %v3471 = vmul.f32 %v3469, %v3469
    %v3472 = vsel %vm871, %v3470, 0.0
    %3473 = vadd.xlane.f32.xlu0 %v3472
    %v3474 = vpop.xlane.xlu0 %3473
    %v3475 = vsel %vm871, %v3471, 0.0
    %3476 = vadd.xlane.f32.xlu0 %v3475
    %v3477 = vpop.xlane.xlu0 %3476
    %v3478 = vmul.f32 %v3474, %v884
    %v3479 = vmul.f32 %v3477, %v884
    %v3480 = vadd.f32 %v3478, 1e-05
    %v3481 = vadd.f32 %v3479, 1e-05
    %v3482 = vrsqrt.pop %v3480
    %v3483 = vmul.f32 %v3482, %v3480
    %v3484 = vmul.f32 %v3483, %v3482
    %v3485 = vmul.f32 0.5, %v3484
    %v3486 = vsub.f32 1.5, %v3485
    %v3487 = vmul.f32 %v3482, %v3486
    %vm3488 = vweird.f32 %v3480
    %vm3489 = vweird.f32 %v3482
    %vm3490 = vmor %vm3488, %vm3489
    %v3491 = vsel %vm3490, %v3482, %v3487
    %v3492 = vrsqrt.pop %v3481
    %v3493 = vmul.f32 %v3492, %v3481
    %v3494 = vmul.f32 %v3493, %v3492
    %v3495 = vmul.f32 0.5, %v3494
    %v3496 = vsub.f32 1.5, %v3495
    %v3497 = vmul.f32 %v3492, %v3496
    %vm3498 = vweird.f32 %v3481
    %vm3499 = vweird.f32 %v3492
    %vm3500 = vmor %vm3498, %vm3499
    %v3501 = vsel %vm3500, %v3492, %v3497
    %v3502 = vmul.f32 %v3468, %v3491
    %v3503 = vmul.f32 %v3469, %v3501
    %v3505 = vperm.slane %v3458, 0
    %v3507 = vmul.f32 %v3502, %v3505
    %v3508 = vmul.f32 %v3503, %v3505
    %v3510 = vperm.slane %v3459, 0
    %v3512 = vadd.f32 %v3507, %v3510
    %v3513 = vadd.f32 %v3508, %v3510
    %s3514 = scalar_lea.vmem %s47, 32
    %v3515 = vld [vmem:[%s3514] sm:$0xff]
    %v3516 = vld [vmem:[%s3514 + $0x8] sm:$0xff]
    %v3517 = vld [vmem:[%s3514 + $0x10] sm:$0xff]
    %v3518 = vld [vmem:[%s3514 + $0x18] sm:$0xff]
    %s3519 = scalar_lea.vmem [#allocation17], 1
    %v3520 = vld [vmem:[%s3519] sm:$0x1]
    %v3522 = vperm.slane %v3520, 0
    %v3525 = vsel %vm871, %v3512, 0
    %v3528 = vsel %vm871, %v3513, 0
    %3530 = vmatpush.msra.mxu0 0.0
    %3531 = vmatpush.msra.mxu0 0.0
    %3532 = vmatpush.msra.mxu0 0.0
    %3533 = vmatpush.msra.mxu0 0.0
    %3534 = vmatpush.msra.mxu0 0.0
    %3535 = vmatpush.msra.mxu0 0.0
    %3536 = vmatpush.msra.mxu0 0.0
    %3537 = vmatpush.msra.mxu0 0.0
    %3538 = vmatpush.msra.mxu0 0.0
    %3539 = vmatpush.msra.mxu0 0.0
    %3540 = vmatpush.msra.mxu0 0.0
    %3541 = vmatpush.msra.mxu0 0.0
    %3542 = vmatpush.msra.mxu0 %v3518
    %3543 = vmatpush.msra.mxu0 %v3517
    %3544 = vmatpush.msra.mxu0 %v3516
    %3545 = vmatpush.msra.mxu0 %v3515
    %3546 = vmatmul.f32.gmra.mxu0 %v3525
    %v3547 = vpop.f32.mrf.mxu0
    %v3548 = vadd.f32 %v3522, %v3547
    %3549 = vmatmul.f32.gmra.mxu0 %v3528
    %v3550 = vpop.f32.mrf.mxu0
    %v3551 = vadd.f32 %v3522, %v3550
    %3552 = vdwg.mxu0
    %3554 = vrot.lane.b32.xlu0 %v3548, 96
    %v3555 = vpop.permute.xlu0 %3554
    %v3556 = vsel %vm977, %v3548, 0
    %v3558 = vsel %vm977, %v3555, 0
    %3560 = vmatpush.xpose.msra.mxu0 0.0
    %3561 = vmatpush.xpose.msra.mxu0 0.0
    %3562 = vmatpush.xpose.msra.mxu0 0.0
    %3563 = vmatpush.xpose.msra.mxu0 0.0
    %3564 = vmatpush.xpose.msra.mxu0 0.0
    %3565 = vmatpush.xpose.msra.mxu0 0.0
    %3566 = vmatpush.xpose.msra.mxu0 0.0
    %3567 = vmatpush.xpose.msra.mxu0 0.0
    %3568 = vmatpush.xpose.msra.mxu0 0.0
    %3569 = vmatpush.xpose.msra.mxu0 0.0
    %3570 = vmatpush.xpose.msra.mxu0 0.0
    %3571 = vmatpush.xpose.msra.mxu0 0.0
    %3572 = vmatpush.xpose.msra.mxu0 0.0
    %3573 = vmatpush.xpose.msra.mxu0 0.0
    %3574 = vmatpush.xpose.msra.mxu0 0.0
    %3575 = vmatpush.xpose.msra.mxu0 %v3558
    %3576 = vmatmul.f32.gmra.mxu0 %v3556
    %v3577 = vpop.f32.mrf.mxu0
    %v3578 = vadd.f32 %v970, %v3577
    %3579 = vdwg.mxu0
    %3581 = vrot.lane.b32.xlu0 %v3551, 96
    %v3582 = vpop.permute.xlu0 %3581
    %v3583 = vsel %vm977, %v3551, 0
    %v3585 = vsel %vm977, %v3582, 0
    %3587 = vmatpush.xpose.msra.mxu0 0.0
    %3588 = vmatpush.xpose.msra.mxu0 0.0
    %3589 = vmatpush.xpose.msra.mxu0 0.0
    %3590 = vmatpush.xpose.msra.mxu0 0.0
    %3591 = vmatpush.xpose.msra.mxu0 0.0
    %3592 = vmatpush.xpose.msra.mxu0 0.0
    %3593 = vmatpush.xpose.msra.mxu0 0.0
    %3594 = vmatpush.xpose.msra.mxu0 0.0
    %3595 = vmatpush.xpose.msra.mxu0 0.0
    %3596 = vmatpush.xpose.msra.mxu0 0.0
    %3597 = vmatpush.xpose.msra.mxu0 0.0
    %3598 = vmatpush.xpose.msra.mxu0 0.0
    %3599 = vmatpush.xpose.msra.mxu0 0.0
    %3600 = vmatpush.xpose.msra.mxu0 0.0
    %3601 = vmatpush.xpose.msra.mxu0 0.0
    %3602 = vmatpush.xpose.msra.mxu0 %v3585
    %3603 = vmatmul.f32.gmra.mxu0 %v3583
    %v3604 = vpop.f32.mrf.mxu0
    %v3605 = vadd.f32 %v971, %v3604
    %3606 = vdwg.mxu0
    %v3607 = vsel %vm977, %v3578, -inf
    %3608 = vmax.xlane.f32.xlu0 %v3607
    %v3609 = vpop.xlane.xlu0 %3608
    %v3610 = vsel %vm977, %v3605, -inf
    %3611 = vmax.xlane.f32.xlu0 %v3610
    %v3612 = vpop.xlane.xlu0 %3611
    %v3613 = vsub.f32 %v3578, %v3609
    %v3614 = vsub.f32 %v3605, %v3612
    %v3615 = vmul.f32 %v3613, 1.442695
    %v3616 = vpow.pop %v3615
    %v3617 = vmul.f32 %v3614, 1.442695
    %v3618 = vpow.pop %v3617
    %v3619 = vsel %vm977, %v3616, 0.0
    %3620 = vadd.xlane.f32.xlu0 %v3619
    %v3621 = vpop.xlane.xlu0 %3620
    %v3622 = vsel %vm977, %v3618, 0.0
    %3623 = vadd.xlane.f32.xlu0 %v3622
    %v3624 = vpop.xlane.xlu0 %3623
    %v3625 = vrcp.pop %v3621
    %v3626 = vrcp.pop %v3624
    %v3627 = vmul.f32 %v3616, %v3625
    %v3628 = vmul.f32 %v3618, %v3626
    %3629 = vrot.lane.b32.xlu0 %v3548, 64
    %v3630 = vpop.permute.xlu0 %3629
    %v3633 = vsel %vm977, %v3627, 0
    %3635 = vmatpush.msra.mxu0 0.0
    %3636 = vmatpush.msra.mxu0 0.0
    %3637 = vmatpush.msra.mxu0 0.0
    %3638 = vmatpush.msra.mxu0 0.0
    %3639 = vmatpush.msra.mxu0 0.0
    %3640 = vmatpush.msra.mxu0 0.0
    %3641 = vmatpush.msra.mxu0 0.0
    %3642 = vmatpush.msra.mxu0 0.0
    %3643 = vmatpush.msra.mxu0 0.0
    %3644 = vmatpush.msra.mxu0 0.0
    %3645 = vmatpush.msra.mxu0 0.0
    %3646 = vmatpush.msra.mxu0 0.0
    %3647 = vmatpush.msra.mxu0 0.0
    %3648 = vmatpush.msra.mxu0 0.0
    %3649 = vmatpush.msra.mxu0 0.0
    %3650 = vmatpush.msra.mxu0 %v3630
    %3651 = vmatmul.f32.gmra.mxu0 %v3633
    %v3652 = vpop.f32.mrf.mxu0
    %v3653 = vadd.f32 0.0, %v3652
    %3654 = vdwg.mxu0
    %3655 = vrot.lane.b32.xlu0 %v3551, 64
    %v3656 = vpop.permute.xlu0 %3655
    %v3659 = vsel %vm977, %v3628, 0
    %3661 = vmatpush.msra.mxu0 0.0
    %3662 = vmatpush.msra.mxu0 0.0
    %3663 = vmatpush.msra.mxu0 0.0
    %3664 = vmatpush.msra.mxu0 0.0
    %3665 = vmatpush.msra.mxu0 0.0
    %3666 = vmatpush.msra.mxu0 0.0
    %3667 = vmatpush.msra.mxu0 0.0
    %3668 = vmatpush.msra.mxu0 0.0
    %3669 = vmatpush.msra.mxu0 0.0
    %3670 = vmatpush.msra.mxu0 0.0
    %3671 = vmatpush.msra.mxu0 0.0
    %3672 = vmatpush.msra.mxu0 0.0
    %3673 = vmatpush.msra.mxu0 0.0
    %3674 = vmatpush.msra.mxu0 0.0
    %3675 = vmatpush.msra.mxu0 0.0
    %3676 = vmatpush.msra.mxu0 %v3656
    %3677 = vmatmul.f32.gmra.mxu0 %v3659
    %v3678 = vpop.f32.mrf.mxu0
    %v3679 = vadd.f32 0.0, %v3678
    %3680 = vdwg.mxu0
    %3681 = vrot.lane.b32.xlu0 %v3548, 120
    %v3682 = vpop.permute.xlu0 %3681
    %3683 = vrot.lane.b32.xlu0 %v3548, 88
    %v3684 = vpop.permute.xlu0 %3683
    %v3685 = vsel %vm977, %v3682, 0
    %v3687 = vsel %vm977, %v3684, 0
    %3689 = vmatpush.xpose.msra.mxu0 0.0
    %3690 = vmatpush.xpose.msra.mxu0 0.0
    %3691 = vmatpush.xpose.msra.mxu0 0.0
    %3692 = vmatpush.xpose.msra.mxu0 0.0
    %3693 = vmatpush.xpose.msra.mxu0 0.0
    %3694 = vmatpush.xpose.msra.mxu0 0.0
    %3695 = vmatpush.xpose.msra.mxu0 0.0
    %3696 = vmatpush.xpose.msra.mxu0 0.0
    %3697 = vmatpush.xpose.msra.mxu0 0.0
    %3698 = vmatpush.xpose.msra.mxu0 0.0
    %3699 = vmatpush.xpose.msra.mxu0 0.0
    %3700 = vmatpush.xpose.msra.mxu0 0.0
    %3701 = vmatpush.xpose.msra.mxu0 0.0
    %3702 = vmatpush.xpose.msra.mxu0 0.0
    %3703 = vmatpush.xpose.msra.mxu0 0.0
    %3704 = vmatpush.xpose.msra.mxu0 %v3687
    %3705 = vmatmul.f32.gmra.mxu0 %v3685
    %v3706 = vpop.f32.mrf.mxu0
    %v3707 = vadd.f32 %v970, %v3706
    %3708 = vdwg.mxu0
    %3709 = vrot.lane.b32.xlu0 %v3551, 120
    %v3710 = vpop.permute.xlu0 %3709
    %3711 = vrot.lane.b32.xlu0 %v3551, 88
    %v3712 = vpop.permute.xlu0 %3711
    %v3713 = vsel %vm977, %v3710, 0
    %v3715 = vsel %vm977, %v3712, 0
    %3717 = vmatpush.xpose.msra.mxu0 0.0
    %3718 = vmatpush.xpose.msra.mxu0 0.0
    %3719 = vmatpush.xpose.msra.mxu0 0.0
    %3720 = vmatpush.xpose.msra.mxu0 0.0
    %3721 = vmatpush.xpose.msra.mxu0 0.0
    %3722 = vmatpush.xpose.msra.mxu0 0.0
    %3723 = vmatpush.xpose.msra.mxu0 0.0
    %3724 = vmatpush.xpose.msra.mxu0 0.0
    %3725 = vmatpush.xpose.msra.mxu0 0.0
    %3726 = vmatpush.xpose.msra.mxu0 0.0
    %3727 = vmatpush.xpose.msra.mxu0 0.0
    %3728 = vmatpush.xpose.msra.mxu0 0.0
    %3729 = vmatpush.xpose.msra.mxu0 0.0
    %3730 = vmatpush.xpose.msra.mxu0 0.0
    %3731 = vmatpush.xpose.msra.mxu0 0.0
    %3732 = vmatpush.xpose.msra.mxu0 %v3715
    %3733 = vmatmul.f32.gmra.mxu0 %v3713
    %v3734 = vpop.f32.mrf.mxu0
    %v3735 = vadd.f32 %v971, %v3734
    %3736 = vdwg.mxu0
    %v3737 = vsel %vm977, %v3707, -inf
    %3738 = vmax.xlane.f32.xlu0 %v3737
    %v3739 = vpop.xlane.xlu0 %3738
    %v3740 = vsel %vm977, %v3735, -inf
    %3741 = vmax.xlane.f32.xlu0 %v3740
    %v3742 = vpop.xlane.xlu0 %3741
    %v3743 = vsub.f32 %v3707, %v3739
    %v3744 = vsub.f32 %v3735, %v3742
    %v3745 = vmul.f32 %v3743, 1.442695
    %v3746 = vpow.pop %v3745
    %v3747 = vmul.f32 %v3744, 1.442695
    %v3748 = vpow.pop %v3747
    %v3749 = vsel %vm977, %v3746, 0.0
    %3750 = vadd.xlane.f32.xlu0 %v3749
    %v3751 = vpop.xlane.xlu0 %3750
    %v3752 = vsel %vm977, %v3748, 0.0
    %3753 = vadd.xlane.f32.xlu0 %v3752
    %v3754 = vpop.xlane.xlu0 %3753
    %v3755 = vrcp.pop %v3751
    %v3756 = vrcp.pop %v3754
    %v3757 = vmul.f32 %v3746, %v3755
    %v3758 = vmul.f32 %v3748, %v3756
    %3759 = vrot.lane.b32.xlu0 %v3548, 56
    %v3760 = vpop.permute.xlu0 %3759
    %v3763 = vsel %vm977, %v3757, 0
    %3765 = vmatpush.msra.mxu0 0.0
    %3766 = vmatpush.msra.mxu0 0.0
    %3767 = vmatpush.msra.mxu0 0.0
    %3768 = vmatpush.msra.mxu0 0.0
    %3769 = vmatpush.msra.mxu0 0.0
    %3770 = vmatpush.msra.mxu0 0.0
    %3771 = vmatpush.msra.mxu0 0.0
    %3772 = vmatpush.msra.mxu0 0.0
    %3773 = vmatpush.msra.mxu0 0.0
    %3774 = vmatpush.msra.mxu0 0.0
    %3775 = vmatpush.msra.mxu0 0.0
    %3776 = vmatpush.msra.mxu0 0.0
    %3777 = vmatpush.msra.mxu0 0.0
    %3778 = vmatpush.msra.mxu0 0.0
    %3779 = vmatpush.msra.mxu0 0.0
    %3780 = vmatpush.msra.mxu0 %v3760
    %3781 = vmatmul.f32.gmra.mxu0 %v3763
    %v3782 = vpop.f32.mrf.mxu0
    %v3783 = vadd.f32 0.0, %v3782
    %3784 = vdwg.mxu0
    %3785 = vrot.lane.b32.xlu0 %v3551, 56
    %v3786 = vpop.permute.xlu0 %3785
    %v3789 = vsel %vm977, %v3758, 0
    %3791 = vmatpush.msra.mxu0 0.0
    %3792 = vmatpush.msra.mxu0 0.0
    %3793 = vmatpush.msra.mxu0 0.0
    %3794 = vmatpush.msra.mxu0 0.0
    %3795 = vmatpush.msra.mxu0 0.0
    %3796 = vmatpush.msra.mxu0 0.0
    %3797 = vmatpush.msra.mxu0 0.0
    %3798 = vmatpush.msra.mxu0 0.0
    %3799 = vmatpush.msra.mxu0 0.0
    %3800 = vmatpush.msra.mxu0 0.0
    %3801 = vmatpush.msra.mxu0 0.0
    %3802 = vmatpush.msra.mxu0 0.0
    %3803 = vmatpush.msra.mxu0 0.0
    %3804 = vmatpush.msra.mxu0 0.0
    %3805 = vmatpush.msra.mxu0 0.0
    %3806 = vmatpush.msra.mxu0 %v3786
    %3807 = vmatmul.f32.gmra.mxu0 %v3789
    %v3808 = vpop.f32.mrf.mxu0
    %v3809 = vadd.f32 0.0, %v3808
    %3810 = vdwg.mxu0
    %3811 = vrot.lane.b32.xlu0 %v3548, 112
    %v3812 = vpop.permute.xlu0 %3811
    %3813 = vrot.lane.b32.xlu0 %v3548, 80
    %v3814 = vpop.permute.xlu0 %3813
    %v3815 = vsel %vm977, %v3812, 0
    %v3817 = vsel %vm977, %v3814, 0
    %3819 = vmatpush.xpose.msra.mxu0 0.0
    %3820 = vmatpush.xpose.msra.mxu0 0.0
    %3821 = vmatpush.xpose.msra.mxu0 0.0
    %3822 = vmatpush.xpose.msra.mxu0 0.0
    %3823 = vmatpush.xpose.msra.mxu0 0.0
    %3824 = vmatpush.xpose.msra.mxu0 0.0
    %3825 = vmatpush.xpose.msra.mxu0 0.0
    %3826 = vmatpush.xpose.msra.mxu0 0.0
    %3827 = vmatpush.xpose.msra.mxu0 0.0
    %3828 = vmatpush.xpose.msra.mxu0 0.0
    %3829 = vmatpush.xpose.msra.mxu0 0.0
    %3830 = vmatpush.xpose.msra.mxu0 0.0
    %3831 = vmatpush.xpose.msra.mxu0 0.0
    %3832 = vmatpush.xpose.msra.mxu0 0.0
    %3833 = vmatpush.xpose.msra.mxu0 0.0
    %3834 = vmatpush.xpose.msra.mxu0 %v3817
    %3835 = vmatmul.f32.gmra.mxu0 %v3815
    %v3836 = vpop.f32.mrf.mxu0
    %v3837 = vadd.f32 %v970, %v3836
    %3838 = vdwg.mxu0
    %3839 = vrot.lane.b32.xlu0 %v3551, 112
    %v3840 = vpop.permute.xlu0 %3839
    %3841 = vrot.lane.b32.xlu0 %v3551, 80
    %v3842 = vpop.permute.xlu0 %3841
    %v3843 = vsel %vm977, %v3840, 0
    %v3845 = vsel %vm977, %v3842, 0
    %3847 = vmatpush.xpose.msra.mxu0 0.0
    %3848 = vmatpush.xpose.msra.mxu0 0.0
    %3849 = vmatpush.xpose.msra.mxu0 0.0
    %3850 = vmatpush.xpose.msra.mxu0 0.0
    %3851 = vmatpush.xpose.msra.mxu0 0.0
    %3852 = vmatpush.xpose.msra.mxu0 0.0
    %3853 = vmatpush.xpose.msra.mxu0 0.0
    %3854 = vmatpush.xpose.msra.mxu0 0.0
    %3855 = vmatpush.xpose.msra.mxu0 0.0
    %3856 = vmatpush.xpose.msra.mxu0 0.0
    %3857 = vmatpush.xpose.msra.mxu0 0.0
    %3858 = vmatpush.xpose.msra.mxu0 0.0
    %3859 = vmatpush.xpose.msra.mxu0 0.0
    %3860 = vmatpush.xpose.msra.mxu0 0.0
    %3861 = vmatpush.xpose.msra.mxu0 0.0
    %3862 = vmatpush.xpose.msra.mxu0 %v3845
    %3863 = vmatmul.f32.gmra.mxu0 %v3843
    %v3864 = vpop.f32.mrf.mxu0
    %v3865 = vadd.f32 %v971, %v3864
    %3866 = vdwg.mxu0
    %v3867 = vsel %vm977, %v3837, -inf
    %3868 = vmax.xlane.f32.xlu0 %v3867
    %v3869 = vpop.xlane.xlu0 %3868
    %v3870 = vsel %vm977, %v3865, -inf
    %3871 = vmax.xlane.f32.xlu0 %v3870
    %v3872 = vpop.xlane.xlu0 %3871
    %v3873 = vsub.f32 %v3837, %v3869
    %v3874 = vsub.f32 %v3865, %v3872
    %v3875 = vmul.f32 %v3873, 1.442695
    %v3876 = vpow.pop %v3875
    %v3877 = vmul.f32 %v3874, 1.442695
    %v3878 = vpow.pop %v3877
    %v3879 = vsel %vm977, %v3876, 0.0
    %3880 = vadd.xlane.f32.xlu0 %v3879
    %v3881 = vpop.xlane.xlu0 %3880
    %v3882 = vsel %vm977, %v3878, 0.0
    %3883 = vadd.xlane.f32.xlu0 %v3882
    %v3884 = vpop.xlane.xlu0 %3883
    %v3885 = vrcp.pop %v3881
    %v3886 = vrcp.pop %v3884
    %v3887 = vmul.f32 %v3876, %v3885
    %v3888 = vmul.f32 %v3878, %v3886
    %3889 = vrot.lane.b32.xlu0 %v3548, 48
    %v3890 = vpop.permute.xlu0 %3889
    %v3893 = vsel %vm977, %v3887, 0
    %3895 = vmatpush.msra.mxu0 0.0
    %3896 = vmatpush.msra.mxu0 0.0
    %3897 = vmatpush.msra.mxu0 0.0
    %3898 = vmatpush.msra.mxu0 0.0
    %3899 = vmatpush.msra.mxu0 0.0
    %3900 = vmatpush.msra.mxu0 0.0
    %3901 = vmatpush.msra.mxu0 0.0
    %3902 = vmatpush.msra.mxu0 0.0
    %3903 = vmatpush.msra.mxu0 0.0
    %3904 = vmatpush.msra.mxu0 0.0
    %3905 = vmatpush.msra.mxu0 0.0
    %3906 = vmatpush.msra.mxu0 0.0
    %3907 = vmatpush.msra.mxu0 0.0
    %3908 = vmatpush.msra.mxu0 0.0
    %3909 = vmatpush.msra.mxu0 0.0
    %3910 = vmatpush.msra.mxu0 %v3890
    %3911 = vmatmul.f32.gmra.mxu0 %v3893
    %v3912 = vpop.f32.mrf.mxu0
    %v3913 = vadd.f32 0.0, %v3912
    %3914 = vdwg.mxu0
    %3915 = vrot.lane.b32.xlu0 %v3551, 48
    %v3916 = vpop.permute.xlu0 %3915
    %v3919 = vsel %vm977, %v3888, 0
    %3921 = vmatpush.msra.mxu0 0.0
    %3922 = vmatpush.msra.mxu0 0.0
    %3923 = vmatpush.msra.mxu0 0.0
    %3924 = vmatpush.msra.mxu0 0.0
    %3925 = vmatpush.msra.mxu0 0.0
    %3926 = vmatpush.msra.mxu0 0.0
    %3927 = vmatpush.msra.mxu0 0.0
    %3928 = vmatpush.msra.mxu0 0.0
    %3929 = vmatpush.msra.mxu0 0.0
    %3930 = vmatpush.msra.mxu0 0.0
    %3931 = vmatpush.msra.mxu0 0.0
    %3932 = vmatpush.msra.mxu0 0.0
    %3933 = vmatpush.msra.mxu0 0.0
    %3934 = vmatpush.msra.mxu0 0.0
    %3935 = vmatpush.msra.mxu0 0.0
    %3936 = vmatpush.msra.mxu0 %v3916
    %3937 = vmatmul.f32.gmra.mxu0 %v3919
    %v3938 = vpop.f32.mrf.mxu0
    %v3939 = vadd.f32 0.0, %v3938
    %3940 = vdwg.mxu0
    %3941 = vrot.lane.b32.xlu0 %v3548, 104
    %v3942 = vpop.permute.xlu0 %3941
    %3943 = vrot.lane.b32.xlu0 %v3548, 72
    %v3944 = vpop.permute.xlu0 %3943
    %v3945 = vsel %vm977, %v3942, 0
    %v3947 = vsel %vm977, %v3944, 0
    %3949 = vmatpush.xpose.msra.mxu0 0.0
    %3950 = vmatpush.xpose.msra.mxu0 0.0
    %3951 = vmatpush.xpose.msra.mxu0 0.0
    %3952 = vmatpush.xpose.msra.mxu0 0.0
    %3953 = vmatpush.xpose.msra.mxu0 0.0
    %3954 = vmatpush.xpose.msra.mxu0 0.0
    %3955 = vmatpush.xpose.msra.mxu0 0.0
    %3956 = vmatpush.xpose.msra.mxu0 0.0
    %3957 = vmatpush.xpose.msra.mxu0 0.0
    %3958 = vmatpush.xpose.msra.mxu0 0.0
    %3959 = vmatpush.xpose.msra.mxu0 0.0
    %3960 = vmatpush.xpose.msra.mxu0 0.0
    %3961 = vmatpush.xpose.msra.mxu0 0.0
    %3962 = vmatpush.xpose.msra.mxu0 0.0
    %3963 = vmatpush.xpose.msra.mxu0 0.0
    %3964 = vmatpush.xpose.msra.mxu0 %v3947
    %3965 = vmatmul.f32.gmra.mxu0 %v3945
    %v3966 = vpop.f32.mrf.mxu0
    %v3967 = vadd.f32 %v970, %v3966
    %3968 = vdwg.mxu0
    %3969 = vrot.lane.b32.xlu0 %v3551, 104
    %v3970 = vpop.permute.xlu0 %3969
    %3971 = vrot.lane.b32.xlu0 %v3551, 72
    %v3972 = vpop.permute.xlu0 %3971
    %v3973 = vsel %vm977, %v3970, 0
    %v3975 = vsel %vm977, %v3972, 0
    %3977 = vmatpush.xpose.msra.mxu0 0.0
    %3978 = vmatpush.xpose.msra.mxu0 0.0
    %3979 = vmatpush.xpose.msra.mxu0 0.0
    %3980 = vmatpush.xpose.msra.mxu0 0.0
    %3981 = vmatpush.xpose.msra.mxu0 0.0
    %3982 = vmatpush.xpose.msra.mxu0 0.0
    %3983 = vmatpush.xpose.msra.mxu0 0.0
    %3984 = vmatpush.xpose.msra.mxu0 0.0
    %3985 = vmatpush.xpose.msra.mxu0 0.0
    %3986 = vmatpush.xpose.msra.mxu0 0.0
    %3987 = vmatpush.xpose.msra.mxu0 0.0
    %3988 = vmatpush.xpose.msra.mxu0 0.0
    %3989 = vmatpush.xpose.msra.mxu0 0.0
    %3990 = vmatpush.xpose.msra.mxu0 0.0
    %3991 = vmatpush.xpose.msra.mxu0 0.0
    %3992 = vmatpush.xpose.msra.mxu0 %v3975
    %3993 = vmatmul.f32.gmra.mxu0 %v3973
    %v3994 = vpop.f32.mrf.mxu0
    %v3995 = vadd.f32 %v971, %v3994
    %3996 = vdwg.mxu0
    %v3997 = vsel %vm977, %v3967, -inf
    %3998 = vmax.xlane.f32.xlu0 %v3997
    %v3999 = vpop.xlane.xlu0 %3998
    %v4000 = vsel %vm977, %v3995, -inf
    %4001 = vmax.xlane.f32.xlu0 %v4000
    %v4002 = vpop.xlane.xlu0 %4001
    %v4003 = vsub.f32 %v3967, %v3999
    %v4004 = vsub.f32 %v3995, %v4002
    %v4005 = vmul.f32 %v4003, 1.442695
    %v4006 = vpow.pop %v4005
    %v4007 = vmul.f32 %v4004, 1.442695
    %v4008 = vpow.pop %v4007
    %v4009 = vsel %vm977, %v4006, 0.0
    %4010 = vadd.xlane.f32.xlu0 %v4009
    %v4011 = vpop.xlane.xlu0 %4010
    %v4012 = vsel %vm977, %v4008, 0.0
    %4013 = vadd.xlane.f32.xlu0 %v4012
    %v4014 = vpop.xlane.xlu0 %4013
    %v4015 = vrcp.pop %v4011
    %v4016 = vrcp.pop %v4014
    %v4017 = vmul.f32 %v4006, %v4015
    %v4018 = vmul.f32 %v4008, %v4016
    %4019 = vrot.lane.b32.xlu0 %v3548, 40
    %v4020 = vpop.permute.xlu0 %4019
    %v4023 = vsel %vm977, %v4017, 0
    %4025 = vmatpush.msra.mxu0 0.0
    %4026 = vmatpush.msra.mxu0 0.0
    %4027 = vmatpush.msra.mxu0 0.0
    %4028 = vmatpush.msra.mxu0 0.0
    %4029 = vmatpush.msra.mxu0 0.0
    %4030 = vmatpush.msra.mxu0 0.0
    %4031 = vmatpush.msra.mxu0 0.0
    %4032 = vmatpush.msra.mxu0 0.0
    %4033 = vmatpush.msra.mxu0 0.0
    %4034 = vmatpush.msra.mxu0 0.0
    %4035 = vmatpush.msra.mxu0 0.0
    %4036 = vmatpush.msra.mxu0 0.0
    %4037 = vmatpush.msra.mxu0 0.0
    %4038 = vmatpush.msra.mxu0 0.0
    %4039 = vmatpush.msra.mxu0 0.0
    %4040 = vmatpush.msra.mxu0 %v4020
    %4041 = vmatmul.f32.gmra.mxu0 %v4023
    %v4042 = vpop.f32.mrf.mxu0
    %v4043 = vadd.f32 0.0, %v4042
    %4044 = vdwg.mxu0
    %4045 = vrot.lane.b32.xlu0 %v3551, 40
    %v4046 = vpop.permute.xlu0 %4045
    %v4049 = vsel %vm977, %v4018, 0
    %4051 = vmatpush.msra.mxu0 0.0
    %4052 = vmatpush.msra.mxu0 0.0
    %4053 = vmatpush.msra.mxu0 0.0
    %4054 = vmatpush.msra.mxu0 0.0
    %4055 = vmatpush.msra.mxu0 0.0
    %4056 = vmatpush.msra.mxu0 0.0
    %4057 = vmatpush.msra.mxu0 0.0
    %4058 = vmatpush.msra.mxu0 0.0
    %4059 = vmatpush.msra.mxu0 0.0
    %4060 = vmatpush.msra.mxu0 0.0
    %4061 = vmatpush.msra.mxu0 0.0
    %4062 = vmatpush.msra.mxu0 0.0
    %4063 = vmatpush.msra.mxu0 0.0
    %4064 = vmatpush.msra.mxu0 0.0
    %4065 = vmatpush.msra.mxu0 0.0
    %4066 = vmatpush.msra.mxu0 %v4046
    %4067 = vmatmul.f32.gmra.mxu0 %v4049
    %v4068 = vpop.f32.mrf.mxu0
    %v4069 = vadd.f32 0.0, %v4068
    %4070 = vdwg.mxu0
    %4073 = vrot.lane.b32.xlu0 %v3783, 8
    %v4074 = vpop.permute.xlu0 %4073
    %4075 = vrot.lane.b32.xlu0 %v3809, 8
    %v4076 = vpop.permute.xlu0 %4075
    %4081 = vrot.lane.b32.xlu0 %v3913, 16
    %v4082 = vpop.permute.xlu0 %4081
    %4083 = vrot.lane.b32.xlu0 %v3939, 16
    %v4084 = vpop.permute.xlu0 %4083
    %4089 = vrot.lane.b32.xlu0 %v4043, 24
    %v4090 = vpop.permute.xlu0 %4089
    %4091 = vrot.lane.b32.xlu0 %v4069, 24
    %v4092 = vpop.permute.xlu0 %4091
    %v4095 = vsel %vm977, %v3653, %v4074
    %v4096 = vsel %vm977, %v3679, %v4076
    %v4097 = vsel %vm1519, %v4095, %v4082
    %v4098 = vsel %vm1519, %v4096, %v4084
    %v4099 = vsel %vm1522, %v4097, %v4090
    %v4100 = vsel %vm1522, %v4098, %v4092
    %s4101 = scalar_lea.vmem %s51, 32
    %v4102 = vld [vmem:[%s4101] sm:$0xff]
    %v4103 = vld [vmem:[%s4101 + $0x8] sm:$0xff]
    %v4104 = vld [vmem:[%s4101 + $0x10] sm:$0xff]
    %v4105 = vld [vmem:[%s4101 + $0x18] sm:$0xff]
    %s4106 = scalar_lea.vmem [#allocation19], 1
    %v4107 = vld [vmem:[%s4106] sm:$0x1]
    %v4109 = vperm.slane %v4107, 0
    %v4112 = vsel %vm871, %v4099, 0
    %v4115 = vsel %vm871, %v4100, 0
    %4117 = vmatpush.msra.mxu0 0.0
    %4118 = vmatpush.msra.mxu0 0.0
    %4119 = vmatpush.msra.mxu0 0.0
    %4120 = vmatpush.msra.mxu0 0.0
    %4121 = vmatpush.msra.mxu0 0.0
    %4122 = vmatpush.msra.mxu0 0.0
    %4123 = vmatpush.msra.mxu0 0.0
    %4124 = vmatpush.msra.mxu0 0.0
    %4125 = vmatpush.msra.mxu0 0.0
    %4126 = vmatpush.msra.mxu0 0.0
    %4127 = vmatpush.msra.mxu0 0.0
    %4128 = vmatpush.msra.mxu0 0.0
    %4129 = vmatpush.msra.mxu0 %v4105
    %4130 = vmatpush.msra.mxu0 %v4104
    %4131 = vmatpush.msra.mxu0 %v4103
    %4132 = vmatpush.msra.mxu0 %v4102
    %4133 = vmatmul.f32.gmra.mxu0 %v4112
    %v4134 = vpop.f32.mrf.mxu0
    %v4135 = vadd.f32 %v4109, %v4134
    %4136 = vmatmul.f32.gmra.mxu0 %v4115
    %v4137 = vpop.f32.mrf.mxu0
    %v4138 = vadd.f32 %v4109, %v4137
    %4139 = vdwg.mxu0
    %v4140 = vadd.f32 %v3512, %v4135
    %v4141 = vadd.f32 %v3513, %v4138
    %s4142 = scalar_lea.vmem [#allocation20], 1
    %v4143 = vld [vmem:[%s4142] sm:$0x1]
    %s4144 = scalar_lea.vmem [#allocation22], 1
    %v4145 = vld [vmem:[%s4144] sm:$0x1]
    %v4146 = vsel %vm871, %v4140, 0.0
    %4147 = vadd.xlane.f32.xlu0 %v4146
    %v4148 = vpop.xlane.xlu0 %4147
    %v4149 = vsel %vm871, %v4141, 0.0
    %4150 = vadd.xlane.f32.xlu0 %v4149
    %v4151 = vpop.xlane.xlu0 %4150
    %v4152 = vmul.f32 %v4148, %v884
    %v4153 = vmul.f32 %v4151, %v884
    %v4154 = vsub.f32 %v4140, %v4152
    %v4155 = vsub.f32 %v4141, %v4153
    %v4156 = vmul.f32 %v4154, %v4154
    %v4157 = vmul.f32 %v4155, %v4155
    %v4158 = vsel %vm871, %v4156, 0.0
    %4159 = vadd.xlane.f32.xlu0 %v4158
    %v4160 = vpop.xlane.xlu0 %4159
    %v4161 = vsel %vm871, %v4157, 0.0
    %4162 = vadd.xlane.f32.xlu0 %v4161
    %v4163 = vpop.xlane.xlu0 %4162
    %v4164 = vmul.f32 %v4160, %v884
    %v4165 = vmul.f32 %v4163, %v884
    %v4166 = vadd.f32 %v4164, 1e-05
    %v4167 = vadd.f32 %v4165, 1e-05
    %v4168 = vrsqrt.pop %v4166
    %v4169 = vmul.f32 %v4168, %v4166
    %v4170 = vmul.f32 %v4169, %v4168
    %v4171 = vmul.f32 0.5, %v4170
    %v4172 = vsub.f32 1.5, %v4171
    %v4173 = vmul.f32 %v4168, %v4172
    %vm4174 = vweird.f32 %v4166
    %vm4175 = vweird.f32 %v4168
    %vm4176 = vmor %vm4174, %vm4175
    %v4177 = vsel %vm4176, %v4168, %v4173
    %v4178 = vrsqrt.pop %v4167
    %v4179 = vmul.f32 %v4178, %v4167
    %v4180 = vmul.f32 %v4179, %v4178
    %v4181 = vmul.f32 0.5, %v4180
    %v4182 = vsub.f32 1.5, %v4181
    %v4183 = vmul.f32 %v4178, %v4182
    %vm4184 = vweird.f32 %v4167
    %vm4185 = vweird.f32 %v4178
    %vm4186 = vmor %vm4184, %vm4185
    %v4187 = vsel %vm4186, %v4178, %v4183
    %v4188 = vmul.f32 %v4154, %v4177
    %v4189 = vmul.f32 %v4155, %v4187
    %v4191 = vperm.slane %v4143, 0
    %v4193 = vmul.f32 %v4188, %v4191
    %v4194 = vmul.f32 %v4189, %v4191
    %v4196 = vperm.slane %v4145, 0
    %v4198 = vadd.f32 %v4193, %v4196
    %v4199 = vadd.f32 %v4194, %v4196
    %s4200 = scalar_lea.vmem %s59, 32
    %v4201 = vld [vmem:[%s4200] sm:$0xff]
    %v4202 = vld [vmem:[%s4200 + $0x8] sm:$0xff]
    %v4203 = vld [vmem:[%s4200 + $0x10] sm:$0xff]
    %v4204 = vld [vmem:[%s4200 + $0x18] sm:$0xff]
    %s4205 = scalar_lea.vmem [#allocation23], 1
    %v4206 = vld [vmem:[%s4205] sm:$0x1]
    %v4208 = vperm.slane %v4206, 0
    %v4211 = vsel %vm871, %v4198, 0
    %v4214 = vsel %vm871, %v4199, 0
    %4216 = vmatpush.msra.mxu0 0.0
    %4217 = vmatpush.msra.mxu0 0.0
    %4218 = vmatpush.msra.mxu0 0.0
    %4219 = vmatpush.msra.mxu0 0.0
    %4220 = vmatpush.msra.mxu0 0.0
    %4221 = vmatpush.msra.mxu0 0.0
    %4222 = vmatpush.msra.mxu0 0.0
    %4223 = vmatpush.msra.mxu0 0.0
    %4224 = vmatpush.msra.mxu0 0.0
    %4225 = vmatpush.msra.mxu0 0.0
    %4226 = vmatpush.msra.mxu0 0.0
    %4227 = vmatpush.msra.mxu0 0.0
    %4228 = vmatpush.msra.mxu0 %v4204
    %4229 = vmatpush.msra.mxu0 %v4203
    %4230 = vmatpush.msra.mxu0 %v4202
    %4231 = vmatpush.msra.mxu0 %v4201
    %4232 = vmatmul.f32.gmra.mxu0 %v4211
    %v4233 = vpop.f32.mrf.mxu0
    %v4234 = vadd.f32 %v4208, %v4233
    %4235 = vmatmul.f32.gmra.mxu0 %v4214
    %v4236 = vpop.f32.mrf.mxu0
    %v4237 = vadd.f32 %v4208, %v4236
    %4238 = vdwg.mxu0
    %v4239 = vmul.f32 %v4234, %v4234
    %v4240 = vmul.f32 %v4237, %v4237
    %v4241 = vmul.f32 %v4234, %v4239
    %v4242 = vmul.f32 %v4237, %v4240
    %v4243 = vmul.f32 %v4241, 0.044715
    %v4244 = vmul.f32 %v4242, 0.044715
    %v4245 = vadd.f32 %v4234, %v4243
    %v4246 = vadd.f32 %v4237, %v4244
    %v4247 = vmul.f32 %v4245, 0.7978846
    %v4248 = vmul.f32 %v4246, 0.7978846
    %v4249 = vtanh.pop %v4247
    %v4250 = vtanh.pop %v4248
    %v4251 = vadd.f32 %v4249, 1.0
    %v4252 = vadd.f32 %v4250, 1.0
    %v4253 = vmul.f32 %v4251, 0.5
    %v4254 = vmul.f32 %v4252, 0.5
    %v4255 = vmul.f32 %v4234, %v4253
    %v4256 = vmul.f32 %v4237, %v4254
    %s4257 = scalar_lea.vmem %s63, 64
    %v4258 = vld [vmem:[%s4257] sm:$0xff]
    %v4259 = vld [vmem:[%s4257 + $0x8] sm:$0xff]
    %v4260 = vld [vmem:[%s4257 + $0x10] sm:$0xff]
    %v4261 = vld [vmem:[%s4257 + $0x18] sm:$0xff]
    %v4262 = vld [vmem:[%s4257 + $0x20] sm:$0xff]
    %v4263 = vld [vmem:[%s4257 + $0x28] sm:$0xff]
    %v4264 = vld [vmem:[%s4257 + $0x30] sm:$0xff]
    %v4265 = vld [vmem:[%s4257 + $0x38] sm:$0xff]
    %s4266 = scalar_lea.vmem [#allocation25], 1
    %v4267 = vld [vmem:[%s4266] sm:$0x1]
    %v4269 = vperm.slane %v4267, 0
    %v4272 = vsel %vm1687, %v4255, 0
    %v4275 = vsel %vm1687, %v4256, 0
    %4277 = vmatpush.msra.mxu0 0.0
    %4278 = vmatpush.msra.mxu0 0.0
    %4279 = vmatpush.msra.mxu0 0.0
    %4280 = vmatpush.msra.mxu0 0.0
    %4281 = vmatpush.msra.mxu0 0.0
    %4282 = vmatpush.msra.mxu0 0.0
    %4283 = vmatpush.msra.mxu0 0.0
    %4284 = vmatpush.msra.mxu0 0.0
    %4285 = vmatpush.msra.mxu0 %v4265
    %4286 = vmatpush.msra.mxu0 %v4264
    %4287 = vmatpush.msra.mxu0 %v4263
    %4288 = vmatpush.msra.mxu0 %v4262
    %4289 = vmatpush.msra.mxu0 %v4261
    %4290 = vmatpush.msra.mxu0 %v4260
    %4291 = vmatpush.msra.mxu0 %v4259
    %4292 = vmatpush.msra.mxu0 %v4258
    %4293 = vmatmul.f32.gmra.mxu0 %v4272
    %v4294 = vpop.f32.mrf.mxu0
    %v4295 = vadd.f32 %v4269, %v4294
    %4296 = vmatmul.f32.gmra.mxu0 %v4275
    %v4297 = vpop.f32.mrf.mxu0
    %v4298 = vadd.f32 %v4269, %v4297
    %4299 = vdwg.mxu0
    %v4300 = vadd.f32 %v4198, %v4295
    %v4301 = vadd.f32 %v4199, %v4298
    %s4302 = scalar_lea.vmem [#allocation26], 1
    %v4303 = vld [vmem:[%s4302] sm:$0x1]
    %s4304 = scalar_lea.vmem [#allocation28], 1
    %v4305 = vld [vmem:[%s4304] sm:$0x1]
    %v4306 = vsel %vm871, %v4300, 0.0
    %4307 = vadd.xlane.f32.xlu0 %v4306
    %v4308 = vpop.xlane.xlu0 %4307
    %v4309 = vsel %vm871, %v4301, 0.0
    %4310 = vadd.xlane.f32.xlu0 %v4309
    %v4311 = vpop.xlane.xlu0 %4310
    %v4312 = vmul.f32 %v4308, %v884
    %v4313 = vmul.f32 %v4311, %v884
    %v4314 = vsub.f32 %v4300, %v4312
    %v4315 = vsub.f32 %v4301, %v4313
    %v4316 = vmul.f32 %v4314, %v4314
    %v4317 = vmul.f32 %v4315, %v4315
    %v4318 = vsel %vm871, %v4316, 0.0
    %4319 = vadd.xlane.f32.xlu0 %v4318
    %v4320 = vpop.xlane.xlu0 %4319
    %v4321 = vsel %vm871, %v4317, 0.0
    %4322 = vadd.xlane.f32.xlu0 %v4321
    %v4323 = vpop.xlane.xlu0 %4322
    %v4324 = vmul.f32 %v4320, %v884
    %v4325 = vmul.f32 %v4323, %v884
    %v4326 = vadd.f32 %v4324, 1e-05
    %v4327 = vadd.f32 %v4325, 1e-05
    %v4328 = vrsqrt.pop %v4326
    %v4329 = vmul.f32 %v4328, %v4326
    %v4330 = vmul.f32 %v4329, %v4328
    %v4331 = vmul.f32 0.5, %v4330
    %v4332 = vsub.f32 1.5, %v4331
    %v4333 = vmul.f32 %v4328, %v4332
    %vm4334 = vweird.f32 %v4326
    %vm4335 = vweird.f32 %v4328
    %vm4336 = vmor %vm4334, %vm4335
    %v4337 = vsel %vm4336, %v4328, %v4333
    %v4338 = vrsqrt.pop %v4327
    %v4339 = vmul.f32 %v4338, %v4327
    %v4340 = vmul.f32 %v4339, %v4338
    %v4341 = vmul.f32 0.5, %v4340
    %v4342 = vsub.f32 1.5, %v4341
    %v4343 = vmul.f32 %v4338, %v4342
    %vm4344 = vweird.f32 %v4327
    %vm4345 = vweird.f32 %v4338
    %vm4346 = vmor %vm4344, %vm4345
    %v4347 = vsel %vm4346, %v4338, %v4343
    %v4348 = vmul.f32 %v4314, %v4337
    %v4349 = vmul.f32 %v4315, %v4347
    %v4351 = vperm.slane %v4303, 0
    %v4353 = vmul.f32 %v4348, %v4351
    %v4354 = vmul.f32 %v4349, %v4351
    %v4356 = vperm.slane %v4305, 0
    %v4358 = vadd.f32 %v4353, %v4356
    %v4359 = vadd.f32 %v4354, %v4356
    %v4360 = vld [vmem:[%s5] sm:$0x3]
    %v4361 = vld [vmem:[%s71] sm:$0xff]
    %v4362 = vld [vmem:[%s71 + $0x8] sm:$0xff]
    %v4363 = vld [vmem:[%s71 + $0x10] sm:$0xff]
    %v4364 = vld [vmem:[%s71 + $0x18] sm:$0xff]
    %v4365 = vld [vmem:[%s71 + $0x20] sm:$0xff]
    %v4366 = vld [vmem:[%s71 + $0x28] sm:$0xff]
    %v4367 = vld [vmem:[%s71 + $0x30] sm:$0xff]
    %v4368 = vld [vmem:[%s71 + $0x38] sm:$0xff]
    %v4369 = vld [vmem:[%s71 + $0x40] sm:$0xff]
    %v4370 = vld [vmem:[%s71 + $0x48] sm:$0xff]
    %v4371 = vld [vmem:[%s71 + $0x50] sm:$0xff]
    %v4372 = vld [vmem:[%s71 + $0x58] sm:$0xff]
    %v4373 = vld [vmem:[%s71 + $0x60] sm:$0xff]
    %v4374 = vld [vmem:[%s71 + $0x68] sm:$0xff]
    %v4375 = vld [vmem:[%s71 + $0x70] sm:$0xff]
    %v4376 = vld [vmem:[%s71 + $0x78] sm:$0xff]
    %v4377 = vld [vmem:[#allocation29] sm:$0xff]
    %v4378 = vperm.slane %v4360, 0
    %v4379 = vlaneseq
    %v4380 = vshrl.u32 %v4379, 7
    %4382 = vset.pattern.permute.xlu0 %v4380
    %4383 = vperm.xlu0 %4382, %v4378
    %v4384 = vpop.permute.xlu0 %4383
    %v4385 = vperm.slane %v4360, 1
    %v4386 = vlaneseq
    %v4387 = vshrl.u32 %v4386, 7
    %4389 = vset.pattern.permute.xlu0 %v4387
    %4390 = vperm.xlu0 %4389, %v4385
    %v4391 = vpop.permute.xlu0 %4390
    %vm4392 = vcmp.eq.s32.totalorder %v797, %v4384
    %vm4393 = vcmp.eq.s32.totalorder %v797, %v4391
    %v4394 = vsel %vm4392, 1, 0
    %v4395 = vsel %vm4393, 1, 0
    %v4396 = vcvt.s32.f32 %v4394
    %v4397 = vcvt.s32.f32 %v4395
    %4398 = vmatpush.msra.mxu0 %v4376
    %4399 = vmatpush.msra.mxu0 %v4375
    %4400 = vmatpush.msra.mxu0 %v4374
    %4401 = vmatpush.msra.mxu0 %v4373
    %4402 = vmatpush.msra.mxu0 %v4372
    %4403 = vmatpush.msra.mxu0 %v4371
    %4404 = vmatpush.msra.mxu0 %v4370
    %4405 = vmatpush.msra.mxu0 %v4369
    %4406 = vmatpush.msra.mxu0 %v4368
    %4407 = vmatpush.msra.mxu0 %v4367
    %4408 = vmatpush.msra.mxu0 %v4366
    %4409 = vmatpush.msra.mxu0 %v4365
    %4410 = vmatpush.msra.mxu0 %v4364
    %4411 = vmatpush.msra.mxu0 %v4363
    %4412 = vmatpush.msra.mxu0 %v4362
    %4413 = vmatpush.msra.mxu0 %v4361
    %4414 = vmatmul.f32.gmra.mxu0 %v4396
    %v4415 = vpop.f32.mrf.mxu0
    %v4416 = vadd.f32 %v4377, %v4415
    %4417 = vmatmul.f32.gmra.mxu0 %v4397
    %v4418 = vpop.f32.mrf.mxu0
    %v4419 = vadd.f32 %v4377, %v4418
    %4420 = vdwg.mxu0
    %v4421 = vld [vmem:[#allocation31] sm:$0x1]
    %v4422 = vld [vmem:[#allocation32] sm:$0x1]
    %v4423 = vsel %vm871, %v4416, 0.0
    %4424 = vadd.xlane.f32.xlu0 %v4423
    %v4425 = vpop.xlane.xlu0 %4424
    %v4426 = vsel %vm871, %v4419, 0.0
    %4427 = vadd.xlane.f32.xlu0 %v4426
    %v4428 = vpop.xlane.xlu0 %4427
    %v4429 = vmul.f32 %v4425, %v884
    %v4430 = vmul.f32 %v4428, %v884
    %v4431 = vsub.f32 %v4416, %v4429
    %v4432 = vsub.f32 %v4419, %v4430
    %v4433 = vmul.f32 %v4431, %v4431
    %v4434 = vmul.f32 %v4432, %v4432
    %v4435 = vsel %vm871, %v4433, 0.0
    %4436 = vadd.xlane.f32.xlu0 %v4435
    %v4437 = vpop.xlane.xlu0 %4436
    %v4438 = vsel %vm871, %v4434, 0.0
    %4439 = vadd.xlane.f32.xlu0 %v4438
    %v4440 = vpop.xlane.xlu0 %4439
    %v4441 = vmul.f32 %v4437, %v884
    %v4442 = vmul.f32 %v4440, %v884
    %v4443 = vadd.f32 %v4441, 1e-05
    %v4444 = vadd.f32 %v4442, 1e-05
    %v4445 = vrsqrt.pop %v4443
    %v4446 = vmul.f32 %v4445, %v4443
    %v4447 = vmul.f32 %v4446, %v4445
    %v4448 = vmul.f32 0.5, %v4447
    %v4449 = vsub.f32 1.5, %v4448
    %v4450 = vmul.f32 %v4445, %v4449
    %vm4451 = vweird.f32 %v4443
    %vm4452 = vweird.f32 %v4445
    %vm4453 = vmor %vm4451, %vm4452
    %v4454 = vsel %vm4453, %v4445, %v4450
    %v4455 = vrsqrt.pop %v4444
    %v4456 = vmul.f32 %v4455, %v4444
    %v4457 = vmul.f32 %v4456, %v4455
    %v4458 = vmul.f32 0.5, %v4457
    %v4459 = vsub.f32 1.5, %v4458
    %v4460 = vmul.f32 %v4455, %v4459
    %vm4461 = vweird.f32 %v4444
    %vm4462 = vweird.f32 %v4455
    %vm4463 = vmor %vm4461, %vm4462
    %v4464 = vsel %vm4463, %v4455, %v4460
    %v4465 = vmul.f32 %v4431, %v4454
    %v4466 = vmul.f32 %v4432, %v4464
    %v4468 = vperm.slane %v4421, 0
    %v4470 = vmul.f32 %v4465, %v4468
    %v4471 = vmul.f32 %v4466, %v4468
    %v4473 = vperm.slane %v4422, 0
    %v4475 = vadd.f32 %v4470, %v4473
    %v4476 = vadd.f32 %v4471, %v4473
    %v4477 = vld [vmem:[%s79] sm:$0xff]
    %v4478 = vld [vmem:[%s79 + $0x8] sm:$0xff]
    %v4479 = vld [vmem:[%s79 + $0x10] sm:$0xff]
    %v4480 = vld [vmem:[%s79 + $0x18] sm:$0xff]
    %v4481 = vld [vmem:[#allocation34] sm:$0x1]
    %v4483 = vperm.slane %v4481, 0
    %v4486 = vsel %vm871, %v4475, 0
    %v4489 = vsel %vm871, %v4476, 0
    %4491 = vmatpush.msra.mxu0 0.0
    %4492 = vmatpush.msra.mxu0 0.0
    %4493 = vmatpush.msra.mxu0 0.0
    %4494 = vmatpush.msra.mxu0 0.0
    %4495 = vmatpush.msra.mxu0 0.0
    %4496 = vmatpush.msra.mxu0 0.0
    %4497 = vmatpush.msra.mxu0 0.0
    %4498 = vmatpush.msra.mxu0 0.0
    %4499 = vmatpush.msra.mxu0 0.0
    %4500 = vmatpush.msra.mxu0 0.0
    %4501 = vmatpush.msra.mxu0 0.0
    %4502 = vmatpush.msra.mxu0 0.0
    %4503 = vmatpush.msra.mxu0 %v4480
    %4504 = vmatpush.msra.mxu0 %v4479
    %4505 = vmatpush.msra.mxu0 %v4478
    %4506 = vmatpush.msra.mxu0 %v4477
    %4507 = vmatmul.f32.gmra.mxu0 %v4486
    %v4508 = vpop.f32.mrf.mxu0
    %v4509 = vadd.f32 %v4483, %v4508
    %4510 = vmatmul.f32.gmra.mxu0 %v4489
    %v4511 = vpop.f32.mrf.mxu0
    %v4512 = vadd.f32 %v4483, %v4511
    %4513 = vdwg.mxu0
    %4515 = vrot.lane.b32.xlu0 %v4509, 96
    %v4516 = vpop.permute.xlu0 %4515
    %v4517 = vsel %vm977, %v4509, 0
    %v4519 = vsel %vm977, %v4516, 0
    %4521 = vmatpush.xpose.msra.mxu0 0.0
    %4522 = vmatpush.xpose.msra.mxu0 0.0
    %4523 = vmatpush.xpose.msra.mxu0 0.0
    %4524 = vmatpush.xpose.msra.mxu0 0.0
    %4525 = vmatpush.xpose.msra.mxu0 0.0
    %4526 = vmatpush.xpose.msra.mxu0 0.0
    %4527 = vmatpush.xpose.msra.mxu0 0.0
    %4528 = vmatpush.xpose.msra.mxu0 0.0
    %4529 = vmatpush.xpose.msra.mxu0 0.0
    %4530 = vmatpush.xpose.msra.mxu0 0.0
    %4531 = vmatpush.xpose.msra.mxu0 0.0
    %4532 = vmatpush.xpose.msra.mxu0 0.0
    %4533 = vmatpush.xpose.msra.mxu0 0.0
    %4534 = vmatpush.xpose.msra.mxu0 0.0
    %4535 = vmatpush.xpose.msra.mxu0 0.0
    %4536 = vmatpush.xpose.msra.mxu0 %v4519
    %4537 = vmatmul.f32.gmra.mxu0 %v4517
    %v4538 = vpop.f32.mrf.mxu0
    %v4539 = vadd.f32 %v806, %v4538
    %4540 = vdwg.mxu0
    %4542 = vrot.lane.b32.xlu0 %v4512, 96
    %v4543 = vpop.permute.xlu0 %4542
    %v4544 = vsel %vm977, %v4512, 0
    %v4546 = vsel %vm977, %v4543, 0
    %4548 = vmatpush.xpose.msra.mxu0 0.0
    %4549 = vmatpush.xpose.msra.mxu0 0.0
    %4550 = vmatpush.xpose.msra.mxu0 0.0
    %4551 = vmatpush.xpose.msra.mxu0 0.0
    %4552 = vmatpush.xpose.msra.mxu0 0.0
    %4553 = vmatpush.xpose.msra.mxu0 0.0
    %4554 = vmatpush.xpose.msra.mxu0 0.0
    %4555 = vmatpush.xpose.msra.mxu0 0.0
    %4556 = vmatpush.xpose.msra.mxu0 0.0
    %4557 = vmatpush.xpose.msra.mxu0 0.0
    %4558 = vmatpush.xpose.msra.mxu0 0.0
    %4559 = vmatpush.xpose.msra.mxu0 0.0
    %4560 = vmatpush.xpose.msra.mxu0 0.0
    %4561 = vmatpush.xpose.msra.mxu0 0.0
    %4562 = vmatpush.xpose.msra.mxu0 0.0
    %4563 = vmatpush.xpose.msra.mxu0 %v4546
    %4564 = vmatmul.f32.gmra.mxu0 %v4544
    %v4565 = vpop.f32.mrf.mxu0
    %v4566 = vadd.f32 %v807, %v4565
    %4567 = vdwg.mxu0
    %v4568 = vsel %vm977, %v4539, -inf
    %4569 = vmax.xlane.f32.xlu0 %v4568
    %v4570 = vpop.xlane.xlu0 %4569
    %v4571 = vsel %vm977, %v4566, -inf
    %4572 = vmax.xlane.f32.xlu0 %v4571
    %v4573 = vpop.xlane.xlu0 %4572
    %v4574 = vsub.f32 %v4539, %v4570
    %v4575 = vsub.f32 %v4566, %v4573
    %v4576 = vmul.f32 %v4574, 1.442695
    %v4577 = vpow.pop %v4576
    %v4578 = vmul.f32 %v4575, 1.442695
    %v4579 = vpow.pop %v4578
    %v4580 = vsel %vm977, %v4577, 0.0
    %4581 = vadd.xlane.f32.xlu0 %v4580
    %v4582 = vpop.xlane.xlu0 %4581
    %v4583 = vsel %vm977, %v4579, 0.0
    %4584 = vadd.xlane.f32.xlu0 %v4583
    %v4585 = vpop.xlane.xlu0 %4584
    %v4586 = vrcp.pop %v4582
    %v4587 = vrcp.pop %v4585
    %v4588 = vmul.f32 %v4577, %v4586
    %v4589 = vmul.f32 %v4579, %v4587
    %4590 = vrot.lane.b32.xlu0 %v4509, 64
    %v4591 = vpop.permute.xlu0 %4590
    %v4594 = vsel %vm977, %v4588, 0
    %4596 = vmatpush.msra.mxu0 0.0
    %4597 = vmatpush.msra.mxu0 0.0
    %4598 = vmatpush.msra.mxu0 0.0
    %4599 = vmatpush.msra.mxu0 0.0
    %4600 = vmatpush.msra.mxu0 0.0
    %4601 = vmatpush.msra.mxu0 0.0
    %4602 = vmatpush.msra.mxu0 0.0
    %4603 = vmatpush.msra.mxu0 0.0
    %4604 = vmatpush.msra.mxu0 0.0
    %4605 = vmatpush.msra.mxu0 0.0
    %4606 = vmatpush.msra.mxu0 0.0
    %4607 = vmatpush.msra.mxu0 0.0
    %4608 = vmatpush.msra.mxu0 0.0
    %4609 = vmatpush.msra.mxu0 0.0
    %4610 = vmatpush.msra.mxu0 0.0
    %4611 = vmatpush.msra.mxu0 %v4591
    %4612 = vmatmul.f32.gmra.mxu0 %v4594
    %v4613 = vpop.f32.mrf.mxu0
    %v4614 = vadd.f32 0.0, %v4613
    %4615 = vdwg.mxu0
    %4616 = vrot.lane.b32.xlu0 %v4512, 64
    %v4617 = vpop.permute.xlu0 %4616
    %v4620 = vsel %vm977, %v4589, 0
    %4622 = vmatpush.msra.mxu0 0.0
    %4623 = vmatpush.msra.mxu0 0.0
    %4624 = vmatpush.msra.mxu0 0.0
    %4625 = vmatpush.msra.mxu0 0.0
    %4626 = vmatpush.msra.mxu0 0.0
    %4627 = vmatpush.msra.mxu0 0.0
    %4628 = vmatpush.msra.mxu0 0.0
    %4629 = vmatpush.msra.mxu0 0.0
    %4630 = vmatpush.msra.mxu0 0.0
    %4631 = vmatpush.msra.mxu0 0.0
    %4632 = vmatpush.msra.mxu0 0.0
    %4633 = vmatpush.msra.mxu0 0.0
    %4634 = vmatpush.msra.mxu0 0.0
    %4635 = vmatpush.msra.mxu0 0.0
    %4636 = vmatpush.msra.mxu0 0.0
    %4637 = vmatpush.msra.mxu0 %v4617
    %4638 = vmatmul.f32.gmra.mxu0 %v4620
    %v4639 = vpop.f32.mrf.mxu0
    %v4640 = vadd.f32 0.0, %v4639
    %4641 = vdwg.mxu0
    %4642 = vrot.lane.b32.xlu0 %v4509, 120
    %v4643 = vpop.permute.xlu0 %4642
    %4644 = vrot.lane.b32.xlu0 %v4509, 88
    %v4645 = vpop.permute.xlu0 %4644
    %v4646 = vsel %vm977, %v4643, 0
    %v4648 = vsel %vm977, %v4645, 0
    %4650 = vmatpush.xpose.msra.mxu0 0.0
    %4651 = vmatpush.xpose.msra.mxu0 0.0
    %4652 = vmatpush.xpose.msra.mxu0 0.0
    %4653 = vmatpush.xpose.msra.mxu0 0.0
    %4654 = vmatpush.xpose.msra.mxu0 0.0
    %4655 = vmatpush.xpose.msra.mxu0 0.0
    %4656 = vmatpush.xpose.msra.mxu0 0.0
    %4657 = vmatpush.xpose.msra.mxu0 0.0
    %4658 = vmatpush.xpose.msra.mxu0 0.0
    %4659 = vmatpush.xpose.msra.mxu0 0.0
    %4660 = vmatpush.xpose.msra.mxu0 0.0
    %4661 = vmatpush.xpose.msra.mxu0 0.0
    %4662 = vmatpush.xpose.msra.mxu0 0.0
    %4663 = vmatpush.xpose.msra.mxu0 0.0
    %4664 = vmatpush.xpose.msra.mxu0 0.0
    %4665 = vmatpush.xpose.msra.mxu0 %v4648
    %4666 = vmatmul.f32.gmra.mxu0 %v4646
    %v4667 = vpop.f32.mrf.mxu0
    %v4668 = vadd.f32 %v806, %v4667
    %4669 = vdwg.mxu0
    %4670 = vrot.lane.b32.xlu0 %v4512, 120
    %v4671 = vpop.permute.xlu0 %4670
    %4672 = vrot.lane.b32.xlu0 %v4512, 88
    %v4673 = vpop.permute.xlu0 %4672
    %v4674 = vsel %vm977, %v4671, 0
    %v4676 = vsel %vm977, %v4673, 0
    %4678 = vmatpush.xpose.msra.mxu0 0.0
    %4679 = vmatpush.xpose.msra.mxu0 0.0
    %4680 = vmatpush.xpose.msra.mxu0 0.0
    %4681 = vmatpush.xpose.msra.mxu0 0.0
    %4682 = vmatpush.xpose.msra.mxu0 0.0
    %4683 = vmatpush.xpose.msra.mxu0 0.0
    %4684 = vmatpush.xpose.msra.mxu0 0.0
    %4685 = vmatpush.xpose.msra.mxu0 0.0
    %4686 = vmatpush.xpose.msra.mxu0 0.0
    %4687 = vmatpush.xpose.msra.mxu0 0.0
    %4688 = vmatpush.xpose.msra.mxu0 0.0
    %4689 = vmatpush.xpose.msra.mxu0 0.0
    %4690 = vmatpush.xpose.msra.mxu0 0.0
    %4691 = vmatpush.xpose.msra.mxu0 0.0
    %4692 = vmatpush.xpose.msra.mxu0 0.0
    %4693 = vmatpush.xpose.msra.mxu0 %v4676
    %4694 = vmatmul.f32.gmra.mxu0 %v4674
    %v4695 = vpop.f32.mrf.mxu0
    %v4696 = vadd.f32 %v807, %v4695
    %4697 = vdwg.mxu0
    %v4698 = vsel %vm977, %v4668, -inf
    %4699 = vmax.xlane.f32.xlu0 %v4698
    %v4700 = vpop.xlane.xlu0 %4699
    %v4701 = vsel %vm977, %v4696, -inf
    %4702 = vmax.xlane.f32.xlu0 %v4701
    %v4703 = vpop.xlane.xlu0 %4702
    %v4704 = vsub.f32 %v4668, %v4700
    %v4705 = vsub.f32 %v4696, %v4703
    %v4706 = vmul.f32 %v4704, 1.442695
    %v4707 = vpow.pop %v4706
    %v4708 = vmul.f32 %v4705, 1.442695
    %v4709 = vpow.pop %v4708
    %v4710 = vsel %vm977, %v4707, 0.0
    %4711 = vadd.xlane.f32.xlu0 %v4710
    %v4712 = vpop.xlane.xlu0 %4711
    %v4713 = vsel %vm977, %v4709, 0.0
    %4714 = vadd.xlane.f32.xlu0 %v4713
    %v4715 = vpop.xlane.xlu0 %4714
    %v4716 = vrcp.pop %v4712
    %v4717 = vrcp.pop %v4715
    %v4718 = vmul.f32 %v4707, %v4716
    %v4719 = vmul.f32 %v4709, %v4717
    %4720 = vrot.lane.b32.xlu0 %v4509, 56
    %v4721 = vpop.permute.xlu0 %4720
    %v4724 = vsel %vm977, %v4718, 0
    %4726 = vmatpush.msra.mxu0 0.0
    %4727 = vmatpush.msra.mxu0 0.0
    %4728 = vmatpush.msra.mxu0 0.0
    %4729 = vmatpush.msra.mxu0 0.0
    %4730 = vmatpush.msra.mxu0 0.0
    %4731 = vmatpush.msra.mxu0 0.0
    %4732 = vmatpush.msra.mxu0 0.0
    %4733 = vmatpush.msra.mxu0 0.0
    %4734 = vmatpush.msra.mxu0 0.0
    %4735 = vmatpush.msra.mxu0 0.0
    %4736 = vmatpush.msra.mxu0 0.0
    %4737 = vmatpush.msra.mxu0 0.0
    %4738 = vmatpush.msra.mxu0 0.0
    %4739 = vmatpush.msra.mxu0 0.0
    %4740 = vmatpush.msra.mxu0 0.0
    %4741 = vmatpush.msra.mxu0 %v4721
    %4742 = vmatmul.f32.gmra.mxu0 %v4724
    %v4743 = vpop.f32.mrf.mxu0
    %v4744 = vadd.f32 0.0, %v4743
    %4745 = vdwg.mxu0
    %4746 = vrot.lane.b32.xlu0 %v4512, 56
    %v4747 = vpop.permute.xlu0 %4746
    %v4750 = vsel %vm977, %v4719, 0
    %4752 = vmatpush.msra.mxu0 0.0
    %4753 = vmatpush.msra.mxu0 0.0
    %4754 = vmatpush.msra.mxu0 0.0
    %4755 = vmatpush.msra.mxu0 0.0
    %4756 = vmatpush.msra.mxu0 0.0
    %4757 = vmatpush.msra.mxu0 0.0
    %4758 = vmatpush.msra.mxu0 0.0
    %4759 = vmatpush.msra.mxu0 0.0
    %4760 = vmatpush.msra.mxu0 0.0
    %4761 = vmatpush.msra.mxu0 0.0
    %4762 = vmatpush.msra.mxu0 0.0
    %4763 = vmatpush.msra.mxu0 0.0
    %4764 = vmatpush.msra.mxu0 0.0
    %4765 = vmatpush.msra.mxu0 0.0
    %4766 = vmatpush.msra.mxu0 0.0
    %4767 = vmatpush.msra.mxu0 %v4747
    %4768 = vmatmul.f32.gmra.mxu0 %v4750
    %v4769 = vpop.f32.mrf.mxu0
    %v4770 = vadd.f32 0.0, %v4769
    %4771 = vdwg.mxu0
    %4772 = vrot.lane.b32.xlu0 %v4509, 112
    %v4773 = vpop.permute.xlu0 %4772
    %4774 = vrot.lane.b32.xlu0 %v4509, 80
    %v4775 = vpop.permute.xlu0 %4774
    %v4776 = vsel %vm977, %v4773, 0
    %v4778 = vsel %vm977, %v4775, 0
    %4780 = vmatpush.xpose.msra.mxu0 0.0
    %4781 = vmatpush.xpose.msra.mxu0 0.0
    %4782 = vmatpush.xpose.msra.mxu0 0.0
    %4783 = vmatpush.xpose.msra.mxu0 0.0
    %4784 = vmatpush.xpose.msra.mxu0 0.0
    %4785 = vmatpush.xpose.msra.mxu0 0.0
    %4786 = vmatpush.xpose.msra.mxu0 0.0
    %4787 = vmatpush.xpose.msra.mxu0 0.0
    %4788 = vmatpush.xpose.msra.mxu0 0.0
    %4789 = vmatpush.xpose.msra.mxu0 0.0
    %4790 = vmatpush.xpose.msra.mxu0 0.0
    %4791 = vmatpush.xpose.msra.mxu0 0.0
    %4792 = vmatpush.xpose.msra.mxu0 0.0
    %4793 = vmatpush.xpose.msra.mxu0 0.0
    %4794 = vmatpush.xpose.msra.mxu0 0.0
    %4795 = vmatpush.xpose.msra.mxu0 %v4778
    %4796 = vmatmul.f32.gmra.mxu0 %v4776
    %v4797 = vpop.f32.mrf.mxu0
    %v4798 = vadd.f32 %v806, %v4797
    %4799 = vdwg.mxu0
    %4800 = vrot.lane.b32.xlu0 %v4512, 112
    %v4801 = vpop.permute.xlu0 %4800
    %4802 = vrot.lane.b32.xlu0 %v4512, 80
    %v4803 = vpop.permute.xlu0 %4802
    %v4804 = vsel %vm977, %v4801, 0
    %v4806 = vsel %vm977, %v4803, 0
    %4808 = vmatpush.xpose.msra.mxu0 0.0
    %4809 = vmatpush.xpose.msra.mxu0 0.0
    %4810 = vmatpush.xpose.msra.mxu0 0.0
    %4811 = vmatpush.xpose.msra.mxu0 0.0
    %4812 = vmatpush.xpose.msra.mxu0 0.0
    %4813 = vmatpush.xpose.msra.mxu0 0.0
    %4814 = vmatpush.xpose.msra.mxu0 0.0
    %4815 = vmatpush.xpose.msra.mxu0 0.0
    %4816 = vmatpush.xpose.msra.mxu0 0.0
    %4817 = vmatpush.xpose.msra.mxu0 0.0
    %4818 = vmatpush.xpose.msra.mxu0 0.0
    %4819 = vmatpush.xpose.msra.mxu0 0.0
    %4820 = vmatpush.xpose.msra.mxu0 0.0
    %4821 = vmatpush.xpose.msra.mxu0 0.0
    %4822 = vmatpush.xpose.msra.mxu0 0.0
    %4823 = vmatpush.xpose.msra.mxu0 %v4806
    %4824 = vmatmul.f32.gmra.mxu0 %v4804
    %v4825 = vpop.f32.mrf.mxu0
    %v4826 = vadd.f32 %v807, %v4825
    %4827 = vdwg.mxu0
    %v4828 = vsel %vm977, %v4798, -inf
    %4829 = vmax.xlane.f32.xlu0 %v4828
    %v4830 = vpop.xlane.xlu0 %4829
    %v4831 = vsel %vm977, %v4826, -inf
    %4832 = vmax.xlane.f32.xlu0 %v4831
    %v4833 = vpop.xlane.xlu0 %4832
    %v4834 = vsub.f32 %v4798, %v4830
    %v4835 = vsub.f32 %v4826, %v4833
    %v4836 = vmul.f32 %v4834, 1.442695
    %v4837 = vpow.pop %v4836
    %v4838 = vmul.f32 %v4835, 1.442695
    %v4839 = vpow.pop %v4838
    %v4840 = vsel %vm977, %v4837, 0.0
    %4841 = vadd.xlane.f32.xlu0 %v4840
    %v4842 = vpop.xlane.xlu0 %4841
    %v4843 = vsel %vm977, %v4839, 0.0
    %4844 = vadd.xlane.f32.xlu0 %v4843
    %v4845 = vpop.xlane.xlu0 %4844
    %v4846 = vrcp.pop %v4842
    %v4847 = vrcp.pop %v4845
    %v4848 = vmul.f32 %v4837, %v4846
    %v4849 = vmul.f32 %v4839, %v4847
    %4850 = vrot.lane.b32.xlu0 %v4509, 48
    %v4851 = vpop.permute.xlu0 %4850
    %v4854 = vsel %vm977, %v4848, 0
    %4856 = vmatpush.msra.mxu0 0.0
    %4857 = vmatpush.msra.mxu0 0.0
    %4858 = vmatpush.msra.mxu0 0.0
    %4859 = vmatpush.msra.mxu0 0.0
    %4860 = vmatpush.msra.mxu0 0.0
    %4861 = vmatpush.msra.mxu0 0.0
    %4862 = vmatpush.msra.mxu0 0.0
    %4863 = vmatpush.msra.mxu0 0.0
    %4864 = vmatpush.msra.mxu0 0.0
    %4865 = vmatpush.msra.mxu0 0.0
    %4866 = vmatpush.msra.mxu0 0.0
    %4867 = vmatpush.msra.mxu0 0.0
    %4868 = vmatpush.msra.mxu0 0.0
    %4869 = vmatpush.msra.mxu0 0.0
    %4870 = vmatpush.msra.mxu0 0.0
    %4871 = vmatpush.msra.mxu0 %v4851
    %4872 = vmatmul.f32.gmra.mxu0 %v4854
    %v4873 = vpop.f32.mrf.mxu0
    %v4874 = vadd.f32 0.0, %v4873
    %4875 = vdwg.mxu0
    %4876 = vrot.lane.b32.xlu0 %v4512, 48
    %v4877 = vpop.permute.xlu0 %4876
    %v4880 = vsel %vm977, %v4849, 0
    %4882 = vmatpush.msra.mxu0 0.0
    %4883 = vmatpush.msra.mxu0 0.0
    %4884 = vmatpush.msra.mxu0 0.0
    %4885 = vmatpush.msra.mxu0 0.0
    %4886 = vmatpush.msra.mxu0 0.0
    %4887 = vmatpush.msra.mxu0 0.0
    %4888 = vmatpush.msra.mxu0 0.0
    %4889 = vmatpush.msra.mxu0 0.0
    %4890 = vmatpush.msra.mxu0 0.0
    %4891 = vmatpush.msra.mxu0 0.0
    %4892 = vmatpush.msra.mxu0 0.0
    %4893 = vmatpush.msra.mxu0 0.0
    %4894 = vmatpush.msra.mxu0 0.0
    %4895 = vmatpush.msra.mxu0 0.0
    %4896 = vmatpush.msra.mxu0 0.0
    %4897 = vmatpush.msra.mxu0 %v4877
    %4898 = vmatmul.f32.gmra.mxu0 %v4880
    %v4899 = vpop.f32.mrf.mxu0
    %v4900 = vadd.f32 0.0, %v4899
    %4901 = vdwg.mxu0
    %4902 = vrot.lane.b32.xlu0 %v4509, 104
    %v4903 = vpop.permute.xlu0 %4902
    %4904 = vrot.lane.b32.xlu0 %v4509, 72
    %v4905 = vpop.permute.xlu0 %4904
    %v4906 = vsel %vm977, %v4903, 0
    %v4908 = vsel %vm977, %v4905, 0
    %4910 = vmatpush.xpose.msra.mxu0 0.0
    %4911 = vmatpush.xpose.msra.mxu0 0.0
    %4912 = vmatpush.xpose.msra.mxu0 0.0
    %4913 = vmatpush.xpose.msra.mxu0 0.0
    %4914 = vmatpush.xpose.msra.mxu0 0.0
    %4915 = vmatpush.xpose.msra.mxu0 0.0
    %4916 = vmatpush.xpose.msra.mxu0 0.0
    %4917 = vmatpush.xpose.msra.mxu0 0.0
    %4918 = vmatpush.xpose.msra.mxu0 0.0
    %4919 = vmatpush.xpose.msra.mxu0 0.0
    %4920 = vmatpush.xpose.msra.mxu0 0.0
    %4921 = vmatpush.xpose.msra.mxu0 0.0
    %4922 = vmatpush.xpose.msra.mxu0 0.0
    %4923 = vmatpush.xpose.msra.mxu0 0.0
    %4924 = vmatpush.xpose.msra.mxu0 0.0
    %4925 = vmatpush.xpose.msra.mxu0 %v4908
    %4926 = vmatmul.f32.gmra.mxu0 %v4906
    %v4927 = vpop.f32.mrf.mxu0
    %v4928 = vadd.f32 %v806, %v4927
    %4929 = vdwg.mxu0
    %4930 = vrot.lane.b32.xlu0 %v4512, 104
    %v4931 = vpop.permute.xlu0 %4930
    %4932 = vrot.lane.b32.xlu0 %v4512, 72
    %v4933 = vpop.permute.xlu0 %4932
    %v4934 = vsel %vm977, %v4931, 0
    %v4936 = vsel %vm977, %v4933, 0
    %4938 = vmatpush.xpose.msra.mxu0 0.0
    %4939 = vmatpush.xpose.msra.mxu0 0.0
    %4940 = vmatpush.xpose.msra.mxu0 0.0
    %4941 = vmatpush.xpose.msra.mxu0 0.0
    %4942 = vmatpush.xpose.msra.mxu0 0.0
    %4943 = vmatpush.xpose.msra.mxu0 0.0
    %4944 = vmatpush.xpose.msra.mxu0 0.0
    %4945 = vmatpush.xpose.msra.mxu0 0.0
    %4946 = vmatpush.xpose.msra.mxu0 0.0
    %4947 = vmatpush.xpose.msra.mxu0 0.0
    %4948 = vmatpush.xpose.msra.mxu0 0.0
    %4949 = vmatpush.xpose.msra.mxu0 0.0
    %4950 = vmatpush.xpose.msra.mxu0 0.0
    %4951 = vmatpush.xpose.msra.mxu0 0.0
    %4952 = vmatpush.xpose.msra.mxu0 0.0
    %4953 = vmatpush.xpose.msra.mxu0 %v4936
    %4954 = vmatmul.f32.gmra.mxu0 %v4934
    %v4955 = vpop.f32.mrf.mxu0
    %v4956 = vadd.f32 %v807, %v4955
    %4957 = vdwg.mxu0
    %v4958 = vsel %vm977, %v4928, -inf
    %4959 = vmax.xlane.f32.xlu0 %v4958
    %v4960 = vpop.xlane.xlu0 %4959
    %v4961 = vsel %vm977, %v4956, -inf
    %4962 = vmax.xlane.f32.xlu0 %v4961
    %v4963 = vpop.xlane.xlu0 %4962
    %v4964 = vsub.f32 %v4928, %v4960
    %v4965 = vsub.f32 %v4956, %v4963
    %v4966 = vmul.f32 %v4964, 1.442695
    %v4967 = vpow.pop %v4966
    %v4968 = vmul.f32 %v4965, 1.442695
    %v4969 = vpow.pop %v4968
    %v4970 = vsel %vm977, %v4967, 0.0
    %4971 = vadd.xlane.f32.xlu0 %v4970
    %v4972 = vpop.xlane.xlu0 %4971
    %v4973 = vsel %vm977, %v4969, 0.0
    %4974 = vadd.xlane.f32.xlu0 %v4973
    %v4975 = vpop.xlane.xlu0 %4974
    %v4976 = vrcp.pop %v4972
    %v4977 = vrcp.pop %v4975
    %v4978 = vmul.f32 %v4967, %v4976
    %v4979 = vmul.f32 %v4969, %v4977
    %4980 = vrot.lane.b32.xlu0 %v4509, 40
    %v4981 = vpop.permute.xlu0 %4980
    %v4984 = vsel %vm977, %v4978, 0
    %4986 = vmatpush.msra.mxu0 0.0
    %4987 = vmatpush.msra.mxu0 0.0
    %4988 = vmatpush.msra.mxu0 0.0
    %4989 = vmatpush.msra.mxu0 0.0
    %4990 = vmatpush.msra.mxu0 0.0
    %4991 = vmatpush.msra.mxu0 0.0
    %4992 = vmatpush.msra.mxu0 0.0
    %4993 = vmatpush.msra.mxu0 0.0
    %4994 = vmatpush.msra.mxu0 0.0
    %4995 = vmatpush.msra.mxu0 0.0
    %4996 = vmatpush.msra.mxu0 0.0
    %4997 = vmatpush.msra.mxu0 0.0
    %4998 = vmatpush.msra.mxu0 0.0
    %4999 = vmatpush.msra.mxu0 0.0
    %5000 = vmatpush.msra.mxu0 0.0
    %5001 = vmatpush.msra.mxu0 %v4981
    %5002 = vmatmul.f32.gmra.mxu0 %v4984
    %v5003 = vpop.f32.mrf.mxu0
    %v5004 = vadd.f32 0.0, %v5003
    %5005 = vdwg.mxu0
    %5006 = vrot.lane.b32.xlu0 %v4512, 40
    %v5007 = vpop.permute.xlu0 %5006
    %v5010 = vsel %vm977, %v4979, 0
    %5012 = vmatpush.msra.mxu0 0.0
    %5013 = vmatpush.msra.mxu0 0.0
    %5014 = vmatpush.msra.mxu0 0.0
    %5015 = vmatpush.msra.mxu0 0.0
    %5016 = vmatpush.msra.mxu0 0.0
    %5017 = vmatpush.msra.mxu0 0.0
    %5018 = vmatpush.msra.mxu0 0.0
    %5019 = vmatpush.msra.mxu0 0.0
    %5020 = vmatpush.msra.mxu0 0.0
    %5021 = vmatpush.msra.mxu0 0.0
    %5022 = vmatpush.msra.mxu0 0.0
    %5023 = vmatpush.msra.mxu0 0.0
    %5024 = vmatpush.msra.mxu0 0.0
    %5025 = vmatpush.msra.mxu0 0.0
    %5026 = vmatpush.msra.mxu0 0.0
    %5027 = vmatpush.msra.mxu0 %v5007
    %5028 = vmatmul.f32.gmra.mxu0 %v5010
    %v5029 = vpop.f32.mrf.mxu0
    %v5030 = vadd.f32 0.0, %v5029
    %5031 = vdwg.mxu0
    %5034 = vrot.lane.b32.xlu0 %v4744, 8
    %v5035 = vpop.permute.xlu0 %5034
    %5036 = vrot.lane.b32.xlu0 %v4770, 8
    %v5037 = vpop.permute.xlu0 %5036
    %5042 = vrot.lane.b32.xlu0 %v4874, 16
    %v5043 = vpop.permute.xlu0 %5042
    %5044 = vrot.lane.b32.xlu0 %v4900, 16
    %v5045 = vpop.permute.xlu0 %5044
    %5050 = vrot.lane.b32.xlu0 %v5004, 24
    %v5051 = vpop.permute.xlu0 %5050
    %5052 = vrot.lane.b32.xlu0 %v5030, 24
    %v5053 = vpop.permute.xlu0 %5052
    %v5056 = vsel %vm977, %v4614, %v5035
    %v5057 = vsel %vm977, %v4640, %v5037
    %v5058 = vsel %vm1519, %v5056, %v5043
    %v5059 = vsel %vm1519, %v5057, %v5045
    %v5060 = vsel %vm1522, %v5058, %v5051
    %v5061 = vsel %vm1522, %v5059, %v5053
    %v5062 = vld [vmem:[%s83] sm:$0xff]
    %v5063 = vld [vmem:[%s83 + $0x8] sm:$0xff]
    %v5064 = vld [vmem:[%s83 + $0x10] sm:$0xff]
    %v5065 = vld [vmem:[%s83 + $0x18] sm:$0xff]
    %v5066 = vld [vmem:[#allocation35] sm:$0x1]
    %v5068 = vperm.slane %v5066, 0
    %v5071 = vsel %vm871, %v5060, 0
    %v5074 = vsel %vm871, %v5061, 0
    %5076 = vmatpush.msra.mxu0 0.0
    %5077 = vmatpush.msra.mxu0 0.0
    %5078 = vmatpush.msra.mxu0 0.0
    %5079 = vmatpush.msra.mxu0 0.0
    %5080 = vmatpush.msra.mxu0 0.0
    %5081 = vmatpush.msra.mxu0 0.0
    %5082 = vmatpush.msra.mxu0 0.0
    %5083 = vmatpush.msra.mxu0 0.0
    %5084 = vmatpush.msra.mxu0 0.0
    %5085 = vmatpush.msra.mxu0 0.0
    %5086 = vmatpush.msra.mxu0 0.0
    %5087 = vmatpush.msra.mxu0 0.0
    %5088 = vmatpush.msra.mxu0 %v5065
    %5089 = vmatpush.msra.mxu0 %v5064
    %5090 = vmatpush.msra.mxu0 %v5063
    %5091 = vmatpush.msra.mxu0 %v5062
    %5092 = vmatmul.f32.gmra.mxu0 %v5071
    %v5093 = vpop.f32.mrf.mxu0
    %v5094 = vadd.f32 %v5068, %v5093
    %5095 = vmatmul.f32.gmra.mxu0 %v5074
    %v5096 = vpop.f32.mrf.mxu0
    %v5097 = vadd.f32 %v5068, %v5096
    %5098 = vdwg.mxu0
    %v5099 = vadd.f32 %v4475, %v5094
    %v5100 = vadd.f32 %v4476, %v5097
    %v5101 = vld [vmem:[#allocation37] sm:$0x1]
    %v5102 = vld [vmem:[#allocation38] sm:$0x1]
    %v5103 = vsel %vm871, %v5099, 0.0
    %5104 = vadd.xlane.f32.xlu0 %v5103
    %v5105 = vpop.xlane.xlu0 %5104
    %v5106 = vsel %vm871, %v5100, 0.0
    %5107 = vadd.xlane.f32.xlu0 %v5106
    %v5108 = vpop.xlane.xlu0 %5107
    %v5109 = vmul.f32 %v5105, %v884
    %v5110 = vmul.f32 %v5108, %v884
    %v5111 = vsub.f32 %v5099, %v5109
    %v5112 = vsub.f32 %v5100, %v5110
    %v5113 = vmul.f32 %v5111, %v5111
    %v5114 = vmul.f32 %v5112, %v5112
    %v5115 = vsel %vm871, %v5113, 0.0
    %5116 = vadd.xlane.f32.xlu0 %v5115
    %v5117 = vpop.xlane.xlu0 %5116
    %v5118 = vsel %vm871, %v5114, 0.0
    %5119 = vadd.xlane.f32.xlu0 %v5118
    %v5120 = vpop.xlane.xlu0 %5119
    %v5121 = vmul.f32 %v5117, %v884
    %v5122 = vmul.f32 %v5120, %v884
    %v5123 = vadd.f32 %v5121, 1e-05
    %v5124 = vadd.f32 %v5122, 1e-05
    %v5125 = vrsqrt.pop %v5123
    %v5126 = vmul.f32 %v5125, %v5123
    %v5127 = vmul.f32 %v5126, %v5125
    %v5128 = vmul.f32 0.5, %v5127
    %v5129 = vsub.f32 1.5, %v5128
    %v5130 = vmul.f32 %v5125, %v5129
    %vm5131 = vweird.f32 %v5123
    %vm5132 = vweird.f32 %v5125
    %vm5133 = vmor %vm5131, %vm5132
    %v5134 = vsel %vm5133, %v5125, %v5130
    %v5135 = vrsqrt.pop %v5124
    %v5136 = vmul.f32 %v5135, %v5124
    %v5137 = vmul.f32 %v5136, %v5135
    %v5138 = vmul.f32 0.5, %v5137
    %v5139 = vsub.f32 1.5, %v5138
    %v5140 = vmul.f32 %v5135, %v5139
    %vm5141 = vweird.f32 %v5124
    %vm5142 = vweird.f32 %v5135
    %vm5143 = vmor %vm5141, %vm5142
    %v5144 = vsel %vm5143, %v5135, %v5140
    %v5145 = vmul.f32 %v5111, %v5134
    %v5146 = vmul.f32 %v5112, %v5144
    %v5148 = vperm.slane %v5101, 0
    %v5150 = vmul.f32 %v5145, %v5148
    %v5151 = vmul.f32 %v5146, %v5148
    %v5153 = vperm.slane %v5102, 0
    %v5155 = vadd.f32 %v5150, %v5153
    %v5156 = vadd.f32 %v5151, %v5153
    %v5157 = vld [vmem:[%s91] sm:$0xff]
    %v5158 = vld [vmem:[%s91 + $0x8] sm:$0xff]
    %v5159 = vld [vmem:[%s91 + $0x10] sm:$0xff]
    %v5160 = vld [vmem:[%s91 + $0x18] sm:$0xff]
    %v5161 = vld [vmem:[#allocation40] sm:$0x1]
    %v5163 = vperm.slane %v5161, 0
    %v5166 = vsel %vm871, %v5155, 0
    %v5169 = vsel %vm871, %v5156, 0
    %5171 = vmatpush.msra.mxu0 0.0
    %5172 = vmatpush.msra.mxu0 0.0
    %5173 = vmatpush.msra.mxu0 0.0
    %5174 = vmatpush.msra.mxu0 0.0
    %5175 = vmatpush.msra.mxu0 0.0
    %5176 = vmatpush.msra.mxu0 0.0
    %5177 = vmatpush.msra.mxu0 0.0
    %5178 = vmatpush.msra.mxu0 0.0
    %5179 = vmatpush.msra.mxu0 0.0
    %5180 = vmatpush.msra.mxu0 0.0
    %5181 = vmatpush.msra.mxu0 0.0
    %5182 = vmatpush.msra.mxu0 0.0
    %5183 = vmatpush.msra.mxu0 %v5160
    %5184 = vmatpush.msra.mxu0 %v5159
    %5185 = vmatpush.msra.mxu0 %v5158
    %5186 = vmatpush.msra.mxu0 %v5157
    %5187 = vmatmul.f32.gmra.mxu0 %v5166
    %v5188 = vpop.f32.mrf.mxu0
    %v5189 = vadd.f32 %v5163, %v5188
    %5190 = vmatmul.f32.gmra.mxu0 %v5169
    %v5191 = vpop.f32.mrf.mxu0
    %v5192 = vadd.f32 %v5163, %v5191
    %5193 = vdwg.mxu0
    %v5194 = vld [vmem:[%s95] sm:$0xff]
    %v5195 = vld [vmem:[%s95 + $0x8] sm:$0xff]
    %v5196 = vld [vmem:[%s95 + $0x10] sm:$0xff]
    %v5197 = vld [vmem:[%s95 + $0x18] sm:$0xff]
    %v5198 = vld [vmem:[#allocation41] sm:$0x1]
    %v5200 = vperm.slane %v5198, 0
    %v5203 = vsel %vm871, %v4358, 0
    %v5206 = vsel %vm871, %v4359, 0
    %5208 = vmatpush.msra.mxu0 0.0
    %5209 = vmatpush.msra.mxu0 0.0
    %5210 = vmatpush.msra.mxu0 0.0
    %5211 = vmatpush.msra.mxu0 0.0
    %5212 = vmatpush.msra.mxu0 0.0
    %5213 = vmatpush.msra.mxu0 0.0
    %5214 = vmatpush.msra.mxu0 0.0
    %5215 = vmatpush.msra.mxu0 0.0
    %5216 = vmatpush.msra.mxu0 0.0
    %5217 = vmatpush.msra.mxu0 0.0
    %5218 = vmatpush.msra.mxu0 0.0
    %5219 = vmatpush.msra.mxu0 0.0
    %5220 = vmatpush.msra.mxu0 %v5197
    %5221 = vmatpush.msra.mxu0 %v5196
    %5222 = vmatpush.msra.mxu0 %v5195
    %5223 = vmatpush.msra.mxu0 %v5194
    %5224 = vmatmul.f32.gmra.mxu0 %v5203
    %v5225 = vpop.f32.mrf.mxu0
    %v5226 = vadd.f32 %v5200, %v5225
    %5227 = vmatmul.f32.gmra.mxu0 %v5206
    %v5228 = vpop.f32.mrf.mxu0
    %v5229 = vadd.f32 %v5200, %v5228
    %5230 = vdwg.mxu0
    %v5232 = vsel %vm977, %v5189, 0
    %v5235 = vsel %vm977, %v5226, 0
    %5237 = vmatpush.xpose.msra.mxu0 0.0
    %5238 = vmatpush.xpose.msra.mxu0 0.0
    %5239 = vmatpush.xpose.msra.mxu0 0.0
    %5240 = vmatpush.xpose.msra.mxu0 0.0
    %5241 = vmatpush.xpose.msra.mxu0 0.0
    %5242 = vmatpush.xpose.msra.mxu0 0.0
    %5243 = vmatpush.xpose.msra.mxu0 0.0
    %5244 = vmatpush.xpose.msra.mxu0 0.0
    %5245 = vmatpush.xpose.msra.mxu0 0.0
    %5246 = vmatpush.xpose.msra.mxu0 0.0
    %5247 = vmatpush.xpose.msra.mxu0 0.0
    %5248 = vmatpush.xpose.msra.mxu0 0.0
    %5249 = vmatpush.xpose.msra.mxu0 0.0
    %5250 = vmatpush.xpose.msra.mxu0 0.0
    %5251 = vmatpush.xpose.msra.mxu0 0.0
    %5252 = vmatpush.xpose.msra.mxu0 %v5235
    %5253 = vmatmul.f32.gmra.mxu0 %v5232
    %v5254 = vpop.f32.mrf.mxu0
    %v5255 = vadd.f32 %v970, %v5254
    %5256 = vdwg.mxu0
    %v5258 = vsel %vm977, %v5192, 0
    %v5261 = vsel %vm977, %v5229, 0
    %5263 = vmatpush.xpose.msra.mxu0 0.0
    %5264 = vmatpush.xpose.msra.mxu0 0.0
    %5265 = vmatpush.xpose.msra.mxu0 0.0
    %5266 = vmatpush.xpose.msra.mxu0 0.0
    %5267 = vmatpush.xpose.msra.mxu0 0.0
    %5268 = vmatpush.xpose.msra.mxu0 0.0
    %5269 = vmatpush.xpose.msra.mxu0 0.0
    %5270 = vmatpush.xpose.msra.mxu0 0.0
    %5271 = vmatpush.xpose.msra.mxu0 0.0
    %5272 = vmatpush.xpose.msra.mxu0 0.0
    %5273 = vmatpush.xpose.msra.mxu0 0.0
    %5274 = vmatpush.xpose.msra.mxu0 0.0
    %5275 = vmatpush.xpose.msra.mxu0 0.0
    %5276 = vmatpush.xpose.msra.mxu0 0.0
    %5277 = vmatpush.xpose.msra.mxu0 0.0
    %5278 = vmatpush.xpose.msra.mxu0 %v5261
    %5279 = vmatmul.f32.gmra.mxu0 %v5258
    %v5280 = vpop.f32.mrf.mxu0
    %v5281 = vadd.f32 %v971, %v5280
    %5282 = vdwg.mxu0
    %v5283 = vsel %vm977, %v5255, -inf
    %5284 = vmax.xlane.f32.xlu0 %v5283
    %v5285 = vpop.xlane.xlu0 %5284
    %v5286 = vsel %vm977, %v5281, -inf
    %5287 = vmax.xlane.f32.xlu0 %v5286
    %v5288 = vpop.xlane.xlu0 %5287
    %v5289 = vsub.f32 %v5255, %v5285
    %v5290 = vsub.f32 %v5281, %v5288
    %v5291 = vmul.f32 %v5289, 1.442695
    %v5292 = vpow.pop %v5291
    %v5293 = vmul.f32 %v5290, 1.442695
    %v5294 = vpow.pop %v5293
    %v5295 = vsel %vm977, %v5292, 0.0
    %5296 = vadd.xlane.f32.xlu0 %v5295
    %v5297 = vpop.xlane.xlu0 %5296
    %v5298 = vsel %vm977, %v5294, 0.0
    %5299 = vadd.xlane.f32.xlu0 %v5298
    %v5300 = vpop.xlane.xlu0 %5299
    %v5301 = vrcp.pop %v5297
    %v5302 = vrcp.pop %v5300
    %v5303 = vmul.f32 %v5292, %v5301
    %v5304 = vmul.f32 %v5294, %v5302
    %5305 = vrot.lane.b32.xlu0 %v5226, 96
    %v5306 = vpop.permute.xlu0 %5305
    %v5309 = vsel %vm977, %v5303, 0
    %5311 = vmatpush.msra.mxu0 0.0
    %5312 = vmatpush.msra.mxu0 0.0
    %5313 = vmatpush.msra.mxu0 0.0
    %5314 = vmatpush.msra.mxu0 0.0
    %5315 = vmatpush.msra.mxu0 0.0
    %5316 = vmatpush.msra.mxu0 0.0
    %5317 = vmatpush.msra.mxu0 0.0
    %5318 = vmatpush.msra.mxu0 0.0
    %5319 = vmatpush.msra.mxu0 0.0
    %5320 = vmatpush.msra.mxu0 0.0
    %5321 = vmatpush.msra.mxu0 0.0
    %5322 = vmatpush.msra.mxu0 0.0
    %5323 = vmatpush.msra.mxu0 0.0
    %5324 = vmatpush.msra.mxu0 0.0
    %5325 = vmatpush.msra.mxu0 0.0
    %5326 = vmatpush.msra.mxu0 %v5306
    %5327 = vmatmul.f32.gmra.mxu0 %v5309
    %v5328 = vpop.f32.mrf.mxu0
    %v5329 = vadd.f32 0.0, %v5328
    %5330 = vdwg.mxu0
    %5331 = vrot.lane.b32.xlu0 %v5229, 96
    %v5332 = vpop.permute.xlu0 %5331
    %v5335 = vsel %vm977, %v5304, 0
    %5337 = vmatpush.msra.mxu0 0.0
    %5338 = vmatpush.msra.mxu0 0.0
    %5339 = vmatpush.msra.mxu0 0.0
    %5340 = vmatpush.msra.mxu0 0.0
    %5341 = vmatpush.msra.mxu0 0.0
    %5342 = vmatpush.msra.mxu0 0.0
    %5343 = vmatpush.msra.mxu0 0.0
    %5344 = vmatpush.msra.mxu0 0.0
    %5345 = vmatpush.msra.mxu0 0.0
    %5346 = vmatpush.msra.mxu0 0.0
    %5347 = vmatpush.msra.mxu0 0.0
    %5348 = vmatpush.msra.mxu0 0.0
    %5349 = vmatpush.msra.mxu0 0.0
    %5350 = vmatpush.msra.mxu0 0.0
    %5351 = vmatpush.msra.mxu0 0.0
    %5352 = vmatpush.msra.mxu0 %v5332
    %5353 = vmatmul.f32.gmra.mxu0 %v5335
    %v5354 = vpop.f32.mrf.mxu0
    %v5355 = vadd.f32 0.0, %v5354
    %5356 = vdwg.mxu0
    %5357 = vrot.lane.b32.xlu0 %v5189, 120
    %v5358 = vpop.permute.xlu0 %5357
    %5359 = vrot.lane.b32.xlu0 %v5226, 120
    %v5360 = vpop.permute.xlu0 %5359
    %v5361 = vsel %vm977, %v5358, 0
    %v5363 = vsel %vm977, %v5360, 0
    %5365 = vmatpush.xpose.msra.mxu0 0.0
    %5366 = vmatpush.xpose.msra.mxu0 0.0
    %5367 = vmatpush.xpose.msra.mxu0 0.0
    %5368 = vmatpush.xpose.msra.mxu0 0.0
    %5369 = vmatpush.xpose.msra.mxu0 0.0
    %5370 = vmatpush.xpose.msra.mxu0 0.0
    %5371 = vmatpush.xpose.msra.mxu0 0.0
    %5372 = vmatpush.xpose.msra.mxu0 0.0
    %5373 = vmatpush.xpose.msra.mxu0 0.0
    %5374 = vmatpush.xpose.msra.mxu0 0.0
    %5375 = vmatpush.xpose.msra.mxu0 0.0
    %5376 = vmatpush.xpose.msra.mxu0 0.0
    %5377 = vmatpush.xpose.msra.mxu0 0.0
    %5378 = vmatpush.xpose.msra.mxu0 0.0
    %5379 = vmatpush.xpose.msra.mxu0 0.0
    %5380 = vmatpush.xpose.msra.mxu0 %v5363
    %5381 = vmatmul.f32.gmra.mxu0 %v5361
    %v5382 = vpop.f32.mrf.mxu0
    %v5383 = vadd.f32 %v970, %v5382
    %5384 = vdwg.mxu0
    %5385 = vrot.lane.b32.xlu0 %v5192, 120
    %v5386 = vpop.permute.xlu0 %5385
    %5387 = vrot.lane.b32.xlu0 %v5229, 120
    %v5388 = vpop.permute.xlu0 %5387
    %v5389 = vsel %vm977, %v5386, 0
    %v5391 = vsel %vm977, %v5388, 0
    %5393 = vmatpush.xpose.msra.mxu0 0.0
    %5394 = vmatpush.xpose.msra.mxu0 0.0
    %5395 = vmatpush.xpose.msra.mxu0 0.0
    %5396 = vmatpush.xpose.msra.mxu0 0.0
    %5397 = vmatpush.xpose.msra.mxu0 0.0
    %5398 = vmatpush.xpose.msra.mxu0 0.0
    %5399 = vmatpush.xpose.msra.mxu0 0.0
    %5400 = vmatpush.xpose.msra.mxu0 0.0
    %5401 = vmatpush.xpose.msra.mxu0 0.0
    %5402 = vmatpush.xpose.msra.mxu0 0.0
    %5403 = vmatpush.xpose.msra.mxu0 0.0
    %5404 = vmatpush.xpose.msra.mxu0 0.0
    %5405 = vmatpush.xpose.msra.mxu0 0.0
    %5406 = vmatpush.xpose.msra.mxu0 0.0
    %5407 = vmatpush.xpose.msra.mxu0 0.0
    %5408 = vmatpush.xpose.msra.mxu0 %v5391
    %5409 = vmatmul.f32.gmra.mxu0 %v5389
    %v5410 = vpop.f32.mrf.mxu0
    %v5411 = vadd.f32 %v971, %v5410
    %5412 = vdwg.mxu0
    %v5413 = vsel %vm977, %v5383, -inf
    %5414 = vmax.xlane.f32.xlu0 %v5413
    %v5415 = vpop.xlane.xlu0 %5414
    %v5416 = vsel %vm977, %v5411, -inf
    %5417 = vmax.xlane.f32.xlu0 %v5416
    %v5418 = vpop.xlane.xlu0 %5417
    %v5419 = vsub.f32 %v5383, %v5415
    %v5420 = vsub.f32 %v5411, %v5418
    %v5421 = vmul.f32 %v5419, 1.442695
    %v5422 = vpow.pop %v5421
    %v5423 = vmul.f32 %v5420, 1.442695
    %v5424 = vpow.pop %v5423
    %v5425 = vsel %vm977, %v5422, 0.0
    %5426 = vadd.xlane.f32.xlu0 %v5425
    %v5427 = vpop.xlane.xlu0 %5426
    %v5428 = vsel %vm977, %v5424, 0.0
    %5429 = vadd.xlane.f32.xlu0 %v5428
    %v5430 = vpop.xlane.xlu0 %5429
    %v5431 = vrcp.pop %v5427
    %v5432 = vrcp.pop %v5430
    %v5433 = vmul.f32 %v5422, %v5431
    %v5434 = vmul.f32 %v5424, %v5432
    %5435 = vrot.lane.b32.xlu0 %v5226, 88
    %v5436 = vpop.permute.xlu0 %5435
    %v5439 = vsel %vm977, %v5433, 0
    %5441 = vmatpush.msra.mxu0 0.0
    %5442 = vmatpush.msra.mxu0 0.0
    %5443 = vmatpush.msra.mxu0 0.0
    %5444 = vmatpush.msra.mxu0 0.0
    %5445 = vmatpush.msra.mxu0 0.0
    %5446 = vmatpush.msra.mxu0 0.0
    %5447 = vmatpush.msra.mxu0 0.0
    %5448 = vmatpush.msra.mxu0 0.0
    %5449 = vmatpush.msra.mxu0 0.0
    %5450 = vmatpush.msra.mxu0 0.0
    %5451 = vmatpush.msra.mxu0 0.0
    %5452 = vmatpush.msra.mxu0 0.0
    %5453 = vmatpush.msra.mxu0 0.0
    %5454 = vmatpush.msra.mxu0 0.0
    %5455 = vmatpush.msra.mxu0 0.0
    %5456 = vmatpush.msra.mxu0 %v5436
    %5457 = vmatmul.f32.gmra.mxu0 %v5439
    %v5458 = vpop.f32.mrf.mxu0
    %v5459 = vadd.f32 0.0, %v5458
    %5460 = vdwg.mxu0
    %5461 = vrot.lane.b32.xlu0 %v5229, 88
    %v5462 = vpop.permute.xlu0 %5461
    %v5465 = vsel %vm977, %v5434, 0
    %5467 = vmatpush.msra.mxu0 0.0
    %5468 = vmatpush.msra.mxu0 0.0
    %5469 = vmatpush.msra.mxu0 0.0
    %5470 = vmatpush.msra.mxu0 0.0
    %5471 = vmatpush.msra.mxu0 0.0
    %5472 = vmatpush.msra.mxu0 0.0
    %5473 = vmatpush.msra.mxu0 0.0
    %5474 = vmatpush.msra.mxu0 0.0
    %5475 = vmatpush.msra.mxu0 0.0
    %5476 = vmatpush.msra.mxu0 0.0
    %5477 = vmatpush.msra.mxu0 0.0
    %5478 = vmatpush.msra.mxu0 0.0
    %5479 = vmatpush.msra.mxu0 0.0
    %5480 = vmatpush.msra.mxu0 0.0
    %5481 = vmatpush.msra.mxu0 0.0
    %5482 = vmatpush.msra.mxu0 %v5462
    %5483 = vmatmul.f32.gmra.mxu0 %v5465
    %v5484 = vpop.f32.mrf.mxu0
    %v5485 = vadd.f32 0.0, %v5484
    %5486 = vdwg.mxu0
    %5487 = vrot.lane.b32.xlu0 %v5189, 112
    %v5488 = vpop.permute.xlu0 %5487
    %5489 = vrot.lane.b32.xlu0 %v5226, 112
    %v5490 = vpop.permute.xlu0 %5489
    %v5491 = vsel %vm977, %v5488, 0
    %v5493 = vsel %vm977, %v5490, 0
    %5495 = vmatpush.xpose.msra.mxu0 0.0
    %5496 = vmatpush.xpose.msra.mxu0 0.0
    %5497 = vmatpush.xpose.msra.mxu0 0.0
    %5498 = vmatpush.xpose.msra.mxu0 0.0
    %5499 = vmatpush.xpose.msra.mxu0 0.0
    %5500 = vmatpush.xpose.msra.mxu0 0.0
    %5501 = vmatpush.xpose.msra.mxu0 0.0
    %5502 = vmatpush.xpose.msra.mxu0 0.0
    %5503 = vmatpush.xpose.msra.mxu0 0.0
    %5504 = vmatpush.xpose.msra.mxu0 0.0
    %5505 = vmatpush.xpose.msra.mxu0 0.0
    %5506 = vmatpush.xpose.msra.mxu0 0.0
    %5507 = vmatpush.xpose.msra.mxu0 0.0
    %5508 = vmatpush.xpose.msra.mxu0 0.0
    %5509 = vmatpush.xpose.msra.mxu0 0.0
    %5510 = vmatpush.xpose.msra.mxu0 %v5493
    %5511 = vmatmul.f32.gmra.mxu0 %v5491
    %v5512 = vpop.f32.mrf.mxu0
    %v5513 = vadd.f32 %v970, %v5512
    %5514 = vdwg.mxu0
    %5515 = vrot.lane.b32.xlu0 %v5192, 112
    %v5516 = vpop.permute.xlu0 %5515
    %5517 = vrot.lane.b32.xlu0 %v5229, 112
    %v5518 = vpop.permute.xlu0 %5517
    %v5519 = vsel %vm977, %v5516, 0
    %v5521 = vsel %vm977, %v5518, 0
    %5523 = vmatpush.xpose.msra.mxu0 0.0
    %5524 = vmatpush.xpose.msra.mxu0 0.0
    %5525 = vmatpush.xpose.msra.mxu0 0.0
    %5526 = vmatpush.xpose.msra.mxu0 0.0
    %5527 = vmatpush.xpose.msra.mxu0 0.0
    %5528 = vmatpush.xpose.msra.mxu0 0.0
    %5529 = vmatpush.xpose.msra.mxu0 0.0
    %5530 = vmatpush.xpose.msra.mxu0 0.0
    %5531 = vmatpush.xpose.msra.mxu0 0.0
    %5532 = vmatpush.xpose.msra.mxu0 0.0
    %5533 = vmatpush.xpose.msra.mxu0 0.0
    %5534 = vmatpush.xpose.msra.mxu0 0.0
    %5535 = vmatpush.xpose.msra.mxu0 0.0
    %5536 = vmatpush.xpose.msra.mxu0 0.0
    %5537 = vmatpush.xpose.msra.mxu0 0.0
    %5538 = vmatpush.xpose.msra.mxu0 %v5521
    %5539 = vmatmul.f32.gmra.mxu0 %v5519
    %v5540 = vpop.f32.mrf.mxu0
    %v5541 = vadd.f32 %v971, %v5540
    %5542 = vdwg.mxu0
    %v5543 = vsel %vm977, %v5513, -inf
    %5544 = vmax.xlane.f32.xlu0 %v5543
    %v5545 = vpop.xlane.xlu0 %5544
    %v5546 = vsel %vm977, %v5541, -inf
    %5547 = vmax.xlane.f32.xlu0 %v5546
    %v5548 = vpop.xlane.xlu0 %5547
    %v5549 = vsub.f32 %v5513, %v5545
    %v5550 = vsub.f32 %v5541, %v5548
    %v5551 = vmul.f32 %v5549, 1.442695
    %v5552 = vpow.pop %v5551
    %v5553 = vmul.f32 %v5550, 1.442695
    %v5554 = vpow.pop %v5553
    %v5555 = vsel %vm977, %v5552, 0.0
    %5556 = vadd.xlane.f32.xlu0 %v5555
    %v5557 = vpop.xlane.xlu0 %5556
    %v5558 = vsel %vm977, %v5554, 0.0
    %5559 = vadd.xlane.f32.xlu0 %v5558
    %v5560 = vpop.xlane.xlu0 %5559
    %v5561 = vrcp.pop %v5557
    %v5562 = vrcp.pop %v5560
    %v5563 = vmul.f32 %v5552, %v5561
    %v5564 = vmul.f32 %v5554, %v5562
    %5565 = vrot.lane.b32.xlu0 %v5226, 80
    %v5566 = vpop.permute.xlu0 %5565
    %v5569 = vsel %vm977, %v5563, 0
    %5571 = vmatpush.msra.mxu0 0.0
    %5572 = vmatpush.msra.mxu0 0.0
    %5573 = vmatpush.msra.mxu0 0.0
    %5574 = vmatpush.msra.mxu0 0.0
    %5575 = vmatpush.msra.mxu0 0.0
    %5576 = vmatpush.msra.mxu0 0.0
    %5577 = vmatpush.msra.mxu0 0.0
    %5578 = vmatpush.msra.mxu0 0.0
    %5579 = vmatpush.msra.mxu0 0.0
    %5580 = vmatpush.msra.mxu0 0.0
    %5581 = vmatpush.msra.mxu0 0.0
    %5582 = vmatpush.msra.mxu0 0.0
    %5583 = vmatpush.msra.mxu0 0.0
    %5584 = vmatpush.msra.mxu0 0.0
    %5585 = vmatpush.msra.mxu0 0.0
    %5586 = vmatpush.msra.mxu0 %v5566
    %5587 = vmatmul.f32.gmra.mxu0 %v5569
    %v5588 = vpop.f32.mrf.mxu0
    %v5589 = vadd.f32 0.0, %v5588
    %5590 = vdwg.mxu0
    %5591 = vrot.lane.b32.xlu0 %v5229, 80
    %v5592 = vpop.permute.xlu0 %5591
    %v5595 = vsel %vm977, %v5564, 0
    %5597 = vmatpush.msra.mxu0 0.0
    %5598 = vmatpush.msra.mxu0 0.0
    %5599 = vmatpush.msra.mxu0 0.0
    %5600 = vmatpush.msra.mxu0 0.0
    %5601 = vmatpush.msra.mxu0 0.0
    %5602 = vmatpush.msra.mxu0 0.0
    %5603 = vmatpush.msra.mxu0 0.0
    %5604 = vmatpush.msra.mxu0 0.0
    %5605 = vmatpush.msra.mxu0 0.0
    %5606 = vmatpush.msra.mxu0 0.0
    %5607 = vmatpush.msra.mxu0 0.0
    %5608 = vmatpush.msra.mxu0 0.0
    %5609 = vmatpush.msra.mxu0 0.0
    %5610 = vmatpush.msra.mxu0 0.0
    %5611 = vmatpush.msra.mxu0 0.0
    %5612 = vmatpush.msra.mxu0 %v5592
    %5613 = vmatmul.f32.gmra.mxu0 %v5595
    %v5614 = vpop.f32.mrf.mxu0
    %v5615 = vadd.f32 0.0, %v5614
    %5616 = vdwg.mxu0
    %5617 = vrot.lane.b32.xlu0 %v5189, 104
    %v5618 = vpop.permute.xlu0 %5617
    %5619 = vrot.lane.b32.xlu0 %v5226, 104
    %v5620 = vpop.permute.xlu0 %5619
    %v5621 = vsel %vm977, %v5618, 0
    %v5623 = vsel %vm977, %v5620, 0
    %5625 = vmatpush.xpose.msra.mxu0 0.0
    %5626 = vmatpush.xpose.msra.mxu0 0.0
    %5627 = vmatpush.xpose.msra.mxu0 0.0
    %5628 = vmatpush.xpose.msra.mxu0 0.0
    %5629 = vmatpush.xpose.msra.mxu0 0.0
    %5630 = vmatpush.xpose.msra.mxu0 0.0
    %5631 = vmatpush.xpose.msra.mxu0 0.0
    %5632 = vmatpush.xpose.msra.mxu0 0.0
    %5633 = vmatpush.xpose.msra.mxu0 0.0
    %5634 = vmatpush.xpose.msra.mxu0 0.0
    %5635 = vmatpush.xpose.msra.mxu0 0.0
    %5636 = vmatpush.xpose.msra.mxu0 0.0
    %5637 = vmatpush.xpose.msra.mxu0 0.0
    %5638 = vmatpush.xpose.msra.mxu0 0.0
    %5639 = vmatpush.xpose.msra.mxu0 0.0
    %5640 = vmatpush.xpose.msra.mxu0 %v5623
    %5641 = vmatmul.f32.gmra.mxu0 %v5621
    %v5642 = vpop.f32.mrf.mxu0
    %v5643 = vadd.f32 %v970, %v5642
    %5644 = vdwg.mxu0
    %5645 = vrot.lane.b32.xlu0 %v5192, 104
    %v5646 = vpop.permute.xlu0 %5645
    %5647 = vrot.lane.b32.xlu0 %v5229, 104
    %v5648 = vpop.permute.xlu0 %5647
    %v5649 = vsel %vm977, %v5646, 0
    %v5651 = vsel %vm977, %v5648, 0
    %5653 = vmatpush.xpose.msra.mxu0 0.0
    %5654 = vmatpush.xpose.msra.mxu0 0.0
    %5655 = vmatpush.xpose.msra.mxu0 0.0
    %5656 = vmatpush.xpose.msra.mxu0 0.0
    %5657 = vmatpush.xpose.msra.mxu0 0.0
    %5658 = vmatpush.xpose.msra.mxu0 0.0
    %5659 = vmatpush.xpose.msra.mxu0 0.0
    %5660 = vmatpush.xpose.msra.mxu0 0.0
    %5661 = vmatpush.xpose.msra.mxu0 0.0
    %5662 = vmatpush.xpose.msra.mxu0 0.0
    %5663 = vmatpush.xpose.msra.mxu0 0.0
    %5664 = vmatpush.xpose.msra.mxu0 0.0
    %5665 = vmatpush.xpose.msra.mxu0 0.0
    %5666 = vmatpush.xpose.msra.mxu0 0.0
    %5667 = vmatpush.xpose.msra.mxu0 0.0
    %5668 = vmatpush.xpose.msra.mxu0 %v5651
    %5669 = vmatmul.f32.gmra.mxu0 %v5649
    %v5670 = vpop.f32.mrf.mxu0
    %v5671 = vadd.f32 %v971, %v5670
    %5672 = vdwg.mxu0
    %v5673 = vsel %vm977, %v5643, -inf
    %5674 = vmax.xlane.f32.xlu0 %v5673
    %v5675 = vpop.xlane.xlu0 %5674
    %v5676 = vsel %vm977, %v5671, -inf
    %5677 = vmax.xlane.f32.xlu0 %v5676
    %v5678 = vpop.xlane.xlu0 %5677
    %v5679 = vsub.f32 %v5643, %v5675
    %v5680 = vsub.f32 %v5671, %v5678
    %v5681 = vmul.f32 %v5679, 1.442695
    %v5682 = vpow.pop %v5681
    %v5683 = vmul.f32 %v5680, 1.442695
    %v5684 = vpow.pop %v5683
    %v5685 = vsel %vm977, %v5682, 0.0
    %5686 = vadd.xlane.f32.xlu0 %v5685
    %v5687 = vpop.xlane.xlu0 %5686
    %v5688 = vsel %vm977, %v5684, 0.0
    %5689 = vadd.xlane.f32.xlu0 %v5688
    %v5690 = vpop.xlane.xlu0 %5689
    %v5691 = vrcp.pop %v5687
    %v5692 = vrcp.pop %v5690
    %v5693 = vmul.f32 %v5682, %v5691
    %v5694 = vmul.f32 %v5684, %v5692
    %5695 = vrot.lane.b32.xlu0 %v5226, 72
    %v5696 = vpop.permute.xlu0 %5695
    %v5699 = vsel %vm977, %v5693, 0
    %5701 = vmatpush.msra.mxu0 0.0
    %5702 = vmatpush.msra.mxu0 0.0
    %5703 = vmatpush.msra.mxu0 0.0
    %5704 = vmatpush.msra.mxu0 0.0
    %5705 = vmatpush.msra.mxu0 0.0
    %5706 = vmatpush.msra.mxu0 0.0
    %5707 = vmatpush.msra.mxu0 0.0
    %5708 = vmatpush.msra.mxu0 0.0
    %5709 = vmatpush.msra.mxu0 0.0
    %5710 = vmatpush.msra.mxu0 0.0
    %5711 = vmatpush.msra.mxu0 0.0
    %5712 = vmatpush.msra.mxu0 0.0
    %5713 = vmatpush.msra.mxu0 0.0
    %5714 = vmatpush.msra.mxu0 0.0
    %5715 = vmatpush.msra.mxu0 0.0
    %5716 = vmatpush.msra.mxu0 %v5696
    %5717 = vmatmul.f32.gmra.mxu0 %v5699
    %v5718 = vpop.f32.mrf.mxu0
    %v5719 = vadd.f32 0.0, %v5718
    %5720 = vdwg.mxu0
    %5721 = vrot.lane.b32.xlu0 %v5229, 72
    %v5722 = vpop.permute.xlu0 %5721
    %v5725 = vsel %vm977, %v5694, 0
    %5727 = vmatpush.msra.mxu0 0.0
    %5728 = vmatpush.msra.mxu0 0.0
    %5729 = vmatpush.msra.mxu0 0.0
    %5730 = vmatpush.msra.mxu0 0.0
    %5731 = vmatpush.msra.mxu0 0.0
    %5732 = vmatpush.msra.mxu0 0.0
    %5733 = vmatpush.msra.mxu0 0.0
    %5734 = vmatpush.msra.mxu0 0.0
    %5735 = vmatpush.msra.mxu0 0.0
    %5736 = vmatpush.msra.mxu0 0.0
    %5737 = vmatpush.msra.mxu0 0.0
    %5738 = vmatpush.msra.mxu0 0.0
    %5739 = vmatpush.msra.mxu0 0.0
    %5740 = vmatpush.msra.mxu0 0.0
    %5741 = vmatpush.msra.mxu0 0.0
    %5742 = vmatpush.msra.mxu0 %v5722
    %5743 = vmatmul.f32.gmra.mxu0 %v5725
    %v5744 = vpop.f32.mrf.mxu0
    %v5745 = vadd.f32 0.0, %v5744
    %5746 = vdwg.mxu0
    %5749 = vrot.lane.b32.xlu0 %v5459, 8
    %v5750 = vpop.permute.xlu0 %5749
    %5751 = vrot.lane.b32.xlu0 %v5485, 8
    %v5752 = vpop.permute.xlu0 %5751
    %5757 = vrot.lane.b32.xlu0 %v5589, 16
    %v5758 = vpop.permute.xlu0 %5757
    %5759 = vrot.lane.b32.xlu0 %v5615, 16
    %v5760 = vpop.permute.xlu0 %5759
    %5765 = vrot.lane.b32.xlu0 %v5719, 24
    %v5766 = vpop.permute.xlu0 %5765
    %5767 = vrot.lane.b32.xlu0 %v5745, 24
    %v5768 = vpop.permute.xlu0 %5767
    %v5771 = vsel %vm977, %v5329, %v5750
    %v5772 = vsel %vm977, %v5355, %v5752
    %v5773 = vsel %vm1519, %v5771, %v5758
    %v5774 = vsel %vm1519, %v5772, %v5760
    %v5775 = vsel %vm1522, %v5773, %v5766
    %v5776 = vsel %vm1522, %v5774, %v5768
    %v5777 = vld [vmem:[%s99] sm:$0xff]
    %v5778 = vld [vmem:[%s99 + $0x8] sm:$0xff]
    %v5779 = vld [vmem:[%s99 + $0x10] sm:$0xff]
    %v5780 = vld [vmem:[%s99 + $0x18] sm:$0xff]
    %v5781 = vld [vmem:[#allocation43] sm:$0x1]
    %v5783 = vperm.slane %v5781, 0
    %v5786 = vsel %vm871, %v5775, 0
    %v5789 = vsel %vm871, %v5776, 0
    %5791 = vmatpush.msra.mxu0 0.0
    %5792 = vmatpush.msra.mxu0 0.0
    %5793 = vmatpush.msra.mxu0 0.0
    %5794 = vmatpush.msra.mxu0 0.0
    %5795 = vmatpush.msra.mxu0 0.0
    %5796 = vmatpush.msra.mxu0 0.0
    %5797 = vmatpush.msra.mxu0 0.0
    %5798 = vmatpush.msra.mxu0 0.0
    %5799 = vmatpush.msra.mxu0 0.0
    %5800 = vmatpush.msra.mxu0 0.0
    %5801 = vmatpush.msra.mxu0 0.0
    %5802 = vmatpush.msra.mxu0 0.0
    %5803 = vmatpush.msra.mxu0 %v5780
    %5804 = vmatpush.msra.mxu0 %v5779
    %5805 = vmatpush.msra.mxu0 %v5778
    %5806 = vmatpush.msra.mxu0 %v5777
    %5807 = vmatmul.f32.gmra.mxu0 %v5786
    %v5808 = vpop.f32.mrf.mxu0
    %v5809 = vadd.f32 %v5783, %v5808
    %5810 = vmatmul.f32.gmra.mxu0 %v5789
    %v5811 = vpop.f32.mrf.mxu0
    %v5812 = vadd.f32 %v5783, %v5811
    %5813 = vdwg.mxu0
    %v5814 = vadd.f32 %v5155, %v5809
    %v5815 = vadd.f32 %v5156, %v5812
    %v5816 = vld [vmem:[#allocation44] sm:$0x1]
    %v5817 = vld [vmem:[#allocation46] sm:$0x1]
    %v5818 = vsel %vm871, %v5814, 0.0
    %5819 = vadd.xlane.f32.xlu0 %v5818
    %v5820 = vpop.xlane.xlu0 %5819
    %v5821 = vsel %vm871, %v5815, 0.0
    %5822 = vadd.xlane.f32.xlu0 %v5821
    %v5823 = vpop.xlane.xlu0 %5822
    %v5824 = vmul.f32 %v5820, %v884
    %v5825 = vmul.f32 %v5823, %v884
    %v5826 = vsub.f32 %v5814, %v5824
    %v5827 = vsub.f32 %v5815, %v5825
    %v5828 = vmul.f32 %v5826, %v5826
    %v5829 = vmul.f32 %v5827, %v5827
    %v5830 = vsel %vm871, %v5828, 0.0
    %5831 = vadd.xlane.f32.xlu0 %v5830
    %v5832 = vpop.xlane.xlu0 %5831
    %v5833 = vsel %vm871, %v5829, 0.0
    %5834 = vadd.xlane.f32.xlu0 %v5833
    %v5835 = vpop.xlane.xlu0 %5834
    %v5836 = vmul.f32 %v5832, %v884
    %v5837 = vmul.f32 %v5835, %v884
    %v5838 = vadd.f32 %v5836, 1e-05
    %v5839 = vadd.f32 %v5837, 1e-05
    %v5840 = vrsqrt.pop %v5838
    %v5841 = vmul.f32 %v5840, %v5838
    %v5842 = vmul.f32 %v5841, %v5840
    %v5843 = vmul.f32 0.5, %v5842
    %v5844 = vsub.f32 1.5, %v5843
    %v5845 = vmul.f32 %v5840, %v5844
    %vm5846 = vweird.f32 %v5838
    %vm5847 = vweird.f32 %v5840
    %vm5848 = vmor %vm5846, %vm5847
    %v5849 = vsel %vm5848, %v5840, %v5845
    %v5850 = vrsqrt.pop %v5839
    %v5851 = vmul.f32 %v5850, %v5839
    %v5852 = vmul.f32 %v5851, %v5850
    %v5853 = vmul.f32 0.5, %v5852
    %v5854 = vsub.f32 1.5, %v5853
    %v5855 = vmul.f32 %v5850, %v5854
    %vm5856 = vweird.f32 %v5839
    %vm5857 = vweird.f32 %v5850
    %vm5858 = vmor %vm5856, %vm5857
    %v5859 = vsel %vm5858, %v5850, %v5855
    %v5860 = vmul.f32 %v5826, %v5849
    %v5861 = vmul.f32 %v5827, %v5859
    %v5863 = vperm.slane %v5816, 0
    %v5865 = vmul.f32 %v5860, %v5863
    %v5866 = vmul.f32 %v5861, %v5863
    %v5868 = vperm.slane %v5817, 0
    %v5870 = vadd.f32 %v5865, %v5868
    %v5871 = vadd.f32 %v5866, %v5868
    %v5872 = vld [vmem:[#allocation47] sm:$0xff]
    %v5873 = vld [vmem:[#allocation47 + $0x8] sm:$0xff]
    %v5874 = vld [vmem:[#allocation47 + $0x10] sm:$0xff]
    %v5875 = vld [vmem:[#allocation47 + $0x18] sm:$0xff]
    %v5876 = vld [vmem:[#allocation49] sm:$0x1]
    %v5878 = vperm.slane %v5876, 0
    %v5881 = vsel %vm871, %v5870, 0
    %v5884 = vsel %vm871, %v5871, 0
    %5886 = vmatpush.msra.mxu0 0.0
    %5887 = vmatpush.msra.mxu0 0.0
    %5888 = vmatpush.msra.mxu0 0.0
    %5889 = vmatpush.msra.mxu0 0.0
    %5890 = vmatpush.msra.mxu0 0.0
    %5891 = vmatpush.msra.mxu0 0.0
    %5892 = vmatpush.msra.mxu0 0.0
    %5893 = vmatpush.msra.mxu0 0.0
    %5894 = vmatpush.msra.mxu0 0.0
    %5895 = vmatpush.msra.mxu0 0.0
    %5896 = vmatpush.msra.mxu0 0.0
    %5897 = vmatpush.msra.mxu0 0.0
    %5898 = vmatpush.msra.mxu0 %v5875
    %5899 = vmatpush.msra.mxu0 %v5874
    %5900 = vmatpush.msra.mxu0 %v5873
    %5901 = vmatpush.msra.mxu0 %v5872
    %5902 = vmatmul.f32.gmra.mxu0 %v5881
    %v5903 = vpop.f32.mrf.mxu0
    %v5904 = vadd.f32 %v5878, %v5903
    %5905 = vmatmul.f32.gmra.mxu0 %v5884
    %v5906 = vpop.f32.mrf.mxu0
    %v5907 = vadd.f32 %v5878, %v5906
    %5908 = vdwg.mxu0
    %v5909 = vmul.f32 %v5904, %v5904
    %v5910 = vmul.f32 %v5907, %v5907
    %v5911 = vmul.f32 %v5904, %v5909
    %v5912 = vmul.f32 %v5907, %v5910
    %v5913 = vmul.f32 %v5911, 0.044715
    %v5914 = vmul.f32 %v5912, 0.044715
    %v5915 = vadd.f32 %v5904, %v5913
    %v5916 = vadd.f32 %v5907, %v5914
    %v5917 = vmul.f32 %v5915, 0.7978846
    %v5918 = vmul.f32 %v5916, 0.7978846
    %v5919 = vtanh.pop %v5917
    %v5920 = vtanh.pop %v5918
    %v5921 = vadd.f32 %v5919, 1.0
    %v5922 = vadd.f32 %v5920, 1.0
    %v5923 = vmul.f32 %v5921, 0.5
    %v5924 = vmul.f32 %v5922, 0.5
    %v5925 = vmul.f32 %v5904, %v5923
    %v5926 = vmul.f32 %v5907, %v5924
    %v5927 = vld [vmem:[%s111] sm:$0xff]
    %v5928 = vld [vmem:[%s111 + $0x8] sm:$0xff]
    %v5929 = vld [vmem:[%s111 + $0x10] sm:$0xff]
    %v5930 = vld [vmem:[%s111 + $0x18] sm:$0xff]
    %v5931 = vld [vmem:[%s111 + $0x20] sm:$0xff]
    %v5932 = vld [vmem:[%s111 + $0x28] sm:$0xff]
    %v5933 = vld [vmem:[%s111 + $0x30] sm:$0xff]
    %v5934 = vld [vmem:[%s111 + $0x38] sm:$0xff]
    %v5935 = vld [vmem:[#allocation50] sm:$0x1]
    %v5937 = vperm.slane %v5935, 0
    %v5940 = vsel %vm1687, %v5925, 0
    %v5943 = vsel %vm1687, %v5926, 0
    %5945 = vmatpush.msra.mxu0 0.0
    %5946 = vmatpush.msra.mxu0 0.0
    %5947 = vmatpush.msra.mxu0 0.0
    %5948 = vmatpush.msra.mxu0 0.0
    %5949 = vmatpush.msra.mxu0 0.0
    %5950 = vmatpush.msra.mxu0 0.0
    %5951 = vmatpush.msra.mxu0 0.0
    %5952 = vmatpush.msra.mxu0 0.0
    %5953 = vmatpush.msra.mxu0 %v5934
    %5954 = vmatpush.msra.mxu0 %v5933
    %5955 = vmatpush.msra.mxu0 %v5932
    %5956 = vmatpush.msra.mxu0 %v5931
    %5957 = vmatpush.msra.mxu0 %v5930
    %5958 = vmatpush.msra.mxu0 %v5929
    %5959 = vmatpush.msra.mxu0 %v5928
    %5960 = vmatpush.msra.mxu0 %v5927
    %5961 = vmatmul.f32.gmra.mxu0 %v5940
    %v5962 = vpop.f32.mrf.mxu0
    %v5963 = vadd.f32 %v5937, %v5962
    %5964 = vmatmul.f32.gmra.mxu0 %v5943
    %v5965 = vpop.f32.mrf.mxu0
    %v5966 = vadd.f32 %v5937, %v5965
    %5967 = vdwg.mxu0
    %v5968 = vadd.f32 %v5870, %v5963
    %v5969 = vadd.f32 %v5871, %v5966
    %v5970 = vld [vmem:[#allocation52] sm:$0x1]
    %v5971 = vld [vmem:[#allocation53] sm:$0x1]
    %v5972 = vsel %vm871, %v5968, 0.0
    %5973 = vadd.xlane.f32.xlu0 %v5972
    %v5974 = vpop.xlane.xlu0 %5973
    %v5975 = vsel %vm871, %v5969, 0.0
    %5976 = vadd.xlane.f32.xlu0 %v5975
    %v5977 = vpop.xlane.xlu0 %5976
    %v5978 = vmul.f32 %v5974, %v884
    %v5979 = vmul.f32 %v5977, %v884
    %v5980 = vsub.f32 %v5968, %v5978
    %v5981 = vsub.f32 %v5969, %v5979
    %v5982 = vmul.f32 %v5980, %v5980
    %v5983 = vmul.f32 %v5981, %v5981
    %v5984 = vsel %vm871, %v5982, 0.0
    %5985 = vadd.xlane.f32.xlu0 %v5984
    %v5986 = vpop.xlane.xlu0 %5985
    %v5987 = vsel %vm871, %v5983, 0.0
    %5988 = vadd.xlane.f32.xlu0 %v5987
    %v5989 = vpop.xlane.xlu0 %5988
    %v5990 = vmul.f32 %v5986, %v884
    %v5991 = vmul.f32 %v5989, %v884
    %v5992 = vadd.f32 %v5990, 1e-05
    %v5993 = vadd.f32 %v5991, 1e-05
    %v5994 = vrsqrt.pop %v5992
    %v5995 = vmul.f32 %v5994, %v5992
    %v5996 = vmul.f32 %v5995, %v5994
    %v5997 = vmul.f32 0.5, %v5996
    %v5998 = vsub.f32 1.5, %v5997
    %v5999 = vmul.f32 %v5994, %v5998
    %vm6000 = vweird.f32 %v5992
    %vm6001 = vweird.f32 %v5994
    %vm6002 = vmor %vm6000, %vm6001
    %v6003 = vsel %vm6002, %v5994, %v5999
    %v6004 = vrsqrt.pop %v5993
    %v6005 = vmul.f32 %v6004, %v5993
    %v6006 = vmul.f32 %v6005, %v6004
    %v6007 = vmul.f32 0.5, %v6006
    %v6008 = vsub.f32 1.5, %v6007
    %v6009 = vmul.f32 %v6004, %v6008
    %vm6010 = vweird.f32 %v5993
    %vm6011 = vweird.f32 %v6004
    %vm6012 = vmor %vm6010, %vm6011
    %v6013 = vsel %vm6012, %v6004, %v6009
    %v6014 = vmul.f32 %v5980, %v6003
    %v6015 = vmul.f32 %v5981, %v6013
    %v6017 = vperm.slane %v5970, 0
    %v6019 = vmul.f32 %v6014, %v6017
    %v6020 = vmul.f32 %v6015, %v6017
    %v6022 = vperm.slane %v5971, 0
    %v6024 = vadd.f32 %v6019, %v6022
    %v6025 = vadd.f32 %v6020, %v6022
    %s6026 = scalar_lea.vmem %s79, 32
    %v6027 = vld [vmem:[%s6026] sm:$0xff]
    %v6028 = vld [vmem:[%s6026 + $0x8] sm:$0xff]
    %v6029 = vld [vmem:[%s6026 + $0x10] sm:$0xff]
    %v6030 = vld [vmem:[%s6026 + $0x18] sm:$0xff]
    %s6031 = scalar_lea.vmem [#allocation34], 1
    %v6032 = vld [vmem:[%s6031] sm:$0x1]
    %v6034 = vperm.slane %v6032, 0
    %v6037 = vsel %vm871, %v6024, 0
    %v6040 = vsel %vm871, %v6025, 0
    %6042 = vmatpush.msra.mxu0 0.0
    %6043 = vmatpush.msra.mxu0 0.0
    %6044 = vmatpush.msra.mxu0 0.0
    %6045 = vmatpush.msra.mxu0 0.0
    %6046 = vmatpush.msra.mxu0 0.0
    %6047 = vmatpush.msra.mxu0 0.0
    %6048 = vmatpush.msra.mxu0 0.0
    %6049 = vmatpush.msra.mxu0 0.0
    %6050 = vmatpush.msra.mxu0 0.0
    %6051 = vmatpush.msra.mxu0 0.0
    %6052 = vmatpush.msra.mxu0 0.0
    %6053 = vmatpush.msra.mxu0 0.0
    %6054 = vmatpush.msra.mxu0 %v6030
    %6055 = vmatpush.msra.mxu0 %v6029
    %6056 = vmatpush.msra.mxu0 %v6028
    %6057 = vmatpush.msra.mxu0 %v6027
    %6058 = vmatmul.f32.gmra.mxu0 %v6037
    %v6059 = vpop.f32.mrf.mxu0
    %v6060 = vadd.f32 %v6034, %v6059
    %6061 = vmatmul.f32.gmra.mxu0 %v6040
    %v6062 = vpop.f32.mrf.mxu0
    %v6063 = vadd.f32 %v6034, %v6062
    %6064 = vdwg.mxu0
    %6066 = vrot.lane.b32.xlu0 %v6060, 96
    %v6067 = vpop.permute.xlu0 %6066
    %v6068 = vsel %vm977, %v6060, 0
    %v6070 = vsel %vm977, %v6067, 0
    %6072 = vmatpush.xpose.msra.mxu0 0.0
    %6073 = vmatpush.xpose.msra.mxu0 0.0
    %6074 = vmatpush.xpose.msra.mxu0 0.0
    %6075 = vmatpush.xpose.msra.mxu0 0.0
    %6076 = vmatpush.xpose.msra.mxu0 0.0
    %6077 = vmatpush.xpose.msra.mxu0 0.0
    %6078 = vmatpush.xpose.msra.mxu0 0.0
    %6079 = vmatpush.xpose.msra.mxu0 0.0
    %6080 = vmatpush.xpose.msra.mxu0 0.0
    %6081 = vmatpush.xpose.msra.mxu0 0.0
    %6082 = vmatpush.xpose.msra.mxu0 0.0
    %6083 = vmatpush.xpose.msra.mxu0 0.0
    %6084 = vmatpush.xpose.msra.mxu0 0.0
    %6085 = vmatpush.xpose.msra.mxu0 0.0
    %6086 = vmatpush.xpose.msra.mxu0 0.0
    %6087 = vmatpush.xpose.msra.mxu0 %v6070
    %6088 = vmatmul.f32.gmra.mxu0 %v6068
    %v6089 = vpop.f32.mrf.mxu0
    %v6090 = vadd.f32 %v806, %v6089
    %6091 = vdwg.mxu0
    %6093 = vrot.lane.b32.xlu0 %v6063, 96
    %v6094 = vpop.permute.xlu0 %6093
    %v6095 = vsel %vm977, %v6063, 0
    %v6097 = vsel %vm977, %v6094, 0
    %6099 = vmatpush.xpose.msra.mxu0 0.0
    %6100 = vmatpush.xpose.msra.mxu0 0.0
    %6101 = vmatpush.xpose.msra.mxu0 0.0
    %6102 = vmatpush.xpose.msra.mxu0 0.0
    %6103 = vmatpush.xpose.msra.mxu0 0.0
    %6104 = vmatpush.xpose.msra.mxu0 0.0
    %6105 = vmatpush.xpose.msra.mxu0 0.0
    %6106 = vmatpush.xpose.msra.mxu0 0.0
    %6107 = vmatpush.xpose.msra.mxu0 0.0
    %6108 = vmatpush.xpose.msra.mxu0 0.0
    %6109 = vmatpush.xpose.msra.mxu0 0.0
    %6110 = vmatpush.xpose.msra.mxu0 0.0
    %6111 = vmatpush.xpose.msra.mxu0 0.0
    %6112 = vmatpush.xpose.msra.mxu0 0.0
    %6113 = vmatpush.xpose.msra.mxu0 0.0
    %6114 = vmatpush.xpose.msra.mxu0 %v6097
    %6115 = vmatmul.f32.gmra.mxu0 %v6095
    %v6116 = vpop.f32.mrf.mxu0
    %v6117 = vadd.f32 %v807, %v6116
    %6118 = vdwg.mxu0
    %v6119 = vsel %vm977, %v6090, -inf
    %6120 = vmax.xlane.f32.xlu0 %v6119
    %v6121 = vpop.xlane.xlu0 %6120
    %v6122 = vsel %vm977, %v6117, -inf
    %6123 = vmax.xlane.f32.xlu0 %v6122
    %v6124 = vpop.xlane.xlu0 %6123
    %v6125 = vsub.f32 %v6090, %v6121
    %v6126 = vsub.f32 %v6117, %v6124
    %v6127 = vmul.f32 %v6125, 1.442695
    %v6128 = vpow.pop %v6127
    %v6129 = vmul.f32 %v6126, 1.442695
    %v6130 = vpow.pop %v6129
    %v6131 = vsel %vm977, %v6128, 0.0
    %6132 = vadd.xlane.f32.xlu0 %v6131
    %v6133 = vpop.xlane.xlu0 %6132
    %v6134 = vsel %vm977, %v6130, 0.0
    %6135 = vadd.xlane.f32.xlu0 %v6134
    %v6136 = vpop.xlane.xlu0 %6135
    %v6137 = vrcp.pop %v6133
    %v6138 = vrcp.pop %v6136
    %v6139 = vmul.f32 %v6128, %v6137
    %v6140 = vmul.f32 %v6130, %v6138
    %6141 = vrot.lane.b32.xlu0 %v6060, 64
    %v6142 = vpop.permute.xlu0 %6141
    %v6145 = vsel %vm977, %v6139, 0
    %6147 = vmatpush.msra.mxu0 0.0
    %6148 = vmatpush.msra.mxu0 0.0
    %6149 = vmatpush.msra.mxu0 0.0
    %6150 = vmatpush.msra.mxu0 0.0
    %6151 = vmatpush.msra.mxu0 0.0
    %6152 = vmatpush.msra.mxu0 0.0
    %6153 = vmatpush.msra.mxu0 0.0
    %6154 = vmatpush.msra.mxu0 0.0
    %6155 = vmatpush.msra.mxu0 0.0
    %6156 = vmatpush.msra.mxu0 0.0
    %6157 = vmatpush.msra.mxu0 0.0
    %6158 = vmatpush.msra.mxu0 0.0
    %6159 = vmatpush.msra.mxu0 0.0
    %6160 = vmatpush.msra.mxu0 0.0
    %6161 = vmatpush.msra.mxu0 0.0
    %6162 = vmatpush.msra.mxu0 %v6142
    %6163 = vmatmul.f32.gmra.mxu0 %v6145
    %v6164 = vpop.f32.mrf.mxu0
    %v6165 = vadd.f32 0.0, %v6164
    %6166 = vdwg.mxu0
    %6167 = vrot.lane.b32.xlu0 %v6063, 64
    %v6168 = vpop.permute.xlu0 %6167
    %v6171 = vsel %vm977, %v6140, 0
    %6173 = vmatpush.msra.mxu0 0.0
    %6174 = vmatpush.msra.mxu0 0.0
    %6175 = vmatpush.msra.mxu0 0.0
    %6176 = vmatpush.msra.mxu0 0.0
    %6177 = vmatpush.msra.mxu0 0.0
    %6178 = vmatpush.msra.mxu0 0.0
    %6179 = vmatpush.msra.mxu0 0.0
    %6180 = vmatpush.msra.mxu0 0.0
    %6181 = vmatpush.msra.mxu0 0.0
    %6182 = vmatpush.msra.mxu0 0.0
    %6183 = vmatpush.msra.mxu0 0.0
    %6184 = vmatpush.msra.mxu0 0.0
    %6185 = vmatpush.msra.mxu0 0.0
    %6186 = vmatpush.msra.mxu0 0.0
    %6187 = vmatpush.msra.mxu0 0.0
    %6188 = vmatpush.msra.mxu0 %v6168
    %6189 = vmatmul.f32.gmra.mxu0 %v6171
    %v6190 = vpop.f32.mrf.mxu0
    %v6191 = vadd.f32 0.0, %v6190
    %6192 = vdwg.mxu0
    %6193 = vrot.lane.b32.xlu0 %v6060, 120
    %v6194 = vpop.permute.xlu0 %6193
    %6195 = vrot.lane.b32.xlu0 %v6060, 88
    %v6196 = vpop.permute.xlu0 %6195
    %v6197 = vsel %vm977, %v6194, 0
    %v6199 = vsel %vm977, %v6196, 0
    %6201 = vmatpush.xpose.msra.mxu0 0.0
    %6202 = vmatpush.xpose.msra.mxu0 0.0
    %6203 = vmatpush.xpose.msra.mxu0 0.0
    %6204 = vmatpush.xpose.msra.mxu0 0.0
    %6205 = vmatpush.xpose.msra.mxu0 0.0
    %6206 = vmatpush.xpose.msra.mxu0 0.0
    %6207 = vmatpush.xpose.msra.mxu0 0.0
    %6208 = vmatpush.xpose.msra.mxu0 0.0
    %6209 = vmatpush.xpose.msra.mxu0 0.0
    %6210 = vmatpush.xpose.msra.mxu0 0.0
    %6211 = vmatpush.xpose.msra.mxu0 0.0
    %6212 = vmatpush.xpose.msra.mxu0 0.0
    %6213 = vmatpush.xpose.msra.mxu0 0.0
    %6214 = vmatpush.xpose.msra.mxu0 0.0
    %6215 = vmatpush.xpose.msra.mxu0 0.0
    %6216 = vmatpush.xpose.msra.mxu0 %v6199
    %6217 = vmatmul.f32.gmra.mxu0 %v6197
    %v6218 = vpop.f32.mrf.mxu0
    %v6219 = vadd.f32 %v806, %v6218
    %6220 = vdwg.mxu0
    %6221 = vrot.lane.b32.xlu0 %v6063, 120
    %v6222 = vpop.permute.xlu0 %6221
    %6223 = vrot.lane.b32.xlu0 %v6063, 88
    %v6224 = vpop.permute.xlu0 %6223
    %v6225 = vsel %vm977, %v6222, 0
    %v6227 = vsel %vm977, %v6224, 0
    %6229 = vmatpush.xpose.msra.mxu0 0.0
    %6230 = vmatpush.xpose.msra.mxu0 0.0
    %6231 = vmatpush.xpose.msra.mxu0 0.0
    %6232 = vmatpush.xpose.msra.mxu0 0.0
    %6233 = vmatpush.xpose.msra.mxu0 0.0
    %6234 = vmatpush.xpose.msra.mxu0 0.0
    %6235 = vmatpush.xpose.msra.mxu0 0.0
    %6236 = vmatpush.xpose.msra.mxu0 0.0
    %6237 = vmatpush.xpose.msra.mxu0 0.0
    %6238 = vmatpush.xpose.msra.mxu0 0.0
    %6239 = vmatpush.xpose.msra.mxu0 0.0
    %6240 = vmatpush.xpose.msra.mxu0 0.0
    %6241 = vmatpush.xpose.msra.mxu0 0.0
    %6242 = vmatpush.xpose.msra.mxu0 0.0
    %6243 = vmatpush.xpose.msra.mxu0 0.0
    %6244 = vmatpush.xpose.msra.mxu0 %v6227
    %6245 = vmatmul.f32.gmra.mxu0 %v6225
    %v6246 = vpop.f32.mrf.mxu0
    %v6247 = vadd.f32 %v807, %v6246
    %6248 = vdwg.mxu0
    %v6249 = vsel %vm977, %v6219, -inf
    %6250 = vmax.xlane.f32.xlu0 %v6249
    %v6251 = vpop.xlane.xlu0 %6250
    %v6252 = vsel %vm977, %v6247, -inf
    %6253 = vmax.xlane.f32.xlu0 %v6252
    %v6254 = vpop.xlane.xlu0 %6253
    %v6255 = vsub.f32 %v6219, %v6251
    %v6256 = vsub.f32 %v6247, %v6254
    %v6257 = vmul.f32 %v6255, 1.442695
    %v6258 = vpow.pop %v6257
    %v6259 = vmul.f32 %v6256, 1.442695
    %v6260 = vpow.pop %v6259
    %v6261 = vsel %vm977, %v6258, 0.0
    %6262 = vadd.xlane.f32.xlu0 %v6261
    %v6263 = vpop.xlane.xlu0 %6262
    %v6264 = vsel %vm977, %v6260, 0.0
    %6265 = vadd.xlane.f32.xlu0 %v6264
    %v6266 = vpop.xlane.xlu0 %6265
    %v6267 = vrcp.pop %v6263
    %v6268 = vrcp.pop %v6266
    %v6269 = vmul.f32 %v6258, %v6267
    %v6270 = vmul.f32 %v6260, %v6268
    %6271 = vrot.lane.b32.xlu0 %v6060, 56
    %v6272 = vpop.permute.xlu0 %6271
    %v6275 = vsel %vm977, %v6269, 0
    %6277 = vmatpush.msra.mxu0 0.0
    %6278 = vmatpush.msra.mxu0 0.0
    %6279 = vmatpush.msra.mxu0 0.0
    %6280 = vmatpush.msra.mxu0 0.0
    %6281 = vmatpush.msra.mxu0 0.0
    %6282 = vmatpush.msra.mxu0 0.0
    %6283 = vmatpush.msra.mxu0 0.0
    %6284 = vmatpush.msra.mxu0 0.0
    %6285 = vmatpush.msra.mxu0 0.0
    %6286 = vmatpush.msra.mxu0 0.0
    %6287 = vmatpush.msra.mxu0 0.0
    %6288 = vmatpush.msra.mxu0 0.0
    %6289 = vmatpush.msra.mxu0 0.0
    %6290 = vmatpush.msra.mxu0 0.0
    %6291 = vmatpush.msra.mxu0 0.0
    %6292 = vmatpush.msra.mxu0 %v6272
    %6293 = vmatmul.f32.gmra.mxu0 %v6275
    %v6294 = vpop.f32.mrf.mxu0
    %v6295 = vadd.f32 0.0, %v6294
    %6296 = vdwg.mxu0
    %6297 = vrot.lane.b32.xlu0 %v6063, 56
    %v6298 = vpop.permute.xlu0 %6297
    %v6301 = vsel %vm977, %v6270, 0
    %6303 = vmatpush.msra.mxu0 0.0
    %6304 = vmatpush.msra.mxu0 0.0
    %6305 = vmatpush.msra.mxu0 0.0
    %6306 = vmatpush.msra.mxu0 0.0
    %6307 = vmatpush.msra.mxu0 0.0
    %6308 = vmatpush.msra.mxu0 0.0
    %6309 = vmatpush.msra.mxu0 0.0
    %6310 = vmatpush.msra.mxu0 0.0
    %6311 = vmatpush.msra.mxu0 0.0
    %6312 = vmatpush.msra.mxu0 0.0
    %6313 = vmatpush.msra.mxu0 0.0
    %6314 = vmatpush.msra.mxu0 0.0
    %6315 = vmatpush.msra.mxu0 0.0
    %6316 = vmatpush.msra.mxu0 0.0
    %6317 = vmatpush.msra.mxu0 0.0
    %6318 = vmatpush.msra.mxu0 %v6298
    %6319 = vmatmul.f32.gmra.mxu0 %v6301
    %v6320 = vpop.f32.mrf.mxu0
    %v6321 = vadd.f32 0.0, %v6320
    %6322 = vdwg.mxu0
    %6323 = vrot.lane.b32.xlu0 %v6060, 112
    %v6324 = vpop.permute.xlu0 %6323
    %6325 = vrot.lane.b32.xlu0 %v6060, 80
    %v6326 = vpop.permute.xlu0 %6325
    %v6327 = vsel %vm977, %v6324, 0
    %v6329 = vsel %vm977, %v6326, 0
    %6331 = vmatpush.xpose.msra.mxu0 0.0
    %6332 = vmatpush.xpose.msra.mxu0 0.0
    %6333 = vmatpush.xpose.msra.mxu0 0.0
    %6334 = vmatpush.xpose.msra.mxu0 0.0
    %6335 = vmatpush.xpose.msra.mxu0 0.0
    %6336 = vmatpush.xpose.msra.mxu0 0.0
    %6337 = vmatpush.xpose.msra.mxu0 0.0
    %6338 = vmatpush.xpose.msra.mxu0 0.0
    %6339 = vmatpush.xpose.msra.mxu0 0.0
    %6340 = vmatpush.xpose.msra.mxu0 0.0
    %6341 = vmatpush.xpose.msra.mxu0 0.0
    %6342 = vmatpush.xpose.msra.mxu0 0.0
    %6343 = vmatpush.xpose.msra.mxu0 0.0
    %6344 = vmatpush.xpose.msra.mxu0 0.0
    %6345 = vmatpush.xpose.msra.mxu0 0.0
    %6346 = vmatpush.xpose.msra.mxu0 %v6329
    %6347 = vmatmul.f32.gmra.mxu0 %v6327
    %v6348 = vpop.f32.mrf.mxu0
    %v6349 = vadd.f32 %v806, %v6348
    %6350 = vdwg.mxu0
    %6351 = vrot.lane.b32.xlu0 %v6063, 112
    %v6352 = vpop.permute.xlu0 %6351
    %6353 = vrot.lane.b32.xlu0 %v6063, 80
    %v6354 = vpop.permute.xlu0 %6353
    %v6355 = vsel %vm977, %v6352, 0
    %v6357 = vsel %vm977, %v6354, 0
    %6359 = vmatpush.xpose.msra.mxu0 0.0
    %6360 = vmatpush.xpose.msra.mxu0 0.0
    %6361 = vmatpush.xpose.msra.mxu0 0.0
    %6362 = vmatpush.xpose.msra.mxu0 0.0
    %6363 = vmatpush.xpose.msra.mxu0 0.0
    %6364 = vmatpush.xpose.msra.mxu0 0.0
    %6365 = vmatpush.xpose.msra.mxu0 0.0
    %6366 = vmatpush.xpose.msra.mxu0 0.0
    %6367 = vmatpush.xpose.msra.mxu0 0.0
    %6368 = vmatpush.xpose.msra.mxu0 0.0
    %6369 = vmatpush.xpose.msra.mxu0 0.0
    %6370 = vmatpush.xpose.msra.mxu0 0.0
    %6371 = vmatpush.xpose.msra.mxu0 0.0
    %6372 = vmatpush.xpose.msra.mxu0 0.0
    %6373 = vmatpush.xpose.msra.mxu0 0.0
    %6374 = vmatpush.xpose.msra.mxu0 %v6357
    %6375 = vmatmul.f32.gmra.mxu0 %v6355
    %v6376 = vpop.f32.mrf.mxu0
    %v6377 = vadd.f32 %v807, %v6376
    %6378 = vdwg.mxu0
    %v6379 = vsel %vm977, %v6349, -inf
    %6380 = vmax.xlane.f32.xlu0 %v6379
    %v6381 = vpop.xlane.xlu0 %6380
    %v6382 = vsel %vm977, %v6377, -inf
    %6383 = vmax.xlane.f32.xlu0 %v6382
    %v6384 = vpop.xlane.xlu0 %6383
    %v6385 = vsub.f32 %v6349, %v6381
    %v6386 = vsub.f32 %v6377, %v6384
    %v6387 = vmul.f32 %v6385, 1.442695
    %v6388 = vpow.pop %v6387
    %v6389 = vmul.f32 %v6386, 1.442695
    %v6390 = vpow.pop %v6389
    %v6391 = vsel %vm977, %v6388, 0.0
    %6392 = vadd.xlane.f32.xlu0 %v6391
    %v6393 = vpop.xlane.xlu0 %6392
    %v6394 = vsel %vm977, %v6390, 0.0
    %6395 = vadd.xlane.f32.xlu0 %v6394
    %v6396 = vpop.xlane.xlu0 %6395
    %v6397 = vrcp.pop %v6393
    %v6398 = vrcp.pop %v6396
    %v6399 = vmul.f32 %v6388, %v6397
    %v6400 = vmul.f32 %v6390, %v6398
    %6401 = vrot.lane.b32.xlu0 %v6060, 48
    %v6402 = vpop.permute.xlu0 %6401
    %v6405 = vsel %vm977, %v6399, 0
    %6407 = vmatpush.msra.mxu0 0.0
    %6408 = vmatpush.msra.mxu0 0.0
    %6409 = vmatpush.msra.mxu0 0.0
    %6410 = vmatpush.msra.mxu0 0.0
    %6411 = vmatpush.msra.mxu0 0.0
    %6412 = vmatpush.msra.mxu0 0.0
    %6413 = vmatpush.msra.mxu0 0.0
    %6414 = vmatpush.msra.mxu0 0.0
    %6415 = vmatpush.msra.mxu0 0.0
    %6416 = vmatpush.msra.mxu0 0.0
    %6417 = vmatpush.msra.mxu0 0.0
    %6418 = vmatpush.msra.mxu0 0.0
    %6419 = vmatpush.msra.mxu0 0.0
    %6420 = vmatpush.msra.mxu0 0.0
    %6421 = vmatpush.msra.mxu0 0.0
    %6422 = vmatpush.msra.mxu0 %v6402
    %6423 = vmatmul.f32.gmra.mxu0 %v6405
    %v6424 = vpop.f32.mrf.mxu0
    %v6425 = vadd.f32 0.0, %v6424
    %6426 = vdwg.mxu0
    %6427 = vrot.lane.b32.xlu0 %v6063, 48
    %v6428 = vpop.permute.xlu0 %6427
    %v6431 = vsel %vm977, %v6400, 0
    %6433 = vmatpush.msra.mxu0 0.0
    %6434 = vmatpush.msra.mxu0 0.0
    %6435 = vmatpush.msra.mxu0 0.0
    %6436 = vmatpush.msra.mxu0 0.0
    %6437 = vmatpush.msra.mxu0 0.0
    %6438 = vmatpush.msra.mxu0 0.0
    %6439 = vmatpush.msra.mxu0 0.0
    %6440 = vmatpush.msra.mxu0 0.0
    %6441 = vmatpush.msra.mxu0 0.0
    %6442 = vmatpush.msra.mxu0 0.0
    %6443 = vmatpush.msra.mxu0 0.0
    %6444 = vmatpush.msra.mxu0 0.0
    %6445 = vmatpush.msra.mxu0 0.0
    %6446 = vmatpush.msra.mxu0 0.0
    %6447 = vmatpush.msra.mxu0 0.0
    %6448 = vmatpush.msra.mxu0 %v6428
    %6449 = vmatmul.f32.gmra.mxu0 %v6431
    %v6450 = vpop.f32.mrf.mxu0
    %v6451 = vadd.f32 0.0, %v6450
    %6452 = vdwg.mxu0
    %6453 = vrot.lane.b32.xlu0 %v6060, 104
    %v6454 = vpop.permute.xlu0 %6453
    %6455 = vrot.lane.b32.xlu0 %v6060, 72
    %v6456 = vpop.permute.xlu0 %6455
    %v6457 = vsel %vm977, %v6454, 0
    %v6459 = vsel %vm977, %v6456, 0
    %6461 = vmatpush.xpose.msra.mxu0 0.0
    %6462 = vmatpush.xpose.msra.mxu0 0.0
    %6463 = vmatpush.xpose.msra.mxu0 0.0
    %6464 = vmatpush.xpose.msra.mxu0 0.0
    %6465 = vmatpush.xpose.msra.mxu0 0.0
    %6466 = vmatpush.xpose.msra.mxu0 0.0
    %6467 = vmatpush.xpose.msra.mxu0 0.0
    %6468 = vmatpush.xpose.msra.mxu0 0.0
    %6469 = vmatpush.xpose.msra.mxu0 0.0
    %6470 = vmatpush.xpose.msra.mxu0 0.0
    %6471 = vmatpush.xpose.msra.mxu0 0.0
    %6472 = vmatpush.xpose.msra.mxu0 0.0
    %6473 = vmatpush.xpose.msra.mxu0 0.0
    %6474 = vmatpush.xpose.msra.mxu0 0.0
    %6475 = vmatpush.xpose.msra.mxu0 0.0
    %6476 = vmatpush.xpose.msra.mxu0 %v6459
    %6477 = vmatmul.f32.gmra.mxu0 %v6457
    %v6478 = vpop.f32.mrf.mxu0
    %v6479 = vadd.f32 %v806, %v6478
    %6480 = vdwg.mxu0
    %6481 = vrot.lane.b32.xlu0 %v6063, 104
    %v6482 = vpop.permute.xlu0 %6481
    %6483 = vrot.lane.b32.xlu0 %v6063, 72
    %v6484 = vpop.permute.xlu0 %6483
    %v6485 = vsel %vm977, %v6482, 0
    %v6487 = vsel %vm977, %v6484, 0
    %6489 = vmatpush.xpose.msra.mxu0 0.0
    %6490 = vmatpush.xpose.msra.mxu0 0.0
    %6491 = vmatpush.xpose.msra.mxu0 0.0
    %6492 = vmatpush.xpose.msra.mxu0 0.0
    %6493 = vmatpush.xpose.msra.mxu0 0.0
    %6494 = vmatpush.xpose.msra.mxu0 0.0
    %6495 = vmatpush.xpose.msra.mxu0 0.0
    %6496 = vmatpush.xpose.msra.mxu0 0.0
    %6497 = vmatpush.xpose.msra.mxu0 0.0
    %6498 = vmatpush.xpose.msra.mxu0 0.0
    %6499 = vmatpush.xpose.msra.mxu0 0.0
    %6500 = vmatpush.xpose.msra.mxu0 0.0
    %6501 = vmatpush.xpose.msra.mxu0 0.0
    %6502 = vmatpush.xpose.msra.mxu0 0.0
    %6503 = vmatpush.xpose.msra.mxu0 0.0
    %6504 = vmatpush.xpose.msra.mxu0 %v6487
    %6505 = vmatmul.f32.gmra.mxu0 %v6485
    %v6506 = vpop.f32.mrf.mxu0
    %v6507 = vadd.f32 %v807, %v6506
    %6508 = vdwg.mxu0
    %v6509 = vsel %vm977, %v6479, -inf
    %6510 = vmax.xlane.f32.xlu0 %v6509
    %v6511 = vpop.xlane.xlu0 %6510
    %v6512 = vsel %vm977, %v6507, -inf
    %6513 = vmax.xlane.f32.xlu0 %v6512
    %v6514 = vpop.xlane.xlu0 %6513
    %v6515 = vsub.f32 %v6479, %v6511
    %v6516 = vsub.f32 %v6507, %v6514
    %v6517 = vmul.f32 %v6515, 1.442695
    %v6518 = vpow.pop %v6517
    %v6519 = vmul.f32 %v6516, 1.442695
    %v6520 = vpow.pop %v6519
    %v6521 = vsel %vm977, %v6518, 0.0
    %6522 = vadd.xlane.f32.xlu0 %v6521
    %v6523 = vpop.xlane.xlu0 %6522
    %v6524 = vsel %vm977, %v6520, 0.0
    %6525 = vadd.xlane.f32.xlu0 %v6524
    %v6526 = vpop.xlane.xlu0 %6525
    %v6527 = vrcp.pop %v6523
    %v6528 = vrcp.pop %v6526
    %v6529 = vmul.f32 %v6518, %v6527
    %v6530 = vmul.f32 %v6520, %v6528
    %6531 = vrot.lane.b32.xlu0 %v6060, 40
    %v6532 = vpop.permute.xlu0 %6531
    %v6535 = vsel %vm977, %v6529, 0
    %6537 = vmatpush.msra.mxu0 0.0
    %6538 = vmatpush.msra.mxu0 0.0
    %6539 = vmatpush.msra.mxu0 0.0
    %6540 = vmatpush.msra.mxu0 0.0
    %6541 = vmatpush.msra.mxu0 0.0
    %6542 = vmatpush.msra.mxu0 0.0
    %6543 = vmatpush.msra.mxu0 0.0
    %6544 = vmatpush.msra.mxu0 0.0
    %6545 = vmatpush.msra.mxu0 0.0
    %6546 = vmatpush.msra.mxu0 0.0
    %6547 = vmatpush.msra.mxu0 0.0
    %6548 = vmatpush.msra.mxu0 0.0
    %6549 = vmatpush.msra.mxu0 0.0
    %6550 = vmatpush.msra.mxu0 0.0
    %6551 = vmatpush.msra.mxu0 0.0
    %6552 = vmatpush.msra.mxu0 %v6532
    %6553 = vmatmul.f32.gmra.mxu0 %v6535
    %v6554 = vpop.f32.mrf.mxu0
    %v6555 = vadd.f32 0.0, %v6554
    %6556 = vdwg.mxu0
    %6557 = vrot.lane.b32.xlu0 %v6063, 40
    %v6558 = vpop.permute.xlu0 %6557
    %v6561 = vsel %vm977, %v6530, 0
    %6563 = vmatpush.msra.mxu0 0.0
    %6564 = vmatpush.msra.mxu0 0.0
    %6565 = vmatpush.msra.mxu0 0.0
    %6566 = vmatpush.msra.mxu0 0.0
    %6567 = vmatpush.msra.mxu0 0.0
    %6568 = vmatpush.msra.mxu0 0.0
    %6569 = vmatpush.msra.mxu0 0.0
    %6570 = vmatpush.msra.mxu0 0.0
    %6571 = vmatpush.msra.mxu0 0.0
    %6572 = vmatpush.msra.mxu0 0.0
    %6573 = vmatpush.msra.mxu0 0.0
    %6574 = vmatpush.msra.mxu0 0.0
    %6575 = vmatpush.msra.mxu0 0.0
    %6576 = vmatpush.msra.mxu0 0.0
    %6577 = vmatpush.msra.mxu0 0.0
    %6578 = vmatpush.msra.mxu0 %v6558
    %6579 = vmatmul.f32.gmra.mxu0 %v6561
    %v6580 = vpop.f32.mrf.mxu0
    %v6581 = vadd.f32 0.0, %v6580
    %6582 = vdwg.mxu0
    %6585 = vrot.lane.b32.xlu0 %v6295, 8
    %v6586 = vpop.permute.xlu0 %6585
    %6587 = vrot.lane.b32.xlu0 %v6321, 8
    %v6588 = vpop.permute.xlu0 %6587
    %6593 = vrot.lane.b32.xlu0 %v6425, 16
    %v6594 = vpop.permute.xlu0 %6593
    %6595 = vrot.lane.b32.xlu0 %v6451, 16
    %v6596 = vpop.permute.xlu0 %6595
    %6601 = vrot.lane.b32.xlu0 %v6555, 24
    %v6602 = vpop.permute.xlu0 %6601
    %6603 = vrot.lane.b32.xlu0 %v6581, 24
    %v6604 = vpop.permute.xlu0 %6603
    %v6607 = vsel %vm977, %v6165, %v6586
    %v6608 = vsel %vm977, %v6191, %v6588
    %v6609 = vsel %vm1519, %v6607, %v6594
    %v6610 = vsel %vm1519, %v6608, %v6596
    %v6611 = vsel %vm1522, %v6609, %v6602
    %v6612 = vsel %vm1522, %v6610, %v6604
    %s6613 = scalar_lea.vmem %s83, 32
    %v6614 = vld [vmem:[%s6613] sm:$0xff]
    %v6615 = vld [vmem:[%s6613 + $0x8] sm:$0xff]
    %v6616 = vld [vmem:[%s6613 + $0x10] sm:$0xff]
    %v6617 = vld [vmem:[%s6613 + $0x18] sm:$0xff]
    %s6618 = scalar_lea.vmem [#allocation35], 1
    %v6619 = vld [vmem:[%s6618] sm:$0x1]
    %v6621 = vperm.slane %v6619, 0
    %v6624 = vsel %vm871, %v6611, 0
    %v6627 = vsel %vm871, %v6612, 0
    %6629 = vmatpush.msra.mxu0 0.0
    %6630 = vmatpush.msra.mxu0 0.0
    %6631 = vmatpush.msra.mxu0 0.0
    %6632 = vmatpush.msra.mxu0 0.0
    %6633 = vmatpush.msra.mxu0 0.0
    %6634 = vmatpush.msra.mxu0 0.0
    %6635 = vmatpush.msra.mxu0 0.0
    %6636 = vmatpush.msra.mxu0 0.0
    %6637 = vmatpush.msra.mxu0 0.0
    %6638 = vmatpush.msra.mxu0 0.0
    %6639 = vmatpush.msra.mxu0 0.0
    %6640 = vmatpush.msra.mxu0 0.0
    %6641 = vmatpush.msra.mxu0 %v6617
    %6642 = vmatpush.msra.mxu0 %v6616
    %6643 = vmatpush.msra.mxu0 %v6615
    %6644 = vmatpush.msra.mxu0 %v6614
    %6645 = vmatmul.f32.gmra.mxu0 %v6624
    %v6646 = vpop.f32.mrf.mxu0
    %v6647 = vadd.f32 %v6621, %v6646
    %6648 = vmatmul.f32.gmra.mxu0 %v6627
    %v6649 = vpop.f32.mrf.mxu0
    %v6650 = vadd.f32 %v6621, %v6649
    %6651 = vdwg.mxu0
    %v6652 = vadd.f32 %v6024, %v6647
    %v6653 = vadd.f32 %v6025, %v6650
    %s6654 = scalar_lea.vmem [#allocation37], 1
    %v6655 = vld [vmem:[%s6654] sm:$0x1]
    %s6656 = scalar_lea.vmem [#allocation38], 1
    %v6657 = vld [vmem:[%s6656] sm:$0x1]
    %v6658 = vsel %vm871, %v6652, 0.0
    %6659 = vadd.xlane.f32.xlu0 %v6658
    %v6660 = vpop.xlane.xlu0 %6659
    %v6661 = vsel %vm871, %v6653, 0.0
    %6662 = vadd.xlane.f32.xlu0 %v6661
    %v6663 = vpop.xlane.xlu0 %6662
    %v6664 = vmul.f32 %v6660, %v884
    %v6665 = vmul.f32 %v6663, %v884
    %v6666 = vsub.f32 %v6652, %v6664
    %v6667 = vsub.f32 %v6653, %v6665
    %v6668 = vmul.f32 %v6666, %v6666
    %v6669 = vmul.f32 %v6667, %v6667
    %v6670 = vsel %vm871, %v6668, 0.0
    %6671 = vadd.xlane.f32.xlu0 %v6670
    %v6672 = vpop.xlane.xlu0 %6671
    %v6673 = vsel %vm871, %v6669, 0.0
    %6674 = vadd.xlane.f32.xlu0 %v6673
    %v6675 = vpop.xlane.xlu0 %6674
    %v6676 = vmul.f32 %v6672, %v884
    %v6677 = vmul.f32 %v6675, %v884
    %v6678 = vadd.f32 %v6676, 1e-05
    %v6679 = vadd.f32 %v6677, 1e-05
    %v6680 = vrsqrt.pop %v6678
    %v6681 = vmul.f32 %v6680, %v6678
    %v6682 = vmul.f32 %v6681, %v6680
    %v6683 = vmul.f32 0.5, %v6682
    %v6684 = vsub.f32 1.5, %v6683
    %v6685 = vmul.f32 %v6680, %v6684
    %vm6686 = vweird.f32 %v6678
    %vm6687 = vweird.f32 %v6680
    %vm6688 = vmor %vm6686, %vm6687
    %v6689 = vsel %vm6688, %v6680, %v6685
    %v6690 = vrsqrt.pop %v6679
    %v6691 = vmul.f32 %v6690, %v6679
    %v6692 = vmul.f32 %v6691, %v6690
    %v6693 = vmul.f32 0.5, %v6692
    %v6694 = vsub.f32 1.5, %v6693
    %v6695 = vmul.f32 %v6690, %v6694
    %vm6696 = vweird.f32 %v6679
    %vm6697 = vweird.f32 %v6690
    %vm6698 = vmor %vm6696, %vm6697
    %v6699 = vsel %vm6698, %v6690, %v6695
    %v6700 = vmul.f32 %v6666, %v6689
    %v6701 = vmul.f32 %v6667, %v6699
    %v6703 = vperm.slane %v6655, 0
    %v6705 = vmul.f32 %v6700, %v6703
    %v6706 = vmul.f32 %v6701, %v6703
    %v6708 = vperm.slane %v6657, 0
    %v6710 = vadd.f32 %v6705, %v6708
    %v6711 = vadd.f32 %v6706, %v6708
    %s6712 = scalar_lea.vmem %s91, 32
    %v6713 = vld [vmem:[%s6712] sm:$0xff]
    %v6714 = vld [vmem:[%s6712 + $0x8] sm:$0xff]
    %v6715 = vld [vmem:[%s6712 + $0x10] sm:$0xff]
    %v6716 = vld [vmem:[%s6712 + $0x18] sm:$0xff]
    %s6717 = scalar_lea.vmem [#allocation40], 1
    %v6718 = vld [vmem:[%s6717] sm:$0x1]
    %v6720 = vperm.slane %v6718, 0
    %v6723 = vsel %vm871, %v6710, 0
    %v6726 = vsel %vm871, %v6711, 0
    %6728 = vmatpush.msra.mxu0 0.0
    %6729 = vmatpush.msra.mxu0 0.0
    %6730 = vmatpush.msra.mxu0 0.0
    %6731 = vmatpush.msra.mxu0 0.0
    %6732 = vmatpush.msra.mxu0 0.0
    %6733 = vmatpush.msra.mxu0 0.0
    %6734 = vmatpush.msra.mxu0 0.0
    %6735 = vmatpush.msra.mxu0 0.0
    %6736 = vmatpush.msra.mxu0 0.0
    %6737 = vmatpush.msra.mxu0 0.0
    %6738 = vmatpush.msra.mxu0 0.0
    %6739 = vmatpush.msra.mxu0 0.0
    %6740 = vmatpush.msra.mxu0 %v6716
    %6741 = vmatpush.msra.mxu0 %v6715
    %6742 = vmatpush.msra.mxu0 %v6714
    %6743 = vmatpush.msra.mxu0 %v6713
    %6744 = vmatmul.f32.gmra.mxu0 %v6723
    %v6745 = vpop.f32.mrf.mxu0
    %v6746 = vadd.f32 %v6720, %v6745
    %6747 = vmatmul.f32.gmra.mxu0 %v6726
    %v6748 = vpop.f32.mrf.mxu0
    %v6749 = vadd.f32 %v6720, %v6748
    %6750 = vdwg.mxu0
    %s6751 = scalar_lea.vmem %s95, 32
    %v6752 = vld [vmem:[%s6751] sm:$0xff]
    %v6753 = vld [vmem:[%s6751 + $0x8] sm:$0xff]
    %v6754 = vld [vmem:[%s6751 + $0x10] sm:$0xff]
    %v6755 = vld [vmem:[%s6751 + $0x18] sm:$0xff]
    %s6756 = scalar_lea.vmem [#allocation41], 1
    %v6757 = vld [vmem:[%s6756] sm:$0x1]
    %v6759 = vperm.slane %v6757, 0
    %6761 = vmatpush.msra.mxu0 0.0
    %6762 = vmatpush.msra.mxu0 0.0
    %6763 = vmatpush.msra.mxu0 0.0
    %6764 = vmatpush.msra.mxu0 0.0
    %6765 = vmatpush.msra.mxu0 0.0
    %6766 = vmatpush.msra.mxu0 0.0
    %6767 = vmatpush.msra.mxu0 0.0
    %6768 = vmatpush.msra.mxu0 0.0
    %6769 = vmatpush.msra.mxu0 0.0
    %6770 = vmatpush.msra.mxu0 0.0
    %6771 = vmatpush.msra.mxu0 0.0
    %6772 = vmatpush.msra.mxu0 0.0
    %6773 = vmatpush.msra.mxu0 %v6755
    %6774 = vmatpush.msra.mxu0 %v6754
    %6775 = vmatpush.msra.mxu0 %v6753
    %6776 = vmatpush.msra.mxu0 %v6752
    %6777 = vmatmul.f32.gmra.mxu0 %v5203
    %v6778 = vpop.f32.mrf.mxu0
    %v6779 = vadd.f32 %v6759, %v6778
    %6780 = vmatmul.f32.gmra.mxu0 %v5206
    %v6781 = vpop.f32.mrf.mxu0
    %v6782 = vadd.f32 %v6759, %v6781
    %6783 = vdwg.mxu0
    %v6785 = vsel %vm977, %v6746, 0
    %v6788 = vsel %vm977, %v6779, 0
    %6790 = vmatpush.xpose.msra.mxu0 0.0
    %6791 = vmatpush.xpose.msra.mxu0 0.0
    %6792 = vmatpush.xpose.msra.mxu0 0.0
    %6793 = vmatpush.xpose.msra.mxu0 0.0
    %6794 = vmatpush.xpose.msra.mxu0 0.0
    %6795 = vmatpush.xpose.msra.mxu0 0.0
    %6796 = vmatpush.xpose.msra.mxu0 0.0
    %6797 = vmatpush.xpose.msra.mxu0 0.0
    %6798 = vmatpush.xpose.msra.mxu0 0.0
    %6799 = vmatpush.xpose.msra.mxu0 0.0
    %6800 = vmatpush.xpose.msra.mxu0 0.0
    %6801 = vmatpush.xpose.msra.mxu0 0.0
    %6802 = vmatpush.xpose.msra.mxu0 0.0
    %6803 = vmatpush.xpose.msra.mxu0 0.0
    %6804 = vmatpush.xpose.msra.mxu0 0.0
    %6805 = vmatpush.xpose.msra.mxu0 %v6788
    %6806 = vmatmul.f32.gmra.mxu0 %v6785
    %v6807 = vpop.f32.mrf.mxu0
    %v6808 = vadd.f32 %v970, %v6807
    %6809 = vdwg.mxu0
    %v6811 = vsel %vm977, %v6749, 0
    %v6814 = vsel %vm977, %v6782, 0
    %6816 = vmatpush.xpose.msra.mxu0 0.0
    %6817 = vmatpush.xpose.msra.mxu0 0.0
    %6818 = vmatpush.xpose.msra.mxu0 0.0
    %6819 = vmatpush.xpose.msra.mxu0 0.0
    %6820 = vmatpush.xpose.msra.mxu0 0.0
    %6821 = vmatpush.xpose.msra.mxu0 0.0
    %6822 = vmatpush.xpose.msra.mxu0 0.0
    %6823 = vmatpush.xpose.msra.mxu0 0.0
    %6824 = vmatpush.xpose.msra.mxu0 0.0
    %6825 = vmatpush.xpose.msra.mxu0 0.0
    %6826 = vmatpush.xpose.msra.mxu0 0.0
    %6827 = vmatpush.xpose.msra.mxu0 0.0
    %6828 = vmatpush.xpose.msra.mxu0 0.0
    %6829 = vmatpush.xpose.msra.mxu0 0.0
    %6830 = vmatpush.xpose.msra.mxu0 0.0
    %6831 = vmatpush.xpose.msra.mxu0 %v6814
    %6832 = vmatmul.f32.gmra.mxu0 %v6811
    %v6833 = vpop.f32.mrf.mxu0
    %v6834 = vadd.f32 %v971, %v6833
    %6835 = vdwg.mxu0
    %v6836 = vsel %vm977, %v6808, -inf
    %6837 = vmax.xlane.f32.xlu0 %v6836
    %v6838 = vpop.xlane.xlu0 %6837
    %v6839 = vsel %vm977, %v6834, -inf
    %6840 = vmax.xlane.f32.xlu0 %v6839
    %v6841 = vpop.xlane.xlu0 %6840
    %v6842 = vsub.f32 %v6808, %v6838
    %v6843 = vsub.f32 %v6834, %v6841
    %v6844 = vmul.f32 %v6842, 1.442695
    %v6845 = vpow.pop %v6844
    %v6846 = vmul.f32 %v6843, 1.442695
    %v6847 = vpow.pop %v6846
    %v6848 = vsel %vm977, %v6845, 0.0
    %6849 = vadd.xlane.f32.xlu0 %v6848
    %v6850 = vpop.xlane.xlu0 %6849
    %v6851 = vsel %vm977, %v6847, 0.0
    %6852 = vadd.xlane.f32.xlu0 %v6851
    %v6853 = vpop.xlane.xlu0 %6852
    %v6854 = vrcp.pop %v6850
    %v6855 = vrcp.pop %v6853
    %v6856 = vmul.f32 %v6845, %v6854
    %v6857 = vmul.f32 %v6847, %v6855
    %6858 = vrot.lane.b32.xlu0 %v6779, 96
    %v6859 = vpop.permute.xlu0 %6858
    %v6862 = vsel %vm977, %v6856, 0
    %6864 = vmatpush.msra.mxu0 0.0
    %6865 = vmatpush.msra.mxu0 0.0
    %6866 = vmatpush.msra.mxu0 0.0
    %6867 = vmatpush.msra.mxu0 0.0
    %6868 = vmatpush.msra.mxu0 0.0
    %6869 = vmatpush.msra.mxu0 0.0
    %6870 = vmatpush.msra.mxu0 0.0
    %6871 = vmatpush.msra.mxu0 0.0
    %6872 = vmatpush.msra.mxu0 0.0
    %6873 = vmatpush.msra.mxu0 0.0
    %6874 = vmatpush.msra.mxu0 0.0
    %6875 = vmatpush.msra.mxu0 0.0
    %6876 = vmatpush.msra.mxu0 0.0
    %6877 = vmatpush.msra.mxu0 0.0
    %6878 = vmatpush.msra.mxu0 0.0
    %6879 = vmatpush.msra.mxu0 %v6859
    %6880 = vmatmul.f32.gmra.mxu0 %v6862
    %v6881 = vpop.f32.mrf.mxu0
    %v6882 = vadd.f32 0.0, %v6881
    %6883 = vdwg.mxu0
    %6884 = vrot.lane.b32.xlu0 %v6782, 96
    %v6885 = vpop.permute.xlu0 %6884
    %v6888 = vsel %vm977, %v6857, 0
    %6890 = vmatpush.msra.mxu0 0.0
    %6891 = vmatpush.msra.mxu0 0.0
    %6892 = vmatpush.msra.mxu0 0.0
    %6893 = vmatpush.msra.mxu0 0.0
    %6894 = vmatpush.msra.mxu0 0.0
    %6895 = vmatpush.msra.mxu0 0.0
    %6896 = vmatpush.msra.mxu0 0.0
    %6897 = vmatpush.msra.mxu0 0.0
    %6898 = vmatpush.msra.mxu0 0.0
    %6899 = vmatpush.msra.mxu0 0.0
    %6900 = vmatpush.msra.mxu0 0.0
    %6901 = vmatpush.msra.mxu0 0.0
    %6902 = vmatpush.msra.mxu0 0.0
    %6903 = vmatpush.msra.mxu0 0.0
    %6904 = vmatpush.msra.mxu0 0.0
    %6905 = vmatpush.msra.mxu0 %v6885
    %6906 = vmatmul.f32.gmra.mxu0 %v6888
    %v6907 = vpop.f32.mrf.mxu0
    %v6908 = vadd.f32 0.0, %v6907
    %6909 = vdwg.mxu0
    %6910 = vrot.lane.b32.xlu0 %v6746, 120
    %v6911 = vpop.permute.xlu0 %6910
    %6912 = vrot.lane.b32.xlu0 %v6779, 120
    %v6913 = vpop.permute.xlu0 %6912
    %v6914 = vsel %vm977, %v6911, 0
    %v6916 = vsel %vm977, %v6913, 0
    %6918 = vmatpush.xpose.msra.mxu0 0.0
    %6919 = vmatpush.xpose.msra.mxu0 0.0
    %6920 = vmatpush.xpose.msra.mxu0 0.0
    %6921 = vmatpush.xpose.msra.mxu0 0.0
    %6922 = vmatpush.xpose.msra.mxu0 0.0
    %6923 = vmatpush.xpose.msra.mxu0 0.0
    %6924 = vmatpush.xpose.msra.mxu0 0.0
    %6925 = vmatpush.xpose.msra.mxu0 0.0
    %6926 = vmatpush.xpose.msra.mxu0 0.0
    %6927 = vmatpush.xpose.msra.mxu0 0.0
    %6928 = vmatpush.xpose.msra.mxu0 0.0
    %6929 = vmatpush.xpose.msra.mxu0 0.0
    %6930 = vmatpush.xpose.msra.mxu0 0.0
    %6931 = vmatpush.xpose.msra.mxu0 0.0
    %6932 = vmatpush.xpose.msra.mxu0 0.0
    %6933 = vmatpush.xpose.msra.mxu0 %v6916
    %6934 = vmatmul.f32.gmra.mxu0 %v6914
    %v6935 = vpop.f32.mrf.mxu0
    %v6936 = vadd.f32 %v970, %v6935
    %6937 = vdwg.mxu0
    %6938 = vrot.lane.b32.xlu0 %v6749, 120
    %v6939 = vpop.permute.xlu0 %6938
    %6940 = vrot.lane.b32.xlu0 %v6782, 120
    %v6941 = vpop.permute.xlu0 %6940
    %v6942 = vsel %vm977, %v6939, 0
    %v6944 = vsel %vm977, %v6941, 0
    %6946 = vmatpush.xpose.msra.mxu0 0.0
    %6947 = vmatpush.xpose.msra.mxu0 0.0
    %6948 = vmatpush.xpose.msra.mxu0 0.0
    %6949 = vmatpush.xpose.msra.mxu0 0.0
    %6950 = vmatpush.xpose.msra.mxu0 0.0
    %6951 = vmatpush.xpose.msra.mxu0 0.0
    %6952 = vmatpush.xpose.msra.mxu0 0.0
    %6953 = vmatpush.xpose.msra.mxu0 0.0
    %6954 = vmatpush.xpose.msra.mxu0 0.0
    %6955 = vmatpush.xpose.msra.mxu0 0.0
    %6956 = vmatpush.xpose.msra.mxu0 0.0
    %6957 = vmatpush.xpose.msra.mxu0 0.0
    %6958 = vmatpush.xpose.msra.mxu0 0.0
    %6959 = vmatpush.xpose.msra.mxu0 0.0
    %6960 = vmatpush.xpose.msra.mxu0 0.0
    %6961 = vmatpush.xpose.msra.mxu0 %v6944
    %6962 = vmatmul.f32.gmra.mxu0 %v6942
    %v6963 = vpop.f32.mrf.mxu0
    %v6964 = vadd.f32 %v971, %v6963
    %6965 = vdwg.mxu0
    %v6966 = vsel %vm977, %v6936, -inf
    %6967 = vmax.xlane.f32.xlu0 %v6966
    %v6968 = vpop.xlane.xlu0 %6967
    %v6969 = vsel %vm977, %v6964, -inf
    %6970 = vmax.xlane.f32.xlu0 %v6969
    %v6971 = vpop.xlane.xlu0 %6970
    %v6972 = vsub.f32 %v6936, %v6968
    %v6973 = vsub.f32 %v6964, %v6971
    %v6974 = vmul.f32 %v6972, 1.442695
    %v6975 = vpow.pop %v6974
    %v6976 = vmul.f32 %v6973, 1.442695
    %v6977 = vpow.pop %v6976
    %v6978 = vsel %vm977, %v6975, 0.0
    %6979 = vadd.xlane.f32.xlu0 %v6978
    %v6980 = vpop.xlane.xlu0 %6979
    %v6981 = vsel %vm977, %v6977, 0.0
    %6982 = vadd.xlane.f32.xlu0 %v6981
    %v6983 = vpop.xlane.xlu0 %6982
    %v6984 = vrcp.pop %v6980
    %v6985 = vrcp.pop %v6983
    %v6986 = vmul.f32 %v6975, %v6984
    %v6987 = vmul.f32 %v6977, %v6985
    %6988 = vrot.lane.b32.xlu0 %v6779, 88
    %v6989 = vpop.permute.xlu0 %6988
    %v6992 = vsel %vm977, %v6986, 0
    %6994 = vmatpush.msra.mxu0 0.0
    %6995 = vmatpush.msra.mxu0 0.0
    %6996 = vmatpush.msra.mxu0 0.0
    %6997 = vmatpush.msra.mxu0 0.0
    %6998 = vmatpush.msra.mxu0 0.0
    %6999 = vmatpush.msra.mxu0 0.0
    %7000 = vmatpush.msra.mxu0 0.0
    %7001 = vmatpush.msra.mxu0 0.0
    %7002 = vmatpush.msra.mxu0 0.0
    %7003 = vmatpush.msra.mxu0 0.0
    %7004 = vmatpush.msra.mxu0 0.0
    %7005 = vmatpush.msra.mxu0 0.0
    %7006 = vmatpush.msra.mxu0 0.0
    %7007 = vmatpush.msra.mxu0 0.0
    %7008 = vmatpush.msra.mxu0 0.0
    %7009 = vmatpush.msra.mxu0 %v6989
    %7010 = vmatmul.f32.gmra.mxu0 %v6992
    %v7011 = vpop.f32.mrf.mxu0
    %v7012 = vadd.f32 0.0, %v7011
    %7013 = vdwg.mxu0
    %7014 = vrot.lane.b32.xlu0 %v6782, 88
    %v7015 = vpop.permute.xlu0 %7014
    %v7018 = vsel %vm977, %v6987, 0
    %7020 = vmatpush.msra.mxu0 0.0
    %7021 = vmatpush.msra.mxu0 0.0
    %7022 = vmatpush.msra.mxu0 0.0
    %7023 = vmatpush.msra.mxu0 0.0
    %7024 = vmatpush.msra.mxu0 0.0
    %7025 = vmatpush.msra.mxu0 0.0
    %7026 = vmatpush.msra.mxu0 0.0
    %7027 = vmatpush.msra.mxu0 0.0
    %7028 = vmatpush.msra.mxu0 0.0
    %7029 = vmatpush.msra.mxu0 0.0
    %7030 = vmatpush.msra.mxu0 0.0
    %7031 = vmatpush.msra.mxu0 0.0
    %7032 = vmatpush.msra.mxu0 0.0
    %7033 = vmatpush.msra.mxu0 0.0
    %7034 = vmatpush.msra.mxu0 0.0
    %7035 = vmatpush.msra.mxu0 %v7015
    %7036 = vmatmul.f32.gmra.mxu0 %v7018
    %v7037 = vpop.f32.mrf.mxu0
    %v7038 = vadd.f32 0.0, %v7037
    %7039 = vdwg.mxu0
    %7040 = vrot.lane.b32.xlu0 %v6746, 112
    %v7041 = vpop.permute.xlu0 %7040
    %7042 = vrot.lane.b32.xlu0 %v6779, 112
    %v7043 = vpop.permute.xlu0 %7042
    %v7044 = vsel %vm977, %v7041, 0
    %v7046 = vsel %vm977, %v7043, 0
    %7048 = vmatpush.xpose.msra.mxu0 0.0
    %7049 = vmatpush.xpose.msra.mxu0 0.0
    %7050 = vmatpush.xpose.msra.mxu0 0.0
    %7051 = vmatpush.xpose.msra.mxu0 0.0
    %7052 = vmatpush.xpose.msra.mxu0 0.0
    %7053 = vmatpush.xpose.msra.mxu0 0.0
    %7054 = vmatpush.xpose.msra.mxu0 0.0
    %7055 = vmatpush.xpose.msra.mxu0 0.0
    %7056 = vmatpush.xpose.msra.mxu0 0.0
    %7057 = vmatpush.xpose.msra.mxu0 0.0
    %7058 = vmatpush.xpose.msra.mxu0 0.0
    %7059 = vmatpush.xpose.msra.mxu0 0.0
    %7060 = vmatpush.xpose.msra.mxu0 0.0
    %7061 = vmatpush.xpose.msra.mxu0 0.0
    %7062 = vmatpush.xpose.msra.mxu0 0.0
    %7063 = vmatpush.xpose.msra.mxu0 %v7046
    %7064 = vmatmul.f32.gmra.mxu0 %v7044
    %v7065 = vpop.f32.mrf.mxu0
    %v7066 = vadd.f32 %v970, %v7065
    %7067 = vdwg.mxu0
    %7068 = vrot.lane.b32.xlu0 %v6749, 112
    %v7069 = vpop.permute.xlu0 %7068
    %7070 = vrot.lane.b32.xlu0 %v6782, 112
    %v7071 = vpop.permute.xlu0 %7070
    %v7072 = vsel %vm977, %v7069, 0
    %v7074 = vsel %vm977, %v7071, 0
    %7076 = vmatpush.xpose.msra.mxu0 0.0
    %7077 = vmatpush.xpose.msra.mxu0 0.0
    %7078 = vmatpush.xpose.msra.mxu0 0.0
    %7079 = vmatpush.xpose.msra.mxu0 0.0
    %7080 = vmatpush.xpose.msra.mxu0 0.0
    %7081 = vmatpush.xpose.msra.mxu0 0.0
    %7082 = vmatpush.xpose.msra.mxu0 0.0
    %7083 = vmatpush.xpose.msra.mxu0 0.0
    %7084 = vmatpush.xpose.msra.mxu0 0.0
    %7085 = vmatpush.xpose.msra.mxu0 0.0
    %7086 = vmatpush.xpose.msra.mxu0 0.0
    %7087 = vmatpush.xpose.msra.mxu0 0.0
    %7088 = vmatpush.xpose.msra.mxu0 0.0
    %7089 = vmatpush.xpose.msra.mxu0 0.0
    %7090 = vmatpush.xpose.msra.mxu0 0.0
    %7091 = vmatpush.xpose.msra.mxu0 %v7074
    %7092 = vmatmul.f32.gmra.mxu0 %v7072
    %v7093 = vpop.f32.mrf.mxu0
    %v7094 = vadd.f32 %v971, %v7093
    %7095 = vdwg.mxu0
    %v7096 = vsel %vm977, %v7066, -inf
    %7097 = vmax.xlane.f32.xlu0 %v7096
    %v7098 = vpop.xlane.xlu0 %7097
    %v7099 = vsel %vm977, %v7094, -inf
    %7100 = vmax.xlane.f32.xlu0 %v7099
    %v7101 = vpop.xlane.xlu0 %7100
    %v7102 = vsub.f32 %v7066, %v7098
    %v7103 = vsub.f32 %v7094, %v7101
    %v7104 = vmul.f32 %v7102, 1.442695
    %v7105 = vpow.pop %v7104
    %v7106 = vmul.f32 %v7103, 1.442695
    %v7107 = vpow.pop %v7106
    %v7108 = vsel %vm977, %v7105, 0.0
    %7109 = vadd.xlane.f32.xlu0 %v7108
    %v7110 = vpop.xlane.xlu0 %7109
    %v7111 = vsel %vm977, %v7107, 0.0
    %7112 = vadd.xlane.f32.xlu0 %v7111
    %v7113 = vpop.xlane.xlu0 %7112
    %v7114 = vrcp.pop %v7110
    %v7115 = vrcp.pop %v7113
    %v7116 = vmul.f32 %v7105, %v7114
    %v7117 = vmul.f32 %v7107, %v7115
    %7118 = vrot.lane.b32.xlu0 %v6779, 80
    %v7119 = vpop.permute.xlu0 %7118
    %v7122 = vsel %vm977, %v7116, 0
    %7124 = vmatpush.msra.mxu0 0.0
    %7125 = vmatpush.msra.mxu0 0.0
    %7126 = vmatpush.msra.mxu0 0.0
    %7127 = vmatpush.msra.mxu0 0.0
    %7128 = vmatpush.msra.mxu0 0.0
    %7129 = vmatpush.msra.mxu0 0.0
    %7130 = vmatpush.msra.mxu0 0.0
    %7131 = vmatpush.msra.mxu0 0.0
    %7132 = vmatpush.msra.mxu0 0.0
    %7133 = vmatpush.msra.mxu0 0.0
    %7134 = vmatpush.msra.mxu0 0.0
    %7135 = vmatpush.msra.mxu0 0.0
    %7136 = vmatpush.msra.mxu0 0.0
    %7137 = vmatpush.msra.mxu0 0.0
    %7138 = vmatpush.msra.mxu0 0.0
    %7139 = vmatpush.msra.mxu0 %v7119
    %7140 = vmatmul.f32.gmra.mxu0 %v7122
    %v7141 = vpop.f32.mrf.mxu0
    %v7142 = vadd.f32 0.0, %v7141
    %7143 = vdwg.mxu0
    %7144 = vrot.lane.b32.xlu0 %v6782, 80
    %v7145 = vpop.permute.xlu0 %7144
    %v7148 = vsel %vm977, %v7117, 0
    %7150 = vmatpush.msra.mxu0 0.0
    %7151 = vmatpush.msra.mxu0 0.0
    %7152 = vmatpush.msra.mxu0 0.0
    %7153 = vmatpush.msra.mxu0 0.0
    %7154 = vmatpush.msra.mxu0 0.0
    %7155 = vmatpush.msra.mxu0 0.0
    %7156 = vmatpush.msra.mxu0 0.0
    %7157 = vmatpush.msra.mxu0 0.0
    %7158 = vmatpush.msra.mxu0 0.0
    %7159 = vmatpush.msra.mxu0 0.0
    %7160 = vmatpush.msra.mxu0 0.0
    %7161 = vmatpush.msra.mxu0 0.0
    %7162 = vmatpush.msra.mxu0 0.0
    %7163 = vmatpush.msra.mxu0 0.0
    %7164 = vmatpush.msra.mxu0 0.0
    %7165 = vmatpush.msra.mxu0 %v7145
    %7166 = vmatmul.f32.gmra.mxu0 %v7148
    %v7167 = vpop.f32.mrf.mxu0
    %v7168 = vadd.f32 0.0, %v7167
    %7169 = vdwg.mxu0
    %7170 = vrot.lane.b32.xlu0 %v6746, 104
    %v7171 = vpop.permute.xlu0 %7170
    %7172 = vrot.lane.b32.xlu0 %v6779, 104
    %v7173 = vpop.permute.xlu0 %7172
    %v7174 = vsel %vm977, %v7171, 0
    %v7176 = vsel %vm977, %v7173, 0
    %7178 = vmatpush.xpose.msra.mxu0 0.0
    %7179 = vmatpush.xpose.msra.mxu0 0.0
    %7180 = vmatpush.xpose.msra.mxu0 0.0
    %7181 = vmatpush.xpose.msra.mxu0 0.0
    %7182 = vmatpush.xpose.msra.mxu0 0.0
    %7183 = vmatpush.xpose.msra.mxu0 0.0
    %7184 = vmatpush.xpose.msra.mxu0 0.0
    %7185 = vmatpush.xpose.msra.mxu0 0.0
    %7186 = vmatpush.xpose.msra.mxu0 0.0
    %7187 = vmatpush.xpose.msra.mxu0 0.0
    %7188 = vmatpush.xpose.msra.mxu0 0.0
    %7189 = vmatpush.xpose.msra.mxu0 0.0
    %7190 = vmatpush.xpose.msra.mxu0 0.0
    %7191 = vmatpush.xpose.msra.mxu0 0.0
    %7192 = vmatpush.xpose.msra.mxu0 0.0
    %7193 = vmatpush.xpose.msra.mxu0 %v7176
    %7194 = vmatmul.f32.gmra.mxu0 %v7174
    %v7195 = vpop.f32.mrf.mxu0
    %v7196 = vadd.f32 %v970, %v7195
    %7197 = vdwg.mxu0
    %7198 = vrot.lane.b32.xlu0 %v6749, 104
    %v7199 = vpop.permute.xlu0 %7198
    %7200 = vrot.lane.b32.xlu0 %v6782, 104
    %v7201 = vpop.permute.xlu0 %7200
    %v7202 = vsel %vm977, %v7199, 0
    %v7204 = vsel %vm977, %v7201, 0
    %7206 = vmatpush.xpose.msra.mxu0 0.0
    %7207 = vmatpush.xpose.msra.mxu0 0.0
    %7208 = vmatpush.xpose.msra.mxu0 0.0
    %7209 = vmatpush.xpose.msra.mxu0 0.0
    %7210 = vmatpush.xpose.msra.mxu0 0.0
    %7211 = vmatpush.xpose.msra.mxu0 0.0
    %7212 = vmatpush.xpose.msra.mxu0 0.0
    %7213 = vmatpush.xpose.msra.mxu0 0.0
    %7214 = vmatpush.xpose.msra.mxu0 0.0
    %7215 = vmatpush.xpose.msra.mxu0 0.0
    %7216 = vmatpush.xpose.msra.mxu0 0.0
    %7217 = vmatpush.xpose.msra.mxu0 0.0
    %7218 = vmatpush.xpose.msra.mxu0 0.0
    %7219 = vmatpush.xpose.msra.mxu0 0.0
    %7220 = vmatpush.xpose.msra.mxu0 0.0
    %7221 = vmatpush.xpose.msra.mxu0 %v7204
    %7222 = vmatmul.f32.gmra.mxu0 %v7202
    %v7223 = vpop.f32.mrf.mxu0
    %v7224 = vadd.f32 %v971, %v7223
    %7225 = vdwg.mxu0
    %v7226 = vsel %vm977, %v7196, -inf
    %7227 = vmax.xlane.f32.xlu0 %v7226
    %v7228 = vpop.xlane.xlu0 %7227
    %v7229 = vsel %vm977, %v7224, -inf
    %7230 = vmax.xlane.f32.xlu0 %v7229
    %v7231 = vpop.xlane.xlu0 %7230
    %v7232 = vsub.f32 %v7196, %v7228
    %v7233 = vsub.f32 %v7224, %v7231
    %v7234 = vmul.f32 %v7232, 1.442695
    %v7235 = vpow.pop %v7234
    %v7236 = vmul.f32 %v7233, 1.442695
    %v7237 = vpow.pop %v7236
    %v7238 = vsel %vm977, %v7235, 0.0
    %7239 = vadd.xlane.f32.xlu0 %v7238
    %v7240 = vpop.xlane.xlu0 %7239
    %v7241 = vsel %vm977, %v7237, 0.0
    %7242 = vadd.xlane.f32.xlu0 %v7241
    %v7243 = vpop.xlane.xlu0 %7242
    %v7244 = vrcp.pop %v7240
    %v7245 = vrcp.pop %v7243
    %v7246 = vmul.f32 %v7235, %v7244
    %v7247 = vmul.f32 %v7237, %v7245
    %7248 = vrot.lane.b32.xlu0 %v6779, 72
    %v7249 = vpop.permute.xlu0 %7248
    %v7252 = vsel %vm977, %v7246, 0
    %7254 = vmatpush.msra.mxu0 0.0
    %7255 = vmatpush.msra.mxu0 0.0
    %7256 = vmatpush.msra.mxu0 0.0
    %7257 = vmatpush.msra.mxu0 0.0
    %7258 = vmatpush.msra.mxu0 0.0
    %7259 = vmatpush.msra.mxu0 0.0
    %7260 = vmatpush.msra.mxu0 0.0
    %7261 = vmatpush.msra.mxu0 0.0
    %7262 = vmatpush.msra.mxu0 0.0
    %7263 = vmatpush.msra.mxu0 0.0
    %7264 = vmatpush.msra.mxu0 0.0
    %7265 = vmatpush.msra.mxu0 0.0
    %7266 = vmatpush.msra.mxu0 0.0
    %7267 = vmatpush.msra.mxu0 0.0
    %7268 = vmatpush.msra.mxu0 0.0
    %7269 = vmatpush.msra.mxu0 %v7249
    %7270 = vmatmul.f32.gmra.mxu0 %v7252
    %v7271 = vpop.f32.mrf.mxu0
    %v7272 = vadd.f32 0.0, %v7271
    %7273 = vdwg.mxu0
    %7274 = vrot.lane.b32.xlu0 %v6782, 72
    %v7275 = vpop.permute.xlu0 %7274
    %v7278 = vsel %vm977, %v7247, 0
    %7280 = vmatpush.msra.mxu0 0.0
    %7281 = vmatpush.msra.mxu0 0.0
    %7282 = vmatpush.msra.mxu0 0.0
    %7283 = vmatpush.msra.mxu0 0.0
    %7284 = vmatpush.msra.mxu0 0.0
    %7285 = vmatpush.msra.mxu0 0.0
    %7286 = vmatpush.msra.mxu0 0.0
    %7287 = vmatpush.msra.mxu0 0.0
    %7288 = vmatpush.msra.mxu0 0.0
    %7289 = vmatpush.msra.mxu0 0.0
    %7290 = vmatpush.msra.mxu0 0.0
    %7291 = vmatpush.msra.mxu0 0.0
    %7292 = vmatpush.msra.mxu0 0.0
    %7293 = vmatpush.msra.mxu0 0.0
    %7294 = vmatpush.msra.mxu0 0.0
    %7295 = vmatpush.msra.mxu0 %v7275
    %7296 = vmatmul.f32.gmra.mxu0 %v7278
    %v7297 = vpop.f32.mrf.mxu0
    %v7298 = vadd.f32 0.0, %v7297
    %7299 = vdwg.mxu0
    %7302 = vrot.lane.b32.xlu0 %v7012, 8
    %v7303 = vpop.permute.xlu0 %7302
    %7304 = vrot.lane.b32.xlu0 %v7038, 8
    %v7305 = vpop.permute.xlu0 %7304
    %7310 = vrot.lane.b32.xlu0 %v7142, 16
    %v7311 = vpop.permute.xlu0 %7310
    %7312 = vrot.lane.b32.xlu0 %v7168, 16
    %v7313 = vpop.permute.xlu0 %7312
    %7318 = vrot.lane.b32.xlu0 %v7272, 24
    %v7319 = vpop.permute.xlu0 %7318
    %7320 = vrot.lane.b32.xlu0 %v7298, 24
    %v7321 = vpop.permute.xlu0 %7320
    %v7324 = vsel %vm977, %v6882, %v7303
    %v7325 = vsel %vm977, %v6908, %v7305
    %v7326 = vsel %vm1519, %v7324, %v7311
    %v7327 = vsel %vm1519, %v7325, %v7313
    %v7328 = vsel %vm1522, %v7326, %v7319
    %v7329 = vsel %vm1522, %v7327, %v7321
    %s7330 = scalar_lea.vmem %s99, 32
    %v7331 = vld [vmem:[%s7330] sm:$0xff]
    %v7332 = vld [vmem:[%s7330 + $0x8] sm:$0xff]
    %v7333 = vld [vmem:[%s7330 + $0x10] sm:$0xff]
    %v7334 = vld [vmem:[%s7330 + $0x18] sm:$0xff]
    %s7335 = scalar_lea.vmem [#allocation43], 1
    %v7336 = vld [vmem:[%s7335] sm:$0x1]
    %v7338 = vperm.slane %v7336, 0
    %v7341 = vsel %vm871, %v7328, 0
    %v7344 = vsel %vm871, %v7329, 0
    %7346 = vmatpush.msra.mxu0 0.0
    %7347 = vmatpush.msra.mxu0 0.0
    %7348 = vmatpush.msra.mxu0 0.0
    %7349 = vmatpush.msra.mxu0 0.0
    %7350 = vmatpush.msra.mxu0 0.0
    %7351 = vmatpush.msra.mxu0 0.0
    %7352 = vmatpush.msra.mxu0 0.0
    %7353 = vmatpush.msra.mxu0 0.0
    %7354 = vmatpush.msra.mxu0 0.0
    %7355 = vmatpush.msra.mxu0 0.0
    %7356 = vmatpush.msra.mxu0 0.0
    %7357 = vmatpush.msra.mxu0 0.0
    %7358 = vmatpush.msra.mxu0 %v7334
    %7359 = vmatpush.msra.mxu0 %v7333
    %7360 = vmatpush.msra.mxu0 %v7332
    %7361 = vmatpush.msra.mxu0 %v7331
    %7362 = vmatmul.f32.gmra.mxu0 %v7341
    %v7363 = vpop.f32.mrf.mxu0
    %v7364 = vadd.f32 %v7338, %v7363
    %7365 = vmatmul.f32.gmra.mxu0 %v7344
    %v7366 = vpop.f32.mrf.mxu0
    %v7367 = vadd.f32 %v7338, %v7366
    %7368 = vdwg.mxu0
    %v7369 = vadd.f32 %v6710, %v7364
    %v7370 = vadd.f32 %v6711, %v7367
    %s7371 = scalar_lea.vmem [#allocation44], 1
    %v7372 = vld [vmem:[%s7371] sm:$0x1]
    %s7373 = scalar_lea.vmem [#allocation46], 1
    %v7374 = vld [vmem:[%s7373] sm:$0x1]
    %v7375 = vsel %vm871, %v7369, 0.0
    %7376 = vadd.xlane.f32.xlu0 %v7375
    %v7377 = vpop.xlane.xlu0 %7376
    %v7378 = vsel %vm871, %v7370, 0.0
    %7379 = vadd.xlane.f32.xlu0 %v7378
    %v7380 = vpop.xlane.xlu0 %7379
    %v7381 = vmul.f32 %v7377, %v884
    %v7382 = vmul.f32 %v7380, %v884
    %v7383 = vsub.f32 %v7369, %v7381
    %v7384 = vsub.f32 %v7370, %v7382
    %v7385 = vmul.f32 %v7383, %v7383
    %v7386 = vmul.f32 %v7384, %v7384
    %v7387 = vsel %vm871, %v7385, 0.0
    %7388 = vadd.xlane.f32.xlu0 %v7387
    %v7389 = vpop.xlane.xlu0 %7388
    %v7390 = vsel %vm871, %v7386, 0.0
    %7391 = vadd.xlane.f32.xlu0 %v7390
    %v7392 = vpop.xlane.xlu0 %7391
    %v7393 = vmul.f32 %v7389, %v884
    %v7394 = vmul.f32 %v7392, %v884
    %v7395 = vadd.f32 %v7393, 1e-05
    %v7396 = vadd.f32 %v7394, 1e-05
    %v7397 = vrsqrt.pop %v7395
    %v7398 = vmul.f32 %v7397, %v7395
    %v7399 = vmul.f32 %v7398, %v7397
    %v7400 = vmul.f32 0.5, %v7399
    %v7401 = vsub.f32 1.5, %v7400
    %v7402 = vmul.f32 %v7397, %v7401
    %vm7403 = vweird.f32 %v7395
    %vm7404 = vweird.f32 %v7397
    %vm7405 = vmor %vm7403, %vm7404
    %v7406 = vsel %vm7405, %v7397, %v7402
    %v7407 = vrsqrt.pop %v7396
    %v7408 = vmul.f32 %v7407, %v7396
    %v7409 = vmul.f32 %v7408, %v7407
    %v7410 = vmul.f32 0.5, %v7409
    %v7411 = vsub.f32 1.5, %v7410
    %v7412 = vmul.f32 %v7407, %v7411
    %vm7413 = vweird.f32 %v7396
    %vm7414 = vweird.f32 %v7407
    %vm7415 = vmor %vm7413, %vm7414
    %v7416 = vsel %vm7415, %v7407, %v7412
    %v7417 = vmul.f32 %v7383, %v7406
    %v7418 = vmul.f32 %v7384, %v7416
    %v7420 = vperm.slane %v7372, 0
    %v7422 = vmul.f32 %v7417, %v7420
    %v7423 = vmul.f32 %v7418, %v7420
    %v7425 = vperm.slane %v7374, 0
    %v7427 = vadd.f32 %v7422, %v7425
    %v7428 = vadd.f32 %v7423, %v7425
    %s7429 = scalar_lea.vmem [#allocation47], 32
    %v7430 = vld [vmem:[%s7429] sm:$0xff]
    %v7431 = vld [vmem:[%s7429 + $0x8] sm:$0xff]
    %v7432 = vld [vmem:[%s7429 + $0x10] sm:$0xff]
    %v7433 = vld [vmem:[%s7429 + $0x18] sm:$0xff]
    %s7434 = scalar_lea.vmem [#allocation49], 1
    %v7435 = vld [vmem:[%s7434] sm:$0x1]
    %v7437 = vperm.slane %v7435, 0
    %v7440 = vsel %vm871, %v7427, 0
    %v7443 = vsel %vm871, %v7428, 0
    %7445 = vmatpush.msra.mxu0 0.0
    %7446 = vmatpush.msra.mxu0 0.0
    %7447 = vmatpush.msra.mxu0 0.0
    %7448 = vmatpush.msra.mxu0 0.0
    %7449 = vmatpush.msra.mxu0 0.0
    %7450 = vmatpush.msra.mxu0 0.0
    %7451 = vmatpush.msra.mxu0 0.0
    %7452 = vmatpush.msra.mxu0 0.0
    %7453 = vmatpush.msra.mxu0 0.0
    %7454 = vmatpush.msra.mxu0 0.0
    %7455 = vmatpush.msra.mxu0 0.0
    %7456 = vmatpush.msra.mxu0 0.0
    %7457 = vmatpush.msra.mxu0 %v7433
    %7458 = vmatpush.msra.mxu0 %v7432
    %7459 = vmatpush.msra.mxu0 %v7431
    %7460 = vmatpush.msra.mxu0 %v7430
    %7461 = vmatmul.f32.gmra.mxu0 %v7440
    %v7462 = vpop.f32.mrf.mxu0
    %v7463 = vadd.f32 %v7437, %v7462
    %7464 = vmatmul.f32.gmra.mxu0 %v7443
    %v7465 = vpop.f32.mrf.mxu0
    %v7466 = vadd.f32 %v7437, %v7465
    %7467 = vdwg.mxu0
    %v7468 = vmul.f32 %v7463, %v7463
    %v7469 = vmul.f32 %v7466, %v7466
    %v7470 = vmul.f32 %v7463, %v7468
    %v7471 = vmul.f32 %v7466, %v7469
    %v7472 = vmul.f32 %v7470, 0.044715
    %v7473 = vmul.f32 %v7471, 0.044715
    %v7474 = vadd.f32 %v7463, %v7472
    %v7475 = vadd.f32 %v7466, %v7473
    %v7476 = vmul.f32 %v7474, 0.7978846
    %v7477 = vmul.f32 %v7475, 0.7978846
    %v7478 = vtanh.pop %v7476
    %v7479 = vtanh.pop %v7477
    %v7480 = vadd.f32 %v7478, 1.0
    %v7481 = vadd.f32 %v7479, 1.0
    %v7482 = vmul.f32 %v7480, 0.5
    %v7483 = vmul.f32 %v7481, 0.5
    %v7484 = vmul.f32 %v7463, %v7482
    %v7485 = vmul.f32 %v7466, %v7483
    %s7486 = scalar_lea.vmem %s111, 64
    %v7487 = vld [vmem:[%s7486] sm:$0xff]
    %v7488 = vld [vmem:[%s7486 + $0x8] sm:$0xff]
    %v7489 = vld [vmem:[%s7486 + $0x10] sm:$0xff]
    %v7490 = vld [vmem:[%s7486 + $0x18] sm:$0xff]
    %v7491 = vld [vmem:[%s7486 + $0x20] sm:$0xff]
    %v7492 = vld [vmem:[%s7486 + $0x28] sm:$0xff]
    %v7493 = vld [vmem:[%s7486 + $0x30] sm:$0xff]
    %v7494 = vld [vmem:[%s7486 + $0x38] sm:$0xff]
    %s7495 = scalar_lea.vmem [#allocation50], 1
    %v7496 = vld [vmem:[%s7495] sm:$0x1]
    %v7498 = vperm.slane %v7496, 0
    %v7501 = vsel %vm1687, %v7484, 0
    %v7504 = vsel %vm1687, %v7485, 0
    %7506 = vmatpush.msra.mxu0 0.0
    %7507 = vmatpush.msra.mxu0 0.0
    %7508 = vmatpush.msra.mxu0 0.0
    %7509 = vmatpush.msra.mxu0 0.0
    %7510 = vmatpush.msra.mxu0 0.0
    %7511 = vmatpush.msra.mxu0 0.0
    %7512 = vmatpush.msra.mxu0 0.0
    %7513 = vmatpush.msra.mxu0 0.0
    %7514 = vmatpush.msra.mxu0 %v7494
    %7515 = vmatpush.msra.mxu0 %v7493
    %7516 = vmatpush.msra.mxu0 %v7492
    %7517 = vmatpush.msra.mxu0 %v7491
    %7518 = vmatpush.msra.mxu0 %v7490
    %7519 = vmatpush.msra.mxu0 %v7489
    %7520 = vmatpush.msra.mxu0 %v7488
    %7521 = vmatpush.msra.mxu0 %v7487
    %7522 = vmatmul.f32.gmra.mxu0 %v7501
    %v7523 = vpop.f32.mrf.mxu0
    %v7524 = vadd.f32 %v7498, %v7523
    %7525 = vmatmul.f32.gmra.mxu0 %v7504
    %v7526 = vpop.f32.mrf.mxu0
    %v7527 = vadd.f32 %v7498, %v7526
    %7528 = vdwg.mxu0
    %v7529 = vadd.f32 %v7427, %v7524
    %v7530 = vadd.f32 %v7428, %v7527
    %s7531 = scalar_lea.vmem [#allocation52], 1
    %v7532 = vld [vmem:[%s7531] sm:$0x1]
    %s7533 = scalar_lea.vmem [#allocation53], 1
    %v7534 = vld [vmem:[%s7533] sm:$0x1]
    %v7535 = vsel %vm871, %v7529, 0.0
    %7536 = vadd.xlane.f32.xlu0 %v7535
    %v7537 = vpop.xlane.xlu0 %7536
    %v7538 = vsel %vm871, %v7530, 0.0
    %7539 = vadd.xlane.f32.xlu0 %v7538
    %v7540 = vpop.xlane.xlu0 %7539
    %v7541 = vmul.f32 %v7537, %v884
    %v7542 = vmul.f32 %v7540, %v884
    %v7543 = vsub.f32 %v7529, %v7541
    %v7544 = vsub.f32 %v7530, %v7542
    %v7545 = vmul.f32 %v7543, %v7543
    %v7546 = vmul.f32 %v7544, %v7544
    %v7547 = vsel %vm871, %v7545, 0.0
    %7548 = vadd.xlane.f32.xlu0 %v7547
    %v7549 = vpop.xlane.xlu0 %7548
    %v7550 = vsel %vm871, %v7546, 0.0
    %7551 = vadd.xlane.f32.xlu0 %v7550
    %v7552 = vpop.xlane.xlu0 %7551
    %v7553 = vmul.f32 %v7549, %v884
    %v7554 = vmul.f32 %v7552, %v884
    %v7555 = vadd.f32 %v7553, 1e-05
    %v7556 = vadd.f32 %v7554, 1e-05
    %v7557 = vrsqrt.pop %v7555
    %v7558 = vmul.f32 %v7557, %v7555
    %v7559 = vmul.f32 %v7558, %v7557
    %v7560 = vmul.f32 0.5, %v7559
    %v7561 = vsub.f32 1.5, %v7560
    %v7562 = vmul.f32 %v7557, %v7561
    %vm7563 = vweird.f32 %v7555
    %vm7564 = vweird.f32 %v7557
    %vm7565 = vmor %vm7563, %vm7564
    %v7566 = vsel %vm7565, %v7557, %v7562
    %v7567 = vrsqrt.pop %v7556
    %v7568 = vmul.f32 %v7567, %v7556
    %v7569 = vmul.f32 %v7568, %v7567
    %v7570 = vmul.f32 0.5, %v7569
    %v7571 = vsub.f32 1.5, %v7570
    %v7572 = vmul.f32 %v7567, %v7571
    %vm7573 = vweird.f32 %v7556
    %vm7574 = vweird.f32 %v7567
    %vm7575 = vmor %vm7573, %vm7574
    %v7576 = vsel %vm7575, %v7567, %v7572
    %v7577 = vmul.f32 %v7543, %v7566
    %v7578 = vmul.f32 %v7544, %v7576
    %v7580 = vperm.slane %v7532, 0
    %v7582 = vmul.f32 %v7577, %v7580
    %v7583 = vmul.f32 %v7578, %v7580
    %v7585 = vperm.slane %v7534, 0
    %v7587 = vadd.f32 %v7582, %v7585
    %v7588 = vadd.f32 %v7583, %v7585
    %v7589 = vld [vmem:[%s119] sm:$0xff]
    %v7590 = vld [vmem:[%s119 + $0x8] sm:$0xff]
    %v7591 = vld [vmem:[%s119 + $0x10] sm:$0xff]
    %v7592 = vld [vmem:[%s119 + $0x18] sm:$0xff]
    %v7593 = vld [vmem:[#allocation55] sm:$0x1]
    %v7595 = vperm.slane %v7593, 0
    %v7598 = vsel %vm871, %v7587, 0
    %v7601 = vsel %vm871, %v7588, 0
    %7603 = vmatpush.msra.mxu0 0.0
    %7604 = vmatpush.msra.mxu0 0.0
    %7605 = vmatpush.msra.mxu0 0.0
    %7606 = vmatpush.msra.mxu0 0.0
    %7607 = vmatpush.msra.mxu0 0.0
    %7608 = vmatpush.msra.mxu0 0.0
    %7609 = vmatpush.msra.mxu0 0.0
    %7610 = vmatpush.msra.mxu0 0.0
    %7611 = vmatpush.msra.mxu0 0.0
    %7612 = vmatpush.msra.mxu0 0.0
    %7613 = vmatpush.msra.mxu0 0.0
    %7614 = vmatpush.msra.mxu0 0.0
    %7615 = vmatpush.msra.mxu0 %v7592
    %7616 = vmatpush.msra.mxu0 %v7591
    %7617 = vmatpush.msra.mxu0 %v7590
    %7618 = vmatpush.msra.mxu0 %v7589
    %7619 = vmatmul.f32.gmra.mxu0 %v7598
    %v7620 = vpop.f32.mrf.mxu0
    %v7621 = vadd.f32 %v7595, %v7620
    %7622 = vmatmul.f32.gmra.mxu0 %v7601
    %v7623 = vpop.f32.mrf.mxu0
    %v7624 = vadd.f32 %v7595, %v7623
    %7625 = vdwg.mxu0
    %7626 = vst [vmem:[#allocation56] sm:$0xff] %v7621
    %7627 = vst [vmem:[#allocation56 + $0x8] sm:$0xff] %v7624
    // Predicated region
    $region386: #{forward.1} parent=1 // pred_check
      _
    $region387: #{forward.1} parent=1 // pred_check_branch
      %7629 = sbr.rel (0) target = $region389
    $region388: #{forward.1} parent=1 // pred_region
      %7631 = vsyncadd [#allocation4], 0
      %s7632 = sshll.u32 [#allocation56], 4
      %s7633 = int_to_ptr.vmem [resolvable:$true] %s7632
      %s7634 = sshll.u32 %s123, 4
      %s7635 = int_to_ptr.hbm [resolvable:$true] %s7634
      %7640 = dma.vmem_to_hbm [thread:$0]  %s7633, 256, %s7635, [#allocation4], 128, 128, 8
    $region389: #{forward.1} parent=1 // pred_fallthru
      _
    // Predicated region
    $region390: #{forward.1} parent=1 // pred_check
      _
    $region391: #{forward.1} parent=1 // pred_check_branch
      %7642 = sbr.rel (0) target = $region393
    $region392: #{forward.1} parent=1 // pred_region
      %7644 = dma.done [#allocation4], 256
    $region393: #{forward.1} parent=1 // pred_fallthru
      _
    %7645 = vsyncpa [#allocation3], 1
    %7646 = vsyncpa [#allocation6], 1
    %7647 = vsyncpa [#allocation9], 1
    %7648 = vsyncpa [#allocation12], 1
    %7649 = vsyncpa [#allocation15], 1
    %7650 = vsyncpa [#allocation18], 1
    %7651 = vsyncpa [#allocation21], 1
    %7652 = vsyncpa [#allocation24], 1
    %7653 = vsyncpa [#allocation27], 1
    %7654 = vsyncpa [#allocation30], 1
    %7655 = vsyncpa [#allocation33], 1
    %7656 = vsyncpa [#allocation36], 1
    %7657 = vsyncpa [#allocation39], 1
    %7658 = vsyncpa [#allocation42], 1
    %7659 = vsyncpa [#allocation45], 1
    %7660 = vsyncpa [#allocation48], 1
    %7661 = vsyncpa [#allocation51], 1
    %7662 = vsyncpa [#allocation54], 1
    %7663 = vsyncpa [#allocation4], 1

</llo_original>
